<compile_context>
chip_gen: v6e
topology: v6e:2x2x1
jax: 0.10.0
libtpu: 0.0.40
codegen_flags: <defaults>
</compile_context>

<pallas_src>
import functools

import numpy as np
import jax
import jax.numpy as jnp
from jax.experimental import pallas as pl
from jax.experimental.pallas import tpu as pltpu


# Left halo width inside the padded VMEM scratch.  Using 8 (instead of 1)
# keeps the interior copy sublane-aligned -> unmasked stores.
_WPAD = 8


def _parnet_kernel(x_ref, w3_ref, b3_ref, wsse_ref, bsse_ref, o_ref,
                   xpad_scr, *maybe_col, use_im2col):
    # x_ref   : (Bblk, H, W, C)            f32   input block (NHWC)
    # w3_ref  : (9*C, C)                   bf16  conv weights (1x1 + BNs folded)
    # b3_ref  : (1, C)                     f32   folded bias (b1 + b3)
    # wsse_ref: (C, C), bsse_ref: (1, C)   f32   sSE 1x1 conv
    # o_ref   : (Bblk, H, W, C)                  output block
    # xpad_scr: (Bblk, H+2, W+2*_WPAD, C)  f32   zero-halo scratch
    # maybe_col (im2col mode only): (Bblk, H, W, 9*C) bf16 im2col scratch
    Bblk, H, W, C = x_ref.shape
    HW = H * W
    M = Bblk * HW
    Wp = W + 2 * _WPAD
    col_scr = maybe_col[0] if use_im2col else None

    x = x_ref[...]                                        # single block load

    # --- zero ONLY the halo cells the 3x3 taps read (perf review #3) -------
    # Taps read rows 0..H+1 and cols _WPAD-1.._WPAD+W; the interior copy
    # below covers rows 1..H x cols _WPAD.._WPAD+W-1, so only two rows and
    # two columns need clearing (instead of the whole scratch).
    zrow = jnp.zeros((Bblk, 1, Wp, C), jnp.float32)
    xpad_scr[:, 0:1, :, :] = zrow                         # top halo row
    xpad_scr[:, H + 1:H + 2, :, :] = zrow                 # bottom halo row
    zcol = jnp.zeros((Bblk, H, 1, C), jnp.float32)
    xpad_scr[:, 1:H + 1, _WPAD - 1:_WPAD, :] = zcol               # left col
    xpad_scr[:, 1:H + 1, _WPAD + W:_WPAD + W + 1, :] = zcol       # right col
    # Interior copy at a sublane-aligned offset -> unmasked stores.
    xpad_scr[:, 1:H + 1, _WPAD:_WPAD + W, :] = x

    # --- sSE gate, hoisted above the conv so its tiny MXU pass + EUP
    # sigmoid overlap with the packing (perf review #11) --------------------
    xf = x.reshape(Bblk, HW, C)
    mean = jnp.mean(xf, axis=1)                            # (Bblk, C)
    att = jax.nn.sigmoid(
        jnp.dot(mean, wsse_ref[...], preferred_element_type=jnp.float32)
        + bsse_ref[...])                                   # (Bblk, C)

    # --- fused 3x3 conv (1x1 conv and both BatchNorms folded into w3/b3) ---
    if use_im2col:
        # Pack 9 shifted windows into a lane-contiguous (Bblk,H,W,9C) bf16
        # scratch (4-D indexed stores, perf review #12), then ONE bf16 MXU
        # matmul with f32 accumulation.
        for ky in range(3):
            for kx in range(3):
                tap = ky * 3 + kx
                w0 = _WPAD - 1 + kx
                win = xpad_scr[:, ky:ky + H, w0:w0 + W, :]       # (Bblk,H,W,C)
                col_scr[:, :, :, tap * C:(tap + 1) * C] = win.astype(jnp.bfloat16)
        y = jnp.dot(col_scr[...].reshape(M, 9 * C), w3_ref[...],
                    preferred_element_type=jnp.float32) + b3_ref[...]   # (M,C)
    else:
        # C >= 256: nine accumulating (M,C)@(C,C) dots — no col scratch
        # (perf review #5/#6); K=C already fills the MXU at these widths.
        y = jnp.zeros((M, C), jnp.float32)
        for ky in range(3):
            for kx in range(3):
                tap = ky * 3 + kx
                w0 = _WPAD - 1 + kx
                win = xpad_scr[:, ky:ky + H, w0:w0 + W, :]
                y = y + jnp.dot(win.reshape(M, C).astype(jnp.bfloat16),
                                w3_ref[tap * C:(tap + 1) * C, :],
                                preferred_element_type=jnp.float32)
        y = y + b3_ref[...]

    # --- combine + SiLU; lane-dense (last dim = C) store --------------------
    y = y.reshape(Bblk, HW, C) + xf * att[:, None, :]
    y = y * jax.nn.sigmoid(y)
    o_ref[...] = y.reshape(Bblk, H, W, C).astype(o_ref.dtype)


def _weight_spec(shape, single_buffer):
    """Constant-index weight block; single-buffered when supported."""
    if single_buffer:
        return pl.BlockSpec(shape, lambda b: (0, 0), pipeline_mode=pl.Buffered(1))
    return pl.BlockSpec(shape, lambda b: (0, 0))


def _pick_vmem_limit():
    """96 MiB budget on 128-MiB-VMEM chips (v5e/v6e); 32 MiB on v7x/unknown."""
    try:
        cap = getattr(pltpu.get_tpu_info(), "vmem_capacity_bytes", None)
        if cap is not None and cap >= 128 * 1024 * 1024:
            return 96 * 1024 * 1024
    except Exception:
        pass
    return 32 * 1024 * 1024


def _build_call(B, H, W, C, bblk, out_dtype, use_im2col, single_buffer_weights,
                vmem_limit_bytes):
    kernel = functools.partial(_parnet_kernel, use_im2col=use_im2col)
    scratch = [pltpu.VMEM((bblk, H + 2, W + 2 * _WPAD, C), jnp.float32)]
    if use_im2col:
        scratch.append(pltpu.VMEM((bblk, H, W, 9 * C), jnp.bfloat16))
    return pl.pallas_call(
        kernel,
        out_shape=jax.ShapeDtypeStruct((B, H, W, C), out_dtype),
        grid_spec=pltpu.PrefetchScalarGridSpec(
            num_scalar_prefetch=0,
            grid=(B // bblk,),
            in_specs=[
                pl.BlockSpec((bblk, H, W, C), lambda b: (b, 0, 0, 0)),
                _weight_spec((9 * C, C), single_buffer_weights),
                _weight_spec((1, C), single_buffer_weights),
                _weight_spec((C, C), single_buffer_weights),
                _weight_spec((1, C), single_buffer_weights),
            ],
            out_specs=pl.BlockSpec((bblk, H, W, C), lambda b: (b, 0, 0, 0)),
            scratch_shapes=scratch,
        ),
        compiler_params=pltpu.CompilerParams(
            dimension_semantics=("parallel",),
            vmem_limit_bytes=vmem_limit_bytes,
        ),
    )


def parnet_attention(x_nhwc, kernel_params, *, batch_block=1, out_dtype=None,
                     use_im2col=None):
    """ParNetAttention forward. x_nhwc: (B, H, W, C) f32 -> (B, H, W, C).

    batch_block defaults to 1 so the grid stays deep (>=2 pipelined steps per
    TensorCore) and HBM DMA is hidden; raise it only for tiny spatial sizes.
    Best performance when C is a multiple of 128 and W is a multiple of 8
    (ParNet's default channel=512 satisfies the former).
    """
    w3c, b3c, wsse, bsse = kernel_params
    B, H, W, C = x_nhwc.shape
    bblk = min(batch_block, B)
    assert B % bblk == 0, "batch must be divisible by batch_block"
    if out_dtype is None:
        out_dtype = x_nhwc.dtype
    if use_im2col is None:
        # K = 9C fills the MXU at small C; at C >= 256 the nine accumulating
        # dots already fill it and avoid the (M, 9C) col scratch entirely.
        use_im2col = C < 256
    vmem_limit = _pick_vmem_limit()

    err = None
    for single_buf in (True, False):   # Buffered(1) weights, then safe fallback
        try:
            fn = _build_call(B, H, W, C, bblk, out_dtype, use_im2col,
                             single_buf, vmem_limit)
            return fn(x_nhwc, w3c, b3c, wsse, bsse)
        except Exception as e:          # pragma: no cover — fallback path
            err = e
    raise err


def parnet_attention_nchw(x_nchw, kernel_params, **kw):
    """Drop-in NCHW wrapper matching the PyTorch module's layout (costs two
    extra HBM passes for the transposes; prefer the NHWC entry point)."""
    y = parnet_attention(jnp.transpose(x_nchw, (0, 2, 3, 1)), kernel_params, **kw)
    return jnp.transpose(y, (0, 3, 1, 2))


def make_params(key, channel):
    """Deterministic synthetic module parameters; BN folded (eval mode)."""
    ks = jax.random.split(key, 12)
    eps = 1e-5
    C = channel

    def u(k, shape, scale=0.1):
        return jax.random.uniform(k, shape, jnp.float32, -scale, scale)

    # conv1x1 (+ BN, eval-mode fold)
    w1 = u(ks[0], (C, C))                 # (Cin, Cout)
    b1 = u(ks[1], (C,))
    g1 = 1.0 + u(ks[2], (C,))
    be1 = u(ks[3], (C,))
    rm1 = u(ks[4], (C,))
    rv1 = 1.0 + jnp.abs(u(ks[5], (C,)))
    s1 = g1 / jnp.sqrt(rv1 + eps)
    w1f = w1 * s1[None, :]
    b1f = ((b1 - rm1) * s1 + be1).reshape(1, C)

    # conv3x3 (+ BN, eval-mode fold)
    w3 = u(ks[6], (3, 3, C, C))           # (kh, kw, Cin, Cout)
    b3 = u(ks[7], (C,))
    g3 = 1.0 + u(ks[8], (C,))
    be3 = u(ks[9], (C,))
    rm3 = u(ks[10], (C,))
    rv3 = 1.0 + jnp.abs(u(ks[11], (C,)))
    s3 = g3 / jnp.sqrt(rv3 + eps)
    w3f = w3 * s3[None, None, None, :]
    b3f = ((b3 - rm3) * s3 + be3).reshape(1, C)

    # sSE 1x1 conv
    ka, kb = jax.random.split(jax.random.fold_in(key, 99))
    wsse = u(ka, (C, C))
    bsse = u(kb, (C,)).reshape(1, C)

    return (w1f, b1f, w3f, b3f, wsse, bsse)


def prepare_kernel_params(ref_params):
    """Fold conv1x1 into the conv3x3 centre tap, lay weights out tap-major
    (row index = (ky*3+kx)*C + ci, matching the kernel's packing order) and
    cast the MXU weight to bf16 (f32 accumulation stays in the kernel)."""
    w1f, b1f, w3f, b3f, wsse, bsse = ref_params
    C = w1f.shape[0]
    w3c = w3f.at[1, 1].add(w1f)                      # exact algebraic fold
    b3c = b3f + b1f                                  # (1, C)
    w3c = w3c.reshape(9 * C, C).astype(jnp.bfloat16)
    return (w3c, b3c, wsse, bsse)


def _reference_nhwc(x, ref_params):
    """Plain-JAX f32 reference with the original module structure
    (x1 = conv1x1+BN, x2 = conv3x3+BN, x3 = sSE gate, SiLU combine)."""
    w1f, b1f, w3f, b3f, wsse, bsse = ref_params
    B, H, W, C = x.shape
    xf = x.reshape(B, H * W, C)

    x1 = jnp.einsum("bnc,cd->bnd", xf, w1f) + b1f

    xpad = jnp.pad(x, ((0, 0), (1, 1), (1, 1), (0, 0)))
    x2 = jnp.zeros((B, H * W, C), jnp.float32)
    for ky in range(3):
        for kx in range(3):
            win = xpad[:, ky:ky + H, kx:kx + W, :].reshape(B, H * W, C)
            x2 = x2 + jnp.einsum("bnc,cd->bnd", win, w3f[ky, kx])
    x2 = x2 + b3f

    mean = jnp.mean(xf, axis=1, keepdims=True)                    # (B,1,C)
    att = jax.nn.sigmoid(jnp.einsum("bnc,cd->bnd", mean, wsse) + bsse)
    x3 = xf * att

    y = x1 + x2 + x3
    y = y * jax.nn.sigmoid(y)
    return y.reshape(B, H, W, C)


if __name__ == "__main__":
    key = jax.random.PRNGKey(0)
    # NHWC; equivalent NCHW shape would be (4, 128, 16, 16).  C=128 keeps the
    # I/O lane-dense; batch_block=1 -> grid of 4 pipelined steps.
    B, H, W, C = 4, 16, 16, 128
    kx, kp = jax.random.split(key)
    x = jax.random.normal(kx, (B, H, W, C), jnp.float32)

    ref_params = make_params(kp, C)
    kernel_params = prepare_kernel_params(ref_params)

    out = jax.block_until_ready(parnet_attention(x, kernel_params, batch_block=1))
    ref = jax.block_until_ready(_reference_nhwc(x, ref_params))

    assert out.shape == (B, H, W, C)
    # Tolerance accounts for bf16 MXU operands (f32 accumulation) vs the pure
    # f32 reference.
    assert np.allclose(np.asarray(out), np.asarray(ref), atol=5e-2, rtol=5e-2)
    print("KERNEL_OK")
</pallas_src>

<mosaic_0001>
module attributes {stable_mosaic.version = 11 : i64} {
  func.func @_parnet_kernel(%arg0: i32, %arg1: memref<1x16x16x128xf32, #tpu.memory_space<vmem>>, %arg2: memref<1152x128xbf16, #tpu.memory_space<vmem>>, %arg3: memref<1x128xf32, #tpu.memory_space<vmem>>, %arg4: memref<128x128xf32, #tpu.memory_space<vmem>>, %arg5: memref<1x128xf32, #tpu.memory_space<vmem>>, %arg6: memref<1x16x16x128xf32, #tpu.memory_space<vmem>>, %arg7: memref<1x18x32x128xf32, #tpu.memory_space<vmem>>, %arg8: memref<1x16x16x1152xbf16, #tpu.memory_space<vmem>>) attributes {dimension_semantics = [#tpu.dimension_semantics<parallel>], iteration_bounds = array<i64: 4>, scalar_prefetch = 0 : i64, scratch_operands = 2 : i64, tpu.core_type = #tpu.core_type<tc>, window_params = [{transform_indices = @transform_0, window_bounds = array<i64: 1, 16, 16, 128>}, {pipeline_mode = #tpu.pipeline_mode<synchronous>, transform_indices = @transform_1, window_bounds = array<i64: 1152, 128>}, {pipeline_mode = #tpu.pipeline_mode<synchronous>, transform_indices = @transform_2, window_bounds = array<i64: 1, 128>}, {pipeline_mode = #tpu.pipeline_mode<synchronous>, transform_indices = @transform_3, window_bounds = array<i64: 128, 128>}, {pipeline_mode = #tpu.pipeline_mode<synchronous>, transform_indices = @transform_4, window_bounds = array<i64: 1, 128>}, {transform_indices = @transform_5, window_bounds = array<i64: 1, 16, 16, 128>}]} {
    %c0 = arith.constant 0 : index
    %c0_0 = arith.constant 0 : index
    %c0_1 = arith.constant 0 : index
    %c0_2 = arith.constant 0 : index
    %0 = vector.load %arg1[%c0, %c0_0, %c0_1, %c0_2] : memref<1x16x16x128xf32, #tpu.memory_space<vmem>>, vector<1x16x16x128xf32>
    %cst = arith.constant 0.000000e+00 : f32
    %1 = vector.broadcast %cst : f32 to vector<1x1x32x128xf32>
    %c0_3 = arith.constant 0 : index
    %c0_4 = arith.constant 0 : index
    %c0_5 = arith.constant 0 : index
    %c0_6 = arith.constant 0 : index
    %2 = vector.load %arg7[%c0_3, %c0_4, %c0_5, %c0_6] : memref<1x18x32x128xf32, #tpu.memory_space<vmem>>, vector<1x1x32x128xf32>
    tpu.vector_store %arg7[%c0_3, %c0_4, %c0_5, %c0_6], %1 {strides = array<i32>} : memref<1x18x32x128xf32, #tpu.memory_space<vmem>>, vector<1x1x32x128xf32>,
    %c0_7 = arith.constant 0 : index
    %c17 = arith.constant 17 : index
    %c0_8 = arith.constant 0 : index
    %c0_9 = arith.constant 0 : index
    %3 = vector.load %arg7[%c0_7, %c17, %c0_8, %c0_9] : memref<1x18x32x128xf32, #tpu.memory_space<vmem>>, vector<1x1x32x128xf32>
    tpu.vector_store %arg7[%c0_7, %c17, %c0_8, %c0_9], %1 {strides = array<i32>} : memref<1x18x32x128xf32, #tpu.memory_space<vmem>>, vector<1x1x32x128xf32>,
    %cst_10 = arith.constant 0.000000e+00 : f32
    %4 = vector.broadcast %cst_10 : f32 to vector<1x16x1x128xf32>
    %c0_11 = arith.constant 0 : index
    %c1 = arith.constant 1 : index
    %c7 = arith.constant 7 : index
    %c0_12 = arith.constant 0 : index
    %5 = vector.load %arg7[%c0_11, %c1, %c7, %c0_12] : memref<1x18x32x128xf32, #tpu.memory_space<vmem>>, vector<1x16x1x128xf32>
    tpu.vector_store %arg7[%c0_11, %c1, %c7, %c0_12], %4 {strides = array<i32>} : memref<1x18x32x128xf32, #tpu.memory_space<vmem>>, vector<1x16x1x128xf32>,
    %c0_13 = arith.constant 0 : index
    %c1_14 = arith.constant 1 : index
    %c24 = arith.constant 24 : index
    %c0_15 = arith.constant 0 : index
    %6 = vector.load %arg7[%c0_13, %c1_14, %c24, %c0_15] : memref<1x18x32x128xf32, #tpu.memory_space<vmem>>, vector<1x16x1x128xf32>
    tpu.vector_store %arg7[%c0_13, %c1_14, %c24, %c0_15], %4 {strides = array<i32>} : memref<1x18x32x128xf32, #tpu.memory_space<vmem>>, vector<1x16x1x128xf32>,
    %c0_16 = arith.constant 0 : index
    %c1_17 = arith.constant 1 : index
    %c8 = arith.constant 8 : index
    %c0_18 = arith.constant 0 : index
    %7 = vector.load %arg7[%c0_16, %c1_17, %c8, %c0_18] : memref<1x18x32x128xf32, #tpu.memory_space<vmem>>, vector<1x16x16x128xf32>
    tpu.vector_store %arg7[%c0_16, %c1_17, %c8, %c0_18], %0 {strides = array<i32>} : memref<1x18x32x128xf32, #tpu.memory_space<vmem>>, vector<1x16x16x128xf32>,
    %8 = vector.shape_cast %0 : vector<1x16x16x128xf32> to vector<1x256x128xf32>
    %cst_19 = arith.constant dense<0.000000e+00> : vector<1x128xf32>
    %9 = vector.multi_reduction <add>, %8, %cst_19 [1] : vector<1x256x128xf32> to vector<1x128xf32>
    %cst_20 = arith.constant 2.560000e+02 : f32
    %10 = vector.broadcast %cst_20 : f32 to vector<1x128xf32>
    %11 = arith.divf %9, %10 : vector<1x128xf32>
    %c0_21 = arith.constant 0 : index
    %c0_22 = arith.constant 0 : index
    %12 = vector.load %arg4[%c0_21, %c0_22] : memref<128x128xf32, #tpu.memory_space<vmem>>, vector<128x128xf32>
    %cst_23 = arith.constant dense<0.000000e+00> : vector<1x128xf32>
    %13 = tpu.matmul %11, %12, %cst_23 {dimension_numbers = #tpu.dot_dimension_numbers<[1], [0], [0], [1], [0, 0, 1, 1], [], []>} : vector<1x128xf32>, vector<128x128xf32>, vector<1x128xf32> -> vector<1x128xf32>
    %c0_24 = arith.constant 0 : index
    %c0_25 = arith.constant 0 : index
    %14 = vector.load %arg5[%c0_24, %c0_25] : memref<1x128xf32, #tpu.memory_space<vmem>>, vector<1x128xf32>
    %15 = arith.addf %13, %14 : vector<1x128xf32>
    %16 = arith.negf %15 : vector<1x128xf32>
    %17 = math.exp %16 : vector<1x128xf32>
    %cst_26 = arith.constant 1.000000e+00 : f32
    %18 = vector.broadcast %cst_26 : f32 to vector<1x128xf32>
    %19 = arith.addf %18, %17 : vector<1x128xf32>
    %20 = arith.divf %18, %19 : vector<1x128xf32>
    %c0_27 = arith.constant 0 : index
    %c0_28 = arith.constant 0 : index
    %c7_29 = arith.constant 7 : index
    %c0_30 = arith.constant 0 : index
    %21 = vector.load %arg7[%c0_27, %c0_28, %c7_29, %c0_30] : memref<1x18x32x128xf32, #tpu.memory_space<vmem>>, vector<1x16x16x128xf32>
    %22 = arith.truncf %21 : vector<1x16x16x128xf32> to vector<1x16x16x128xbf16>
    %c0_31 = arith.constant 0 : index
    %c0_32 = arith.constant 0 : index
    %c0_33 = arith.constant 0 : index
    %c0_34 = arith.constant 0 : index
    %23 = vector.load %arg8[%c0_31, %c0_32, %c0_33, %c0_34] : memref<1x16x16x1152xbf16, #tpu.memory_space<vmem>>, vector<1x16x16x128xbf16>
    tpu.vector_store %arg8[%c0_31, %c0_32, %c0_33, %c0_34], %22 {strides = array<i32>} : memref<1x16x16x1152xbf16, #tpu.memory_space<vmem>>, vector<1x16x16x128xbf16>,
    %c0_35 = arith.constant 0 : index
    %c0_36 = arith.constant 0 : index
    %c8_37 = arith.constant 8 : index
    %c0_38 = arith.constant 0 : index
    %24 = vector.load %arg7[%c0_35, %c0_36, %c8_37, %c0_38] : memref<1x18x32x128xf32, #tpu.memory_space<vmem>>, vector<1x16x16x128xf32>
    %25 = arith.truncf %24 : vector<1x16x16x128xf32> to vector<1x16x16x128xbf16>
    %c0_39 = arith.constant 0 : index
    %c0_40 = arith.constant 0 : index
    %c0_41 = arith.constant 0 : index
    %c128 = arith.constant 128 : index
    %26 = vector.load %arg8[%c0_39, %c0_40, %c0_41, %c128] : memref<1x16x16x1152xbf16, #tpu.memory_space<vmem>>, vector<1x16x16x128xbf16>
    tpu.vector_store %arg8[%c0_39, %c0_40, %c0_41, %c128], %25 {strides = array<i32>} : memref<1x16x16x1152xbf16, #tpu.memory_space<vmem>>, vector<1x16x16x128xbf16>,
    %c0_42 = arith.constant 0 : index
    %c0_43 = arith.constant 0 : index
    %c9 = arith.constant 9 : index
    %c0_44 = arith.constant 0 : index
    %27 = vector.load %arg7[%c0_42, %c0_43, %c9, %c0_44] : memref<1x18x32x128xf32, #tpu.memory_space<vmem>>, vector<1x16x16x128xf32>
    %28 = arith.truncf %27 : vector<1x16x16x128xf32> to vector<1x16x16x128xbf16>
    %c0_45 = arith.constant 0 : index
    %c0_46 = arith.constant 0 : index
    %c0_47 = arith.constant 0 : index
    %c256 = arith.constant 256 : index
    %29 = vector.load %arg8[%c0_45, %c0_46, %c0_47, %c256] : memref<1x16x16x1152xbf16, #tpu.memory_space<vmem>>, vector<1x16x16x128xbf16>
    tpu.vector_store %arg8[%c0_45, %c0_46, %c0_47, %c256], %28 {strides = array<i32>} : memref<1x16x16x1152xbf16, #tpu.memory_space<vmem>>, vector<1x16x16x128xbf16>,
    %c0_48 = arith.constant 0 : index
    %c1_49 = arith.constant 1 : index
    %c7_50 = arith.constant 7 : index
    %c0_51 = arith.constant 0 : index
    %30 = vector.load %arg7[%c0_48, %c1_49, %c7_50, %c0_51] : memref<1x18x32x128xf32, #tpu.memory_space<vmem>>, vector<1x16x16x128xf32>
    %31 = arith.truncf %30 : vector<1x16x16x128xf32> to vector<1x16x16x128xbf16>
    %c0_52 = arith.constant 0 : index
    %c0_53 = arith.constant 0 : index
    %c0_54 = arith.constant 0 : index
    %c384 = arith.constant 384 : index
    %32 = vector.load %arg8[%c0_52, %c0_53, %c0_54, %c384] : memref<1x16x16x1152xbf16, #tpu.memory_space<vmem>>, vector<1x16x16x128xbf16>
    tpu.vector_store %arg8[%c0_52, %c0_53, %c0_54, %c384], %31 {strides = array<i32>} : memref<1x16x16x1152xbf16, #tpu.memory_space<vmem>>, vector<1x16x16x128xbf16>,
    %c0_55 = arith.constant 0 : index
    %c1_56 = arith.constant 1 : index
    %c8_57 = arith.constant 8 : index
    %c0_58 = arith.constant 0 : index
    %33 = vector.load %arg7[%c0_55, %c1_56, %c8_57, %c0_58] : memref<1x18x32x128xf32, #tpu.memory_space<vmem>>, vector<1x16x16x128xf32>
    %34 = arith.truncf %33 : vector<1x16x16x128xf32> to vector<1x16x16x128xbf16>
    %c0_59 = arith.constant 0 : index
    %c0_60 = arith.constant 0 : index
    %c0_61 = arith.constant 0 : index
    %c512 = arith.constant 512 : index
    %35 = vector.load %arg8[%c0_59, %c0_60, %c0_61, %c512] : memref<1x16x16x1152xbf16, #tpu.memory_space<vmem>>, vector<1x16x16x128xbf16>
    tpu.vector_store %arg8[%c0_59, %c0_60, %c0_61, %c512], %34 {strides = array<i32>} : memref<1x16x16x1152xbf16, #tpu.memory_space<vmem>>, vector<1x16x16x128xbf16>,
    %c0_62 = arith.constant 0 : index
    %c1_63 = arith.constant 1 : index
    %c9_64 = arith.constant 9 : index
    %c0_65 = arith.constant 0 : index
    %36 = vector.load %arg7[%c0_62, %c1_63, %c9_64, %c0_65] : memref<1x18x32x128xf32, #tpu.memory_space<vmem>>, vector<1x16x16x128xf32>
    %37 = arith.truncf %36 : vector<1x16x16x128xf32> to vector<1x16x16x128xbf16>
    %c0_66 = arith.constant 0 : index
    %c0_67 = arith.constant 0 : index
    %c0_68 = arith.constant 0 : index
    %c640 = arith.constant 640 : index
    %38 = vector.load %arg8[%c0_66, %c0_67, %c0_68, %c640] : memref<1x16x16x1152xbf16, #tpu.memory_space<vmem>>, vector<1x16x16x128xbf16>
    tpu.vector_store %arg8[%c0_66, %c0_67, %c0_68, %c640], %37 {strides = array<i32>} : memref<1x16x16x1152xbf16, #tpu.memory_space<vmem>>, vector<1x16x16x128xbf16>,
    %c0_69 = arith.constant 0 : index
    %c2 = arith.constant 2 : index
    %c7_70 = arith.constant 7 : index
    %c0_71 = arith.constant 0 : index
    %39 = vector.load %arg7[%c0_69, %c2, %c7_70, %c0_71] : memref<1x18x32x128xf32, #tpu.memory_space<vmem>>, vector<1x16x16x128xf32>
    %40 = arith.truncf %39 : vector<1x16x16x128xf32> to vector<1x16x16x128xbf16>
    %c0_72 = arith.constant 0 : index
    %c0_73 = arith.constant 0 : index
    %c0_74 = arith.constant 0 : index
    %c768 = arith.constant 768 : index
    %41 = vector.load %arg8[%c0_72, %c0_73, %c0_74, %c768] : memref<1x16x16x1152xbf16, #tpu.memory_space<vmem>>, vector<1x16x16x128xbf16>
    tpu.vector_store %arg8[%c0_72, %c0_73, %c0_74, %c768], %40 {strides = array<i32>} : memref<1x16x16x1152xbf16, #tpu.memory_space<vmem>>, vector<1x16x16x128xbf16>,
    %c0_75 = arith.constant 0 : index
    %c2_76 = arith.constant 2 : index
    %c8_77 = arith.constant 8 : index
    %c0_78 = arith.constant 0 : index
    %42 = vector.load %arg7[%c0_75, %c2_76, %c8_77, %c0_78] : memref<1x18x32x128xf32, #tpu.memory_space<vmem>>, vector<1x16x16x128xf32>
    %43 = arith.truncf %42 : vector<1x16x16x128xf32> to vector<1x16x16x128xbf16>
    %c0_79 = arith.constant 0 : index
    %c0_80 = arith.constant 0 : index
    %c0_81 = arith.constant 0 : index
    %c896 = arith.constant 896 : index
    %44 = vector.load %arg8[%c0_79, %c0_80, %c0_81, %c896] : memref<1x16x16x1152xbf16, #tpu.memory_space<vmem>>, vector<1x16x16x128xbf16>
    tpu.vector_store %arg8[%c0_79, %c0_80, %c0_81, %c896], %43 {strides = array<i32>} : memref<1x16x16x1152xbf16, #tpu.memory_space<vmem>>, vector<1x16x16x128xbf16>,
    %c0_82 = arith.constant 0 : index
    %c2_83 = arith.constant 2 : index
    %c9_84 = arith.constant 9 : index
    %c0_85 = arith.constant 0 : index
    %45 = vector.load %arg7[%c0_82, %c2_83, %c9_84, %c0_85] : memref<1x18x32x128xf32, #tpu.memory_space<vmem>>, vector<1x16x16x128xf32>
    %46 = arith.truncf %45 : vector<1x16x16x128xf32> to vector<1x16x16x128xbf16>
    %c0_86 = arith.constant 0 : index
    %c0_87 = arith.constant 0 : index
    %c0_88 = arith.constant 0 : index
    %c1024 = arith.constant 1024 : index
    %47 = vector.load %arg8[%c0_86, %c0_87, %c0_88, %c1024] : memref<1x16x16x1152xbf16, #tpu.memory_space<vmem>>, vector<1x16x16x128xbf16>
    tpu.vector_store %arg8[%c0_86, %c0_87, %c0_88, %c1024], %46 {strides = array<i32>} : memref<1x16x16x1152xbf16, #tpu.memory_space<vmem>>, vector<1x16x16x128xbf16>,
    %c0_89 = arith.constant 0 : index
    %c0_90 = arith.constant 0 : index
    %c0_91 = arith.constant 0 : index
    %c0_92 = arith.constant 0 : index
    %48 = vector.load %arg8[%c0_89, %c0_90, %c0_91, %c0_92] : memref<1x16x16x1152xbf16, #tpu.memory_space<vmem>>, vector<1x16x16x1152xbf16>
    %49 = vector.shape_cast %48 : vector<1x16x16x1152xbf16> to vector<256x1152xbf16>
    %c0_93 = arith.constant 0 : index
    %c0_94 = arith.constant 0 : index
    %50 = vector.load %arg2[%c0_93, %c0_94] : memref<1152x128xbf16, #tpu.memory_space<vmem>>, vector<1152x128xbf16>
    %cst_95 = arith.constant dense<0.000000e+00> : vector<256x128xf32>
    %51 = tpu.matmul %49, %50, %cst_95 {dimension_numbers = #tpu.dot_dimension_numbers<[1], [0], [0], [1], [0, 0, 1, 1], [], []>} : vector<256x1152xbf16>, vector<1152x128xbf16>, vector<256x128xf32> -> vector<256x128xf32>
    %c0_96 = arith.constant 0 : index
    %c0_97 = arith.constant 0 : index
    %52 = vector.load %arg3[%c0_96, %c0_97] : memref<1x128xf32, #tpu.memory_space<vmem>>, vector<1x128xf32>
    %53 = vector.broadcast %52 : vector<1x128xf32> to vector<256x128xf32>
    %54 = arith.addf %51, %53 : vector<256x128xf32>
    %55 = vector.shape_cast %54 : vector<256x128xf32> to vector<1x256x128xf32>
    %56 = vector.shape_cast %20 : vector<1x128xf32> to vector<1x1x128xf32>
    %57 = vector.broadcast %56 : vector<1x1x128xf32> to vector<1x256x128xf32>
    %58 = arith.mulf %8, %57 : vector<1x256x128xf32>
    %59 = arith.addf %55, %58 : vector<1x256x128xf32>
    %60 = arith.negf %59 : vector<1x256x128xf32>
    %61 = math.exp %60 : vector<1x256x128xf32>
    %cst_98 = arith.constant 1.000000e+00 : f32
    %62 = vector.broadcast %cst_98 : f32 to vector<1x256x128xf32>
    %63 = arith.addf %62, %61 : vector<1x256x128xf32>
    %64 = arith.divf %62, %63 : vector<1x256x128xf32>
    %65 = arith.mulf %59, %64 : vector<1x256x128xf32>
    %66 = vector.shape_cast %65 : vector<1x256x128xf32> to vector<1x16x16x128xf32>
    %c0_99 = arith.constant 0 : index
    %c0_100 = arith.constant 0 : index
    %c0_101 = arith.constant 0 : index
    %c0_102 = arith.constant 0 : index
    %67 = vector.load %arg6[%c0_99, %c0_100, %c0_101, %c0_102] : memref<1x16x16x128xf32, #tpu.memory_space<vmem>>, vector<1x16x16x128xf32>
    tpu.vector_store %arg6[%c0_99, %c0_100, %c0_101, %c0_102], %66 {strides = array<i32>} : memref<1x16x16x128xf32, #tpu.memory_space<vmem>>, vector<1x16x16x128xf32>,
    return
  }
  func.func @transform_0(%arg0: i32) -> (i32, i32, i32, i32) {
    %c0_i32 = arith.constant 0 : i32
    %c0_i32_0 = arith.constant 0 : i32
    %c0_i32_1 = arith.constant 0 : i32
    %c0_i32_2 = arith.constant 0 : i32
    return %arg0, %c0_i32, %c0_i32_0, %c0_i32_1 : i32, i32, i32, i32
  }
  func.func @transform_1(%arg0: i32) -> (i32, i32) {
    %c0_i32 = arith.constant 0 : i32
    %c0_i32_0 = arith.constant 0 : i32
    %c0_i32_1 = arith.constant 0 : i32
    return %c0_i32, %c0_i32_0 : i32, i32
  }
  func.func @transform_2(%arg0: i32) -> (i32, i32) {
    %c0_i32 = arith.constant 0 : i32
    %c0_i32_0 = arith.constant 0 : i32
    %c0_i32_1 = arith.constant 0 : i32
    return %c0_i32, %c0_i32_0 : i32, i32
  }
  func.func @transform_3(%arg0: i32) -> (i32, i32) {
    %c0_i32 = arith.constant 0 : i32
    %c0_i32_0 = arith.constant 0 : i32
    %c0_i32_1 = arith.constant 0 : i32
    return %c0_i32, %c0_i32_0 : i32, i32
  }
  func.func @transform_4(%arg0: i32) -> (i32, i32) {
    %c0_i32 = arith.constant 0 : i32
    %c0_i32_0 = arith.constant 0 : i32
    %c0_i32_1 = arith.constant 0 : i32
    return %c0_i32, %c0_i32_0 : i32, i32
  }
  func.func @transform_5(%arg0: i32) -> (i32, i32, i32, i32) {
    %c0_i32 = arith.constant 0 : i32
    %c0_i32_0 = arith.constant 0 : i32
    %c0_i32_1 = arith.constant 0 : i32
    %c0_i32_2 = arith.constant 0 : i32
    return %arg0, %c0_i32, %c0_i32_0, %c0_i32_1 : i32, i32, i32, i32
  }
}

module attributes {stable_mosaic.version = 11 : i64} {
  func.func @_parnet_kernel(%arg0: i32, %arg1: memref<1x16x16x128xf32, #tpu.memory_space<vmem>>, %arg2: memref<1152x128xbf16, #tpu.memory_space<vmem>>, %arg3: memref<1x128xf32, #tpu.memory_space<vmem>>, %arg4: memref<128x128xf32, #tpu.memory_space<vmem>>, %arg5: memref<1x128xf32, #tpu.memory_space<vmem>>, %arg6: memref<1x16x16x128xf32, #tpu.memory_space<vmem>>, %arg7: memref<1x18x32x128xf32, #tpu.memory_space<vmem>>, %arg8: memref<1x16x16x1152xbf16, #tpu.memory_space<vmem>>) attributes {dimension_semantics = [#tpu.dimension_semantics<parallel>], iteration_bounds = array<i64: 4>, scalar_prefetch = 0 : i64, scratch_operands = 2 : i64, tpu.core_type = #tpu.core_type<tc>, window_params = [{transform_indices = @transform_0, window_bounds = array<i64: 1, 16, 16, 128>}, {pipeline_mode = #tpu.pipeline_mode<synchronous>, transform_indices = @transform_1, window_bounds = array<i64: 1152, 128>}, {pipeline_mode = #tpu.pipeline_mode<synchronous>, transform_indices = @transform_2, window_bounds = array<i64: 1, 128>}, {pipeline_mode = #tpu.pipeline_mode<synchronous>, transform_indices = @transform_3, window_bounds = array<i64: 128, 128>}, {pipeline_mode = #tpu.pipeline_mode<synchronous>, transform_indices = @transform_4, window_bounds = array<i64: 1, 128>}, {transform_indices = @transform_5, window_bounds = array<i64: 1, 16, 16, 128>}]} {
    %c0 = arith.constant 0 : index
    %c0_0 = arith.constant 0 : index
    %c0_1 = arith.constant 0 : index
    %c0_2 = arith.constant 0 : index
    %0 = vector.load %arg1[%c0, %c0_0, %c0_1, %c0_2] : memref<1x16x16x128xf32, #tpu.memory_space<vmem>>, vector<1x16x16x128xf32>
    %cst = arith.constant 0.000000e+00 : f32
    %1 = vector.broadcast %cst : f32 to vector<1x1x32x128xf32>
    %c0_3 = arith.constant 0 : index
    %c0_4 = arith.constant 0 : index
    %c0_5 = arith.constant 0 : index
    %c0_6 = arith.constant 0 : index
    %2 = vector.load %arg7[%c0_3, %c0_4, %c0_5, %c0_6] : memref<1x18x32x128xf32, #tpu.memory_space<vmem>>, vector<1x1x32x128xf32>
    tpu.vector_store %arg7[%c0_3, %c0_4, %c0_5, %c0_6], %1 {strides = array<i32>} : memref<1x18x32x128xf32, #tpu.memory_space<vmem>>, vector<1x1x32x128xf32>,
    %c0_7 = arith.constant 0 : index
    %c17 = arith.constant 17 : index
    %c0_8 = arith.constant 0 : index
    %c0_9 = arith.constant 0 : index
    %3 = vector.load %arg7[%c0_7, %c17, %c0_8, %c0_9] : memref<1x18x32x128xf32, #tpu.memory_space<vmem>>, vector<1x1x32x128xf32>
    tpu.vector_store %arg7[%c0_7, %c17, %c0_8, %c0_9], %1 {strides = array<i32>} : memref<1x18x32x128xf32, #tpu.memory_space<vmem>>, vector<1x1x32x128xf32>,
    %cst_10 = arith.constant 0.000000e+00 : f32
    %4 = vector.broadcast %cst_10 : f32 to vector<1x16x1x128xf32>
    %c0_11 = arith.constant 0 : index
    %c1 = arith.constant 1 : index
    %c7 = arith.constant 7 : index
    %c0_12 = arith.constant 0 : index
    %5 = vector.load %arg7[%c0_11, %c1, %c7, %c0_12] : memref<1x18x32x128xf32, #tpu.memory_space<vmem>>, vector<1x16x1x128xf32>
    tpu.vector_store %arg7[%c0_11, %c1, %c7, %c0_12], %4 {strides = array<i32>} : memref<1x18x32x128xf32, #tpu.memory_space<vmem>>, vector<1x16x1x128xf32>,
    %c0_13 = arith.constant 0 : index
    %c1_14 = arith.constant 1 : index
    %c24 = arith.constant 24 : index
    %c0_15 = arith.constant 0 : index
    %6 = vector.load %arg7[%c0_13, %c1_14, %c24, %c0_15] : memref<1x18x32x128xf32, #tpu.memory_space<vmem>>, vector<1x16x1x128xf32>
    tpu.vector_store %arg7[%c0_13, %c1_14, %c24, %c0_15], %4 {strides = array<i32>} : memref<1x18x32x128xf32, #tpu.memory_space<vmem>>, vector<1x16x1x128xf32>,
    %c0_16 = arith.constant 0 : index
    %c1_17 = arith.constant 1 : index
    %c8 = arith.constant 8 : index
    %c0_18 = arith.constant 0 : index
    %7 = vector.load %arg7[%c0_16, %c1_17, %c8, %c0_18] : memref<1x18x32x128xf32, #tpu.memory_space<vmem>>, vector<1x16x16x128xf32>
    tpu.vector_store %arg7[%c0_16, %c1_17, %c8, %c0_18], %0 {strides = array<i32>} : memref<1x18x32x128xf32, #tpu.memory_space<vmem>>, vector<1x16x16x128xf32>,
    %8 = vector.shape_cast %0 : vector<1x16x16x128xf32> to vector<1x256x128xf32>
    %cst_19 = arith.constant dense<0.000000e+00> : vector<1x128xf32>
    %9 = vector.multi_reduction <add>, %8, %cst_19 [1] : vector<1x256x128xf32> to vector<1x128xf32>
    %cst_20 = arith.constant 2.560000e+02 : f32
    %10 = vector.broadcast %cst_20 : f32 to vector<1x128xf32>
    %11 = arith.divf %9, %10 : vector<1x128xf32>
    %c0_21 = arith.constant 0 : index
    %c0_22 = arith.constant 0 : index
    %12 = vector.load %arg4[%c0_21, %c0_22] : memref<128x128xf32, #tpu.memory_space<vmem>>, vector<128x128xf32>
    %cst_23 = arith.constant dense<0.000000e+00> : vector<1x128xf32>
    %13 = tpu.matmul %11, %12, %cst_23 {dimension_numbers = #tpu.dot_dimension_numbers<[1], [0], [0], [1], [0, 0, 1, 1], [], []>} : vector<1x128xf32>, vector<128x128xf32>, vector<1x128xf32> -> vector<1x128xf32>
    %c0_24 = arith.constant 0 : index
    %c0_25 = arith.constant 0 : index
    %14 = vector.load %arg5[%c0_24, %c0_25] : memref<1x128xf32, #tpu.memory_space<vmem>>, vector<1x128xf32>
    %15 = arith.addf %13, %14 : vector<1x128xf32>
    %16 = arith.negf %15 : vector<1x128xf32>
    %17 = math.exp %16 : vector<1x128xf32>
    %cst_26 = arith.constant 1.000000e+00 : f32
    %18 = vector.broadcast %cst_26 : f32 to vector<1x128xf32>
    %19 = arith.addf %18, %17 : vector<1x128xf32>
    %20 = arith.divf %18, %19 : vector<1x128xf32>
    %c0_27 = arith.constant 0 : index
    %c0_28 = arith.constant 0 : index
    %c7_29 = arith.constant 7 : index
    %c0_30 = arith.constant 0 : index
    %21 = vector.load %arg7[%c0_27, %c0_28, %c7_29, %c0_30] : memref<1x18x32x128xf32, #tpu.memory_space<vmem>>, vector<1x16x16x128xf32>
    %22 = arith.truncf %21 : vector<1x16x16x128xf32> to vector<1x16x16x128xbf16>
    %c0_31 = arith.constant 0 : index
    %c0_32 = arith.constant 0 : index
    %c0_33 = arith.constant 0 : index
    %c0_34 = arith.constant 0 : index
    %23 = vector.load %arg8[%c0_31, %c0_32, %c0_33, %c0_34] : memref<1x16x16x1152xbf16, #tpu.memory_space<vmem>>, vector<1x16x16x128xbf16>
    tpu.vector_store %arg8[%c0_31, %c0_32, %c0_33, %c0_34], %22 {strides = array<i32>} : memref<1x16x16x1152xbf16, #tpu.memory_space<vmem>>, vector<1x16x16x128xbf16>,
    %c0_35 = arith.constant 0 : index
    %c0_36 = arith.constant 0 : index
    %c8_37 = arith.constant 8 : index
    %c0_38 = arith.constant 0 : index
    %24 = vector.load %arg7[%c0_35, %c0_36, %c8_37, %c0_38] : memref<1x18x32x128xf32, #tpu.memory_space<vmem>>, vector<1x16x16x128xf32>
    %25 = arith.truncf %24 : vector<1x16x16x128xf32> to vector<1x16x16x128xbf16>
    %c0_39 = arith.constant 0 : index
    %c0_40 = arith.constant 0 : index
    %c0_41 = arith.constant 0 : index
    %c128 = arith.constant 128 : index
    %26 = vector.load %arg8[%c0_39, %c0_40, %c0_41, %c128] : memref<1x16x16x1152xbf16, #tpu.memory_space<vmem>>, vector<1x16x16x128xbf16>
    tpu.vector_store %arg8[%c0_39, %c0_40, %c0_41, %c128], %25 {strides = array<i32>} : memref<1x16x16x1152xbf16, #tpu.memory_space<vmem>>, vector<1x16x16x128xbf16>,
    %c0_42 = arith.constant 0 : index
    %c0_43 = arith.constant 0 : index
    %c9 = arith.constant 9 : index
    %c0_44 = arith.constant 0 : index
    %27 = vector.load %arg7[%c0_42, %c0_43, %c9, %c0_44] : memref<1x18x32x128xf32, #tpu.memory_space<vmem>>, vector<1x16x16x128xf32>
    %28 = arith.truncf %27 : vector<1x16x16x128xf32> to vector<1x16x16x128xbf16>
    %c0_45 = arith.constant 0 : index
    %c0_46 = arith.constant 0 : index
    %c0_47 = arith.constant 0 : index
    %c256 = arith.constant 256 : index
    %29 = vector.load %arg8[%c0_45, %c0_46, %c0_47, %c256] : memref<1x16x16x1152xbf16, #tpu.memory_space<vmem>>, vector<1x16x16x128xbf16>
    tpu.vector_store %arg8[%c0_45, %c0_46, %c0_47, %c256], %28 {strides = array<i32>} : memref<1x16x16x1152xbf16, #tpu.memory_space<vmem>>, vector<1x16x16x128xbf16>,
    %c0_48 = arith.constant 0 : index
    %c1_49 = arith.constant 1 : index
    %c7_50 = arith.constant 7 : index
    %c0_51 = arith.constant 0 : index
    %30 = vector.load %arg7[%c0_48, %c1_49, %c7_50, %c0_51] : memref<1x18x32x128xf32, #tpu.memory_space<vmem>>, vector<1x16x16x128xf32>
    %31 = arith.truncf %30 : vector<1x16x16x128xf32> to vector<1x16x16x128xbf16>
    %c0_52 = arith.constant 0 : index
    %c0_53 = arith.constant 0 : index
    %c0_54 = arith.constant 0 : index
    %c384 = arith.constant 384 : index
    %32 = vector.load %arg8[%c0_52, %c0_53, %c0_54, %c384] : memref<1x16x16x1152xbf16, #tpu.memory_space<vmem>>, vector<1x16x16x128xbf16>
    tpu.vector_store %arg8[%c0_52, %c0_53, %c0_54, %c384], %31 {strides = array<i32>} : memref<1x16x16x1152xbf16, #tpu.memory_space<vmem>>, vector<1x16x16x128xbf16>,
    %c0_55 = arith.constant 0 : index
    %c1_56 = arith.constant 1 : index
    %c8_57 = arith.constant 8 : index
    %c0_58 = arith.constant 0 : index
    %33 = vector.load %arg7[%c0_55, %c1_56, %c8_57, %c0_58] : memref<1x18x32x128xf32, #tpu.memory_space<vmem>>, vector<1x16x16x128xf32>
    %34 = arith.truncf %33 : vector<1x16x16x128xf32> to vector<1x16x16x128xbf16>
    %c0_59 = arith.constant 0 : index
    %c0_60 = arith.constant 0 : index
    %c0_61 = arith.constant 0 : index
    %c512 = arith.constant 512 : index
    %35 = vector.load %arg8[%c0_59, %c0_60, %c0_61, %c512] : memref<1x16x16x1152xbf16, #tpu.memory_space<vmem>>, vector<1x16x16x128xbf16>
    tpu.vector_store %arg8[%c0_59, %c0_60, %c0_61, %c512], %34 {strides = array<i32>} : memref<1x16x16x1152xbf16, #tpu.memory_space<vmem>>, vector<1x16x16x128xbf16>,
    %c0_62 = arith.constant 0 : index
    %c1_63 = arith.constant 1 : index
    %c9_64 = arith.constant 9 : index
    %c0_65 = arith.constant 0 : index
    %36 = vector.load %arg7[%c0_62, %c1_63, %c9_64, %c0_65] : memref<1x18x32x128xf32, #tpu.memory_space<vmem>>, vector<1x16x16x128xf32>
    %37 = arith.truncf %36 : vector<1x16x16x128xf32> to vector<1x16x16x128xbf16>
    %c0_66 = arith.constant 0 : index
    %c0_67 = arith.constant 0 : index
    %c0_68 = arith.constant 0 : index
    %c640 = arith.constant 640 : index
    %38 = vector.load %arg8[%c0_66, %c0_67, %c0_68, %c640] : memref<1x16x16x1152xbf16, #tpu.memory_space<vmem>>, vector<1x16x16x128xbf16>
    tpu.vector_store %arg8[%c0_66, %c0_67, %c0_68, %c640], %37 {strides = array<i32>} : memref<1x16x16x1152xbf16, #tpu.memory_space<vmem>>, vector<1x16x16x128xbf16>,
    %c0_69 = arith.constant 0 : index
    %c2 = arith.constant 2 : index
    %c7_70 = arith.constant 7 : index
    %c0_71 = arith.constant 0 : index
    %39 = vector.load %arg7[%c0_69, %c2, %c7_70, %c0_71] : memref<1x18x32x128xf32, #tpu.memory_space<vmem>>, vector<1x16x16x128xf32>
    %40 = arith.truncf %39 : vector<1x16x16x128xf32> to vector<1x16x16x128xbf16>
    %c0_72 = arith.constant 0 : index
    %c0_73 = arith.constant 0 : index
    %c0_74 = arith.constant 0 : index
    %c768 = arith.constant 768 : index
    %41 = vector.load %arg8[%c0_72, %c0_73, %c0_74, %c768] : memref<1x16x16x1152xbf16, #tpu.memory_space<vmem>>, vector<1x16x16x128xbf16>
    tpu.vector_store %arg8[%c0_72, %c0_73, %c0_74, %c768], %40 {strides = array<i32>} : memref<1x16x16x1152xbf16, #tpu.memory_space<vmem>>, vector<1x16x16x128xbf16>,
    %c0_75 = arith.constant 0 : index
    %c2_76 = arith.constant 2 : index
    %c8_77 = arith.constant 8 : index
    %c0_78 = arith.constant 0 : index
    %42 = vector.load %arg7[%c0_75, %c2_76, %c8_77, %c0_78] : memref<1x18x32x128xf32, #tpu.memory_space<vmem>>, vector<1x16x16x128xf32>
    %43 = arith.truncf %42 : vector<1x16x16x128xf32> to vector<1x16x16x128xbf16>
    %c0_79 = arith.constant 0 : index
    %c0_80 = arith.constant 0 : index
    %c0_81 = arith.constant 0 : index
    %c896 = arith.constant 896 : index
    %44 = vector.load %arg8[%c0_79, %c0_80, %c0_81, %c896] : memref<1x16x16x1152xbf16, #tpu.memory_space<vmem>>, vector<1x16x16x128xbf16>
    tpu.vector_store %arg8[%c0_79, %c0_80, %c0_81, %c896], %43 {strides = array<i32>} : memref<1x16x16x1152xbf16, #tpu.memory_space<vmem>>, vector<1x16x16x128xbf16>,
    %c0_82 = arith.constant 0 : index
    %c2_83 = arith.constant 2 : index
    %c9_84 = arith.constant 9 : index
    %c0_85 = arith.constant 0 : index
    %45 = vector.load %arg7[%c0_82, %c2_83, %c9_84, %c0_85] : memref<1x18x32x128xf32, #tpu.memory_space<vmem>>, vector<1x16x16x128xf32>
    %46 = arith.truncf %45 : vector<1x16x16x128xf32> to vector<1x16x16x128xbf16>
    %c0_86 = arith.constant 0 : index
    %c0_87 = arith.constant 0 : index
    %c0_88 = arith.constant 0 : index
    %c1024 = arith.constant 1024 : index
    %47 = vector.load %arg8[%c0_86, %c0_87, %c0_88, %c1024] : memref<1x16x16x1152xbf16, #tpu.memory_space<vmem>>, vector<1x16x16x128xbf16>
    tpu.vector_store %arg8[%c0_86, %c0_87, %c0_88, %c1024], %46 {strides = array<i32>} : memref<1x16x16x1152xbf16, #tpu.memory_space<vmem>>, vector<1x16x16x128xbf16>,
    %c0_89 = arith.constant 0 : index
    %c0_90 = arith.constant 0 : index
    %c0_91 = arith.constant 0 : index
    %c0_92 = arith.constant 0 : index
    %48 = vector.load %arg8[%c0_89, %c0_90, %c0_91, %c0_92] : memref<1x16x16x1152xbf16, #tpu.memory_space<vmem>>, vector<1x16x16x1152xbf16>
    %49 = vector.shape_cast %48 : vector<1x16x16x1152xbf16> to vector<256x1152xbf16>
    %c0_93 = arith.constant 0 : index
    %c0_94 = arith.constant 0 : index
    %50 = vector.load %arg2[%c0_93, %c0_94] : memref<1152x128xbf16, #tpu.memory_space<vmem>>, vector<1152x128xbf16>
    %cst_95 = arith.constant dense<0.000000e+00> : vector<256x128xf32>
    %51 = tpu.matmul %49, %50, %cst_95 {dimension_numbers = #tpu.dot_dimension_numbers<[1], [0], [0], [1], [0, 0, 1, 1], [], []>} : vector<256x1152xbf16>, vector<1152x128xbf16>, vector<256x128xf32> -> vector<256x128xf32>
    %c0_96 = arith.constant 0 : index
    %c0_97 = arith.constant 0 : index
    %52 = vector.load %arg3[%c0_96, %c0_97] : memref<1x128xf32, #tpu.memory_space<vmem>>, vector<1x128xf32>
    %53 = vector.broadcast %52 : vector<1x128xf32> to vector<256x128xf32>
    %54 = arith.addf %51, %53 : vector<256x128xf32>
    %55 = vector.shape_cast %54 : vector<256x128xf32> to vector<1x256x128xf32>
    %56 = vector.shape_cast %20 : vector<1x128xf32> to vector<1x1x128xf32>
    %57 = vector.broadcast %56 : vector<1x1x128xf32> to vector<1x256x128xf32>
    %58 = arith.mulf %8, %57 : vector<1x256x128xf32>
    %59 = arith.addf %55, %58 : vector<1x256x128xf32>
    %60 = arith.negf %59 : vector<1x256x128xf32>
    %61 = math.exp %60 : vector<1x256x128xf32>
    %cst_98 = arith.constant 1.000000e+00 : f32
    %62 = vector.broadcast %cst_98 : f32 to vector<1x256x128xf32>
    %63 = arith.addf %62, %61 : vector<1x256x128xf32>
    %64 = arith.divf %62, %63 : vector<1x256x128xf32>
    %65 = arith.mulf %59, %64 : vector<1x256x128xf32>
    %66 = vector.shape_cast %65 : vector<1x256x128xf32> to vector<1x16x16x128xf32>
    %c0_99 = arith.constant 0 : index
    %c0_100 = arith.constant 0 : index
    %c0_101 = arith.constant 0 : index
    %c0_102 = arith.constant 0 : index
    %67 = vector.load %arg6[%c0_99, %c0_100, %c0_101, %c0_102] : memref<1x16x16x128xf32, #tpu.memory_space<vmem>>, vector<1x16x16x128xf32>
    tpu.vector_store %arg6[%c0_99, %c0_100, %c0_101, %c0_102], %66 {strides = array<i32>} : memref<1x16x16x128xf32, #tpu.memory_space<vmem>>, vector<1x16x16x128xf32>,
    return
  }
  func.func @transform_0(%arg0: i32) -> (i32, i32, i32, i32) {
    %c0_i32 = arith.constant 0 : i32
    %c0_i32_0 = arith.constant 0 : i32
    %c0_i32_1 = arith.constant 0 : i32
    %c0_i32_2 = arith.constant 0 : i32
    return %arg0, %c0_i32, %c0_i32_0, %c0_i32_1 : i32, i32, i32, i32
  }
  func.func @transform_1(%arg0: i32) -> (i32, i32) {
    %c0_i32 = arith.constant 0 : i32
    %c0_i32_0 = arith.constant 0 : i32
    %c0_i32_1 = arith.constant 0 : i32
    return %c0_i32, %c0_i32_0 : i32, i32
  }
  func.func @transform_2(%arg0: i32) -> (i32, i32) {
    %c0_i32 = arith.constant 0 : i32
    %c0_i32_0 = arith.constant 0 : i32
    %c0_i32_1 = arith.constant 0 : i32
    return %c0_i32, %c0_i32_0 : i32, i32
  }
  func.func @transform_3(%arg0: i32) -> (i32, i32) {
    %c0_i32 = arith.constant 0 : i32
    %c0_i32_0 = arith.constant 0 : i32
    %c0_i32_1 = arith.constant 0 : i32
    return %c0_i32, %c0_i32_0 : i32, i32
  }
  func.func @transform_4(%arg0: i32) -> (i32, i32) {
    %c0_i32 = arith.constant 0 : i32
    %c0_i32_0 = arith.constant 0 : i32
    %c0_i32_1 = arith.constant 0 : i32
    return %c0_i32, %c0_i32_0 : i32, i32
  }
  func.func @transform_5(%arg0: i32) -> (i32, i32, i32, i32) {
    %c0_i32 = arith.constant 0 : i32
    %c0_i32_0 = arith.constant 0 : i32
    %c0_i32_1 = arith.constant 0 : i32
    %c0_i32_2 = arith.constant 0 : i32
    return %arg0, %c0_i32, %c0_i32_0, %c0_i32_1 : i32, i32, i32, i32
  }
}

</mosaic_0001>

<llo_original>
// kernel: tpu_custom_call.1
$region0: #{tpu_custom_call.1}
  #allocation0 [shape = 'u32[]', space=smem, size = 0x4, offset = 0x4, fixed_abs, tag = 'smem constant byte address 0x4 - core index']
  #allocation1 [shape = 'u32[144,128]{1,0:T(1,128)}', space=vmem, size = 0x12000, scoped, tag = 'internal scratch']
  #allocation2 [shape = 'f32[1,18,32,128]{3,2,1,0:T(8,128)}', space=vmem, size = 0x48000, scoped, tag = 'scratch operand']
  #allocation3 [shape = 'bf16[1,16,16,1152]{3,2,1,0:T(8,128)(2,1)}', space=vmem, size = 0x90000, scoped, tag = 'scratch operand']
  %s0 = inlined_call_operand.hbm [shape: f32[4,16,16,128], index: 0, kind: input, shape index: {}]
  %s1 = inlined_call_operand.hbm [shape: bf16[1152,128], index: 1, kind: input, shape index: {}]
  %s2 = inlined_call_operand.vmem [shape: f32[1,128], index: 2, kind: input, shape index: {}]
  %s3 = inlined_call_operand.hbm [shape: f32[128,128], index: 3, kind: input, shape index: {}]
  %s4 = inlined_call_operand.vmem [shape: f32[1,128], index: 4, kind: input, shape index: {}]
  %s5 = inlined_call_operand.hbm [shape: f32[4,16,16,128], index: 5, kind: output, shape index: {}]
  %s6 = sld [smem:[#allocation0]]
  $region65: #{tpu_custom_call.1} parent=0
    _
  %s8 = ssub.s32 1, %s6
  %s9 = scalar_select 0, %s8, %s6
  $region1: #{tpu_custom_call.1} parent=0
    #allocation4 [shape = 'u8[262144]{0}', space=vmem, size = 0x40000, scoped, tag = 'input window, operand 0']
    #allocation5 [shape = 's32[2]{0}', space=sflag, size = 0x8, scoped, tag = 'scoped memory for tpu_custom_call.1']
    #allocation6 [shape = 's32[2]{0}', space=sflag, size = 0x8, scoped, tag = 'scoped memory for tpu_custom_call.1']
    #allocation7 [shape = 'u8[294912]{0}', space=vmem, size = 0x48000, scoped, tag = 'input window, operand 1, single buffered']
    #allocation8 [shape = 's32[1]{0}', space=sflag, size = 0x4, scoped, tag = 'scoped memory for tpu_custom_call.1']
    #allocation9 [shape = 'u8[65536]{0}', space=vmem, size = 0x10000, scoped, tag = 'input window, operand 3, single buffered']
    #allocation10 [shape = 'u8[262144]{0}', space=vmem, size = 0x40000, scoped, tag = 'output window, operand 0']
    %10 = vsyncpa [#allocation5], 0
    %s11 = scalar_lea.sflag [#allocation5], 1
    %12 = vsyncpa %s11, 0
    %13 = vsyncpa [#allocation8], 0
    %14 = vsyncpa [#allocation6], 0
    %s15 = scalar_lea.sflag [#allocation6], 1
    %16 = vsyncpa %s15, 0
    loop: start=0, step=1, limit=6
    $region2: #{tpu_custom_call.1} parent=1 // loop_pre_header
      _
    $region3: #{tpu_custom_call.1} parent=1 // loop_header
      %s18 = sphi 0, %s22
      %p19 = scmp.ge.s32.totalorder %s18, 6
      %s28 = sphi 0, %s30
      %s31 = sphi 0, %s28
      %s32 = sphi 0, %s31
      %s48 = sphi 0, %s32
      %s52 = sphi 0, %s52
      %s54 = sphi 0, %s52
      %s55 = sphi 0, %s54
      %s69 = sphi 0, %s55
      %s73 = sphi 0, %s73
      %s75 = sphi 0, %s73
      %s76 = sphi 0, %s75
      %s90 = sphi 0, %s76
      %s94 = sphi 0, %s94
      %s96 = sphi 0, %s94
      %s97 = sphi 0, %s96
      %s111 = sphi 0, %s97
      %s115 = sphi 0, %s115
      %s117 = sphi 0, %s115
      %s118 = sphi 0, %s117
      %s132 = sphi 0, %s118
      %s138 = sphi 0, %s140
      %s141 = sphi 0, %s138
      %s142 = sphi 0, %s141
      %s158 = sphi 0, %s142
    $region4: #{tpu_custom_call.1} parent=1 // loop_header_branch
      %21 = sbr.rel (%p19) target = $region8
    $region5: #{tpu_custom_call.1} parent=1 // loop_body
      %s23 = ssub.s32 %s18, 1
      %s24 = ssub.s32 %s18, 2
      %s25 = sadd.s32 %s18, 1
      %s26 = ssub.s32 %s18, %s25
      %p27 = scmp.eq.s32.totalorder %s26, 0
      %s29 = sadd.s32 %s28, 1
      %s30 = scalar_select %p27, %s28, %s29
      %p33 = pneg %p27
      %p34 = scmp.eq.s32.totalorder %s18, 3
      %p35 = por %p33, %p34
      %p36 = scmp.ne.s32.totalorder %s28, %s31
      %p37 = scmp.eq.s32.totalorder %s18, 0
      %p38 = por %p36, %p37
      %p39 = scmp.ne.s32.totalorder %s28, %s31
      %p40 = scmp.eq.s32.totalorder %s23, 3
      %p41 = por %p39, %p40
      %p42 = scmp.ne.s32.totalorder %s31, %s32
      %p43 = scmp.eq.s32.totalorder %s23, 0
      %p44 = por %p42, %p43
      %p45 = scmp.ne.s32.totalorder %s31, %s32
      %p46 = scmp.eq.s32.totalorder %s24, 3
      %p47 = por %p45, %p46
      %p49 = scmp.ne.s32.totalorder %s32, %s48
      %p50 = scmp.eq.s32.totalorder %s24, 0
      %p51 = por %p49, %p50
      %s53 = sadd.s32 %s52, 1
      %p56 = scmp.eq.s32.totalorder %s18, 3
      %p57 = scmp.ne.s32.totalorder %s52, %s54
      %p58 = scmp.eq.s32.totalorder %s18, 0
      %p59 = por %p57, %p58
      %p60 = scmp.ne.s32.totalorder %s52, %s54
      %p61 = scmp.eq.s32.totalorder %s23, 3
      %p62 = por %p60, %p61
      %p63 = scmp.ne.s32.totalorder %s54, %s55
      %p64 = scmp.eq.s32.totalorder %s23, 0
      %p65 = por %p63, %p64
      %p66 = scmp.ne.s32.totalorder %s54, %s55
      %p67 = scmp.eq.s32.totalorder %s24, 3
      %p68 = por %p66, %p67
      %p70 = scmp.ne.s32.totalorder %s55, %s69
      %p71 = scmp.eq.s32.totalorder %s24, 0
      %p72 = por %p70, %p71
      %s74 = sadd.s32 %s73, 1
      %p77 = scmp.eq.s32.totalorder %s18, 3
      %p78 = scmp.ne.s32.totalorder %s73, %s75
      %p79 = scmp.eq.s32.totalorder %s18, 0
      %p80 = por %p78, %p79
      %p81 = scmp.ne.s32.totalorder %s73, %s75
      %p82 = scmp.eq.s32.totalorder %s23, 3
      %p83 = por %p81, %p82
      %p84 = scmp.ne.s32.totalorder %s75, %s76
      %p85 = scmp.eq.s32.totalorder %s23, 0
      %p86 = por %p84, %p85
      %p87 = scmp.ne.s32.totalorder %s75, %s76
      %p88 = scmp.eq.s32.totalorder %s24, 3
      %p89 = por %p87, %p88
      %p91 = scmp.ne.s32.totalorder %s76, %s90
      %p92 = scmp.eq.s32.totalorder %s24, 0
      %p93 = por %p91, %p92
      %s95 = sadd.s32 %s94, 1
      %p98 = scmp.eq.s32.totalorder %s18, 3
      %p99 = scmp.ne.s32.totalorder %s94, %s96
      %p100 = scmp.eq.s32.totalorder %s18, 0
      %p101 = por %p99, %p100
      %p102 = scmp.ne.s32.totalorder %s94, %s96
      %p103 = scmp.eq.s32.totalorder %s23, 3
      %p104 = por %p102, %p103
      %p105 = scmp.ne.s32.totalorder %s96, %s97
      %p106 = scmp.eq.s32.totalorder %s23, 0
      %p107 = por %p105, %p106
      %p108 = scmp.ne.s32.totalorder %s96, %s97
      %p109 = scmp.eq.s32.totalorder %s24, 3
      %p110 = por %p108, %p109
      %p112 = scmp.ne.s32.totalorder %s97, %s111
      %p113 = scmp.eq.s32.totalorder %s24, 0
      %p114 = por %p112, %p113
      %s116 = sadd.s32 %s115, 1
      %p119 = scmp.eq.s32.totalorder %s18, 3
      %p120 = scmp.ne.s32.totalorder %s115, %s117
      %p121 = scmp.eq.s32.totalorder %s18, 0
      %p122 = por %p120, %p121
      %p123 = scmp.ne.s32.totalorder %s115, %s117
      %p124 = scmp.eq.s32.totalorder %s23, 3
      %p125 = por %p123, %p124
      %p126 = scmp.ne.s32.totalorder %s117, %s118
      %p127 = scmp.eq.s32.totalorder %s23, 0
      %p128 = por %p126, %p127
      %p129 = scmp.ne.s32.totalorder %s117, %s118
      %p130 = scmp.eq.s32.totalorder %s24, 3
      %p131 = por %p129, %p130
      %p133 = scmp.ne.s32.totalorder %s118, %s132
      %p134 = scmp.eq.s32.totalorder %s24, 0
      %p135 = por %p133, %p134
      %s136 = ssub.s32 %s18, %s25
      %p137 = scmp.eq.s32.totalorder %s136, 0
      %s139 = sadd.s32 %s138, 1
      %s140 = scalar_select %p137, %s138, %s139
      %p143 = pneg %p137
      %p144 = scmp.eq.s32.totalorder %s18, 3
      %p145 = por %p143, %p144
      %p146 = scmp.ne.s32.totalorder %s138, %s141
      %p147 = scmp.eq.s32.totalorder %s18, 0
      %p148 = por %p146, %p147
      %p149 = scmp.ne.s32.totalorder %s138, %s141
      %p150 = scmp.eq.s32.totalorder %s23, 3
      %p151 = por %p149, %p150
      %p152 = scmp.ne.s32.totalorder %s141, %s142
      %p153 = scmp.eq.s32.totalorder %s23, 0
      %p154 = por %p152, %p153
      %p155 = scmp.ne.s32.totalorder %s141, %s142
      %p156 = scmp.eq.s32.totalorder %s24, 3
      %p157 = por %p155, %p156
      %p159 = scmp.ne.s32.totalorder %s142, %s158
      %p160 = scmp.eq.s32.totalorder %s24, 0
      %p161 = por %p159, %p160
      %p162 = scmp.le.s32.totalorder 1, %s18
      %p163 = scmp.lt.s32.totalorder %s18, 5
      %p164 = pnand %p162, %p163
      %p165 = pneg %p164
      // Predicated region
      $region9: #{tpu_custom_call.1} parent=5 // pred_check
        _
      $region10: #{tpu_custom_call.1} parent=5 // pred_check_branch
        %167 = sbr.rel (%p164) target = $region12
      $region11: #{tpu_custom_call.1} parent=5 // pred_region
        %s168 = ssub.s32 %s18, 1
        // Predicated region
        $region13: #{tpu_custom_call.1} parent=11 // pred_check
          %p169 = pneg %p65
        $region14: #{tpu_custom_call.1} parent=11 // pred_check_branch
          %171 = sbr.rel (%p169) target = $region16
        $region15: #{tpu_custom_call.1} parent=11 // pred_region
          %s173 = ssub.s32 9216, 9216
          %174 = vsyncadd [#allocation8], %s173
          %s175 = sshll.u32 [#allocation7], 4
          %s176 = int_to_ptr.vmem [resolvable:$true] %s175
          %181 = dma.hbm_to_vmem [thread:$0]  %s1, 9216, %s176, [#allocation8], 64, 64, 4
        $region16: #{tpu_custom_call.1} parent=11 // pred_fallthru
          _
        // Predicated region
        $region17: #{tpu_custom_call.1} parent=11 // pred_check
          %p182 = pneg %p86
        $region18: #{tpu_custom_call.1} parent=11 // pred_check_branch
          %184 = sbr.rel (%p182) target = $region20
        $region19: #{tpu_custom_call.1} parent=11 // pred_region
          _
        $region20: #{tpu_custom_call.1} parent=11 // pred_fallthru
          _
        // Predicated region
        $region21: #{tpu_custom_call.1} parent=11 // pred_check
          %p185 = pneg %p107
        $region22: #{tpu_custom_call.1} parent=11 // pred_check_branch
          %187 = sbr.rel (%p185) target = $region24
        $region23: #{tpu_custom_call.1} parent=11 // pred_region
          %s189 = ssub.s32 2048, 2048
          %190 = vsyncadd [#allocation8], %s189
          %s191 = sshll.u32 [#allocation9], 4
          %s192 = int_to_ptr.vmem [resolvable:$true] %s191
          %197 = dma.hbm_to_vmem [thread:$0]  %s3, 2048, %s192, [#allocation8], 128, 128, 8
        $region24: #{tpu_custom_call.1} parent=11 // pred_fallthru
          _
        // Predicated region
        $region25: #{tpu_custom_call.1} parent=11 // pred_check
          %p198 = pneg %p128
        $region26: #{tpu_custom_call.1} parent=11 // pred_check_branch
          %200 = sbr.rel (%p198) target = $region28
        $region27: #{tpu_custom_call.1} parent=11 // pred_region
          _
        $region28: #{tpu_custom_call.1} parent=11 // pred_fallthru
          _
      $region12: #{tpu_custom_call.1} parent=5 // pred_fallthru
        _
      %p201 = scmp.lt.s32.totalorder %s18, 4
      // Predicated region
      $region29: #{tpu_custom_call.1} parent=5 // pred_check
        %p202 = pneg %p201
      $region30: #{tpu_custom_call.1} parent=5 // pred_check_branch
        %204 = sbr.rel (%p202) target = $region32
      $region31: #{tpu_custom_call.1} parent=5 // pred_region
        // Predicated region
        $region33: #{tpu_custom_call.1} parent=31 // pred_check
          %p205 = pneg %p38
        $region34: #{tpu_custom_call.1} parent=31 // pred_check_branch
          %207 = sbr.rel (%p205) target = $region36
        $region35: #{tpu_custom_call.1} parent=31 // pred_region
          %s208 = sand.u32 %s28, 1
          %s209 = scalar_lea.sflag [#allocation5], %s208
          %s210 = sand.u32 %s28, 1
          %s211 = smul.addr %s210, 256
          %s212 = scalar_lea.vmem [#allocation4], %s211
          %s214 = ssub.s32 4096, 4096
          %215 = vsyncadd %s209, %s214
          %s216 = smul.addr %s18, 32
          %s217 = smul.addr %s216, 128
          %s218 = scalar_lea.hbm %s0, %s217
          %s219 = sshll.u32 %s212, 4
          %s220 = int_to_ptr.vmem [resolvable:$true] %s219
          %225 = dma.hbm_to_vmem [thread:$0]  %s218, 4096, %s220, %s209, 128, 128, 8
        $region36: #{tpu_custom_call.1} parent=31 // pred_fallthru
          _
      $region32: #{tpu_custom_call.1} parent=5 // pred_fallthru
        _
      %p226 = scmp.le.s32.totalorder 1, %s18
      %p227 = scmp.lt.s32.totalorder %s18, 5
      %p228 = pnand %p226, %p227
      %p229 = pneg %p228
      // Predicated region
      $region37: #{tpu_custom_call.1} parent=5 // pred_check
        _
      $region38: #{tpu_custom_call.1} parent=5 // pred_check_branch
        %231 = sbr.rel (%p228) target = $region40
      $region39: #{tpu_custom_call.1} parent=5 // pred_region
        %s232 = ssub.s32 %s18, 1
        %s233 = sand.u32 %s31, 1
        %s234 = scalar_lea.sflag [#allocation5], %s233
        %s235 = sand.u32 %s31, 1
        %s236 = smul.addr %s235, 256
        %s237 = scalar_lea.vmem [#allocation4], %s236
        // Predicated region
        $region41: #{tpu_custom_call.1} parent=39 // pred_check
          %p238 = pneg %p44
        $region42: #{tpu_custom_call.1} parent=39 // pred_check_branch
          %240 = sbr.rel (%p238) target = $region44
        $region43: #{tpu_custom_call.1} parent=39 // pred_region
          %241 = dma.done %s234, 4096
        $region44: #{tpu_custom_call.1} parent=39 // pred_fallthru
          _
        // Predicated region
        $region45: #{tpu_custom_call.1} parent=39 // pred_check
          %p242 = pneg %p65
        $region46: #{tpu_custom_call.1} parent=39 // pred_check_branch
          %244 = sbr.rel (%p242) target = $region48
        $region47: #{tpu_custom_call.1} parent=39 // pred_region
          %245 = dma.done [#allocation8], 9216
        $region48: #{tpu_custom_call.1} parent=39 // pred_fallthru
          _
        // Predicated region
        $region49: #{tpu_custom_call.1} parent=39 // pred_check
          %p246 = pneg %p107
        $region50: #{tpu_custom_call.1} parent=39 // pred_check_branch
          %248 = sbr.rel (%p246) target = $region52
        $region51: #{tpu_custom_call.1} parent=39 // pred_region
          %249 = dma.done [#allocation8], 2048
        $region52: #{tpu_custom_call.1} parent=39 // pred_fallthru
          _
        %s250 = sand.u32 %s31, 1
        %s251 = scalar_lea.sflag [#allocation5], %s250
        %s252 = sand.u32 %s31, 1
        %s253 = smul.addr %s252, 256
        %s254 = scalar_lea.vmem [#allocation4], %s253
        %p255 = pneg %p44
        %p256 = pneg %p41
        %p257 = pneg %p65
        %p258 = pneg %p62
        %p259 = pneg %p86
        %p260 = pneg %p83
        %p261 = pneg %p107
        %p262 = pneg %p104
        %p263 = pneg %p128
        %p264 = pneg %p125
        %p265 = pneg %p154
        %p266 = pneg %p151
        %s267 = sand.u32 %s141, 1
        %s268 = scalar_lea.sflag [#allocation6], %s267
        %s269 = sand.u32 %s141, 1
        %s270 = smul.addr %s269, 256
        %s271 = scalar_lea.vmem [#allocation10], %s270
        %v273 = vld [vmem:[%s237] sm:$0xff]
        %v274 = vld [vmem:[%s237 + $0x8] sm:$0xff]
        %v275 = vld [vmem:[%s237 + $0x10] sm:$0xff]
        %v276 = vld [vmem:[%s237 + $0x18] sm:$0xff]
        %v277 = vld [vmem:[%s237 + $0x20] sm:$0xff]
        %v278 = vld [vmem:[%s237 + $0x28] sm:$0xff]
        %v279 = vld [vmem:[%s237 + $0x30] sm:$0xff]
        %v280 = vld [vmem:[%s237 + $0x38] sm:$0xff]
        %v281 = vld [vmem:[%s237 + $0x40] sm:$0xff]
        %v282 = vld [vmem:[%s237 + $0x48] sm:$0xff]
        %v283 = vld [vmem:[%s237 + $0x50] sm:$0xff]
        %v284 = vld [vmem:[%s237 + $0x58] sm:$0xff]
        %v285 = vld [vmem:[%s237 + $0x60] sm:$0xff]
        %v286 = vld [vmem:[%s237 + $0x68] sm:$0xff]
        %v287 = vld [vmem:[%s237 + $0x70] sm:$0xff]
        %v288 = vld [vmem:[%s237 + $0x78] sm:$0xff]
        %v289 = vld [vmem:[%s237 + $0x80] sm:$0xff]
        %v290 = vld [vmem:[%s237 + $0x88] sm:$0xff]
        %v291 = vld [vmem:[%s237 + $0x90] sm:$0xff]
        %v292 = vld [vmem:[%s237 + $0x98] sm:$0xff]
        %v293 = vld [vmem:[%s237 + $0xa0] sm:$0xff]
        %v294 = vld [vmem:[%s237 + $0xa8] sm:$0xff]
        %v295 = vld [vmem:[%s237 + $0xb0] sm:$0xff]
        %v296 = vld [vmem:[%s237 + $0xb8] sm:$0xff]
        %v297 = vld [vmem:[%s237 + $0xc0] sm:$0xff]
        %v298 = vld [vmem:[%s237 + $0xc8] sm:$0xff]
        %v299 = vld [vmem:[%s237 + $0xd0] sm:$0xff]
        %v300 = vld [vmem:[%s237 + $0xd8] sm:$0xff]
        %v301 = vld [vmem:[%s237 + $0xe0] sm:$0xff]
        %v302 = vld [vmem:[%s237 + $0xe8] sm:$0xff]
        %v303 = vld [vmem:[%s237 + $0xf0] sm:$0xff]
        %v304 = vld [vmem:[%s237 + $0xf8] sm:$0xff]
        %305 = vst [vmem:[#allocation2] sm:$0xff] 0.0
        %306 = vst [vmem:[#allocation2 + $0x8] sm:$0xff] 0.0
        %307 = vst [vmem:[#allocation2 + $0x10] sm:$0xff] 0.0
        %308 = vst [vmem:[#allocation2 + $0x18] sm:$0xff] 0.0
        %s309 = scalar_lea.vmem [#allocation2], 544
        %310 = vst [vmem:[%s309] sm:$0xff] 0.0
        %311 = vst [vmem:[%s309 + $0x8] sm:$0xff] 0.0
        %312 = vst [vmem:[%s309 + $0x10] sm:$0xff] 0.0
        %313 = vst [vmem:[%s309 + $0x18] sm:$0xff] 0.0
        %s314 = scalar_lea.vmem [#allocation2], 32
        %315 = vst [vmem:[%s314 + $0x7] sm:$0x1] 0.0
        %316 = vst [vmem:[%s314 + $0x27] sm:$0x1] 0.0
        %317 = vst [vmem:[%s314 + $0x47] sm:$0x1] 0.0
        %318 = vst [vmem:[%s314 + $0x67] sm:$0x1] 0.0
        %319 = vst [vmem:[%s314 + $0x87] sm:$0x1] 0.0
        %320 = vst [vmem:[%s314 + $0xa7] sm:$0x1] 0.0
        %321 = vst [vmem:[%s314 + $0xc7] sm:$0x1] 0.0
        %322 = vst [vmem:[%s314 + $0xe7] sm:$0x1] 0.0
        %323 = vst [vmem:[%s314 + $0x107] sm:$0x1] 0.0
        %324 = vst [vmem:[%s314 + $0x127] sm:$0x1] 0.0
        %325 = vst [vmem:[%s314 + $0x147] sm:$0x1] 0.0
        %326 = vst [vmem:[%s314 + $0x167] sm:$0x1] 0.0
        %327 = vst [vmem:[%s314 + $0x187] sm:$0x1] 0.0
        %328 = vst [vmem:[%s314 + $0x1a7] sm:$0x1] 0.0
        %329 = vst [vmem:[%s314 + $0x1c7] sm:$0x1] 0.0
        %330 = vst [vmem:[%s314 + $0x1e7] sm:$0x1] 0.0
        %331 = vst [vmem:[%s314 + $0x18] sm:$0x1] 0.0
        %332 = vst [vmem:[%s314 + $0x38] sm:$0x1] 0.0
        %333 = vst [vmem:[%s314 + $0x58] sm:$0x1] 0.0
        %334 = vst [vmem:[%s314 + $0x78] sm:$0x1] 0.0
        %335 = vst [vmem:[%s314 + $0x98] sm:$0x1] 0.0
        %336 = vst [vmem:[%s314 + $0xb8] sm:$0x1] 0.0
        %337 = vst [vmem:[%s314 + $0xd8] sm:$0x1] 0.0
        %338 = vst [vmem:[%s314 + $0xf8] sm:$0x1] 0.0
        %339 = vst [vmem:[%s314 + $0x118] sm:$0x1] 0.0
        %340 = vst [vmem:[%s314 + $0x138] sm:$0x1] 0.0
        %341 = vst [vmem:[%s314 + $0x158] sm:$0x1] 0.0
        %342 = vst [vmem:[%s314 + $0x178] sm:$0x1] 0.0
        %343 = vst [vmem:[%s314 + $0x198] sm:$0x1] 0.0
        %344 = vst [vmem:[%s314 + $0x1b8] sm:$0x1] 0.0
        %345 = vst [vmem:[%s314 + $0x1d8] sm:$0x1] 0.0
        %346 = vst [vmem:[%s314 + $0x1f8] sm:$0x1] 0.0
        %347 = vst [vmem:[%s314 + $0x8] sm:$0xff] %v273
        %348 = vst [vmem:[%s314 + $0x10] sm:$0xff] %v274
        %349 = vst [vmem:[%s314 + $0x28] sm:$0xff] %v275
        %350 = vst [vmem:[%s314 + $0x30] sm:$0xff] %v276
        %351 = vst [vmem:[%s314 + $0x48] sm:$0xff] %v277
        %352 = vst [vmem:[%s314 + $0x50] sm:$0xff] %v278
        %353 = vst [vmem:[%s314 + $0x68] sm:$0xff] %v279
        %354 = vst [vmem:[%s314 + $0x70] sm:$0xff] %v280
        %355 = vst [vmem:[%s314 + $0x88] sm:$0xff] %v281
        %356 = vst [vmem:[%s314 + $0x90] sm:$0xff] %v282
        %357 = vst [vmem:[%s314 + $0xa8] sm:$0xff] %v283
        %358 = vst [vmem:[%s314 + $0xb0] sm:$0xff] %v284
        %359 = vst [vmem:[%s314 + $0xc8] sm:$0xff] %v285
        %360 = vst [vmem:[%s314 + $0xd0] sm:$0xff] %v286
        %361 = vst [vmem:[%s314 + $0xe8] sm:$0xff] %v287
        %362 = vst [vmem:[%s314 + $0xf0] sm:$0xff] %v288
        %363 = vst [vmem:[%s314 + $0x108] sm:$0xff] %v289
        %364 = vst [vmem:[%s314 + $0x110] sm:$0xff] %v290
        %365 = vst [vmem:[%s314 + $0x128] sm:$0xff] %v291
        %366 = vst [vmem:[%s314 + $0x130] sm:$0xff] %v292
        %367 = vst [vmem:[%s314 + $0x148] sm:$0xff] %v293
        %368 = vst [vmem:[%s314 + $0x150] sm:$0xff] %v294
        %369 = vst [vmem:[%s314 + $0x168] sm:$0xff] %v295
        %370 = vst [vmem:[%s314 + $0x170] sm:$0xff] %v296
        %371 = vst [vmem:[%s314 + $0x188] sm:$0xff] %v297
        %372 = vst [vmem:[%s314 + $0x190] sm:$0xff] %v298
        %373 = vst [vmem:[%s314 + $0x1a8] sm:$0xff] %v299
        %374 = vst [vmem:[%s314 + $0x1b0] sm:$0xff] %v300
        %375 = vst [vmem:[%s314 + $0x1c8] sm:$0xff] %v301
        %376 = vst [vmem:[%s314 + $0x1d0] sm:$0xff] %v302
        %377 = vst [vmem:[%s314 + $0x1e8] sm:$0xff] %v303
        %378 = vst [vmem:[%s314 + $0x1f0] sm:$0xff] %v304
        %v379 = vadd.f32 %v273, %v274
        %v380 = vadd.f32 %v379, %v275
        %v381 = vadd.f32 %v380, %v276
        %v382 = vadd.f32 %v381, %v277
        %v383 = vadd.f32 %v382, %v278
        %v384 = vadd.f32 %v383, %v279
        %v385 = vadd.f32 %v384, %v280
        %v386 = vadd.f32 %v385, %v281
        %v387 = vadd.f32 %v386, %v282
        %v388 = vadd.f32 %v387, %v283
        %v389 = vadd.f32 %v388, %v284
        %v390 = vadd.f32 %v389, %v285
        %v391 = vadd.f32 %v390, %v286
        %v392 = vadd.f32 %v391, %v287
        %v393 = vadd.f32 %v392, %v288
        %v394 = vadd.f32 %v393, %v289
        %v395 = vadd.f32 %v394, %v290
        %v396 = vadd.f32 %v395, %v291
        %v397 = vadd.f32 %v396, %v292
        %v398 = vadd.f32 %v397, %v293
        %v399 = vadd.f32 %v398, %v294
        %v400 = vadd.f32 %v399, %v295
        %v401 = vadd.f32 %v400, %v296
        %v402 = vadd.f32 %v401, %v297
        %v403 = vadd.f32 %v402, %v298
        %v404 = vadd.f32 %v403, %v299
        %v405 = vadd.f32 %v404, %v300
        %v406 = vadd.f32 %v405, %v301
        %v407 = vadd.f32 %v406, %v302
        %v408 = vadd.f32 %v407, %v303
        %v409 = vadd.f32 %v408, %v304
        %v410 = vrot.slane %v409, 4
        %v411 = vadd.f32 %v409, %v410
        %v412 = vrot.slane %v411, 2
        %v413 = vadd.f32 %v411, %v412
        %v414 = vrot.slane %v413, 1
        %v415 = vadd.f32 %v413, %v414
        %v416 = vrcp.pop 256.0
        %v417 = vmul.f32 %v415, %v416
        %v418 = vld [vmem:[#allocation9] sm:$0xff]
        %v419 = vld [vmem:[#allocation9 + $0x8] sm:$0xff]
        %v420 = vld [vmem:[#allocation9 + $0x10] sm:$0xff]
        %v421 = vld [vmem:[#allocation9 + $0x18] sm:$0xff]
        %v422 = vld [vmem:[#allocation9 + $0x20] sm:$0xff]
        %v423 = vld [vmem:[#allocation9 + $0x28] sm:$0xff]
        %v424 = vld [vmem:[#allocation9 + $0x30] sm:$0xff]
        %v425 = vld [vmem:[#allocation9 + $0x38] sm:$0xff]
        %v426 = vld [vmem:[#allocation9 + $0x40] sm:$0xff]
        %v427 = vld [vmem:[#allocation9 + $0x48] sm:$0xff]
        %v428 = vld [vmem:[#allocation9 + $0x50] sm:$0xff]
        %v429 = vld [vmem:[#allocation9 + $0x58] sm:$0xff]
        %v430 = vld [vmem:[#allocation9 + $0x60] sm:$0xff]
        %v431 = vld [vmem:[#allocation9 + $0x68] sm:$0xff]
        %v432 = vld [vmem:[#allocation9 + $0x70] sm:$0xff]
        %v433 = vld [vmem:[#allocation9 + $0x78] sm:$0xff]
        %v434 = vld [vmem:[%s4] sm:$0x1]
        %435 = vmatprep.subr.mxu0 0.0
        %436 = vmatpush1.msra.mxu0 %v433
        %437 = vmatprep.subr.mxu0 0.0
        %438 = vmatpush1.msra.mxu0 %v432
        %439 = vmatprep.subr.mxu0 0.0
        %440 = vmatpush1.msra.mxu0 %v431
        %441 = vmatprep.subr.mxu0 0.0
        %442 = vmatpush1.msra.mxu0 %v430
        %443 = vmatprep.subr.mxu0 0.0
        %444 = vmatpush1.msra.mxu0 %v429
        %445 = vmatprep.subr.mxu0 0.0
        %446 = vmatpush1.msra.mxu0 %v428
        %447 = vmatprep.subr.mxu0 0.0
        %448 = vmatpush1.msra.mxu0 %v427
        %449 = vmatprep.subr.mxu0 0.0
        %450 = vmatpush1.msra.mxu0 %v426
        %451 = vmatprep.subr.mxu0 0.0
        %452 = vmatpush1.msra.mxu0 %v425
        %453 = vmatprep.subr.mxu0 0.0
        %454 = vmatpush1.msra.mxu0 %v424
        %455 = vmatprep.subr.mxu0 0.0
        %456 = vmatpush1.msra.mxu0 %v423
        %457 = vmatprep.subr.mxu0 0.0
        %458 = vmatpush1.msra.mxu0 %v422
        %459 = vmatprep.subr.mxu0 0.0
        %460 = vmatpush1.msra.mxu0 %v421
        %461 = vmatprep.subr.mxu0 0.0
        %462 = vmatpush1.msra.mxu0 %v420
        %463 = vmatprep.subr.mxu0 0.0
        %464 = vmatpush1.msra.mxu0 %v419
        %465 = vmatprep.subr.mxu0 0.0
        %466 = vmatpush1.msra.mxu0 %v418
        %467 = vmatprep.subr.mxu0 0.0
        %468 = vmatpush2.msra.mxu0 0.0
        %469 = vmatprep.subr.mxu0 0.0
        %470 = vmatpush2.msra.mxu0 0.0
        %471 = vmatprep.subr.mxu0 0.0
        %472 = vmatpush2.msra.mxu0 0.0
        %473 = vmatprep.subr.mxu0 0.0
        %474 = vmatpush2.msra.mxu0 0.0
        %475 = vmatprep.subr.mxu0 0.0
        %476 = vmatpush2.msra.mxu0 0.0
        %477 = vmatprep.subr.mxu0 0.0
        %478 = vmatpush2.msra.mxu0 0.0
        %479 = vmatprep.subr.mxu0 0.0
        %480 = vmatpush2.msra.mxu0 0.0
        %481 = vmatprep.subr.mxu0 0.0
        %482 = vmatpush2.msra.mxu0 0.0
        %483 = vmatprep.subr.mxu0 0.0
        %484 = vmatpush2.msra.mxu0 0.0
        %485 = vmatprep.subr.mxu0 0.0
        %486 = vmatpush2.msra.mxu0 0.0
        %487 = vmatprep.subr.mxu0 0.0
        %488 = vmatpush2.msra.mxu0 0.0
        %489 = vmatprep.subr.mxu0 0.0
        %490 = vmatpush2.msra.mxu0 0.0
        %491 = vmatprep.subr.mxu0 0.0
        %492 = vmatpush2.msra.mxu0 0.0
        %493 = vmatprep.subr.mxu0 0.0
        %494 = vmatpush2.msra.mxu0 0.0
        %495 = vmatprep.subr.mxu0 0.0
        %496 = vmatpush2.msra.mxu0 0.0
        %497 = vmatprep.subr.mxu0 0.0
        %498 = vmatpush2.msra.mxu0 0.0
        %499 = vmatprep.mubr.f32.mxu0 0.0
        %500 = vmatmul.mubr.f32.gmra.mxu0 %v417
        %v501 = vpop.f32.mrf.mxu0
        %v502 = vadd.f32 %v434, %v501
        %v503 = vpop.f32.mrf.mxu0
        %504 = vdwg.mxu0
        %v505 = vxor.u32 %v502, 2147483648
        %v506 = vmul.f32 %v505, 1.442695
        %v507 = vpow.pop %v506
        %v508 = vadd.f32 %v507, 1.0
        %v509 = vrcp.pop %v508
        %v510 = vmul.f32 1.0, %v509
        %v511 = vld [vmem:[#allocation2 + $0x7] sm:$0xff]
        %v512 = vld [vmem:[#allocation2 + $0xf] sm:$0xff]
        %v513 = vld [vmem:[#allocation2 + $0x27] sm:$0xff]
        %v514 = vld [vmem:[#allocation2 + $0x2f] sm:$0xff]
        %v515 = vld [vmem:[#allocation2 + $0x47] sm:$0xff]
        %v516 = vld [vmem:[#allocation2 + $0x4f] sm:$0xff]
        %v517 = vld [vmem:[#allocation2 + $0x67] sm:$0xff]
        %v518 = vld [vmem:[#allocation2 + $0x6f] sm:$0xff]
        %v519 = vld [vmem:[#allocation2 + $0x87] sm:$0xff]
        %v520 = vld [vmem:[#allocation2 + $0x8f] sm:$0xff]
        %v521 = vld [vmem:[#allocation2 + $0xa7] sm:$0xff]
        %v522 = vld [vmem:[#allocation2 + $0xaf] sm:$0xff]
        %v523 = vld [vmem:[#allocation2 + $0xc7] sm:$0xff]
        %v524 = vld [vmem:[#allocation2 + $0xcf] sm:$0xff]
        %v525 = vld [vmem:[#allocation2 + $0xe7] sm:$0xff]
        %v526 = vld [vmem:[#allocation2 + $0xef] sm:$0xff]
        %v527 = vld [vmem:[#allocation2 + $0x107] sm:$0xff]
        %v528 = vld [vmem:[#allocation2 + $0x10f] sm:$0xff]
        %v529 = vld [vmem:[#allocation2 + $0x127] sm:$0xff]
        %v530 = vld [vmem:[#allocation2 + $0x12f] sm:$0xff]
        %v531 = vld [vmem:[#allocation2 + $0x147] sm:$0xff]
        %v532 = vld [vmem:[#allocation2 + $0x14f] sm:$0xff]
        %v533 = vld [vmem:[#allocation2 + $0x167] sm:$0xff]
        %v534 = vld [vmem:[#allocation2 + $0x16f] sm:$0xff]
        %v535 = vld [vmem:[#allocation2 + $0x187] sm:$0xff]
        %v536 = vld [vmem:[#allocation2 + $0x18f] sm:$0xff]
        %v537 = vld [vmem:[#allocation2 + $0x1a7] sm:$0xff]
        %v538 = vld [vmem:[#allocation2 + $0x1af] sm:$0xff]
        %v539 = vld [vmem:[#allocation2 + $0x1c7] sm:$0xff]
        %v540 = vld [vmem:[#allocation2 + $0x1cf] sm:$0xff]
        %v541 = vld [vmem:[#allocation2 + $0x1e7] sm:$0xff]
        %v542 = vld [vmem:[#allocation2 + $0x1ef] sm:$0xff]
        %v543 = vpack.c.bf16 %v512, %v511
        %v544 = vpack.c.bf16 %v514, %v513
        %v545 = vpack.c.bf16 %v516, %v515
        %v546 = vpack.c.bf16 %v518, %v517
        %v547 = vpack.c.bf16 %v520, %v519
        %v548 = vpack.c.bf16 %v522, %v521
        %v549 = vpack.c.bf16 %v524, %v523
        %v550 = vpack.c.bf16 %v526, %v525
        %v551 = vpack.c.bf16 %v528, %v527
        %v552 = vpack.c.bf16 %v530, %v529
        %v553 = vpack.c.bf16 %v532, %v531
        %v554 = vpack.c.bf16 %v534, %v533
        %v555 = vpack.c.bf16 %v536, %v535
        %v556 = vpack.c.bf16 %v538, %v537
        %v557 = vpack.c.bf16 %v540, %v539
        %v558 = vpack.c.bf16 %v542, %v541
        %v575 = vunpack.c.l.b16 %v543
        %v576 = vunpack.c.h.b16 %v543
        %v577 = vunpack.c.l.b16 %v544
        %v578 = vunpack.c.h.b16 %v544
        %v579 = vunpack.c.l.b16 %v545
        %v580 = vunpack.c.h.b16 %v545
        %v581 = vunpack.c.l.b16 %v546
        %v582 = vunpack.c.h.b16 %v546
        %v583 = vunpack.c.l.b16 %v547
        %v584 = vunpack.c.h.b16 %v547
        %v585 = vunpack.c.l.b16 %v548
        %v586 = vunpack.c.h.b16 %v548
        %v587 = vunpack.c.l.b16 %v549
        %v588 = vunpack.c.h.b16 %v549
        %v589 = vunpack.c.l.b16 %v550
        %v590 = vunpack.c.h.b16 %v550
        %v591 = vunpack.c.l.b16 %v551
        %v592 = vunpack.c.h.b16 %v551
        %v593 = vunpack.c.l.b16 %v552
        %v594 = vunpack.c.h.b16 %v552
        %v595 = vunpack.c.l.b16 %v553
        %v596 = vunpack.c.h.b16 %v553
        %v597 = vunpack.c.l.b16 %v554
        %v598 = vunpack.c.h.b16 %v554
        %v599 = vunpack.c.l.b16 %v555
        %v600 = vunpack.c.h.b16 %v555
        %v601 = vunpack.c.l.b16 %v556
        %v602 = vunpack.c.h.b16 %v556
        %v603 = vunpack.c.l.b16 %v557
        %v604 = vunpack.c.h.b16 %v557
        %v605 = vunpack.c.l.b16 %v558
        %v606 = vunpack.c.h.b16 %v558
        %v607 = vpack.c.b16 %v575, %v575
        %v608 = vpack.c.b16 %v576, %v576
        %v609 = vpack.c.b16 %v577, %v577
        %v610 = vpack.c.b16 %v578, %v578
        %v611 = vpack.c.b16 %v579, %v579
        %v612 = vpack.c.b16 %v580, %v580
        %v613 = vpack.c.b16 %v581, %v581
        %v614 = vpack.c.b16 %v582, %v582
        %v615 = vpack.c.b16 %v583, %v583
        %v616 = vpack.c.b16 %v584, %v584
        %v617 = vpack.c.b16 %v585, %v585
        %v618 = vpack.c.b16 %v586, %v586
        %v619 = vpack.c.b16 %v587, %v587
        %v620 = vpack.c.b16 %v588, %v588
        %v621 = vpack.c.b16 %v589, %v589
        %v622 = vpack.c.b16 %v590, %v590
        %v623 = vpack.c.b16 %v591, %v591
        %v624 = vpack.c.b16 %v592, %v592
        %v625 = vpack.c.b16 %v593, %v593
        %v626 = vpack.c.b16 %v594, %v594
        %v627 = vpack.c.b16 %v595, %v595
        %v628 = vpack.c.b16 %v596, %v596
        %v629 = vpack.c.b16 %v597, %v597
        %v630 = vpack.c.b16 %v598, %v598
        %v631 = vpack.c.b16 %v599, %v599
        %v632 = vpack.c.b16 %v600, %v600
        %v633 = vpack.c.b16 %v601, %v601
        %v634 = vpack.c.b16 %v602, %v602
        %v635 = vpack.c.b16 %v603, %v603
        %v636 = vpack.c.b16 %v604, %v604
        %v637 = vpack.c.b16 %v605, %v605
        %v638 = vpack.c.b16 %v606, %v606
        %671 = vst [vmem:[#allocation3] sm:$0xf] %v607
        %672 = vst [vmem:[#allocation3 + $0x24] sm:$0xf] %v608
        %673 = vst [vmem:[#allocation3 + $0x48] sm:$0xf] %v609
        %674 = vst [vmem:[#allocation3 + $0x6c] sm:$0xf] %v610
        %675 = vst [vmem:[#allocation3 + $0x90] sm:$0xf] %v611
        %676 = vst [vmem:[#allocation3 + $0xb4] sm:$0xf] %v612
        %677 = vst [vmem:[#allocation3 + $0xd8] sm:$0xf] %v613
        %678 = vst [vmem:[#allocation3 + $0xfc] sm:$0xf] %v614
        %679 = vst [vmem:[#allocation3 + $0x120] sm:$0xf] %v615
        %680 = vst [vmem:[#allocation3 + $0x144] sm:$0xf] %v616
        %681 = vst [vmem:[#allocation3 + $0x168] sm:$0xf] %v617
        %682 = vst [vmem:[#allocation3 + $0x18c] sm:$0xf] %v618
        %683 = vst [vmem:[#allocation3 + $0x1b0] sm:$0xf] %v619
        %684 = vst [vmem:[#allocation3 + $0x1d4] sm:$0xf] %v620
        %685 = vst [vmem:[#allocation3 + $0x1f8] sm:$0xf] %v621
        %686 = vst [vmem:[#allocation3 + $0x21c] sm:$0xf] %v622
        %687 = vst [vmem:[#allocation3 + $0x240] sm:$0xf] %v623
        %688 = vst [vmem:[#allocation3 + $0x264] sm:$0xf] %v624
        %689 = vst [vmem:[#allocation3 + $0x288] sm:$0xf] %v625
        %690 = vst [vmem:[#allocation3 + $0x2ac] sm:$0xf] %v626
        %691 = vst [vmem:[#allocation3 + $0x2d0] sm:$0xf] %v627
        %692 = vst [vmem:[#allocation3 + $0x2f4] sm:$0xf] %v628
        %693 = vst [vmem:[#allocation3 + $0x318] sm:$0xf] %v629
        %694 = vst [vmem:[#allocation3 + $0x33c] sm:$0xf] %v630
        %695 = vst [vmem:[#allocation3 + $0x360] sm:$0xf] %v631
        %696 = vst [vmem:[#allocation3 + $0x384] sm:$0xf] %v632
        %697 = vst [vmem:[#allocation3 + $0x3a8] sm:$0xf] %v633
        %698 = vst [vmem:[#allocation3 + $0x3cc] sm:$0xf] %v634
        %699 = vst [vmem:[#allocation3 + $0x3f0] sm:$0xf] %v635
        %700 = vst [vmem:[#allocation3 + $0x414] sm:$0xf] %v636
        %701 = vst [vmem:[#allocation3 + $0x438] sm:$0xf] %v637
        %702 = vst [vmem:[#allocation3 + $0x45c] sm:$0xf] %v638
        %v703 = vld [vmem:[#allocation2 + $0x8] sm:$0xff]
        %v704 = vld [vmem:[#allocation2 + $0x10] sm:$0xff]
        %v705 = vld [vmem:[#allocation2 + $0x28] sm:$0xff]
        %v706 = vld [vmem:[#allocation2 + $0x30] sm:$0xff]
        %v707 = vld [vmem:[#allocation2 + $0x48] sm:$0xff]
        %v708 = vld [vmem:[#allocation2 + $0x50] sm:$0xff]
        %v709 = vld [vmem:[#allocation2 + $0x68] sm:$0xff]
        %v710 = vld [vmem:[#allocation2 + $0x70] sm:$0xff]
        %v711 = vld [vmem:[#allocation2 + $0x88] sm:$0xff]
        %v712 = vld [vmem:[#allocation2 + $0x90] sm:$0xff]
        %v713 = vld [vmem:[#allocation2 + $0xa8] sm:$0xff]
        %v714 = vld [vmem:[#allocation2 + $0xb0] sm:$0xff]
        %v715 = vld [vmem:[#allocation2 + $0xc8] sm:$0xff]
        %v716 = vld [vmem:[#allocation2 + $0xd0] sm:$0xff]
        %v717 = vld [vmem:[#allocation2 + $0xe8] sm:$0xff]
        %v718 = vld [vmem:[#allocation2 + $0xf0] sm:$0xff]
        %v719 = vld [vmem:[#allocation2 + $0x108] sm:$0xff]
        %v720 = vld [vmem:[#allocation2 + $0x110] sm:$0xff]
        %v721 = vld [vmem:[#allocation2 + $0x128] sm:$0xff]
        %v722 = vld [vmem:[#allocation2 + $0x130] sm:$0xff]
        %v723 = vld [vmem:[#allocation2 + $0x148] sm:$0xff]
        %v724 = vld [vmem:[#allocation2 + $0x150] sm:$0xff]
        %v725 = vld [vmem:[#allocation2 + $0x168] sm:$0xff]
        %v726 = vld [vmem:[#allocation2 + $0x170] sm:$0xff]
        %v727 = vld [vmem:[#allocation2 + $0x188] sm:$0xff]
        %v728 = vld [vmem:[#allocation2 + $0x190] sm:$0xff]
        %v729 = vld [vmem:[#allocation2 + $0x1a8] sm:$0xff]
        %v730 = vld [vmem:[#allocation2 + $0x1b0] sm:$0xff]
        %v731 = vld [vmem:[#allocation2 + $0x1c8] sm:$0xff]
        %v732 = vld [vmem:[#allocation2 + $0x1d0] sm:$0xff]
        %v733 = vld [vmem:[#allocation2 + $0x1e8] sm:$0xff]
        %v734 = vld [vmem:[#allocation2 + $0x1f0] sm:$0xff]
        %v735 = vpack.c.bf16 %v704, %v703
        %v736 = vpack.c.bf16 %v706, %v705
        %v737 = vpack.c.bf16 %v708, %v707
        %v738 = vpack.c.bf16 %v710, %v709
        %v739 = vpack.c.bf16 %v712, %v711
        %v740 = vpack.c.bf16 %v714, %v713
        %v741 = vpack.c.bf16 %v716, %v715
        %v742 = vpack.c.bf16 %v718, %v717
        %v743 = vpack.c.bf16 %v720, %v719
        %v744 = vpack.c.bf16 %v722, %v721
        %v745 = vpack.c.bf16 %v724, %v723
        %v746 = vpack.c.bf16 %v726, %v725
        %v747 = vpack.c.bf16 %v728, %v727
        %v748 = vpack.c.bf16 %v730, %v729
        %v749 = vpack.c.bf16 %v732, %v731
        %v750 = vpack.c.bf16 %v734, %v733
        %v767 = vunpack.c.l.b16 %v735
        %v768 = vunpack.c.h.b16 %v735
        %v769 = vunpack.c.l.b16 %v736
        %v770 = vunpack.c.h.b16 %v736
        %v771 = vunpack.c.l.b16 %v737
        %v772 = vunpack.c.h.b16 %v737
        %v773 = vunpack.c.l.b16 %v738
        %v774 = vunpack.c.h.b16 %v738
        %v775 = vunpack.c.l.b16 %v739
        %v776 = vunpack.c.h.b16 %v739
        %v777 = vunpack.c.l.b16 %v740
        %v778 = vunpack.c.h.b16 %v740
        %v779 = vunpack.c.l.b16 %v741
        %v780 = vunpack.c.h.b16 %v741
        %v781 = vunpack.c.l.b16 %v742
        %v782 = vunpack.c.h.b16 %v742
        %v783 = vunpack.c.l.b16 %v743
        %v784 = vunpack.c.h.b16 %v743
        %v785 = vunpack.c.l.b16 %v744
        %v786 = vunpack.c.h.b16 %v744
        %v787 = vunpack.c.l.b16 %v745
        %v788 = vunpack.c.h.b16 %v745
        %v789 = vunpack.c.l.b16 %v746
        %v790 = vunpack.c.h.b16 %v746
        %v791 = vunpack.c.l.b16 %v747
        %v792 = vunpack.c.h.b16 %v747
        %v793 = vunpack.c.l.b16 %v748
        %v794 = vunpack.c.h.b16 %v748
        %v795 = vunpack.c.l.b16 %v749
        %v796 = vunpack.c.h.b16 %v749
        %v797 = vunpack.c.l.b16 %v750
        %v798 = vunpack.c.h.b16 %v750
        %v799 = vpack.c.b16 %v767, %v767
        %v800 = vpack.c.b16 %v768, %v768
        %v801 = vpack.c.b16 %v769, %v769
        %v802 = vpack.c.b16 %v770, %v770
        %v803 = vpack.c.b16 %v771, %v771
        %v804 = vpack.c.b16 %v772, %v772
        %v805 = vpack.c.b16 %v773, %v773
        %v806 = vpack.c.b16 %v774, %v774
        %v807 = vpack.c.b16 %v775, %v775
        %v808 = vpack.c.b16 %v776, %v776
        %v809 = vpack.c.b16 %v777, %v777
        %v810 = vpack.c.b16 %v778, %v778
        %v811 = vpack.c.b16 %v779, %v779
        %v812 = vpack.c.b16 %v780, %v780
        %v813 = vpack.c.b16 %v781, %v781
        %v814 = vpack.c.b16 %v782, %v782
        %v815 = vpack.c.b16 %v783, %v783
        %v816 = vpack.c.b16 %v784, %v784
        %v817 = vpack.c.b16 %v785, %v785
        %v818 = vpack.c.b16 %v786, %v786
        %v819 = vpack.c.b16 %v787, %v787
        %v820 = vpack.c.b16 %v788, %v788
        %v821 = vpack.c.b16 %v789, %v789
        %v822 = vpack.c.b16 %v790, %v790
        %v823 = vpack.c.b16 %v791, %v791
        %v824 = vpack.c.b16 %v792, %v792
        %v825 = vpack.c.b16 %v793, %v793
        %v826 = vpack.c.b16 %v794, %v794
        %v827 = vpack.c.b16 %v795, %v795
        %v828 = vpack.c.b16 %v796, %v796
        %v829 = vpack.c.b16 %v797, %v797
        %v830 = vpack.c.b16 %v798, %v798
        %863 = vst [vmem:[#allocation3 + $0x4] sm:$0xf] %v799
        %864 = vst [vmem:[#allocation3 + $0x28] sm:$0xf] %v800
        %865 = vst [vmem:[#allocation3 + $0x4c] sm:$0xf] %v801
        %866 = vst [vmem:[#allocation3 + $0x70] sm:$0xf] %v802
        %867 = vst [vmem:[#allocation3 + $0x94] sm:$0xf] %v803
        %868 = vst [vmem:[#allocation3 + $0xb8] sm:$0xf] %v804
        %869 = vst [vmem:[#allocation3 + $0xdc] sm:$0xf] %v805
        %870 = vst [vmem:[#allocation3 + $0x100] sm:$0xf] %v806
        %871 = vst [vmem:[#allocation3 + $0x124] sm:$0xf] %v807
        %872 = vst [vmem:[#allocation3 + $0x148] sm:$0xf] %v808
        %873 = vst [vmem:[#allocation3 + $0x16c] sm:$0xf] %v809
        %874 = vst [vmem:[#allocation3 + $0x190] sm:$0xf] %v810
        %875 = vst [vmem:[#allocation3 + $0x1b4] sm:$0xf] %v811
        %876 = vst [vmem:[#allocation3 + $0x1d8] sm:$0xf] %v812
        %877 = vst [vmem:[#allocation3 + $0x1fc] sm:$0xf] %v813
        %878 = vst [vmem:[#allocation3 + $0x220] sm:$0xf] %v814
        %879 = vst [vmem:[#allocation3 + $0x244] sm:$0xf] %v815
        %880 = vst [vmem:[#allocation3 + $0x268] sm:$0xf] %v816
        %881 = vst [vmem:[#allocation3 + $0x28c] sm:$0xf] %v817
        %882 = vst [vmem:[#allocation3 + $0x2b0] sm:$0xf] %v818
        %883 = vst [vmem:[#allocation3 + $0x2d4] sm:$0xf] %v819
        %884 = vst [vmem:[#allocation3 + $0x2f8] sm:$0xf] %v820
        %885 = vst [vmem:[#allocation3 + $0x31c] sm:$0xf] %v821
        %886 = vst [vmem:[#allocation3 + $0x340] sm:$0xf] %v822
        %887 = vst [vmem:[#allocation3 + $0x364] sm:$0xf] %v823
        %888 = vst [vmem:[#allocation3 + $0x388] sm:$0xf] %v824
        %889 = vst [vmem:[#allocation3 + $0x3ac] sm:$0xf] %v825
        %890 = vst [vmem:[#allocation3 + $0x3d0] sm:$0xf] %v826
        %891 = vst [vmem:[#allocation3 + $0x3f4] sm:$0xf] %v827
        %892 = vst [vmem:[#allocation3 + $0x418] sm:$0xf] %v828
        %893 = vst [vmem:[#allocation3 + $0x43c] sm:$0xf] %v829
        %894 = vst [vmem:[#allocation3 + $0x460] sm:$0xf] %v830
        %v895 = vld [vmem:[#allocation2 + $0x9] sm:$0xff]
        %v896 = vld [vmem:[#allocation2 + $0x11] sm:$0xff]
        %v897 = vld [vmem:[#allocation2 + $0x29] sm:$0xff]
        %v898 = vld [vmem:[#allocation2 + $0x31] sm:$0xff]
        %v899 = vld [vmem:[#allocation2 + $0x49] sm:$0xff]
        %v900 = vld [vmem:[#allocation2 + $0x51] sm:$0xff]
        %v901 = vld [vmem:[#allocation2 + $0x69] sm:$0xff]
        %v902 = vld [vmem:[#allocation2 + $0x71] sm:$0xff]
        %v903 = vld [vmem:[#allocation2 + $0x89] sm:$0xff]
        %v904 = vld [vmem:[#allocation2 + $0x91] sm:$0xff]
        %v905 = vld [vmem:[#allocation2 + $0xa9] sm:$0xff]
        %v906 = vld [vmem:[#allocation2 + $0xb1] sm:$0xff]
        %v907 = vld [vmem:[#allocation2 + $0xc9] sm:$0xff]
        %v908 = vld [vmem:[#allocation2 + $0xd1] sm:$0xff]
        %v909 = vld [vmem:[#allocation2 + $0xe9] sm:$0xff]
        %v910 = vld [vmem:[#allocation2 + $0xf1] sm:$0xff]
        %v911 = vld [vmem:[#allocation2 + $0x109] sm:$0xff]
        %v912 = vld [vmem:[#allocation2 + $0x111] sm:$0xff]
        %v913 = vld [vmem:[#allocation2 + $0x129] sm:$0xff]
        %v914 = vld [vmem:[#allocation2 + $0x131] sm:$0xff]
        %v915 = vld [vmem:[#allocation2 + $0x149] sm:$0xff]
        %v916 = vld [vmem:[#allocation2 + $0x151] sm:$0xff]
        %v917 = vld [vmem:[#allocation2 + $0x169] sm:$0xff]
        %v918 = vld [vmem:[#allocation2 + $0x171] sm:$0xff]
        %v919 = vld [vmem:[#allocation2 + $0x189] sm:$0xff]
        %v920 = vld [vmem:[#allocation2 + $0x191] sm:$0xff]
        %v921 = vld [vmem:[#allocation2 + $0x1a9] sm:$0xff]
        %v922 = vld [vmem:[#allocation2 + $0x1b1] sm:$0xff]
        %v923 = vld [vmem:[#allocation2 + $0x1c9] sm:$0xff]
        %v924 = vld [vmem:[#allocation2 + $0x1d1] sm:$0xff]
        %v925 = vld [vmem:[#allocation2 + $0x1e9] sm:$0xff]
        %v926 = vld [vmem:[#allocation2 + $0x1f1] sm:$0xff]
        %v927 = vpack.c.bf16 %v896, %v895
        %v928 = vpack.c.bf16 %v898, %v897
        %v929 = vpack.c.bf16 %v900, %v899
        %v930 = vpack.c.bf16 %v902, %v901
        %v931 = vpack.c.bf16 %v904, %v903
        %v932 = vpack.c.bf16 %v906, %v905
        %v933 = vpack.c.bf16 %v908, %v907
        %v934 = vpack.c.bf16 %v910, %v909
        %v935 = vpack.c.bf16 %v912, %v911
        %v936 = vpack.c.bf16 %v914, %v913
        %v937 = vpack.c.bf16 %v916, %v915
        %v938 = vpack.c.bf16 %v918, %v917
        %v939 = vpack.c.bf16 %v920, %v919
        %v940 = vpack.c.bf16 %v922, %v921
        %v941 = vpack.c.bf16 %v924, %v923
        %v942 = vpack.c.bf16 %v926, %v925
        %v959 = vunpack.c.l.b16 %v927
        %v960 = vunpack.c.h.b16 %v927
        %v961 = vunpack.c.l.b16 %v928
        %v962 = vunpack.c.h.b16 %v928
        %v963 = vunpack.c.l.b16 %v929
        %v964 = vunpack.c.h.b16 %v929
        %v965 = vunpack.c.l.b16 %v930
        %v966 = vunpack.c.h.b16 %v930
        %v967 = vunpack.c.l.b16 %v931
        %v968 = vunpack.c.h.b16 %v931
        %v969 = vunpack.c.l.b16 %v932
        %v970 = vunpack.c.h.b16 %v932
        %v971 = vunpack.c.l.b16 %v933
        %v972 = vunpack.c.h.b16 %v933
        %v973 = vunpack.c.l.b16 %v934
        %v974 = vunpack.c.h.b16 %v934
        %v975 = vunpack.c.l.b16 %v935
        %v976 = vunpack.c.h.b16 %v935
        %v977 = vunpack.c.l.b16 %v936
        %v978 = vunpack.c.h.b16 %v936
        %v979 = vunpack.c.l.b16 %v937
        %v980 = vunpack.c.h.b16 %v937
        %v981 = vunpack.c.l.b16 %v938
        %v982 = vunpack.c.h.b16 %v938
        %v983 = vunpack.c.l.b16 %v939
        %v984 = vunpack.c.h.b16 %v939
        %v985 = vunpack.c.l.b16 %v940
        %v986 = vunpack.c.h.b16 %v940
        %v987 = vunpack.c.l.b16 %v941
        %v988 = vunpack.c.h.b16 %v941
        %v989 = vunpack.c.l.b16 %v942
        %v990 = vunpack.c.h.b16 %v942
        %v991 = vpack.c.b16 %v959, %v959
        %v992 = vpack.c.b16 %v960, %v960
        %v993 = vpack.c.b16 %v961, %v961
        %v994 = vpack.c.b16 %v962, %v962
        %v995 = vpack.c.b16 %v963, %v963
        %v996 = vpack.c.b16 %v964, %v964
        %v997 = vpack.c.b16 %v965, %v965
        %v998 = vpack.c.b16 %v966, %v966
        %v999 = vpack.c.b16 %v967, %v967
        %v1000 = vpack.c.b16 %v968, %v968
        %v1001 = vpack.c.b16 %v969, %v969
        %v1002 = vpack.c.b16 %v970, %v970
        %v1003 = vpack.c.b16 %v971, %v971
        %v1004 = vpack.c.b16 %v972, %v972
        %v1005 = vpack.c.b16 %v973, %v973
        %v1006 = vpack.c.b16 %v974, %v974
        %v1007 = vpack.c.b16 %v975, %v975
        %v1008 = vpack.c.b16 %v976, %v976
        %v1009 = vpack.c.b16 %v977, %v977
        %v1010 = vpack.c.b16 %v978, %v978
        %v1011 = vpack.c.b16 %v979, %v979
        %v1012 = vpack.c.b16 %v980, %v980
        %v1013 = vpack.c.b16 %v981, %v981
        %v1014 = vpack.c.b16 %v982, %v982
        %v1015 = vpack.c.b16 %v983, %v983
        %v1016 = vpack.c.b16 %v984, %v984
        %v1017 = vpack.c.b16 %v985, %v985
        %v1018 = vpack.c.b16 %v986, %v986
        %v1019 = vpack.c.b16 %v987, %v987
        %v1020 = vpack.c.b16 %v988, %v988
        %v1021 = vpack.c.b16 %v989, %v989
        %v1022 = vpack.c.b16 %v990, %v990
        %1055 = vst [vmem:[#allocation3 + $0x8] sm:$0xf] %v991
        %1056 = vst [vmem:[#allocation3 + $0x2c] sm:$0xf] %v992
        %1057 = vst [vmem:[#allocation3 + $0x50] sm:$0xf] %v993
        %1058 = vst [vmem:[#allocation3 + $0x74] sm:$0xf] %v994
        %1059 = vst [vmem:[#allocation3 + $0x98] sm:$0xf] %v995
        %1060 = vst [vmem:[#allocation3 + $0xbc] sm:$0xf] %v996
        %1061 = vst [vmem:[#allocation3 + $0xe0] sm:$0xf] %v997
        %1062 = vst [vmem:[#allocation3 + $0x104] sm:$0xf] %v998
        %1063 = vst [vmem:[#allocation3 + $0x128] sm:$0xf] %v999
        %1064 = vst [vmem:[#allocation3 + $0x14c] sm:$0xf] %v1000
        %1065 = vst [vmem:[#allocation3 + $0x170] sm:$0xf] %v1001
        %1066 = vst [vmem:[#allocation3 + $0x194] sm:$0xf] %v1002
        %1067 = vst [vmem:[#allocation3 + $0x1b8] sm:$0xf] %v1003
        %1068 = vst [vmem:[#allocation3 + $0x1dc] sm:$0xf] %v1004
        %1069 = vst [vmem:[#allocation3 + $0x200] sm:$0xf] %v1005
        %1070 = vst [vmem:[#allocation3 + $0x224] sm:$0xf] %v1006
        %1071 = vst [vmem:[#allocation3 + $0x248] sm:$0xf] %v1007
        %1072 = vst [vmem:[#allocation3 + $0x26c] sm:$0xf] %v1008
        %1073 = vst [vmem:[#allocation3 + $0x290] sm:$0xf] %v1009
        %1074 = vst [vmem:[#allocation3 + $0x2b4] sm:$0xf] %v1010
        %1075 = vst [vmem:[#allocation3 + $0x2d8] sm:$0xf] %v1011
        %1076 = vst [vmem:[#allocation3 + $0x2fc] sm:$0xf] %v1012
        %1077 = vst [vmem:[#allocation3 + $0x320] sm:$0xf] %v1013
        %1078 = vst [vmem:[#allocation3 + $0x344] sm:$0xf] %v1014
        %1079 = vst [vmem:[#allocation3 + $0x368] sm:$0xf] %v1015
        %1080 = vst [vmem:[#allocation3 + $0x38c] sm:$0xf] %v1016
        %1081 = vst [vmem:[#allocation3 + $0x3b0] sm:$0xf] %v1017
        %1082 = vst [vmem:[#allocation3 + $0x3d4] sm:$0xf] %v1018
        %1083 = vst [vmem:[#allocation3 + $0x3f8] sm:$0xf] %v1019
        %1084 = vst [vmem:[#allocation3 + $0x41c] sm:$0xf] %v1020
        %1085 = vst [vmem:[#allocation3 + $0x440] sm:$0xf] %v1021
        %1086 = vst [vmem:[#allocation3 + $0x464] sm:$0xf] %v1022
        %v1087 = vld [vmem:[%s314 + $0x7] sm:$0xff]
        %v1088 = vld [vmem:[%s314 + $0xf] sm:$0xff]
        %v1089 = vld [vmem:[%s314 + $0x27] sm:$0xff]
        %v1090 = vld [vmem:[%s314 + $0x2f] sm:$0xff]
        %v1091 = vld [vmem:[%s314 + $0x47] sm:$0xff]
        %v1092 = vld [vmem:[%s314 + $0x4f] sm:$0xff]
        %v1093 = vld [vmem:[%s314 + $0x67] sm:$0xff]
        %v1094 = vld [vmem:[%s314 + $0x6f] sm:$0xff]
        %v1095 = vld [vmem:[%s314 + $0x87] sm:$0xff]
        %v1096 = vld [vmem:[%s314 + $0x8f] sm:$0xff]
        %v1097 = vld [vmem:[%s314 + $0xa7] sm:$0xff]
        %v1098 = vld [vmem:[%s314 + $0xaf] sm:$0xff]
        %v1099 = vld [vmem:[%s314 + $0xc7] sm:$0xff]
        %v1100 = vld [vmem:[%s314 + $0xcf] sm:$0xff]
        %v1101 = vld [vmem:[%s314 + $0xe7] sm:$0xff]
        %v1102 = vld [vmem:[%s314 + $0xef] sm:$0xff]
        %v1103 = vld [vmem:[%s314 + $0x107] sm:$0xff]
        %v1104 = vld [vmem:[%s314 + $0x10f] sm:$0xff]
        %v1105 = vld [vmem:[%s314 + $0x127] sm:$0xff]
        %v1106 = vld [vmem:[%s314 + $0x12f] sm:$0xff]
        %v1107 = vld [vmem:[%s314 + $0x147] sm:$0xff]
        %v1108 = vld [vmem:[%s314 + $0x14f] sm:$0xff]
        %v1109 = vld [vmem:[%s314 + $0x167] sm:$0xff]
        %v1110 = vld [vmem:[%s314 + $0x16f] sm:$0xff]
        %v1111 = vld [vmem:[%s314 + $0x187] sm:$0xff]
        %v1112 = vld [vmem:[%s314 + $0x18f] sm:$0xff]
        %v1113 = vld [vmem:[%s314 + $0x1a7] sm:$0xff]
        %v1114 = vld [vmem:[%s314 + $0x1af] sm:$0xff]
        %v1115 = vld [vmem:[%s314 + $0x1c7] sm:$0xff]
        %v1116 = vld [vmem:[%s314 + $0x1cf] sm:$0xff]
        %v1117 = vld [vmem:[%s314 + $0x1e7] sm:$0xff]
        %v1118 = vld [vmem:[%s314 + $0x1ef] sm:$0xff]
        %v1119 = vpack.c.bf16 %v1088, %v1087
        %v1120 = vpack.c.bf16 %v1090, %v1089
        %v1121 = vpack.c.bf16 %v1092, %v1091
        %v1122 = vpack.c.bf16 %v1094, %v1093
        %v1123 = vpack.c.bf16 %v1096, %v1095
        %v1124 = vpack.c.bf16 %v1098, %v1097
        %v1125 = vpack.c.bf16 %v1100, %v1099
        %v1126 = vpack.c.bf16 %v1102, %v1101
        %v1127 = vpack.c.bf16 %v1104, %v1103
        %v1128 = vpack.c.bf16 %v1106, %v1105
        %v1129 = vpack.c.bf16 %v1108, %v1107
        %v1130 = vpack.c.bf16 %v1110, %v1109
        %v1131 = vpack.c.bf16 %v1112, %v1111
        %v1132 = vpack.c.bf16 %v1114, %v1113
        %v1133 = vpack.c.bf16 %v1116, %v1115
        %v1134 = vpack.c.bf16 %v1118, %v1117
        %v1151 = vunpack.c.l.b16 %v1119
        %v1152 = vunpack.c.h.b16 %v1119
        %v1153 = vunpack.c.l.b16 %v1120
        %v1154 = vunpack.c.h.b16 %v1120
        %v1155 = vunpack.c.l.b16 %v1121
        %v1156 = vunpack.c.h.b16 %v1121
        %v1157 = vunpack.c.l.b16 %v1122
        %v1158 = vunpack.c.h.b16 %v1122
        %v1159 = vunpack.c.l.b16 %v1123
        %v1160 = vunpack.c.h.b16 %v1123
        %v1161 = vunpack.c.l.b16 %v1124
        %v1162 = vunpack.c.h.b16 %v1124
        %v1163 = vunpack.c.l.b16 %v1125
        %v1164 = vunpack.c.h.b16 %v1125
        %v1165 = vunpack.c.l.b16 %v1126
        %v1166 = vunpack.c.h.b16 %v1126
        %v1167 = vunpack.c.l.b16 %v1127
        %v1168 = vunpack.c.h.b16 %v1127
        %v1169 = vunpack.c.l.b16 %v1128
        %v1170 = vunpack.c.h.b16 %v1128
        %v1171 = vunpack.c.l.b16 %v1129
        %v1172 = vunpack.c.h.b16 %v1129
        %v1173 = vunpack.c.l.b16 %v1130
        %v1174 = vunpack.c.h.b16 %v1130
        %v1175 = vunpack.c.l.b16 %v1131
        %v1176 = vunpack.c.h.b16 %v1131
        %v1177 = vunpack.c.l.b16 %v1132
        %v1178 = vunpack.c.h.b16 %v1132
        %v1179 = vunpack.c.l.b16 %v1133
        %v1180 = vunpack.c.h.b16 %v1133
        %v1181 = vunpack.c.l.b16 %v1134
        %v1182 = vunpack.c.h.b16 %v1134
        %v1183 = vpack.c.b16 %v1151, %v1151
        %v1184 = vpack.c.b16 %v1152, %v1152
        %v1185 = vpack.c.b16 %v1153, %v1153
        %v1186 = vpack.c.b16 %v1154, %v1154
        %v1187 = vpack.c.b16 %v1155, %v1155
        %v1188 = vpack.c.b16 %v1156, %v1156
        %v1189 = vpack.c.b16 %v1157, %v1157
        %v1190 = vpack.c.b16 %v1158, %v1158
        %v1191 = vpack.c.b16 %v1159, %v1159
        %v1192 = vpack.c.b16 %v1160, %v1160
        %v1193 = vpack.c.b16 %v1161, %v1161
        %v1194 = vpack.c.b16 %v1162, %v1162
        %v1195 = vpack.c.b16 %v1163, %v1163
        %v1196 = vpack.c.b16 %v1164, %v1164
        %v1197 = vpack.c.b16 %v1165, %v1165
        %v1198 = vpack.c.b16 %v1166, %v1166
        %v1199 = vpack.c.b16 %v1167, %v1167
        %v1200 = vpack.c.b16 %v1168, %v1168
        %v1201 = vpack.c.b16 %v1169, %v1169
        %v1202 = vpack.c.b16 %v1170, %v1170
        %v1203 = vpack.c.b16 %v1171, %v1171
        %v1204 = vpack.c.b16 %v1172, %v1172
        %v1205 = vpack.c.b16 %v1173, %v1173
        %v1206 = vpack.c.b16 %v1174, %v1174
        %v1207 = vpack.c.b16 %v1175, %v1175
        %v1208 = vpack.c.b16 %v1176, %v1176
        %v1209 = vpack.c.b16 %v1177, %v1177
        %v1210 = vpack.c.b16 %v1178, %v1178
        %v1211 = vpack.c.b16 %v1179, %v1179
        %v1212 = vpack.c.b16 %v1180, %v1180
        %v1213 = vpack.c.b16 %v1181, %v1181
        %v1214 = vpack.c.b16 %v1182, %v1182
        %1247 = vst [vmem:[#allocation3 + $0xc] sm:$0xf] %v1183
        %1248 = vst [vmem:[#allocation3 + $0x30] sm:$0xf] %v1184
        %1249 = vst [vmem:[#allocation3 + $0x54] sm:$0xf] %v1185
        %1250 = vst [vmem:[#allocation3 + $0x78] sm:$0xf] %v1186
        %1251 = vst [vmem:[#allocation3 + $0x9c] sm:$0xf] %v1187
        %1252 = vst [vmem:[#allocation3 + $0xc0] sm:$0xf] %v1188
        %1253 = vst [vmem:[#allocation3 + $0xe4] sm:$0xf] %v1189
        %1254 = vst [vmem:[#allocation3 + $0x108] sm:$0xf] %v1190
        %1255 = vst [vmem:[#allocation3 + $0x12c] sm:$0xf] %v1191
        %1256 = vst [vmem:[#allocation3 + $0x150] sm:$0xf] %v1192
        %1257 = vst [vmem:[#allocation3 + $0x174] sm:$0xf] %v1193
        %1258 = vst [vmem:[#allocation3 + $0x198] sm:$0xf] %v1194
        %1259 = vst [vmem:[#allocation3 + $0x1bc] sm:$0xf] %v1195
        %1260 = vst [vmem:[#allocation3 + $0x1e0] sm:$0xf] %v1196
        %1261 = vst [vmem:[#allocation3 + $0x204] sm:$0xf] %v1197
        %1262 = vst [vmem:[#allocation3 + $0x228] sm:$0xf] %v1198
        %1263 = vst [vmem:[#allocation3 + $0x24c] sm:$0xf] %v1199
        %1264 = vst [vmem:[#allocation3 + $0x270] sm:$0xf] %v1200
        %1265 = vst [vmem:[#allocation3 + $0x294] sm:$0xf] %v1201
        %1266 = vst [vmem:[#allocation3 + $0x2b8] sm:$0xf] %v1202
        %1267 = vst [vmem:[#allocation3 + $0x2dc] sm:$0xf] %v1203
        %1268 = vst [vmem:[#allocation3 + $0x300] sm:$0xf] %v1204
        %1269 = vst [vmem:[#allocation3 + $0x324] sm:$0xf] %v1205
        %1270 = vst [vmem:[#allocation3 + $0x348] sm:$0xf] %v1206
        %1271 = vst [vmem:[#allocation3 + $0x36c] sm:$0xf] %v1207
        %1272 = vst [vmem:[#allocation3 + $0x390] sm:$0xf] %v1208
        %1273 = vst [vmem:[#allocation3 + $0x3b4] sm:$0xf] %v1209
        %1274 = vst [vmem:[#allocation3 + $0x3d8] sm:$0xf] %v1210
        %1275 = vst [vmem:[#allocation3 + $0x3fc] sm:$0xf] %v1211
        %1276 = vst [vmem:[#allocation3 + $0x420] sm:$0xf] %v1212
        %1277 = vst [vmem:[#allocation3 + $0x444] sm:$0xf] %v1213
        %1278 = vst [vmem:[#allocation3 + $0x468] sm:$0xf] %v1214
        %v1279 = vld [vmem:[%s314 + $0x8] sm:$0xff]
        %v1280 = vld [vmem:[%s314 + $0x10] sm:$0xff]
        %v1281 = vld [vmem:[%s314 + $0x28] sm:$0xff]
        %v1282 = vld [vmem:[%s314 + $0x30] sm:$0xff]
        %v1283 = vld [vmem:[%s314 + $0x48] sm:$0xff]
        %v1284 = vld [vmem:[%s314 + $0x50] sm:$0xff]
        %v1285 = vld [vmem:[%s314 + $0x68] sm:$0xff]
        %v1286 = vld [vmem:[%s314 + $0x70] sm:$0xff]
        %v1287 = vld [vmem:[%s314 + $0x88] sm:$0xff]
        %v1288 = vld [vmem:[%s314 + $0x90] sm:$0xff]
        %v1289 = vld [vmem:[%s314 + $0xa8] sm:$0xff]
        %v1290 = vld [vmem:[%s314 + $0xb0] sm:$0xff]
        %v1291 = vld [vmem:[%s314 + $0xc8] sm:$0xff]
        %v1292 = vld [vmem:[%s314 + $0xd0] sm:$0xff]
        %v1293 = vld [vmem:[%s314 + $0xe8] sm:$0xff]
        %v1294 = vld [vmem:[%s314 + $0xf0] sm:$0xff]
        %v1295 = vld [vmem:[%s314 + $0x108] sm:$0xff]
        %v1296 = vld [vmem:[%s314 + $0x110] sm:$0xff]
        %v1297 = vld [vmem:[%s314 + $0x128] sm:$0xff]
        %v1298 = vld [vmem:[%s314 + $0x130] sm:$0xff]
        %v1299 = vld [vmem:[%s314 + $0x148] sm:$0xff]
        %v1300 = vld [vmem:[%s314 + $0x150] sm:$0xff]
        %v1301 = vld [vmem:[%s314 + $0x168] sm:$0xff]
        %v1302 = vld [vmem:[%s314 + $0x170] sm:$0xff]
        %v1303 = vld [vmem:[%s314 + $0x188] sm:$0xff]
        %v1304 = vld [vmem:[%s314 + $0x190] sm:$0xff]
        %v1305 = vld [vmem:[%s314 + $0x1a8] sm:$0xff]
        %v1306 = vld [vmem:[%s314 + $0x1b0] sm:$0xff]
        %v1307 = vld [vmem:[%s314 + $0x1c8] sm:$0xff]
        %v1308 = vld [vmem:[%s314 + $0x1d0] sm:$0xff]
        %v1309 = vld [vmem:[%s314 + $0x1e8] sm:$0xff]
        %v1310 = vld [vmem:[%s314 + $0x1f0] sm:$0xff]
        %v1311 = vpack.c.bf16 %v1280, %v1279
        %v1312 = vpack.c.bf16 %v1282, %v1281
        %v1313 = vpack.c.bf16 %v1284, %v1283
        %v1314 = vpack.c.bf16 %v1286, %v1285
        %v1315 = vpack.c.bf16 %v1288, %v1287
        %v1316 = vpack.c.bf16 %v1290, %v1289
        %v1317 = vpack.c.bf16 %v1292, %v1291
        %v1318 = vpack.c.bf16 %v1294, %v1293
        %v1319 = vpack.c.bf16 %v1296, %v1295
        %v1320 = vpack.c.bf16 %v1298, %v1297
        %v1321 = vpack.c.bf16 %v1300, %v1299
        %v1322 = vpack.c.bf16 %v1302, %v1301
        %v1323 = vpack.c.bf16 %v1304, %v1303
        %v1324 = vpack.c.bf16 %v1306, %v1305
        %v1325 = vpack.c.bf16 %v1308, %v1307
        %v1326 = vpack.c.bf16 %v1310, %v1309
        %v1343 = vunpack.c.l.b16 %v1311
        %v1344 = vunpack.c.h.b16 %v1311
        %v1345 = vunpack.c.l.b16 %v1312
        %v1346 = vunpack.c.h.b16 %v1312
        %v1347 = vunpack.c.l.b16 %v1313
        %v1348 = vunpack.c.h.b16 %v1313
        %v1349 = vunpack.c.l.b16 %v1314
        %v1350 = vunpack.c.h.b16 %v1314
        %v1351 = vunpack.c.l.b16 %v1315
        %v1352 = vunpack.c.h.b16 %v1315
        %v1353 = vunpack.c.l.b16 %v1316
        %v1354 = vunpack.c.h.b16 %v1316
        %v1355 = vunpack.c.l.b16 %v1317
        %v1356 = vunpack.c.h.b16 %v1317
        %v1357 = vunpack.c.l.b16 %v1318
        %v1358 = vunpack.c.h.b16 %v1318
        %v1359 = vunpack.c.l.b16 %v1319
        %v1360 = vunpack.c.h.b16 %v1319
        %v1361 = vunpack.c.l.b16 %v1320
        %v1362 = vunpack.c.h.b16 %v1320
        %v1363 = vunpack.c.l.b16 %v1321
        %v1364 = vunpack.c.h.b16 %v1321
        %v1365 = vunpack.c.l.b16 %v1322
        %v1366 = vunpack.c.h.b16 %v1322
        %v1367 = vunpack.c.l.b16 %v1323
        %v1368 = vunpack.c.h.b16 %v1323
        %v1369 = vunpack.c.l.b16 %v1324
        %v1370 = vunpack.c.h.b16 %v1324
        %v1371 = vunpack.c.l.b16 %v1325
        %v1372 = vunpack.c.h.b16 %v1325
        %v1373 = vunpack.c.l.b16 %v1326
        %v1374 = vunpack.c.h.b16 %v1326
        %v1375 = vpack.c.b16 %v1343, %v1343
        %v1376 = vpack.c.b16 %v1344, %v1344
        %v1377 = vpack.c.b16 %v1345, %v1345
        %v1378 = vpack.c.b16 %v1346, %v1346
        %v1379 = vpack.c.b16 %v1347, %v1347
        %v1380 = vpack.c.b16 %v1348, %v1348
        %v1381 = vpack.c.b16 %v1349, %v1349
        %v1382 = vpack.c.b16 %v1350, %v1350
        %v1383 = vpack.c.b16 %v1351, %v1351
        %v1384 = vpack.c.b16 %v1352, %v1352
        %v1385 = vpack.c.b16 %v1353, %v1353
        %v1386 = vpack.c.b16 %v1354, %v1354
        %v1387 = vpack.c.b16 %v1355, %v1355
        %v1388 = vpack.c.b16 %v1356, %v1356
        %v1389 = vpack.c.b16 %v1357, %v1357
        %v1390 = vpack.c.b16 %v1358, %v1358
        %v1391 = vpack.c.b16 %v1359, %v1359
        %v1392 = vpack.c.b16 %v1360, %v1360
        %v1393 = vpack.c.b16 %v1361, %v1361
        %v1394 = vpack.c.b16 %v1362, %v1362
        %v1395 = vpack.c.b16 %v1363, %v1363
        %v1396 = vpack.c.b16 %v1364, %v1364
        %v1397 = vpack.c.b16 %v1365, %v1365
        %v1398 = vpack.c.b16 %v1366, %v1366
        %v1399 = vpack.c.b16 %v1367, %v1367
        %v1400 = vpack.c.b16 %v1368, %v1368
        %v1401 = vpack.c.b16 %v1369, %v1369
        %v1402 = vpack.c.b16 %v1370, %v1370
        %v1403 = vpack.c.b16 %v1371, %v1371
        %v1404 = vpack.c.b16 %v1372, %v1372
        %v1405 = vpack.c.b16 %v1373, %v1373
        %v1406 = vpack.c.b16 %v1374, %v1374
        %1439 = vst [vmem:[#allocation3 + $0x10] sm:$0xf] %v1375
        %1440 = vst [vmem:[#allocation3 + $0x34] sm:$0xf] %v1376
        %1441 = vst [vmem:[#allocation3 + $0x58] sm:$0xf] %v1377
        %1442 = vst [vmem:[#allocation3 + $0x7c] sm:$0xf] %v1378
        %1443 = vst [vmem:[#allocation3 + $0xa0] sm:$0xf] %v1379
        %1444 = vst [vmem:[#allocation3 + $0xc4] sm:$0xf] %v1380
        %1445 = vst [vmem:[#allocation3 + $0xe8] sm:$0xf] %v1381
        %1446 = vst [vmem:[#allocation3 + $0x10c] sm:$0xf] %v1382
        %1447 = vst [vmem:[#allocation3 + $0x130] sm:$0xf] %v1383
        %1448 = vst [vmem:[#allocation3 + $0x154] sm:$0xf] %v1384
        %1449 = vst [vmem:[#allocation3 + $0x178] sm:$0xf] %v1385
        %1450 = vst [vmem:[#allocation3 + $0x19c] sm:$0xf] %v1386
        %1451 = vst [vmem:[#allocation3 + $0x1c0] sm:$0xf] %v1387
        %1452 = vst [vmem:[#allocation3 + $0x1e4] sm:$0xf] %v1388
        %1453 = vst [vmem:[#allocation3 + $0x208] sm:$0xf] %v1389
        %1454 = vst [vmem:[#allocation3 + $0x22c] sm:$0xf] %v1390
        %1455 = vst [vmem:[#allocation3 + $0x250] sm:$0xf] %v1391
        %1456 = vst [vmem:[#allocation3 + $0x274] sm:$0xf] %v1392
        %1457 = vst [vmem:[#allocation3 + $0x298] sm:$0xf] %v1393
        %1458 = vst [vmem:[#allocation3 + $0x2bc] sm:$0xf] %v1394
        %1459 = vst [vmem:[#allocation3 + $0x2e0] sm:$0xf] %v1395
        %1460 = vst [vmem:[#allocation3 + $0x304] sm:$0xf] %v1396
        %1461 = vst [vmem:[#allocation3 + $0x328] sm:$0xf] %v1397
        %1462 = vst [vmem:[#allocation3 + $0x34c] sm:$0xf] %v1398
        %1463 = vst [vmem:[#allocation3 + $0x370] sm:$0xf] %v1399
        %1464 = vst [vmem:[#allocation3 + $0x394] sm:$0xf] %v1400
        %1465 = vst [vmem:[#allocation3 + $0x3b8] sm:$0xf] %v1401
        %1466 = vst [vmem:[#allocation3 + $0x3dc] sm:$0xf] %v1402
        %1467 = vst [vmem:[#allocation3 + $0x400] sm:$0xf] %v1403
        %1468 = vst [vmem:[#allocation3 + $0x424] sm:$0xf] %v1404
        %1469 = vst [vmem:[#allocation3 + $0x448] sm:$0xf] %v1405
        %1470 = vst [vmem:[#allocation3 + $0x46c] sm:$0xf] %v1406
        %v1471 = vld [vmem:[%s314 + $0x9] sm:$0xff]
        %v1472 = vld [vmem:[%s314 + $0x11] sm:$0xff]
        %v1473 = vld [vmem:[%s314 + $0x29] sm:$0xff]
        %v1474 = vld [vmem:[%s314 + $0x31] sm:$0xff]
        %v1475 = vld [vmem:[%s314 + $0x49] sm:$0xff]
        %v1476 = vld [vmem:[%s314 + $0x51] sm:$0xff]
        %v1477 = vld [vmem:[%s314 + $0x69] sm:$0xff]
        %v1478 = vld [vmem:[%s314 + $0x71] sm:$0xff]
        %v1479 = vld [vmem:[%s314 + $0x89] sm:$0xff]
        %v1480 = vld [vmem:[%s314 + $0x91] sm:$0xff]
        %v1481 = vld [vmem:[%s314 + $0xa9] sm:$0xff]
        %v1482 = vld [vmem:[%s314 + $0xb1] sm:$0xff]
        %v1483 = vld [vmem:[%s314 + $0xc9] sm:$0xff]
        %v1484 = vld [vmem:[%s314 + $0xd1] sm:$0xff]
        %v1485 = vld [vmem:[%s314 + $0xe9] sm:$0xff]
        %v1486 = vld [vmem:[%s314 + $0xf1] sm:$0xff]
        %v1487 = vld [vmem:[%s314 + $0x109] sm:$0xff]
        %v1488 = vld [vmem:[%s314 + $0x111] sm:$0xff]
        %v1489 = vld [vmem:[%s314 + $0x129] sm:$0xff]
        %v1490 = vld [vmem:[%s314 + $0x131] sm:$0xff]
        %v1491 = vld [vmem:[%s314 + $0x149] sm:$0xff]
        %v1492 = vld [vmem:[%s314 + $0x151] sm:$0xff]
        %v1493 = vld [vmem:[%s314 + $0x169] sm:$0xff]
        %v1494 = vld [vmem:[%s314 + $0x171] sm:$0xff]
        %v1495 = vld [vmem:[%s314 + $0x189] sm:$0xff]
        %v1496 = vld [vmem:[%s314 + $0x191] sm:$0xff]
        %v1497 = vld [vmem:[%s314 + $0x1a9] sm:$0xff]
        %v1498 = vld [vmem:[%s314 + $0x1b1] sm:$0xff]
        %v1499 = vld [vmem:[%s314 + $0x1c9] sm:$0xff]
        %v1500 = vld [vmem:[%s314 + $0x1d1] sm:$0xff]
        %v1501 = vld [vmem:[%s314 + $0x1e9] sm:$0xff]
        %v1502 = vld [vmem:[%s314 + $0x1f1] sm:$0xff]
        %v1503 = vpack.c.bf16 %v1472, %v1471
        %v1504 = vpack.c.bf16 %v1474, %v1473
        %v1505 = vpack.c.bf16 %v1476, %v1475
        %v1506 = vpack.c.bf16 %v1478, %v1477
        %v1507 = vpack.c.bf16 %v1480, %v1479
        %v1508 = vpack.c.bf16 %v1482, %v1481
        %v1509 = vpack.c.bf16 %v1484, %v1483
        %v1510 = vpack.c.bf16 %v1486, %v1485
        %v1511 = vpack.c.bf16 %v1488, %v1487
        %v1512 = vpack.c.bf16 %v1490, %v1489
        %v1513 = vpack.c.bf16 %v1492, %v1491
        %v1514 = vpack.c.bf16 %v1494, %v1493
        %v1515 = vpack.c.bf16 %v1496, %v1495
        %v1516 = vpack.c.bf16 %v1498, %v1497
        %v1517 = vpack.c.bf16 %v1500, %v1499
        %v1518 = vpack.c.bf16 %v1502, %v1501
        %v1535 = vunpack.c.l.b16 %v1503
        %v1536 = vunpack.c.h.b16 %v1503
        %v1537 = vunpack.c.l.b16 %v1504
        %v1538 = vunpack.c.h.b16 %v1504
        %v1539 = vunpack.c.l.b16 %v1505
        %v1540 = vunpack.c.h.b16 %v1505
        %v1541 = vunpack.c.l.b16 %v1506
        %v1542 = vunpack.c.h.b16 %v1506
        %v1543 = vunpack.c.l.b16 %v1507
        %v1544 = vunpack.c.h.b16 %v1507
        %v1545 = vunpack.c.l.b16 %v1508
        %v1546 = vunpack.c.h.b16 %v1508
        %v1547 = vunpack.c.l.b16 %v1509
        %v1548 = vunpack.c.h.b16 %v1509
        %v1549 = vunpack.c.l.b16 %v1510
        %v1550 = vunpack.c.h.b16 %v1510
        %v1551 = vunpack.c.l.b16 %v1511
        %v1552 = vunpack.c.h.b16 %v1511
        %v1553 = vunpack.c.l.b16 %v1512
        %v1554 = vunpack.c.h.b16 %v1512
        %v1555 = vunpack.c.l.b16 %v1513
        %v1556 = vunpack.c.h.b16 %v1513
        %v1557 = vunpack.c.l.b16 %v1514
        %v1558 = vunpack.c.h.b16 %v1514
        %v1559 = vunpack.c.l.b16 %v1515
        %v1560 = vunpack.c.h.b16 %v1515
        %v1561 = vunpack.c.l.b16 %v1516
        %v1562 = vunpack.c.h.b16 %v1516
        %v1563 = vunpack.c.l.b16 %v1517
        %v1564 = vunpack.c.h.b16 %v1517
        %v1565 = vunpack.c.l.b16 %v1518
        %v1566 = vunpack.c.h.b16 %v1518
        %v1567 = vpack.c.b16 %v1535, %v1535
        %v1568 = vpack.c.b16 %v1536, %v1536
        %v1569 = vpack.c.b16 %v1537, %v1537
        %v1570 = vpack.c.b16 %v1538, %v1538
        %v1571 = vpack.c.b16 %v1539, %v1539
        %v1572 = vpack.c.b16 %v1540, %v1540
        %v1573 = vpack.c.b16 %v1541, %v1541
        %v1574 = vpack.c.b16 %v1542, %v1542
        %v1575 = vpack.c.b16 %v1543, %v1543
        %v1576 = vpack.c.b16 %v1544, %v1544
        %v1577 = vpack.c.b16 %v1545, %v1545
        %v1578 = vpack.c.b16 %v1546, %v1546
        %v1579 = vpack.c.b16 %v1547, %v1547
        %v1580 = vpack.c.b16 %v1548, %v1548
        %v1581 = vpack.c.b16 %v1549, %v1549
        %v1582 = vpack.c.b16 %v1550, %v1550
        %v1583 = vpack.c.b16 %v1551, %v1551
        %v1584 = vpack.c.b16 %v1552, %v1552
        %v1585 = vpack.c.b16 %v1553, %v1553
        %v1586 = vpack.c.b16 %v1554, %v1554
        %v1587 = vpack.c.b16 %v1555, %v1555
        %v1588 = vpack.c.b16 %v1556, %v1556
        %v1589 = vpack.c.b16 %v1557, %v1557
        %v1590 = vpack.c.b16 %v1558, %v1558
        %v1591 = vpack.c.b16 %v1559, %v1559
        %v1592 = vpack.c.b16 %v1560, %v1560
        %v1593 = vpack.c.b16 %v1561, %v1561
        %v1594 = vpack.c.b16 %v1562, %v1562
        %v1595 = vpack.c.b16 %v1563, %v1563
        %v1596 = vpack.c.b16 %v1564, %v1564
        %v1597 = vpack.c.b16 %v1565, %v1565
        %v1598 = vpack.c.b16 %v1566, %v1566
        %1631 = vst [vmem:[#allocation3 + $0x14] sm:$0xf] %v1567
        %1632 = vst [vmem:[#allocation3 + $0x38] sm:$0xf] %v1568
        %1633 = vst [vmem:[#allocation3 + $0x5c] sm:$0xf] %v1569
        %1634 = vst [vmem:[#allocation3 + $0x80] sm:$0xf] %v1570
        %1635 = vst [vmem:[#allocation3 + $0xa4] sm:$0xf] %v1571
        %1636 = vst [vmem:[#allocation3 + $0xc8] sm:$0xf] %v1572
        %1637 = vst [vmem:[#allocation3 + $0xec] sm:$0xf] %v1573
        %1638 = vst [vmem:[#allocation3 + $0x110] sm:$0xf] %v1574
        %1639 = vst [vmem:[#allocation3 + $0x134] sm:$0xf] %v1575
        %1640 = vst [vmem:[#allocation3 + $0x158] sm:$0xf] %v1576
        %1641 = vst [vmem:[#allocation3 + $0x17c] sm:$0xf] %v1577
        %1642 = vst [vmem:[#allocation3 + $0x1a0] sm:$0xf] %v1578
        %1643 = vst [vmem:[#allocation3 + $0x1c4] sm:$0xf] %v1579
        %1644 = vst [vmem:[#allocation3 + $0x1e8] sm:$0xf] %v1580
        %1645 = vst [vmem:[#allocation3 + $0x20c] sm:$0xf] %v1581
        %1646 = vst [vmem:[#allocation3 + $0x230] sm:$0xf] %v1582
        %1647 = vst [vmem:[#allocation3 + $0x254] sm:$0xf] %v1583
        %1648 = vst [vmem:[#allocation3 + $0x278] sm:$0xf] %v1584
        %1649 = vst [vmem:[#allocation3 + $0x29c] sm:$0xf] %v1585
        %1650 = vst [vmem:[#allocation3 + $0x2c0] sm:$0xf] %v1586
        %1651 = vst [vmem:[#allocation3 + $0x2e4] sm:$0xf] %v1587
        %1652 = vst [vmem:[#allocation3 + $0x308] sm:$0xf] %v1588
        %1653 = vst [vmem:[#allocation3 + $0x32c] sm:$0xf] %v1589
        %1654 = vst [vmem:[#allocation3 + $0x350] sm:$0xf] %v1590
        %1655 = vst [vmem:[#allocation3 + $0x374] sm:$0xf] %v1591
        %1656 = vst [vmem:[#allocation3 + $0x398] sm:$0xf] %v1592
        %1657 = vst [vmem:[#allocation3 + $0x3bc] sm:$0xf] %v1593
        %1658 = vst [vmem:[#allocation3 + $0x3e0] sm:$0xf] %v1594
        %1659 = vst [vmem:[#allocation3 + $0x404] sm:$0xf] %v1595
        %1660 = vst [vmem:[#allocation3 + $0x428] sm:$0xf] %v1596
        %1661 = vst [vmem:[#allocation3 + $0x44c] sm:$0xf] %v1597
        %1662 = vst [vmem:[#allocation3 + $0x470] sm:$0xf] %v1598
        %s1663 = scalar_lea.vmem [#allocation2], 64
        %v1664 = vld [vmem:[%s1663 + $0x7] sm:$0xff]
        %v1665 = vld [vmem:[%s1663 + $0xf] sm:$0xff]
        %v1666 = vld [vmem:[%s1663 + $0x27] sm:$0xff]
        %v1667 = vld [vmem:[%s1663 + $0x2f] sm:$0xff]
        %v1668 = vld [vmem:[%s1663 + $0x47] sm:$0xff]
        %v1669 = vld [vmem:[%s1663 + $0x4f] sm:$0xff]
        %v1670 = vld [vmem:[%s1663 + $0x67] sm:$0xff]
        %v1671 = vld [vmem:[%s1663 + $0x6f] sm:$0xff]
        %v1672 = vld [vmem:[%s1663 + $0x87] sm:$0xff]
        %v1673 = vld [vmem:[%s1663 + $0x8f] sm:$0xff]
        %v1674 = vld [vmem:[%s1663 + $0xa7] sm:$0xff]
        %v1675 = vld [vmem:[%s1663 + $0xaf] sm:$0xff]
        %v1676 = vld [vmem:[%s1663 + $0xc7] sm:$0xff]
        %v1677 = vld [vmem:[%s1663 + $0xcf] sm:$0xff]
        %v1678 = vld [vmem:[%s1663 + $0xe7] sm:$0xff]
        %v1679 = vld [vmem:[%s1663 + $0xef] sm:$0xff]
        %v1680 = vld [vmem:[%s1663 + $0x107] sm:$0xff]
        %v1681 = vld [vmem:[%s1663 + $0x10f] sm:$0xff]
        %v1682 = vld [vmem:[%s1663 + $0x127] sm:$0xff]
        %v1683 = vld [vmem:[%s1663 + $0x12f] sm:$0xff]
        %v1684 = vld [vmem:[%s1663 + $0x147] sm:$0xff]
        %v1685 = vld [vmem:[%s1663 + $0x14f] sm:$0xff]
        %v1686 = vld [vmem:[%s1663 + $0x167] sm:$0xff]
        %v1687 = vld [vmem:[%s1663 + $0x16f] sm:$0xff]
        %v1688 = vld [vmem:[%s1663 + $0x187] sm:$0xff]
        %v1689 = vld [vmem:[%s1663 + $0x18f] sm:$0xff]
        %v1690 = vld [vmem:[%s1663 + $0x1a7] sm:$0xff]
        %v1691 = vld [vmem:[%s1663 + $0x1af] sm:$0xff]
        %v1692 = vld [vmem:[%s1663 + $0x1c7] sm:$0xff]
        %v1693 = vld [vmem:[%s1663 + $0x1cf] sm:$0xff]
        %v1694 = vld [vmem:[%s1663 + $0x1e7] sm:$0xff]
        %v1695 = vld [vmem:[%s1663 + $0x1ef] sm:$0xff]
        %v1696 = vpack.c.bf16 %v1665, %v1664
        %v1697 = vpack.c.bf16 %v1667, %v1666
        %v1698 = vpack.c.bf16 %v1669, %v1668
        %v1699 = vpack.c.bf16 %v1671, %v1670
        %v1700 = vpack.c.bf16 %v1673, %v1672
        %v1701 = vpack.c.bf16 %v1675, %v1674
        %v1702 = vpack.c.bf16 %v1677, %v1676
        %v1703 = vpack.c.bf16 %v1679, %v1678
        %v1704 = vpack.c.bf16 %v1681, %v1680
        %v1705 = vpack.c.bf16 %v1683, %v1682
        %v1706 = vpack.c.bf16 %v1685, %v1684
        %v1707 = vpack.c.bf16 %v1687, %v1686
        %v1708 = vpack.c.bf16 %v1689, %v1688
        %v1709 = vpack.c.bf16 %v1691, %v1690
        %v1710 = vpack.c.bf16 %v1693, %v1692
        %v1711 = vpack.c.bf16 %v1695, %v1694
        %v1728 = vunpack.c.l.b16 %v1696
        %v1729 = vunpack.c.h.b16 %v1696
        %v1730 = vunpack.c.l.b16 %v1697
        %v1731 = vunpack.c.h.b16 %v1697
        %v1732 = vunpack.c.l.b16 %v1698
        %v1733 = vunpack.c.h.b16 %v1698
        %v1734 = vunpack.c.l.b16 %v1699
        %v1735 = vunpack.c.h.b16 %v1699
        %v1736 = vunpack.c.l.b16 %v1700
        %v1737 = vunpack.c.h.b16 %v1700
        %v1738 = vunpack.c.l.b16 %v1701
        %v1739 = vunpack.c.h.b16 %v1701
        %v1740 = vunpack.c.l.b16 %v1702
        %v1741 = vunpack.c.h.b16 %v1702
        %v1742 = vunpack.c.l.b16 %v1703
        %v1743 = vunpack.c.h.b16 %v1703
        %v1744 = vunpack.c.l.b16 %v1704
        %v1745 = vunpack.c.h.b16 %v1704
        %v1746 = vunpack.c.l.b16 %v1705
        %v1747 = vunpack.c.h.b16 %v1705
        %v1748 = vunpack.c.l.b16 %v1706
        %v1749 = vunpack.c.h.b16 %v1706
        %v1750 = vunpack.c.l.b16 %v1707
        %v1751 = vunpack.c.h.b16 %v1707
        %v1752 = vunpack.c.l.b16 %v1708
        %v1753 = vunpack.c.h.b16 %v1708
        %v1754 = vunpack.c.l.b16 %v1709
        %v1755 = vunpack.c.h.b16 %v1709
        %v1756 = vunpack.c.l.b16 %v1710
        %v1757 = vunpack.c.h.b16 %v1710
        %v1758 = vunpack.c.l.b16 %v1711
        %v1759 = vunpack.c.h.b16 %v1711
        %v1760 = vpack.c.b16 %v1728, %v1728
        %v1761 = vpack.c.b16 %v1729, %v1729
        %v1762 = vpack.c.b16 %v1730, %v1730
        %v1763 = vpack.c.b16 %v1731, %v1731
        %v1764 = vpack.c.b16 %v1732, %v1732
        %v1765 = vpack.c.b16 %v1733, %v1733
        %v1766 = vpack.c.b16 %v1734, %v1734
        %v1767 = vpack.c.b16 %v1735, %v1735
        %v1768 = vpack.c.b16 %v1736, %v1736
        %v1769 = vpack.c.b16 %v1737, %v1737
        %v1770 = vpack.c.b16 %v1738, %v1738
        %v1771 = vpack.c.b16 %v1739, %v1739
        %v1772 = vpack.c.b16 %v1740, %v1740
        %v1773 = vpack.c.b16 %v1741, %v1741
        %v1774 = vpack.c.b16 %v1742, %v1742
        %v1775 = vpack.c.b16 %v1743, %v1743
        %v1776 = vpack.c.b16 %v1744, %v1744
        %v1777 = vpack.c.b16 %v1745, %v1745
        %v1778 = vpack.c.b16 %v1746, %v1746
        %v1779 = vpack.c.b16 %v1747, %v1747
        %v1780 = vpack.c.b16 %v1748, %v1748
        %v1781 = vpack.c.b16 %v1749, %v1749
        %v1782 = vpack.c.b16 %v1750, %v1750
        %v1783 = vpack.c.b16 %v1751, %v1751
        %v1784 = vpack.c.b16 %v1752, %v1752
        %v1785 = vpack.c.b16 %v1753, %v1753
        %v1786 = vpack.c.b16 %v1754, %v1754
        %v1787 = vpack.c.b16 %v1755, %v1755
        %v1788 = vpack.c.b16 %v1756, %v1756
        %v1789 = vpack.c.b16 %v1757, %v1757
        %v1790 = vpack.c.b16 %v1758, %v1758
        %v1791 = vpack.c.b16 %v1759, %v1759
        %1824 = vst [vmem:[#allocation3 + $0x18] sm:$0xf] %v1760
        %1825 = vst [vmem:[#allocation3 + $0x3c] sm:$0xf] %v1761
        %1826 = vst [vmem:[#allocation3 + $0x60] sm:$0xf] %v1762
        %1827 = vst [vmem:[#allocation3 + $0x84] sm:$0xf] %v1763
        %1828 = vst [vmem:[#allocation3 + $0xa8] sm:$0xf] %v1764
        %1829 = vst [vmem:[#allocation3 + $0xcc] sm:$0xf] %v1765
        %1830 = vst [vmem:[#allocation3 + $0xf0] sm:$0xf] %v1766
        %1831 = vst [vmem:[#allocation3 + $0x114] sm:$0xf] %v1767
        %1832 = vst [vmem:[#allocation3 + $0x138] sm:$0xf] %v1768
        %1833 = vst [vmem:[#allocation3 + $0x15c] sm:$0xf] %v1769
        %1834 = vst [vmem:[#allocation3 + $0x180] sm:$0xf] %v1770
        %1835 = vst [vmem:[#allocation3 + $0x1a4] sm:$0xf] %v1771
        %1836 = vst [vmem:[#allocation3 + $0x1c8] sm:$0xf] %v1772
        %1837 = vst [vmem:[#allocation3 + $0x1ec] sm:$0xf] %v1773
        %1838 = vst [vmem:[#allocation3 + $0x210] sm:$0xf] %v1774
        %1839 = vst [vmem:[#allocation3 + $0x234] sm:$0xf] %v1775
        %1840 = vst [vmem:[#allocation3 + $0x258] sm:$0xf] %v1776
        %1841 = vst [vmem:[#allocation3 + $0x27c] sm:$0xf] %v1777
        %1842 = vst [vmem:[#allocation3 + $0x2a0] sm:$0xf] %v1778
        %1843 = vst [vmem:[#allocation3 + $0x2c4] sm:$0xf] %v1779
        %1844 = vst [vmem:[#allocation3 + $0x2e8] sm:$0xf] %v1780
        %1845 = vst [vmem:[#allocation3 + $0x30c] sm:$0xf] %v1781
        %1846 = vst [vmem:[#allocation3 + $0x330] sm:$0xf] %v1782
        %1847 = vst [vmem:[#allocation3 + $0x354] sm:$0xf] %v1783
        %1848 = vst [vmem:[#allocation3 + $0x378] sm:$0xf] %v1784
        %1849 = vst [vmem:[#allocation3 + $0x39c] sm:$0xf] %v1785
        %1850 = vst [vmem:[#allocation3 + $0x3c0] sm:$0xf] %v1786
        %1851 = vst [vmem:[#allocation3 + $0x3e4] sm:$0xf] %v1787
        %1852 = vst [vmem:[#allocation3 + $0x408] sm:$0xf] %v1788
        %1853 = vst [vmem:[#allocation3 + $0x42c] sm:$0xf] %v1789
        %1854 = vst [vmem:[#allocation3 + $0x450] sm:$0xf] %v1790
        %1855 = vst [vmem:[#allocation3 + $0x474] sm:$0xf] %v1791
        %v1856 = vld [vmem:[%s1663 + $0x8] sm:$0xff]
        %v1857 = vld [vmem:[%s1663 + $0x10] sm:$0xff]
        %v1858 = vld [vmem:[%s1663 + $0x28] sm:$0xff]
        %v1859 = vld [vmem:[%s1663 + $0x30] sm:$0xff]
        %v1860 = vld [vmem:[%s1663 + $0x48] sm:$0xff]
        %v1861 = vld [vmem:[%s1663 + $0x50] sm:$0xff]
        %v1862 = vld [vmem:[%s1663 + $0x68] sm:$0xff]
        %v1863 = vld [vmem:[%s1663 + $0x70] sm:$0xff]
        %v1864 = vld [vmem:[%s1663 + $0x88] sm:$0xff]
        %v1865 = vld [vmem:[%s1663 + $0x90] sm:$0xff]
        %v1866 = vld [vmem:[%s1663 + $0xa8] sm:$0xff]
        %v1867 = vld [vmem:[%s1663 + $0xb0] sm:$0xff]
        %v1868 = vld [vmem:[%s1663 + $0xc8] sm:$0xff]
        %v1869 = vld [vmem:[%s1663 + $0xd0] sm:$0xff]
        %v1870 = vld [vmem:[%s1663 + $0xe8] sm:$0xff]
        %v1871 = vld [vmem:[%s1663 + $0xf0] sm:$0xff]
        %v1872 = vld [vmem:[%s1663 + $0x108] sm:$0xff]
        %v1873 = vld [vmem:[%s1663 + $0x110] sm:$0xff]
        %v1874 = vld [vmem:[%s1663 + $0x128] sm:$0xff]
        %v1875 = vld [vmem:[%s1663 + $0x130] sm:$0xff]
        %v1876 = vld [vmem:[%s1663 + $0x148] sm:$0xff]
        %v1877 = vld [vmem:[%s1663 + $0x150] sm:$0xff]
        %v1878 = vld [vmem:[%s1663 + $0x168] sm:$0xff]
        %v1879 = vld [vmem:[%s1663 + $0x170] sm:$0xff]
        %v1880 = vld [vmem:[%s1663 + $0x188] sm:$0xff]
        %v1881 = vld [vmem:[%s1663 + $0x190] sm:$0xff]
        %v1882 = vld [vmem:[%s1663 + $0x1a8] sm:$0xff]
        %v1883 = vld [vmem:[%s1663 + $0x1b0] sm:$0xff]
        %v1884 = vld [vmem:[%s1663 + $0x1c8] sm:$0xff]
        %v1885 = vld [vmem:[%s1663 + $0x1d0] sm:$0xff]
        %v1886 = vld [vmem:[%s1663 + $0x1e8] sm:$0xff]
        %v1887 = vld [vmem:[%s1663 + $0x1f0] sm:$0xff]
        %v1888 = vpack.c.bf16 %v1857, %v1856
        %v1889 = vpack.c.bf16 %v1859, %v1858
        %v1890 = vpack.c.bf16 %v1861, %v1860
        %v1891 = vpack.c.bf16 %v1863, %v1862
        %v1892 = vpack.c.bf16 %v1865, %v1864
        %v1893 = vpack.c.bf16 %v1867, %v1866
        %v1894 = vpack.c.bf16 %v1869, %v1868
        %v1895 = vpack.c.bf16 %v1871, %v1870
        %v1896 = vpack.c.bf16 %v1873, %v1872
        %v1897 = vpack.c.bf16 %v1875, %v1874
        %v1898 = vpack.c.bf16 %v1877, %v1876
        %v1899 = vpack.c.bf16 %v1879, %v1878
        %v1900 = vpack.c.bf16 %v1881, %v1880
        %v1901 = vpack.c.bf16 %v1883, %v1882
        %v1902 = vpack.c.bf16 %v1885, %v1884
        %v1903 = vpack.c.bf16 %v1887, %v1886
        %v1920 = vunpack.c.l.b16 %v1888
        %v1921 = vunpack.c.h.b16 %v1888
        %v1922 = vunpack.c.l.b16 %v1889
        %v1923 = vunpack.c.h.b16 %v1889
        %v1924 = vunpack.c.l.b16 %v1890
        %v1925 = vunpack.c.h.b16 %v1890
        %v1926 = vunpack.c.l.b16 %v1891
        %v1927 = vunpack.c.h.b16 %v1891
        %v1928 = vunpack.c.l.b16 %v1892
        %v1929 = vunpack.c.h.b16 %v1892
        %v1930 = vunpack.c.l.b16 %v1893
        %v1931 = vunpack.c.h.b16 %v1893
        %v1932 = vunpack.c.l.b16 %v1894
        %v1933 = vunpack.c.h.b16 %v1894
        %v1934 = vunpack.c.l.b16 %v1895
        %v1935 = vunpack.c.h.b16 %v1895
        %v1936 = vunpack.c.l.b16 %v1896
        %v1937 = vunpack.c.h.b16 %v1896
        %v1938 = vunpack.c.l.b16 %v1897
        %v1939 = vunpack.c.h.b16 %v1897
        %v1940 = vunpack.c.l.b16 %v1898
        %v1941 = vunpack.c.h.b16 %v1898
        %v1942 = vunpack.c.l.b16 %v1899
        %v1943 = vunpack.c.h.b16 %v1899
        %v1944 = vunpack.c.l.b16 %v1900
        %v1945 = vunpack.c.h.b16 %v1900
        %v1946 = vunpack.c.l.b16 %v1901
        %v1947 = vunpack.c.h.b16 %v1901
        %v1948 = vunpack.c.l.b16 %v1902
        %v1949 = vunpack.c.h.b16 %v1902
        %v1950 = vunpack.c.l.b16 %v1903
        %v1951 = vunpack.c.h.b16 %v1903
        %v1952 = vpack.c.b16 %v1920, %v1920
        %v1953 = vpack.c.b16 %v1921, %v1921
        %v1954 = vpack.c.b16 %v1922, %v1922
        %v1955 = vpack.c.b16 %v1923, %v1923
        %v1956 = vpack.c.b16 %v1924, %v1924
        %v1957 = vpack.c.b16 %v1925, %v1925
        %v1958 = vpack.c.b16 %v1926, %v1926
        %v1959 = vpack.c.b16 %v1927, %v1927
        %v1960 = vpack.c.b16 %v1928, %v1928
        %v1961 = vpack.c.b16 %v1929, %v1929
        %v1962 = vpack.c.b16 %v1930, %v1930
        %v1963 = vpack.c.b16 %v1931, %v1931
        %v1964 = vpack.c.b16 %v1932, %v1932
        %v1965 = vpack.c.b16 %v1933, %v1933
        %v1966 = vpack.c.b16 %v1934, %v1934
        %v1967 = vpack.c.b16 %v1935, %v1935
        %v1968 = vpack.c.b16 %v1936, %v1936
        %v1969 = vpack.c.b16 %v1937, %v1937
        %v1970 = vpack.c.b16 %v1938, %v1938
        %v1971 = vpack.c.b16 %v1939, %v1939
        %v1972 = vpack.c.b16 %v1940, %v1940
        %v1973 = vpack.c.b16 %v1941, %v1941
        %v1974 = vpack.c.b16 %v1942, %v1942
        %v1975 = vpack.c.b16 %v1943, %v1943
        %v1976 = vpack.c.b16 %v1944, %v1944
        %v1977 = vpack.c.b16 %v1945, %v1945
        %v1978 = vpack.c.b16 %v1946, %v1946
        %v1979 = vpack.c.b16 %v1947, %v1947
        %v1980 = vpack.c.b16 %v1948, %v1948
        %v1981 = vpack.c.b16 %v1949, %v1949
        %v1982 = vpack.c.b16 %v1950, %v1950
        %v1983 = vpack.c.b16 %v1951, %v1951
        %2016 = vst [vmem:[#allocation3 + $0x1c] sm:$0xf] %v1952
        %2017 = vst [vmem:[#allocation3 + $0x40] sm:$0xf] %v1953
        %2018 = vst [vmem:[#allocation3 + $0x64] sm:$0xf] %v1954
        %2019 = vst [vmem:[#allocation3 + $0x88] sm:$0xf] %v1955
        %2020 = vst [vmem:[#allocation3 + $0xac] sm:$0xf] %v1956
        %2021 = vst [vmem:[#allocation3 + $0xd0] sm:$0xf] %v1957
        %2022 = vst [vmem:[#allocation3 + $0xf4] sm:$0xf] %v1958
        %2023 = vst [vmem:[#allocation3 + $0x118] sm:$0xf] %v1959
        %2024 = vst [vmem:[#allocation3 + $0x13c] sm:$0xf] %v1960
        %2025 = vst [vmem:[#allocation3 + $0x160] sm:$0xf] %v1961
        %2026 = vst [vmem:[#allocation3 + $0x184] sm:$0xf] %v1962
        %2027 = vst [vmem:[#allocation3 + $0x1a8] sm:$0xf] %v1963
        %2028 = vst [vmem:[#allocation3 + $0x1cc] sm:$0xf] %v1964
        %2029 = vst [vmem:[#allocation3 + $0x1f0] sm:$0xf] %v1965
        %2030 = vst [vmem:[#allocation3 + $0x214] sm:$0xf] %v1966
        %2031 = vst [vmem:[#allocation3 + $0x238] sm:$0xf] %v1967
        %2032 = vst [vmem:[#allocation3 + $0x25c] sm:$0xf] %v1968
        %2033 = vst [vmem:[#allocation3 + $0x280] sm:$0xf] %v1969
        %2034 = vst [vmem:[#allocation3 + $0x2a4] sm:$0xf] %v1970
        %2035 = vst [vmem:[#allocation3 + $0x2c8] sm:$0xf] %v1971
        %2036 = vst [vmem:[#allocation3 + $0x2ec] sm:$0xf] %v1972
        %2037 = vst [vmem:[#allocation3 + $0x310] sm:$0xf] %v1973
        %2038 = vst [vmem:[#allocation3 + $0x334] sm:$0xf] %v1974
        %2039 = vst [vmem:[#allocation3 + $0x358] sm:$0xf] %v1975
        %2040 = vst [vmem:[#allocation3 + $0x37c] sm:$0xf] %v1976
        %2041 = vst [vmem:[#allocation3 + $0x3a0] sm:$0xf] %v1977
        %2042 = vst [vmem:[#allocation3 + $0x3c4] sm:$0xf] %v1978
        %2043 = vst [vmem:[#allocation3 + $0x3e8] sm:$0xf] %v1979
        %2044 = vst [vmem:[#allocation3 + $0x40c] sm:$0xf] %v1980
        %2045 = vst [vmem:[#allocation3 + $0x430] sm:$0xf] %v1981
        %2046 = vst [vmem:[#allocation3 + $0x454] sm:$0xf] %v1982
        %2047 = vst [vmem:[#allocation3 + $0x478] sm:$0xf] %v1983
        %v2048 = vld [vmem:[%s1663 + $0x9] sm:$0xff]
        %v2049 = vld [vmem:[%s1663 + $0x11] sm:$0xff]
        %v2050 = vld [vmem:[%s1663 + $0x29] sm:$0xff]
        %v2051 = vld [vmem:[%s1663 + $0x31] sm:$0xff]
        %v2052 = vld [vmem:[%s1663 + $0x49] sm:$0xff]
        %v2053 = vld [vmem:[%s1663 + $0x51] sm:$0xff]
        %v2054 = vld [vmem:[%s1663 + $0x69] sm:$0xff]
        %v2055 = vld [vmem:[%s1663 + $0x71] sm:$0xff]
        %v2056 = vld [vmem:[%s1663 + $0x89] sm:$0xff]
        %v2057 = vld [vmem:[%s1663 + $0x91] sm:$0xff]
        %v2058 = vld [vmem:[%s1663 + $0xa9] sm:$0xff]
        %v2059 = vld [vmem:[%s1663 + $0xb1] sm:$0xff]
        %v2060 = vld [vmem:[%s1663 + $0xc9] sm:$0xff]
        %v2061 = vld [vmem:[%s1663 + $0xd1] sm:$0xff]
        %v2062 = vld [vmem:[%s1663 + $0xe9] sm:$0xff]
        %v2063 = vld [vmem:[%s1663 + $0xf1] sm:$0xff]
        %v2064 = vld [vmem:[%s1663 + $0x109] sm:$0xff]
        %v2065 = vld [vmem:[%s1663 + $0x111] sm:$0xff]
        %v2066 = vld [vmem:[%s1663 + $0x129] sm:$0xff]
        %v2067 = vld [vmem:[%s1663 + $0x131] sm:$0xff]
        %v2068 = vld [vmem:[%s1663 + $0x149] sm:$0xff]
        %v2069 = vld [vmem:[%s1663 + $0x151] sm:$0xff]
        %v2070 = vld [vmem:[%s1663 + $0x169] sm:$0xff]
        %v2071 = vld [vmem:[%s1663 + $0x171] sm:$0xff]
        %v2072 = vld [vmem:[%s1663 + $0x189] sm:$0xff]
        %v2073 = vld [vmem:[%s1663 + $0x191] sm:$0xff]
        %v2074 = vld [vmem:[%s1663 + $0x1a9] sm:$0xff]
        %v2075 = vld [vmem:[%s1663 + $0x1b1] sm:$0xff]
        %v2076 = vld [vmem:[%s1663 + $0x1c9] sm:$0xff]
        %v2077 = vld [vmem:[%s1663 + $0x1d1] sm:$0xff]
        %v2078 = vld [vmem:[%s1663 + $0x1e9] sm:$0xff]
        %v2079 = vld [vmem:[%s1663 + $0x1f1] sm:$0xff]
        %v2080 = vpack.c.bf16 %v2049, %v2048
        %v2081 = vpack.c.bf16 %v2051, %v2050
        %v2082 = vpack.c.bf16 %v2053, %v2052
        %v2083 = vpack.c.bf16 %v2055, %v2054
        %v2084 = vpack.c.bf16 %v2057, %v2056
        %v2085 = vpack.c.bf16 %v2059, %v2058
        %v2086 = vpack.c.bf16 %v2061, %v2060
        %v2087 = vpack.c.bf16 %v2063, %v2062
        %v2088 = vpack.c.bf16 %v2065, %v2064
        %v2089 = vpack.c.bf16 %v2067, %v2066
        %v2090 = vpack.c.bf16 %v2069, %v2068
        %v2091 = vpack.c.bf16 %v2071, %v2070
        %v2092 = vpack.c.bf16 %v2073, %v2072
        %v2093 = vpack.c.bf16 %v2075, %v2074
        %v2094 = vpack.c.bf16 %v2077, %v2076
        %v2095 = vpack.c.bf16 %v2079, %v2078
        %v2112 = vunpack.c.l.b16 %v2080
        %v2113 = vunpack.c.h.b16 %v2080
        %v2114 = vunpack.c.l.b16 %v2081
        %v2115 = vunpack.c.h.b16 %v2081
        %v2116 = vunpack.c.l.b16 %v2082
        %v2117 = vunpack.c.h.b16 %v2082
        %v2118 = vunpack.c.l.b16 %v2083
        %v2119 = vunpack.c.h.b16 %v2083
        %v2120 = vunpack.c.l.b16 %v2084
        %v2121 = vunpack.c.h.b16 %v2084
        %v2122 = vunpack.c.l.b16 %v2085
        %v2123 = vunpack.c.h.b16 %v2085
        %v2124 = vunpack.c.l.b16 %v2086
        %v2125 = vunpack.c.h.b16 %v2086
        %v2126 = vunpack.c.l.b16 %v2087
        %v2127 = vunpack.c.h.b16 %v2087
        %v2128 = vunpack.c.l.b16 %v2088
        %v2129 = vunpack.c.h.b16 %v2088
        %v2130 = vunpack.c.l.b16 %v2089
        %v2131 = vunpack.c.h.b16 %v2089
        %v2132 = vunpack.c.l.b16 %v2090
        %v2133 = vunpack.c.h.b16 %v2090
        %v2134 = vunpack.c.l.b16 %v2091
        %v2135 = vunpack.c.h.b16 %v2091
        %v2136 = vunpack.c.l.b16 %v2092
        %v2137 = vunpack.c.h.b16 %v2092
        %v2138 = vunpack.c.l.b16 %v2093
        %v2139 = vunpack.c.h.b16 %v2093
        %v2140 = vunpack.c.l.b16 %v2094
        %v2141 = vunpack.c.h.b16 %v2094
        %v2142 = vunpack.c.l.b16 %v2095
        %v2143 = vunpack.c.h.b16 %v2095
        %v2144 = vpack.c.b16 %v2112, %v2112
        %v2145 = vpack.c.b16 %v2113, %v2113
        %v2146 = vpack.c.b16 %v2114, %v2114
        %v2147 = vpack.c.b16 %v2115, %v2115
        %v2148 = vpack.c.b16 %v2116, %v2116
        %v2149 = vpack.c.b16 %v2117, %v2117
        %v2150 = vpack.c.b16 %v2118, %v2118
        %v2151 = vpack.c.b16 %v2119, %v2119
        %v2152 = vpack.c.b16 %v2120, %v2120
        %v2153 = vpack.c.b16 %v2121, %v2121
        %v2154 = vpack.c.b16 %v2122, %v2122
        %v2155 = vpack.c.b16 %v2123, %v2123
        %v2156 = vpack.c.b16 %v2124, %v2124
        %v2157 = vpack.c.b16 %v2125, %v2125
        %v2158 = vpack.c.b16 %v2126, %v2126
        %v2159 = vpack.c.b16 %v2127, %v2127
        %v2160 = vpack.c.b16 %v2128, %v2128
        %v2161 = vpack.c.b16 %v2129, %v2129
        %v2162 = vpack.c.b16 %v2130, %v2130
        %v2163 = vpack.c.b16 %v2131, %v2131
        %v2164 = vpack.c.b16 %v2132, %v2132
        %v2165 = vpack.c.b16 %v2133, %v2133
        %v2166 = vpack.c.b16 %v2134, %v2134
        %v2167 = vpack.c.b16 %v2135, %v2135
        %v2168 = vpack.c.b16 %v2136, %v2136
        %v2169 = vpack.c.b16 %v2137, %v2137
        %v2170 = vpack.c.b16 %v2138, %v2138
        %v2171 = vpack.c.b16 %v2139, %v2139
        %v2172 = vpack.c.b16 %v2140, %v2140
        %v2173 = vpack.c.b16 %v2141, %v2141
        %v2174 = vpack.c.b16 %v2142, %v2142
        %v2175 = vpack.c.b16 %v2143, %v2143
        %2208 = vst [vmem:[#allocation3 + $0x20] sm:$0xf] %v2144
        %2209 = vst [vmem:[#allocation3 + $0x44] sm:$0xf] %v2145
        %2210 = vst [vmem:[#allocation3 + $0x68] sm:$0xf] %v2146
        %2211 = vst [vmem:[#allocation3 + $0x8c] sm:$0xf] %v2147
        %2212 = vst [vmem:[#allocation3 + $0xb0] sm:$0xf] %v2148
        %2213 = vst [vmem:[#allocation3 + $0xd4] sm:$0xf] %v2149
        %2214 = vst [vmem:[#allocation3 + $0xf8] sm:$0xf] %v2150
        %2215 = vst [vmem:[#allocation3 + $0x11c] sm:$0xf] %v2151
        %2216 = vst [vmem:[#allocation3 + $0x140] sm:$0xf] %v2152
        %2217 = vst [vmem:[#allocation3 + $0x164] sm:$0xf] %v2153
        %2218 = vst [vmem:[#allocation3 + $0x188] sm:$0xf] %v2154
        %2219 = vst [vmem:[#allocation3 + $0x1ac] sm:$0xf] %v2155
        %2220 = vst [vmem:[#allocation3 + $0x1d0] sm:$0xf] %v2156
        %2221 = vst [vmem:[#allocation3 + $0x1f4] sm:$0xf] %v2157
        %2222 = vst [vmem:[#allocation3 + $0x218] sm:$0xf] %v2158
        %2223 = vst [vmem:[#allocation3 + $0x23c] sm:$0xf] %v2159
        %2224 = vst [vmem:[#allocation3 + $0x260] sm:$0xf] %v2160
        %2225 = vst [vmem:[#allocation3 + $0x284] sm:$0xf] %v2161
        %2226 = vst [vmem:[#allocation3 + $0x2a8] sm:$0xf] %v2162
        %2227 = vst [vmem:[#allocation3 + $0x2cc] sm:$0xf] %v2163
        %2228 = vst [vmem:[#allocation3 + $0x2f0] sm:$0xf] %v2164
        %2229 = vst [vmem:[#allocation3 + $0x314] sm:$0xf] %v2165
        %2230 = vst [vmem:[#allocation3 + $0x338] sm:$0xf] %v2166
        %2231 = vst [vmem:[#allocation3 + $0x35c] sm:$0xf] %v2167
        %2232 = vst [vmem:[#allocation3 + $0x380] sm:$0xf] %v2168
        %2233 = vst [vmem:[#allocation3 + $0x3a4] sm:$0xf] %v2169
        %2234 = vst [vmem:[#allocation3 + $0x3c8] sm:$0xf] %v2170
        %2235 = vst [vmem:[#allocation3 + $0x3ec] sm:$0xf] %v2171
        %2236 = vst [vmem:[#allocation3 + $0x410] sm:$0xf] %v2172
        %2237 = vst [vmem:[#allocation3 + $0x434] sm:$0xf] %v2173
        %2238 = vst [vmem:[#allocation3 + $0x458] sm:$0xf] %v2174
        %2239 = vst [vmem:[#allocation3 + $0x47c] sm:$0xf] %v2175
        %v2240 = vld [vmem:[#allocation3] sm:$0xff]
        %v2241 = vld [vmem:[#allocation3 + $0x8] sm:$0xff]
        %v2242 = vld [vmem:[#allocation3 + $0x10] sm:$0xff]
        %v2243 = vld [vmem:[#allocation3 + $0x18] sm:$0xff]
        %v2244 = vld [vmem:[#allocation3 + $0x20] sm:$0xf]
        %v2245 = vld [vmem:[#allocation3 + $0x24] sm:$0xff]
        %v2246 = vld [vmem:[#allocation3 + $0x2c] sm:$0xff]
        %v2247 = vld [vmem:[#allocation3 + $0x34] sm:$0xff]
        %v2248 = vld [vmem:[#allocation3 + $0x3c] sm:$0xff]
        %v2249 = vld [vmem:[#allocation3 + $0x44] sm:$0xf]
        %v2250 = vld [vmem:[#allocation3 + $0x48] sm:$0xff]
        %v2251 = vld [vmem:[#allocation3 + $0x50] sm:$0xff]
        %v2252 = vld [vmem:[#allocation3 + $0x58] sm:$0xff]
        %v2253 = vld [vmem:[#allocation3 + $0x60] sm:$0xff]
        %v2254 = vld [vmem:[#allocation3 + $0x68] sm:$0xf]
        %v2255 = vld [vmem:[#allocation3 + $0x6c] sm:$0xff]
        %v2256 = vld [vmem:[#allocation3 + $0x74] sm:$0xff]
        %v2257 = vld [vmem:[#allocation3 + $0x7c] sm:$0xff]
        %v2258 = vld [vmem:[#allocation3 + $0x84] sm:$0xff]
        %v2259 = vld [vmem:[#allocation3 + $0x8c] sm:$0xf]
        %v2260 = vld [vmem:[#allocation3 + $0x90] sm:$0xff]
        %v2261 = vld [vmem:[#allocation3 + $0x98] sm:$0xff]
        %v2262 = vld [vmem:[#allocation3 + $0xa0] sm:$0xff]
        %v2263 = vld [vmem:[#allocation3 + $0xa8] sm:$0xff]
        %v2264 = vld [vmem:[#allocation3 + $0xb0] sm:$0xf]
        %v2265 = vld [vmem:[#allocation3 + $0xb4] sm:$0xff]
        %v2266 = vld [vmem:[#allocation3 + $0xbc] sm:$0xff]
        %v2267 = vld [vmem:[#allocation3 + $0xc4] sm:$0xff]
        %v2268 = vld [vmem:[#allocation3 + $0xcc] sm:$0xff]
        %v2269 = vld [vmem:[#allocation3 + $0xd4] sm:$0xf]
        %v2270 = vld [vmem:[#allocation3 + $0xd8] sm:$0xff]
        %v2271 = vld [vmem:[#allocation3 + $0xe0] sm:$0xff]
        %v2272 = vld [vmem:[#allocation3 + $0xe8] sm:$0xff]
        %v2273 = vld [vmem:[#allocation3 + $0xf0] sm:$0xff]
        %v2274 = vld [vmem:[#allocation3 + $0xf8] sm:$0xf]
        %v2275 = vld [vmem:[#allocation3 + $0xfc] sm:$0xff]
        %v2276 = vld [vmem:[#allocation3 + $0x104] sm:$0xff]
        %v2277 = vld [vmem:[#allocation3 + $0x10c] sm:$0xff]
        %v2278 = vld [vmem:[#allocation3 + $0x114] sm:$0xff]
        %v2279 = vld [vmem:[#allocation3 + $0x11c] sm:$0xf]
        %v2280 = vld [vmem:[#allocation3 + $0x120] sm:$0xff]
        %v2281 = vld [vmem:[#allocation3 + $0x128] sm:$0xff]
        %v2282 = vld [vmem:[#allocation3 + $0x130] sm:$0xff]
        %v2283 = vld [vmem:[#allocation3 + $0x138] sm:$0xff]
        %v2284 = vld [vmem:[#allocation3 + $0x140] sm:$0xf]
        %v2285 = vld [vmem:[#allocation3 + $0x144] sm:$0xff]
        %v2286 = vld [vmem:[#allocation3 + $0x14c] sm:$0xff]
        %v2287 = vld [vmem:[#allocation3 + $0x154] sm:$0xff]
        %v2288 = vld [vmem:[#allocation3 + $0x15c] sm:$0xff]
        %v2289 = vld [vmem:[#allocation3 + $0x164] sm:$0xf]
        %v2290 = vld [vmem:[#allocation3 + $0x168] sm:$0xff]
        %v2291 = vld [vmem:[#allocation3 + $0x170] sm:$0xff]
        %v2292 = vld [vmem:[#allocation3 + $0x178] sm:$0xff]
        %v2293 = vld [vmem:[#allocation3 + $0x180] sm:$0xff]
        %v2294 = vld [vmem:[#allocation3 + $0x188] sm:$0xf]
        %v2295 = vld [vmem:[#allocation3 + $0x18c] sm:$0xff]
        %v2296 = vld [vmem:[#allocation3 + $0x194] sm:$0xff]
        %v2297 = vld [vmem:[#allocation3 + $0x19c] sm:$0xff]
        %v2298 = vld [vmem:[#allocation3 + $0x1a4] sm:$0xff]
        %v2299 = vld [vmem:[#allocation3 + $0x1ac] sm:$0xf]
        %v2300 = vld [vmem:[#allocation3 + $0x1b0] sm:$0xff]
        %v2301 = vld [vmem:[#allocation3 + $0x1b8] sm:$0xff]
        %v2302 = vld [vmem:[#allocation3 + $0x1c0] sm:$0xff]
        %v2303 = vld [vmem:[#allocation3 + $0x1c8] sm:$0xff]
        %v2304 = vld [vmem:[#allocation3 + $0x1d0] sm:$0xf]
        %v2305 = vld [vmem:[#allocation3 + $0x1d4] sm:$0xff]
        %v2306 = vld [vmem:[#allocation3 + $0x1dc] sm:$0xff]
        %v2307 = vld [vmem:[#allocation3 + $0x1e4] sm:$0xff]
        %v2308 = vld [vmem:[#allocation3 + $0x1ec] sm:$0xff]
        %v2309 = vld [vmem:[#allocation3 + $0x1f4] sm:$0xf]
        %v2310 = vld [vmem:[#allocation3 + $0x1f8] sm:$0xff]
        %v2311 = vld [vmem:[#allocation3 + $0x200] sm:$0xff]
        %v2312 = vld [vmem:[#allocation3 + $0x208] sm:$0xff]
        %v2313 = vld [vmem:[#allocation3 + $0x210] sm:$0xff]
        %v2314 = vld [vmem:[#allocation3 + $0x218] sm:$0xf]
        %v2315 = vld [vmem:[#allocation3 + $0x21c] sm:$0xff]
        %v2316 = vld [vmem:[#allocation3 + $0x224] sm:$0xff]
        %v2317 = vld [vmem:[#allocation3 + $0x22c] sm:$0xff]
        %v2318 = vld [vmem:[#allocation3 + $0x234] sm:$0xff]
        %v2319 = vld [vmem:[#allocation3 + $0x23c] sm:$0xf]
        %v2320 = vld [vmem:[#allocation3 + $0x240] sm:$0xff]
        %v2321 = vld [vmem:[#allocation3 + $0x248] sm:$0xff]
        %v2322 = vld [vmem:[#allocation3 + $0x250] sm:$0xff]
        %v2323 = vld [vmem:[#allocation3 + $0x258] sm:$0xff]
        %v2324 = vld [vmem:[#allocation3 + $0x260] sm:$0xf]
        %v2325 = vld [vmem:[#allocation3 + $0x264] sm:$0xff]
        %v2326 = vld [vmem:[#allocation3 + $0x26c] sm:$0xff]
        %v2327 = vld [vmem:[#allocation3 + $0x274] sm:$0xff]
        %v2328 = vld [vmem:[#allocation3 + $0x27c] sm:$0xff]
        %v2329 = vld [vmem:[#allocation3 + $0x284] sm:$0xf]
        %v2330 = vld [vmem:[#allocation3 + $0x288] sm:$0xff]
        %v2331 = vld [vmem:[#allocation3 + $0x290] sm:$0xff]
        %v2332 = vld [vmem:[#allocation3 + $0x298] sm:$0xff]
        %v2333 = vld [vmem:[#allocation3 + $0x2a0] sm:$0xff]
        %v2334 = vld [vmem:[#allocation3 + $0x2a8] sm:$0xf]
        %v2335 = vld [vmem:[#allocation3 + $0x2ac] sm:$0xff]
        %v2336 = vld [vmem:[#allocation3 + $0x2b4] sm:$0xff]
        %v2337 = vld [vmem:[#allocation3 + $0x2bc] sm:$0xff]
        %v2338 = vld [vmem:[#allocation3 + $0x2c4] sm:$0xff]
        %v2339 = vld [vmem:[#allocation3 + $0x2cc] sm:$0xf]
        %v2340 = vld [vmem:[#allocation3 + $0x2d0] sm:$0xff]
        %v2341 = vld [vmem:[#allocation3 + $0x2d8] sm:$0xff]
        %v2342 = vld [vmem:[#allocation3 + $0x2e0] sm:$0xff]
        %v2343 = vld [vmem:[#allocation3 + $0x2e8] sm:$0xff]
        %v2344 = vld [vmem:[#allocation3 + $0x2f0] sm:$0xf]
        %v2345 = vld [vmem:[#allocation3 + $0x2f4] sm:$0xff]
        %v2346 = vld [vmem:[#allocation3 + $0x2fc] sm:$0xff]
        %v2347 = vld [vmem:[#allocation3 + $0x304] sm:$0xff]
        %v2348 = vld [vmem:[#allocation3 + $0x30c] sm:$0xff]
        %v2349 = vld [vmem:[#allocation3 + $0x314] sm:$0xf]
        %v2350 = vld [vmem:[#allocation3 + $0x318] sm:$0xff]
        %v2351 = vld [vmem:[#allocation3 + $0x320] sm:$0xff]
        %v2352 = vld [vmem:[#allocation3 + $0x328] sm:$0xff]
        %v2353 = vld [vmem:[#allocation3 + $0x330] sm:$0xff]
        %v2354 = vld [vmem:[#allocation3 + $0x338] sm:$0xf]
        %v2355 = vld [vmem:[#allocation3 + $0x33c] sm:$0xff]
        %v2356 = vld [vmem:[#allocation3 + $0x344] sm:$0xff]
        %v2357 = vld [vmem:[#allocation3 + $0x34c] sm:$0xff]
        %v2358 = vld [vmem:[#allocation3 + $0x354] sm:$0xff]
        %v2359 = vld [vmem:[#allocation3 + $0x35c] sm:$0xf]
        %v2360 = vld [vmem:[#allocation3 + $0x360] sm:$0xff]
        %v2361 = vld [vmem:[#allocation3 + $0x368] sm:$0xff]
        %v2362 = vld [vmem:[#allocation3 + $0x370] sm:$0xff]
        %v2363 = vld [vmem:[#allocation3 + $0x378] sm:$0xff]
        %v2364 = vld [vmem:[#allocation3 + $0x380] sm:$0xf]
        %v2365 = vld [vmem:[#allocation3 + $0x384] sm:$0xff]
        %v2366 = vld [vmem:[#allocation3 + $0x38c] sm:$0xff]
        %v2367 = vld [vmem:[#allocation3 + $0x394] sm:$0xff]
        %v2368 = vld [vmem:[#allocation3 + $0x39c] sm:$0xff]
        %v2369 = vld [vmem:[#allocation3 + $0x3a4] sm:$0xf]
        %v2370 = vld [vmem:[#allocation3 + $0x3a8] sm:$0xff]
        %v2371 = vld [vmem:[#allocation3 + $0x3b0] sm:$0xff]
        %v2372 = vld [vmem:[#allocation3 + $0x3b8] sm:$0xff]
        %v2373 = vld [vmem:[#allocation3 + $0x3c0] sm:$0xff]
        %v2374 = vld [vmem:[#allocation3 + $0x3c8] sm:$0xf]
        %v2375 = vld [vmem:[#allocation3 + $0x3cc] sm:$0xff]
        %v2376 = vld [vmem:[#allocation3 + $0x3d4] sm:$0xff]
        %v2377 = vld [vmem:[#allocation3 + $0x3dc] sm:$0xff]
        %v2378 = vld [vmem:[#allocation3 + $0x3e4] sm:$0xff]
        %v2379 = vld [vmem:[#allocation3 + $0x3ec] sm:$0xf]
        %v2380 = vld [vmem:[#allocation3 + $0x3f0] sm:$0xff]
        %v2381 = vld [vmem:[#allocation3 + $0x3f8] sm:$0xff]
        %v2382 = vld [vmem:[#allocation3 + $0x400] sm:$0xff]
        %v2383 = vld [vmem:[#allocation3 + $0x408] sm:$0xff]
        %v2384 = vld [vmem:[#allocation3 + $0x410] sm:$0xf]
        %v2385 = vld [vmem:[#allocation3 + $0x414] sm:$0xff]
        %v2386 = vld [vmem:[#allocation3 + $0x41c] sm:$0xff]
        %v2387 = vld [vmem:[#allocation3 + $0x424] sm:$0xff]
        %v2388 = vld [vmem:[#allocation3 + $0x42c] sm:$0xff]
        %v2389 = vld [vmem:[#allocation3 + $0x434] sm:$0xf]
        %v2390 = vld [vmem:[#allocation3 + $0x438] sm:$0xff]
        %v2391 = vld [vmem:[#allocation3 + $0x440] sm:$0xff]
        %v2392 = vld [vmem:[#allocation3 + $0x448] sm:$0xff]
        %v2393 = vld [vmem:[#allocation3 + $0x450] sm:$0xff]
        %v2394 = vld [vmem:[#allocation3 + $0x458] sm:$0xf]
        %v2395 = vld [vmem:[#allocation3 + $0x45c] sm:$0xff]
        %v2396 = vld [vmem:[#allocation3 + $0x464] sm:$0xff]
        %v2397 = vld [vmem:[#allocation3 + $0x46c] sm:$0xff]
        %v2398 = vld [vmem:[#allocation3 + $0x474] sm:$0xff]
        %v2399 = vld [vmem:[#allocation3 + $0x47c] sm:$0xf]
        %v2400 = vld [vmem:[#allocation7] sm:$0xf]
        %v2401 = vld [vmem:[#allocation7 + $0x4] sm:$0xf]
        %v2402 = vld [vmem:[#allocation7 + $0x8] sm:$0xf]
        %v2403 = vld [vmem:[#allocation7 + $0xc] sm:$0xf]
        %v2404 = vld [vmem:[#allocation7 + $0x10] sm:$0xf]
        %v2405 = vld [vmem:[#allocation7 + $0x14] sm:$0xf]
        %v2406 = vld [vmem:[#allocation7 + $0x18] sm:$0xf]
        %v2407 = vld [vmem:[#allocation7 + $0x1c] sm:$0xf]
        %v2408 = vld [vmem:[#allocation7 + $0x20] sm:$0xf]
        %v2409 = vld [vmem:[#allocation7 + $0x24] sm:$0xf]
        %v2410 = vld [vmem:[#allocation7 + $0x28] sm:$0xf]
        %v2411 = vld [vmem:[#allocation7 + $0x2c] sm:$0xf]
        %v2412 = vld [vmem:[#allocation7 + $0x30] sm:$0xf]
        %v2413 = vld [vmem:[#allocation7 + $0x34] sm:$0xf]
        %v2414 = vld [vmem:[#allocation7 + $0x38] sm:$0xf]
        %v2415 = vld [vmem:[#allocation7 + $0x3c] sm:$0xf]
        %v2416 = vld [vmem:[#allocation7 + $0x40] sm:$0xf]
        %v2417 = vld [vmem:[#allocation7 + $0x44] sm:$0xf]
        %v2418 = vld [vmem:[#allocation7 + $0x48] sm:$0xf]
        %v2419 = vld [vmem:[#allocation7 + $0x4c] sm:$0xf]
        %v2420 = vld [vmem:[#allocation7 + $0x50] sm:$0xf]
        %v2421 = vld [vmem:[#allocation7 + $0x54] sm:$0xf]
        %v2422 = vld [vmem:[#allocation7 + $0x58] sm:$0xf]
        %v2423 = vld [vmem:[#allocation7 + $0x5c] sm:$0xf]
        %v2424 = vld [vmem:[#allocation7 + $0x60] sm:$0xf]
        %v2425 = vld [vmem:[#allocation7 + $0x64] sm:$0xf]
        %v2426 = vld [vmem:[#allocation7 + $0x68] sm:$0xf]
        %v2427 = vld [vmem:[#allocation7 + $0x6c] sm:$0xf]
        %v2428 = vld [vmem:[#allocation7 + $0x70] sm:$0xf]
        %v2429 = vld [vmem:[#allocation7 + $0x74] sm:$0xf]
        %v2430 = vld [vmem:[#allocation7 + $0x78] sm:$0xf]
        %v2431 = vld [vmem:[#allocation7 + $0x7c] sm:$0xf]
        %v2432 = vld [vmem:[#allocation7 + $0x80] sm:$0xf]
        %v2433 = vld [vmem:[#allocation7 + $0x84] sm:$0xf]
        %v2434 = vld [vmem:[#allocation7 + $0x88] sm:$0xf]
        %v2435 = vld [vmem:[#allocation7 + $0x8c] sm:$0xf]
        %v2436 = vld [vmem:[#allocation7 + $0x90] sm:$0xf]
        %v2437 = vld [vmem:[#allocation7 + $0x94] sm:$0xf]
        %v2438 = vld [vmem:[#allocation7 + $0x98] sm:$0xf]
        %v2439 = vld [vmem:[#allocation7 + $0x9c] sm:$0xf]
        %v2440 = vld [vmem:[#allocation7 + $0xa0] sm:$0xf]
        %v2441 = vld [vmem:[#allocation7 + $0xa4] sm:$0xf]
        %v2442 = vld [vmem:[#allocation7 + $0xa8] sm:$0xf]
        %v2443 = vld [vmem:[#allocation7 + $0xac] sm:$0xf]
        %v2444 = vld [vmem:[#allocation7 + $0xb0] sm:$0xf]
        %v2445 = vld [vmem:[#allocation7 + $0xb4] sm:$0xf]
        %v2446 = vld [vmem:[#allocation7 + $0xb8] sm:$0xf]
        %v2447 = vld [vmem:[#allocation7 + $0xbc] sm:$0xf]
        %v2448 = vld [vmem:[#allocation7 + $0xc0] sm:$0xf]
        %v2449 = vld [vmem:[#allocation7 + $0xc4] sm:$0xf]
        %v2450 = vld [vmem:[#allocation7 + $0xc8] sm:$0xf]
        %v2451 = vld [vmem:[#allocation7 + $0xcc] sm:$0xf]
        %v2452 = vld [vmem:[#allocation7 + $0xd0] sm:$0xf]
        %v2453 = vld [vmem:[#allocation7 + $0xd4] sm:$0xf]
        %v2454 = vld [vmem:[#allocation7 + $0xd8] sm:$0xf]
        %v2455 = vld [vmem:[#allocation7 + $0xdc] sm:$0xf]
        %v2456 = vld [vmem:[#allocation7 + $0xe0] sm:$0xf]
        %v2457 = vld [vmem:[#allocation7 + $0xe4] sm:$0xf]
        %v2458 = vld [vmem:[#allocation7 + $0xe8] sm:$0xf]
        %v2459 = vld [vmem:[#allocation7 + $0xec] sm:$0xf]
        %v2460 = vld [vmem:[#allocation7 + $0xf0] sm:$0xf]
        %v2461 = vld [vmem:[#allocation7 + $0xf4] sm:$0xf]
        %v2462 = vld [vmem:[#allocation7 + $0xf8] sm:$0xf]
        %v2463 = vld [vmem:[#allocation7 + $0xfc] sm:$0xf]
        %v2464 = vld [vmem:[#allocation7 + $0x100] sm:$0xf]
        %v2465 = vld [vmem:[#allocation7 + $0x104] sm:$0xf]
        %v2466 = vld [vmem:[#allocation7 + $0x108] sm:$0xf]
        %v2467 = vld [vmem:[#allocation7 + $0x10c] sm:$0xf]
        %v2468 = vld [vmem:[#allocation7 + $0x110] sm:$0xf]
        %v2469 = vld [vmem:[#allocation7 + $0x114] sm:$0xf]
        %v2470 = vld [vmem:[#allocation7 + $0x118] sm:$0xf]
        %v2471 = vld [vmem:[#allocation7 + $0x11c] sm:$0xf]
        %v2472 = vld [vmem:[#allocation7 + $0x120] sm:$0xf]
        %v2473 = vld [vmem:[#allocation7 + $0x124] sm:$0xf]
        %v2474 = vld [vmem:[#allocation7 + $0x128] sm:$0xf]
        %v2475 = vld [vmem:[#allocation7 + $0x12c] sm:$0xf]
        %v2476 = vld [vmem:[#allocation7 + $0x130] sm:$0xf]
        %v2477 = vld [vmem:[#allocation7 + $0x134] sm:$0xf]
        %v2478 = vld [vmem:[#allocation7 + $0x138] sm:$0xf]
        %v2479 = vld [vmem:[#allocation7 + $0x13c] sm:$0xf]
        %v2480 = vld [vmem:[#allocation7 + $0x140] sm:$0xf]
        %v2481 = vld [vmem:[#allocation7 + $0x144] sm:$0xf]
        %v2482 = vld [vmem:[#allocation7 + $0x148] sm:$0xf]
        %v2483 = vld [vmem:[#allocation7 + $0x14c] sm:$0xf]
        %v2484 = vld [vmem:[#allocation7 + $0x150] sm:$0xf]
        %v2485 = vld [vmem:[#allocation7 + $0x154] sm:$0xf]
        %v2486 = vld [vmem:[#allocation7 + $0x158] sm:$0xf]
        %v2487 = vld [vmem:[#allocation7 + $0x15c] sm:$0xf]
        %v2488 = vld [vmem:[#allocation7 + $0x160] sm:$0xf]
        %v2489 = vld [vmem:[#allocation7 + $0x164] sm:$0xf]
        %v2490 = vld [vmem:[#allocation7 + $0x168] sm:$0xf]
        %v2491 = vld [vmem:[#allocation7 + $0x16c] sm:$0xf]
        %v2492 = vld [vmem:[#allocation7 + $0x170] sm:$0xf]
        %v2493 = vld [vmem:[#allocation7 + $0x174] sm:$0xf]
        %v2494 = vld [vmem:[#allocation7 + $0x178] sm:$0xf]
        %v2495 = vld [vmem:[#allocation7 + $0x17c] sm:$0xf]
        %v2496 = vld [vmem:[#allocation7 + $0x180] sm:$0xf]
        %v2497 = vld [vmem:[#allocation7 + $0x184] sm:$0xf]
        %v2498 = vld [vmem:[#allocation7 + $0x188] sm:$0xf]
        %v2499 = vld [vmem:[#allocation7 + $0x18c] sm:$0xf]
        %v2500 = vld [vmem:[#allocation7 + $0x190] sm:$0xf]
        %v2501 = vld [vmem:[#allocation7 + $0x194] sm:$0xf]
        %v2502 = vld [vmem:[#allocation7 + $0x198] sm:$0xf]
        %v2503 = vld [vmem:[#allocation7 + $0x19c] sm:$0xf]
        %v2504 = vld [vmem:[#allocation7 + $0x1a0] sm:$0xf]
        %v2505 = vld [vmem:[#allocation7 + $0x1a4] sm:$0xf]
        %v2506 = vld [vmem:[#allocation7 + $0x1a8] sm:$0xf]
        %v2507 = vld [vmem:[#allocation7 + $0x1ac] sm:$0xf]
        %v2508 = vld [vmem:[#allocation7 + $0x1b0] sm:$0xf]
        %v2509 = vld [vmem:[#allocation7 + $0x1b4] sm:$0xf]
        %v2510 = vld [vmem:[#allocation7 + $0x1b8] sm:$0xf]
        %v2511 = vld [vmem:[#allocation7 + $0x1bc] sm:$0xf]
        %v2512 = vld [vmem:[#allocation7 + $0x1c0] sm:$0xf]
        %v2513 = vld [vmem:[#allocation7 + $0x1c4] sm:$0xf]
        %v2514 = vld [vmem:[#allocation7 + $0x1c8] sm:$0xf]
        %v2515 = vld [vmem:[#allocation7 + $0x1cc] sm:$0xf]
        %v2516 = vld [vmem:[#allocation7 + $0x1d0] sm:$0xf]
        %v2517 = vld [vmem:[#allocation7 + $0x1d4] sm:$0xf]
        %v2518 = vld [vmem:[#allocation7 + $0x1d8] sm:$0xf]
        %v2519 = vld [vmem:[#allocation7 + $0x1dc] sm:$0xf]
        %v2520 = vld [vmem:[#allocation7 + $0x1e0] sm:$0xf]
        %v2521 = vld [vmem:[#allocation7 + $0x1e4] sm:$0xf]
        %v2522 = vld [vmem:[#allocation7 + $0x1e8] sm:$0xf]
        %v2523 = vld [vmem:[#allocation7 + $0x1ec] sm:$0xf]
        %v2524 = vld [vmem:[#allocation7 + $0x1f0] sm:$0xf]
        %v2525 = vld [vmem:[#allocation7 + $0x1f4] sm:$0xf]
        %v2526 = vld [vmem:[#allocation7 + $0x1f8] sm:$0xf]
        %v2527 = vld [vmem:[#allocation7 + $0x1fc] sm:$0xf]
        %v2528 = vld [vmem:[#allocation7 + $0x200] sm:$0xf]
        %v2529 = vld [vmem:[#allocation7 + $0x204] sm:$0xf]
        %v2530 = vld [vmem:[#allocation7 + $0x208] sm:$0xf]
        %v2531 = vld [vmem:[#allocation7 + $0x20c] sm:$0xf]
        %v2532 = vld [vmem:[#allocation7 + $0x210] sm:$0xf]
        %v2533 = vld [vmem:[#allocation7 + $0x214] sm:$0xf]
        %v2534 = vld [vmem:[#allocation7 + $0x218] sm:$0xf]
        %v2535 = vld [vmem:[#allocation7 + $0x21c] sm:$0xf]
        %v2536 = vld [vmem:[#allocation7 + $0x220] sm:$0xf]
        %v2537 = vld [vmem:[#allocation7 + $0x224] sm:$0xf]
        %v2538 = vld [vmem:[#allocation7 + $0x228] sm:$0xf]
        %v2539 = vld [vmem:[#allocation7 + $0x22c] sm:$0xf]
        %v2540 = vld [vmem:[#allocation7 + $0x230] sm:$0xf]
        %v2541 = vld [vmem:[#allocation7 + $0x234] sm:$0xf]
        %v2542 = vld [vmem:[#allocation7 + $0x238] sm:$0xf]
        %v2543 = vld [vmem:[#allocation7 + $0x23c] sm:$0xf]
        %v2544 = vld [vmem:[%s2] sm:$0x1]
        %v2546 = vlaneseq
        %v2547 = vshrl.u32 %v2546, 7
        %v2548 = vsub.s32 0, %v2547
        %v2549 = vrot.slane %v2544, %v2548
        %v2711 = vunpack.c.l.b16 %v2240
        %v2712 = vunpack.c.h.b16 %v2240
        %v2713 = vunpack.c.l.b16 %v2241
        %v2714 = vunpack.c.h.b16 %v2241
        %v2715 = vunpack.c.l.b16 %v2242
        %v2716 = vunpack.c.h.b16 %v2242
        %v2717 = vunpack.c.l.b16 %v2243
        %v2718 = vunpack.c.h.b16 %v2243
        %v2719 = vunpack.c.l.b16 %v2244
        %v2720 = vunpack.c.l.b16 %v2245
        %v2721 = vunpack.c.h.b16 %v2245
        %v2722 = vunpack.c.l.b16 %v2246
        %v2723 = vunpack.c.h.b16 %v2246
        %v2724 = vunpack.c.l.b16 %v2247
        %v2725 = vunpack.c.h.b16 %v2247
        %v2726 = vunpack.c.l.b16 %v2248
        %v2727 = vunpack.c.h.b16 %v2248
        %v2728 = vunpack.c.l.b16 %v2249
        %v2729 = vunpack.c.l.b16 %v2250
        %v2730 = vunpack.c.h.b16 %v2250
        %v2731 = vunpack.c.l.b16 %v2251
        %v2732 = vunpack.c.h.b16 %v2251
        %v2733 = vunpack.c.l.b16 %v2252
        %v2734 = vunpack.c.h.b16 %v2252
        %v2735 = vunpack.c.l.b16 %v2253
        %v2736 = vunpack.c.h.b16 %v2253
        %v2737 = vunpack.c.l.b16 %v2254
        %v2738 = vunpack.c.l.b16 %v2255
        %v2739 = vunpack.c.h.b16 %v2255
        %v2740 = vunpack.c.l.b16 %v2256
        %v2741 = vunpack.c.h.b16 %v2256
        %v2742 = vunpack.c.l.b16 %v2257
        %v2743 = vunpack.c.h.b16 %v2257
        %v2744 = vunpack.c.l.b16 %v2258
        %v2745 = vunpack.c.h.b16 %v2258
        %v2746 = vunpack.c.l.b16 %v2259
        %v2747 = vunpack.c.l.b16 %v2260
        %v2748 = vunpack.c.h.b16 %v2260
        %v2749 = vunpack.c.l.b16 %v2261
        %v2750 = vunpack.c.h.b16 %v2261
        %v2751 = vunpack.c.l.b16 %v2262
        %v2752 = vunpack.c.h.b16 %v2262
        %v2753 = vunpack.c.l.b16 %v2263
        %v2754 = vunpack.c.h.b16 %v2263
        %v2755 = vunpack.c.l.b16 %v2264
        %v2756 = vunpack.c.l.b16 %v2265
        %v2757 = vunpack.c.h.b16 %v2265
        %v2758 = vunpack.c.l.b16 %v2266
        %v2759 = vunpack.c.h.b16 %v2266
        %v2760 = vunpack.c.l.b16 %v2267
        %v2761 = vunpack.c.h.b16 %v2267
        %v2762 = vunpack.c.l.b16 %v2268
        %v2763 = vunpack.c.h.b16 %v2268
        %v2764 = vunpack.c.l.b16 %v2269
        %v2765 = vunpack.c.l.b16 %v2270
        %v2766 = vunpack.c.h.b16 %v2270
        %v2767 = vunpack.c.l.b16 %v2271
        %v2768 = vunpack.c.h.b16 %v2271
        %v2769 = vunpack.c.l.b16 %v2272
        %v2770 = vunpack.c.h.b16 %v2272
        %v2771 = vunpack.c.l.b16 %v2273
        %v2772 = vunpack.c.h.b16 %v2273
        %v2773 = vunpack.c.l.b16 %v2274
        %v2774 = vunpack.c.l.b16 %v2275
        %v2775 = vunpack.c.h.b16 %v2275
        %v2776 = vunpack.c.l.b16 %v2276
        %v2777 = vunpack.c.h.b16 %v2276
        %v2778 = vunpack.c.l.b16 %v2277
        %v2779 = vunpack.c.h.b16 %v2277
        %v2780 = vunpack.c.l.b16 %v2278
        %v2781 = vunpack.c.h.b16 %v2278
        %v2782 = vunpack.c.l.b16 %v2279
        %v2783 = vunpack.c.l.b16 %v2280
        %v2784 = vunpack.c.h.b16 %v2280
        %v2785 = vunpack.c.l.b16 %v2281
        %v2786 = vunpack.c.h.b16 %v2281
        %v2787 = vunpack.c.l.b16 %v2282
        %v2788 = vunpack.c.h.b16 %v2282
        %v2789 = vunpack.c.l.b16 %v2283
        %v2790 = vunpack.c.h.b16 %v2283
        %v2791 = vunpack.c.l.b16 %v2284
        %v2792 = vunpack.c.l.b16 %v2285
        %v2793 = vunpack.c.h.b16 %v2285
        %v2794 = vunpack.c.l.b16 %v2286
        %v2795 = vunpack.c.h.b16 %v2286
        %v2796 = vunpack.c.l.b16 %v2287
        %v2797 = vunpack.c.h.b16 %v2287
        %v2798 = vunpack.c.l.b16 %v2288
        %v2799 = vunpack.c.h.b16 %v2288
        %v2800 = vunpack.c.l.b16 %v2289
        %v2801 = vunpack.c.l.b16 %v2290
        %v2802 = vunpack.c.h.b16 %v2290
        %v2803 = vunpack.c.l.b16 %v2291
        %v2804 = vunpack.c.h.b16 %v2291
        %v2805 = vunpack.c.l.b16 %v2292
        %v2806 = vunpack.c.h.b16 %v2292
        %v2807 = vunpack.c.l.b16 %v2293
        %v2808 = vunpack.c.h.b16 %v2293
        %v2809 = vunpack.c.l.b16 %v2294
        %v2810 = vunpack.c.l.b16 %v2295
        %v2811 = vunpack.c.h.b16 %v2295
        %v2812 = vunpack.c.l.b16 %v2296
        %v2813 = vunpack.c.h.b16 %v2296
        %v2814 = vunpack.c.l.b16 %v2297
        %v2815 = vunpack.c.h.b16 %v2297
        %v2816 = vunpack.c.l.b16 %v2298
        %v2817 = vunpack.c.h.b16 %v2298
        %v2818 = vunpack.c.l.b16 %v2299
        %v2819 = vunpack.c.l.b16 %v2300
        %v2820 = vunpack.c.h.b16 %v2300
        %v2821 = vunpack.c.l.b16 %v2301
        %v2822 = vunpack.c.h.b16 %v2301
        %v2823 = vunpack.c.l.b16 %v2302
        %v2824 = vunpack.c.h.b16 %v2302
        %v2825 = vunpack.c.l.b16 %v2303
        %v2826 = vunpack.c.h.b16 %v2303
        %v2827 = vunpack.c.l.b16 %v2304
        %v2828 = vunpack.c.l.b16 %v2305
        %v2829 = vunpack.c.h.b16 %v2305
        %v2830 = vunpack.c.l.b16 %v2306
        %v2831 = vunpack.c.h.b16 %v2306
        %v2832 = vunpack.c.l.b16 %v2307
        %v2833 = vunpack.c.h.b16 %v2307
        %v2834 = vunpack.c.l.b16 %v2308
        %v2835 = vunpack.c.h.b16 %v2308
        %v2836 = vunpack.c.l.b16 %v2309
        %v2837 = vunpack.c.l.b16 %v2310
        %v2838 = vunpack.c.h.b16 %v2310
        %v2839 = vunpack.c.l.b16 %v2311
        %v2840 = vunpack.c.h.b16 %v2311
        %v2841 = vunpack.c.l.b16 %v2312
        %v2842 = vunpack.c.h.b16 %v2312
        %v2843 = vunpack.c.l.b16 %v2313
        %v2844 = vunpack.c.h.b16 %v2313
        %v2845 = vunpack.c.l.b16 %v2314
        %v2846 = vunpack.c.l.b16 %v2315
        %v2847 = vunpack.c.h.b16 %v2315
        %v2848 = vunpack.c.l.b16 %v2316
        %v2849 = vunpack.c.h.b16 %v2316
        %v2850 = vunpack.c.l.b16 %v2317
        %v2851 = vunpack.c.h.b16 %v2317
        %v2852 = vunpack.c.l.b16 %v2318
        %v2853 = vunpack.c.h.b16 %v2318
        %v2854 = vunpack.c.l.b16 %v2319
        %v2855 = vunpack.c.l.b16 %v2320
        %v2856 = vunpack.c.h.b16 %v2320
        %v2857 = vunpack.c.l.b16 %v2321
        %v2858 = vunpack.c.h.b16 %v2321
        %v2859 = vunpack.c.l.b16 %v2322
        %v2860 = vunpack.c.h.b16 %v2322
        %v2861 = vunpack.c.l.b16 %v2323
        %v2862 = vunpack.c.h.b16 %v2323
        %v2863 = vunpack.c.l.b16 %v2324
        %v2864 = vunpack.c.l.b16 %v2325
        %v2865 = vunpack.c.h.b16 %v2325
        %v2866 = vunpack.c.l.b16 %v2326
        %v2867 = vunpack.c.h.b16 %v2326
        %v2868 = vunpack.c.l.b16 %v2327
        %v2869 = vunpack.c.h.b16 %v2327
        %v2870 = vunpack.c.l.b16 %v2328
        %v2871 = vunpack.c.h.b16 %v2328
        %v2872 = vunpack.c.l.b16 %v2329
        %v2873 = vunpack.c.l.b16 %v2330
        %v2874 = vunpack.c.h.b16 %v2330
        %v2875 = vunpack.c.l.b16 %v2331
        %v2876 = vunpack.c.h.b16 %v2331
        %v2877 = vunpack.c.l.b16 %v2332
        %v2878 = vunpack.c.h.b16 %v2332
        %v2879 = vunpack.c.l.b16 %v2333
        %v2880 = vunpack.c.h.b16 %v2333
        %v2881 = vunpack.c.l.b16 %v2334
        %v2882 = vunpack.c.l.b16 %v2335
        %v2883 = vunpack.c.h.b16 %v2335
        %v2884 = vunpack.c.l.b16 %v2336
        %v2885 = vunpack.c.h.b16 %v2336
        %v2886 = vunpack.c.l.b16 %v2337
        %v2887 = vunpack.c.h.b16 %v2337
        %v2888 = vunpack.c.l.b16 %v2338
        %v2889 = vunpack.c.h.b16 %v2338
        %v2890 = vunpack.c.l.b16 %v2339
        %v2891 = vunpack.c.l.b16 %v2340
        %v2892 = vunpack.c.h.b16 %v2340
        %v2893 = vunpack.c.l.b16 %v2341
        %v2894 = vunpack.c.h.b16 %v2341
        %v2895 = vunpack.c.l.b16 %v2342
        %v2896 = vunpack.c.h.b16 %v2342
        %v2897 = vunpack.c.l.b16 %v2343
        %v2898 = vunpack.c.h.b16 %v2343
        %v2899 = vunpack.c.l.b16 %v2344
        %v2900 = vunpack.c.l.b16 %v2345
        %v2901 = vunpack.c.h.b16 %v2345
        %v2902 = vunpack.c.l.b16 %v2346
        %v2903 = vunpack.c.h.b16 %v2346
        %v2904 = vunpack.c.l.b16 %v2347
        %v2905 = vunpack.c.h.b16 %v2347
        %v2906 = vunpack.c.l.b16 %v2348
        %v2907 = vunpack.c.h.b16 %v2348
        %v2908 = vunpack.c.l.b16 %v2349
        %v2909 = vunpack.c.l.b16 %v2350
        %v2910 = vunpack.c.h.b16 %v2350
        %v2911 = vunpack.c.l.b16 %v2351
        %v2912 = vunpack.c.h.b16 %v2351
        %v2913 = vunpack.c.l.b16 %v2352
        %v2914 = vunpack.c.h.b16 %v2352
        %v2915 = vunpack.c.l.b16 %v2353
        %v2916 = vunpack.c.h.b16 %v2353
        %v2917 = vunpack.c.l.b16 %v2354
        %v2918 = vunpack.c.l.b16 %v2355
        %v2919 = vunpack.c.h.b16 %v2355
        %v2920 = vunpack.c.l.b16 %v2356
        %v2921 = vunpack.c.h.b16 %v2356
        %v2922 = vunpack.c.l.b16 %v2357
        %v2923 = vunpack.c.h.b16 %v2357
        %v2924 = vunpack.c.l.b16 %v2358
        %v2925 = vunpack.c.h.b16 %v2358
        %v2926 = vunpack.c.l.b16 %v2359
        %v2927 = vunpack.c.l.b16 %v2360
        %v2928 = vunpack.c.h.b16 %v2360
        %v2929 = vunpack.c.l.b16 %v2361
        %v2930 = vunpack.c.h.b16 %v2361
        %v2931 = vunpack.c.l.b16 %v2362
        %v2932 = vunpack.c.h.b16 %v2362
        %v2933 = vunpack.c.l.b16 %v2363
        %v2934 = vunpack.c.h.b16 %v2363
        %v2935 = vunpack.c.l.b16 %v2364
        %v2936 = vunpack.c.l.b16 %v2365
        %v2937 = vunpack.c.h.b16 %v2365
        %v2938 = vunpack.c.l.b16 %v2366
        %v2939 = vunpack.c.h.b16 %v2366
        %v2940 = vunpack.c.l.b16 %v2367
        %v2941 = vunpack.c.h.b16 %v2367
        %v2942 = vunpack.c.l.b16 %v2368
        %v2943 = vunpack.c.h.b16 %v2368
        %v2944 = vunpack.c.l.b16 %v2369
        %v2945 = vunpack.c.l.b16 %v2370
        %v2946 = vunpack.c.h.b16 %v2370
        %v2947 = vunpack.c.l.b16 %v2371
        %v2948 = vunpack.c.h.b16 %v2371
        %v2949 = vunpack.c.l.b16 %v2372
        %v2950 = vunpack.c.h.b16 %v2372
        %v2951 = vunpack.c.l.b16 %v2373
        %v2952 = vunpack.c.h.b16 %v2373
        %v2953 = vunpack.c.l.b16 %v2374
        %v2954 = vunpack.c.l.b16 %v2375
        %v2955 = vunpack.c.h.b16 %v2375
        %v2956 = vunpack.c.l.b16 %v2376
        %v2957 = vunpack.c.h.b16 %v2376
        %v2958 = vunpack.c.l.b16 %v2377
        %v2959 = vunpack.c.h.b16 %v2377
        %v2960 = vunpack.c.l.b16 %v2378
        %v2961 = vunpack.c.h.b16 %v2378
        %v2962 = vunpack.c.l.b16 %v2379
        %v2963 = vunpack.c.l.b16 %v2380
        %v2964 = vunpack.c.h.b16 %v2380
        %v2965 = vunpack.c.l.b16 %v2381
        %v2966 = vunpack.c.h.b16 %v2381
        %v2967 = vunpack.c.l.b16 %v2382
        %v2968 = vunpack.c.h.b16 %v2382
        %v2969 = vunpack.c.l.b16 %v2383
        %v2970 = vunpack.c.h.b16 %v2383
        %v2971 = vunpack.c.l.b16 %v2384
        %v2972 = vunpack.c.l.b16 %v2385
        %v2973 = vunpack.c.h.b16 %v2385
        %v2974 = vunpack.c.l.b16 %v2386
        %v2975 = vunpack.c.h.b16 %v2386
        %v2976 = vunpack.c.l.b16 %v2387
        %v2977 = vunpack.c.h.b16 %v2387
        %v2978 = vunpack.c.l.b16 %v2388
        %v2979 = vunpack.c.h.b16 %v2388
        %v2980 = vunpack.c.l.b16 %v2389
        %v2981 = vunpack.c.l.b16 %v2390
        %v2982 = vunpack.c.h.b16 %v2390
        %v2983 = vunpack.c.l.b16 %v2391
        %v2984 = vunpack.c.h.b16 %v2391
        %v2985 = vunpack.c.l.b16 %v2392
        %v2986 = vunpack.c.h.b16 %v2392
        %v2987 = vunpack.c.l.b16 %v2393
        %v2988 = vunpack.c.h.b16 %v2393
        %v2989 = vunpack.c.l.b16 %v2394
        %v2990 = vunpack.c.l.b16 %v2395
        %v2991 = vunpack.c.h.b16 %v2395
        %v2992 = vunpack.c.l.b16 %v2396
        %v2993 = vunpack.c.h.b16 %v2396
        %v2994 = vunpack.c.l.b16 %v2397
        %v2995 = vunpack.c.h.b16 %v2397
        %v2996 = vunpack.c.l.b16 %v2398
        %v2997 = vunpack.c.h.b16 %v2398
        %v2998 = vunpack.c.l.b16 %v2399
        %v2999 = vpack.c.b16 %v2720, %v2711
        %v3000 = vpack.c.b16 %v2721, %v2712
        %v3001 = vpack.c.b16 %v2722, %v2713
        %v3002 = vpack.c.b16 %v2723, %v2714
        %v3003 = vpack.c.b16 %v2724, %v2715
        %v3004 = vpack.c.b16 %v2725, %v2716
        %v3005 = vpack.c.b16 %v2726, %v2717
        %v3006 = vpack.c.b16 %v2727, %v2718
        %v3007 = vpack.c.b16 %v2728, %v2719
        %v3008 = vpack.c.b16 %v2738, %v2729
        %v3009 = vpack.c.b16 %v2739, %v2730
        %v3010 = vpack.c.b16 %v2740, %v2731
        %v3011 = vpack.c.b16 %v2741, %v2732
        %v3012 = vpack.c.b16 %v2742, %v2733
        %v3013 = vpack.c.b16 %v2743, %v2734
        %v3014 = vpack.c.b16 %v2744, %v2735
        %v3015 = vpack.c.b16 %v2745, %v2736
        %v3016 = vpack.c.b16 %v2746, %v2737
        %v3017 = vpack.c.b16 %v2756, %v2747
        %v3018 = vpack.c.b16 %v2757, %v2748
        %v3019 = vpack.c.b16 %v2758, %v2749
        %v3020 = vpack.c.b16 %v2759, %v2750
        %v3021 = vpack.c.b16 %v2760, %v2751
        %v3022 = vpack.c.b16 %v2761, %v2752
        %v3023 = vpack.c.b16 %v2762, %v2753
        %v3024 = vpack.c.b16 %v2763, %v2754
        %v3025 = vpack.c.b16 %v2764, %v2755
        %v3026 = vpack.c.b16 %v2774, %v2765
        %v3027 = vpack.c.b16 %v2775, %v2766
        %v3028 = vpack.c.b16 %v2776, %v2767
        %v3029 = vpack.c.b16 %v2777, %v2768
        %v3030 = vpack.c.b16 %v2778, %v2769
        %v3031 = vpack.c.b16 %v2779, %v2770
        %v3032 = vpack.c.b16 %v2780, %v2771
        %v3033 = vpack.c.b16 %v2781, %v2772
        %v3034 = vpack.c.b16 %v2782, %v2773
        %v3035 = vpack.c.b16 %v2792, %v2783
        %v3036 = vpack.c.b16 %v2793, %v2784
        %v3037 = vpack.c.b16 %v2794, %v2785
        %v3038 = vpack.c.b16 %v2795, %v2786
        %v3039 = vpack.c.b16 %v2796, %v2787
        %v3040 = vpack.c.b16 %v2797, %v2788
        %v3041 = vpack.c.b16 %v2798, %v2789
        %v3042 = vpack.c.b16 %v2799, %v2790
        %v3043 = vpack.c.b16 %v2800, %v2791
        %v3044 = vpack.c.b16 %v2810, %v2801
        %v3045 = vpack.c.b16 %v2811, %v2802
        %v3046 = vpack.c.b16 %v2812, %v2803
        %v3047 = vpack.c.b16 %v2813, %v2804
        %v3048 = vpack.c.b16 %v2814, %v2805
        %v3049 = vpack.c.b16 %v2815, %v2806
        %v3050 = vpack.c.b16 %v2816, %v2807
        %v3051 = vpack.c.b16 %v2817, %v2808
        %v3052 = vpack.c.b16 %v2818, %v2809
        %v3053 = vpack.c.b16 %v2828, %v2819
        %v3054 = vpack.c.b16 %v2829, %v2820
        %v3055 = vpack.c.b16 %v2830, %v2821
        %v3056 = vpack.c.b16 %v2831, %v2822
        %v3057 = vpack.c.b16 %v2832, %v2823
        %v3058 = vpack.c.b16 %v2833, %v2824
        %v3059 = vpack.c.b16 %v2834, %v2825
        %v3060 = vpack.c.b16 %v2835, %v2826
        %v3061 = vpack.c.b16 %v2836, %v2827
        %v3062 = vpack.c.b16 %v2846, %v2837
        %v3063 = vpack.c.b16 %v2847, %v2838
        %v3064 = vpack.c.b16 %v2848, %v2839
        %v3065 = vpack.c.b16 %v2849, %v2840
        %v3066 = vpack.c.b16 %v2850, %v2841
        %v3067 = vpack.c.b16 %v2851, %v2842
        %v3068 = vpack.c.b16 %v2852, %v2843
        %v3069 = vpack.c.b16 %v2853, %v2844
        %v3070 = vpack.c.b16 %v2854, %v2845
        %v3071 = vpack.c.b16 %v2864, %v2855
        %v3072 = vpack.c.b16 %v2865, %v2856
        %v3073 = vpack.c.b16 %v2866, %v2857
        %v3074 = vpack.c.b16 %v2867, %v2858
        %v3075 = vpack.c.b16 %v2868, %v2859
        %v3076 = vpack.c.b16 %v2869, %v2860
        %v3077 = vpack.c.b16 %v2870, %v2861
        %v3078 = vpack.c.b16 %v2871, %v2862
        %v3079 = vpack.c.b16 %v2872, %v2863
        %v3080 = vpack.c.b16 %v2882, %v2873
        %v3081 = vpack.c.b16 %v2883, %v2874
        %v3082 = vpack.c.b16 %v2884, %v2875
        %v3083 = vpack.c.b16 %v2885, %v2876
        %v3084 = vpack.c.b16 %v2886, %v2877
        %v3085 = vpack.c.b16 %v2887, %v2878
        %v3086 = vpack.c.b16 %v2888, %v2879
        %v3087 = vpack.c.b16 %v2889, %v2880
        %v3088 = vpack.c.b16 %v2890, %v2881
        %v3089 = vpack.c.b16 %v2900, %v2891
        %v3090 = vpack.c.b16 %v2901, %v2892
        %v3091 = vpack.c.b16 %v2902, %v2893
        %v3092 = vpack.c.b16 %v2903, %v2894
        %v3093 = vpack.c.b16 %v2904, %v2895
        %v3094 = vpack.c.b16 %v2905, %v2896
        %v3095 = vpack.c.b16 %v2906, %v2897
        %v3096 = vpack.c.b16 %v2907, %v2898
        %v3097 = vpack.c.b16 %v2908, %v2899
        %v3098 = vpack.c.b16 %v2918, %v2909
        %v3099 = vpack.c.b16 %v2919, %v2910
        %v3100 = vpack.c.b16 %v2920, %v2911
        %v3101 = vpack.c.b16 %v2921, %v2912
        %v3102 = vpack.c.b16 %v2922, %v2913
        %v3103 = vpack.c.b16 %v2923, %v2914
        %v3104 = vpack.c.b16 %v2924, %v2915
        %v3105 = vpack.c.b16 %v2925, %v2916
        %v3106 = vpack.c.b16 %v2926, %v2917
        %v3107 = vpack.c.b16 %v2936, %v2927
        %v3108 = vpack.c.b16 %v2937, %v2928
        %v3109 = vpack.c.b16 %v2938, %v2929
        %v3110 = vpack.c.b16 %v2939, %v2930
        %v3111 = vpack.c.b16 %v2940, %v2931
        %v3112 = vpack.c.b16 %v2941, %v2932
        %v3113 = vpack.c.b16 %v2942, %v2933
        %v3114 = vpack.c.b16 %v2943, %v2934
        %v3115 = vpack.c.b16 %v2944, %v2935
        %v3116 = vpack.c.b16 %v2954, %v2945
        %v3117 = vpack.c.b16 %v2955, %v2946
        %v3118 = vpack.c.b16 %v2956, %v2947
        %v3119 = vpack.c.b16 %v2957, %v2948
        %v3120 = vpack.c.b16 %v2958, %v2949
        %v3121 = vpack.c.b16 %v2959, %v2950
        %v3122 = vpack.c.b16 %v2960, %v2951
        %v3123 = vpack.c.b16 %v2961, %v2952
        %v3124 = vpack.c.b16 %v2962, %v2953
        %v3125 = vpack.c.b16 %v2972, %v2963
        %v3126 = vpack.c.b16 %v2973, %v2964
        %v3127 = vpack.c.b16 %v2974, %v2965
        %v3128 = vpack.c.b16 %v2975, %v2966
        %v3129 = vpack.c.b16 %v2976, %v2967
        %v3130 = vpack.c.b16 %v2977, %v2968
        %v3131 = vpack.c.b16 %v2978, %v2969
        %v3132 = vpack.c.b16 %v2979, %v2970
        %v3133 = vpack.c.b16 %v2980, %v2971
        %v3134 = vpack.c.b16 %v2990, %v2981
        %v3135 = vpack.c.b16 %v2991, %v2982
        %v3136 = vpack.c.b16 %v2992, %v2983
        %v3137 = vpack.c.b16 %v2993, %v2984
        %v3138 = vpack.c.b16 %v2994, %v2985
        %v3139 = vpack.c.b16 %v2995, %v2986
        %v3140 = vpack.c.b16 %v2996, %v2987
        %v3141 = vpack.c.b16 %v2997, %v2988
        %v3142 = vpack.c.b16 %v2998, %v2989
        %v3431 = vunpack.c.l.b16 %v2400
        %v3432 = vunpack.c.l.b16 %v2401
        %v3433 = vunpack.c.l.b16 %v2402
        %v3434 = vunpack.c.l.b16 %v2403
        %v3435 = vunpack.c.l.b16 %v2404
        %v3436 = vunpack.c.l.b16 %v2405
        %v3437 = vunpack.c.l.b16 %v2406
        %v3438 = vunpack.c.l.b16 %v2407
        %v3439 = vunpack.c.l.b16 %v2408
        %v3440 = vunpack.c.l.b16 %v2409
        %v3441 = vunpack.c.l.b16 %v2410
        %v3442 = vunpack.c.l.b16 %v2411
        %v3443 = vunpack.c.l.b16 %v2412
        %v3444 = vunpack.c.l.b16 %v2413
        %v3445 = vunpack.c.l.b16 %v2414
        %v3446 = vunpack.c.l.b16 %v2415
        %v3447 = vunpack.c.l.b16 %v2416
        %v3448 = vunpack.c.l.b16 %v2417
        %v3449 = vunpack.c.l.b16 %v2418
        %v3450 = vunpack.c.l.b16 %v2419
        %v3451 = vunpack.c.l.b16 %v2420
        %v3452 = vunpack.c.l.b16 %v2421
        %v3453 = vunpack.c.l.b16 %v2422
        %v3454 = vunpack.c.l.b16 %v2423
        %v3455 = vunpack.c.l.b16 %v2424
        %v3456 = vunpack.c.l.b16 %v2425
        %v3457 = vunpack.c.l.b16 %v2426
        %v3458 = vunpack.c.l.b16 %v2427
        %v3459 = vunpack.c.l.b16 %v2428
        %v3460 = vunpack.c.l.b16 %v2429
        %v3461 = vunpack.c.l.b16 %v2430
        %v3462 = vunpack.c.l.b16 %v2431
        %v3463 = vunpack.c.l.b16 %v2432
        %v3464 = vunpack.c.l.b16 %v2433
        %v3465 = vunpack.c.l.b16 %v2434
        %v3466 = vunpack.c.l.b16 %v2435
        %v3467 = vunpack.c.l.b16 %v2436
        %v3468 = vunpack.c.l.b16 %v2437
        %v3469 = vunpack.c.l.b16 %v2438
        %v3470 = vunpack.c.l.b16 %v2439
        %v3471 = vunpack.c.l.b16 %v2440
        %v3472 = vunpack.c.l.b16 %v2441
        %v3473 = vunpack.c.l.b16 %v2442
        %v3474 = vunpack.c.l.b16 %v2443
        %v3475 = vunpack.c.l.b16 %v2444
        %v3476 = vunpack.c.l.b16 %v2445
        %v3477 = vunpack.c.l.b16 %v2446
        %v3478 = vunpack.c.l.b16 %v2447
        %v3479 = vunpack.c.l.b16 %v2448
        %v3480 = vunpack.c.l.b16 %v2449
        %v3481 = vunpack.c.l.b16 %v2450
        %v3482 = vunpack.c.l.b16 %v2451
        %v3483 = vunpack.c.l.b16 %v2452
        %v3484 = vunpack.c.l.b16 %v2453
        %v3485 = vunpack.c.l.b16 %v2454
        %v3486 = vunpack.c.l.b16 %v2455
        %v3487 = vunpack.c.l.b16 %v2456
        %v3488 = vunpack.c.l.b16 %v2457
        %v3489 = vunpack.c.l.b16 %v2458
        %v3490 = vunpack.c.l.b16 %v2459
        %v3491 = vunpack.c.l.b16 %v2460
        %v3492 = vunpack.c.l.b16 %v2461
        %v3493 = vunpack.c.l.b16 %v2462
        %v3494 = vunpack.c.l.b16 %v2463
        %v3495 = vunpack.c.l.b16 %v2464
        %v3496 = vunpack.c.l.b16 %v2465
        %v3497 = vunpack.c.l.b16 %v2466
        %v3498 = vunpack.c.l.b16 %v2467
        %v3499 = vunpack.c.l.b16 %v2468
        %v3500 = vunpack.c.l.b16 %v2469
        %v3501 = vunpack.c.l.b16 %v2470
        %v3502 = vunpack.c.l.b16 %v2471
        %v3503 = vunpack.c.l.b16 %v2472
        %v3504 = vunpack.c.l.b16 %v2473
        %v3505 = vunpack.c.l.b16 %v2474
        %v3506 = vunpack.c.l.b16 %v2475
        %v3507 = vunpack.c.l.b16 %v2476
        %v3508 = vunpack.c.l.b16 %v2477
        %v3509 = vunpack.c.l.b16 %v2478
        %v3510 = vunpack.c.l.b16 %v2479
        %v3511 = vunpack.c.l.b16 %v2480
        %v3512 = vunpack.c.l.b16 %v2481
        %v3513 = vunpack.c.l.b16 %v2482
        %v3514 = vunpack.c.l.b16 %v2483
        %v3515 = vunpack.c.l.b16 %v2484
        %v3516 = vunpack.c.l.b16 %v2485
        %v3517 = vunpack.c.l.b16 %v2486
        %v3518 = vunpack.c.l.b16 %v2487
        %v3519 = vunpack.c.l.b16 %v2488
        %v3520 = vunpack.c.l.b16 %v2489
        %v3521 = vunpack.c.l.b16 %v2490
        %v3522 = vunpack.c.l.b16 %v2491
        %v3523 = vunpack.c.l.b16 %v2492
        %v3524 = vunpack.c.l.b16 %v2493
        %v3525 = vunpack.c.l.b16 %v2494
        %v3526 = vunpack.c.l.b16 %v2495
        %v3527 = vunpack.c.l.b16 %v2496
        %v3528 = vunpack.c.l.b16 %v2497
        %v3529 = vunpack.c.l.b16 %v2498
        %v3530 = vunpack.c.l.b16 %v2499
        %v3531 = vunpack.c.l.b16 %v2500
        %v3532 = vunpack.c.l.b16 %v2501
        %v3533 = vunpack.c.l.b16 %v2502
        %v3534 = vunpack.c.l.b16 %v2503
        %v3535 = vunpack.c.l.b16 %v2504
        %v3536 = vunpack.c.l.b16 %v2505
        %v3537 = vunpack.c.l.b16 %v2506
        %v3538 = vunpack.c.l.b16 %v2507
        %v3539 = vunpack.c.l.b16 %v2508
        %v3540 = vunpack.c.l.b16 %v2509
        %v3541 = vunpack.c.l.b16 %v2510
        %v3542 = vunpack.c.l.b16 %v2511
        %v3543 = vunpack.c.l.b16 %v2512
        %v3544 = vunpack.c.l.b16 %v2513
        %v3545 = vunpack.c.l.b16 %v2514
        %v3546 = vunpack.c.l.b16 %v2515
        %v3547 = vunpack.c.l.b16 %v2516
        %v3548 = vunpack.c.l.b16 %v2517
        %v3549 = vunpack.c.l.b16 %v2518
        %v3550 = vunpack.c.l.b16 %v2519
        %v3551 = vunpack.c.l.b16 %v2520
        %v3552 = vunpack.c.l.b16 %v2521
        %v3553 = vunpack.c.l.b16 %v2522
        %v3554 = vunpack.c.l.b16 %v2523
        %v3555 = vunpack.c.l.b16 %v2524
        %v3556 = vunpack.c.l.b16 %v2525
        %v3557 = vunpack.c.l.b16 %v2526
        %v3558 = vunpack.c.l.b16 %v2527
        %v3559 = vunpack.c.l.b16 %v2528
        %v3560 = vunpack.c.l.b16 %v2529
        %v3561 = vunpack.c.l.b16 %v2530
        %v3562 = vunpack.c.l.b16 %v2531
        %v3563 = vunpack.c.l.b16 %v2532
        %v3564 = vunpack.c.l.b16 %v2533
        %v3565 = vunpack.c.l.b16 %v2534
        %v3566 = vunpack.c.l.b16 %v2535
        %v3567 = vunpack.c.l.b16 %v2536
        %v3568 = vunpack.c.l.b16 %v2537
        %v3569 = vunpack.c.l.b16 %v2538
        %v3570 = vunpack.c.l.b16 %v2539
        %v3571 = vunpack.c.l.b16 %v2540
        %v3572 = vunpack.c.l.b16 %v2541
        %v3573 = vunpack.c.l.b16 %v2542
        %v3574 = vunpack.c.l.b16 %v2543
        %v3575 = vpack.c.b16 %v3432, %v3431
        %v3576 = vpack.c.b16 %v3434, %v3433
        %v3577 = vpack.c.b16 %v3436, %v3435
        %v3578 = vpack.c.b16 %v3438, %v3437
        %v3579 = vpack.c.b16 %v3440, %v3439
        %v3580 = vpack.c.b16 %v3442, %v3441
        %v3581 = vpack.c.b16 %v3444, %v3443
        %v3582 = vpack.c.b16 %v3446, %v3445
        %v3583 = vpack.c.b16 %v3448, %v3447
        %v3584 = vpack.c.b16 %v3450, %v3449
        %v3585 = vpack.c.b16 %v3452, %v3451
        %v3586 = vpack.c.b16 %v3454, %v3453
        %v3587 = vpack.c.b16 %v3456, %v3455
        %v3588 = vpack.c.b16 %v3458, %v3457
        %v3589 = vpack.c.b16 %v3460, %v3459
        %v3590 = vpack.c.b16 %v3462, %v3461
        %v3591 = vpack.c.b16 %v3464, %v3463
        %v3592 = vpack.c.b16 %v3466, %v3465
        %v3593 = vpack.c.b16 %v3468, %v3467
        %v3594 = vpack.c.b16 %v3470, %v3469
        %v3595 = vpack.c.b16 %v3472, %v3471
        %v3596 = vpack.c.b16 %v3474, %v3473
        %v3597 = vpack.c.b16 %v3476, %v3475
        %v3598 = vpack.c.b16 %v3478, %v3477
        %v3599 = vpack.c.b16 %v3480, %v3479
        %v3600 = vpack.c.b16 %v3482, %v3481
        %v3601 = vpack.c.b16 %v3484, %v3483
        %v3602 = vpack.c.b16 %v3486, %v3485
        %v3603 = vpack.c.b16 %v3488, %v3487
        %v3604 = vpack.c.b16 %v3490, %v3489
        %v3605 = vpack.c.b16 %v3492, %v3491
        %v3606 = vpack.c.b16 %v3494, %v3493
        %v3607 = vpack.c.b16 %v3496, %v3495
        %v3608 = vpack.c.b16 %v3498, %v3497
        %v3609 = vpack.c.b16 %v3500, %v3499
        %v3610 = vpack.c.b16 %v3502, %v3501
        %v3611 = vpack.c.b16 %v3504, %v3503
        %v3612 = vpack.c.b16 %v3506, %v3505
        %v3613 = vpack.c.b16 %v3508, %v3507
        %v3614 = vpack.c.b16 %v3510, %v3509
        %v3615 = vpack.c.b16 %v3512, %v3511
        %v3616 = vpack.c.b16 %v3514, %v3513
        %v3617 = vpack.c.b16 %v3516, %v3515
        %v3618 = vpack.c.b16 %v3518, %v3517
        %v3619 = vpack.c.b16 %v3520, %v3519
        %v3620 = vpack.c.b16 %v3522, %v3521
        %v3621 = vpack.c.b16 %v3524, %v3523
        %v3622 = vpack.c.b16 %v3526, %v3525
        %v3623 = vpack.c.b16 %v3528, %v3527
        %v3624 = vpack.c.b16 %v3530, %v3529
        %v3625 = vpack.c.b16 %v3532, %v3531
        %v3626 = vpack.c.b16 %v3534, %v3533
        %v3627 = vpack.c.b16 %v3536, %v3535
        %v3628 = vpack.c.b16 %v3538, %v3537
        %v3629 = vpack.c.b16 %v3540, %v3539
        %v3630 = vpack.c.b16 %v3542, %v3541
        %v3631 = vpack.c.b16 %v3544, %v3543
        %v3632 = vpack.c.b16 %v3546, %v3545
        %v3633 = vpack.c.b16 %v3548, %v3547
        %v3634 = vpack.c.b16 %v3550, %v3549
        %v3635 = vpack.c.b16 %v3552, %v3551
        %v3636 = vpack.c.b16 %v3554, %v3553
        %v3637 = vpack.c.b16 %v3556, %v3555
        %v3638 = vpack.c.b16 %v3558, %v3557
        %v3639 = vpack.c.b16 %v3560, %v3559
        %v3640 = vpack.c.b16 %v3562, %v3561
        %v3641 = vpack.c.b16 %v3564, %v3563
        %v3642 = vpack.c.b16 %v3566, %v3565
        %v3643 = vpack.c.b16 %v3568, %v3567
        %v3644 = vpack.c.b16 %v3570, %v3569
        %v3645 = vpack.c.b16 %v3572, %v3571
        %v3646 = vpack.c.b16 %v3574, %v3573
        %3719 = vmatprep.subr.bf16.mxu0 0
        %3720 = vmatpush1.bf16.msra.mxu0 %v3582
        %3721 = vmatprep.subr.bf16.mxu0 0
        %3722 = vmatpush1.bf16.msra.mxu0 %v3581
        %3723 = vmatprep.subr.bf16.mxu0 0
        %3724 = vmatpush1.bf16.msra.mxu0 %v3580
        %3725 = vmatprep.subr.bf16.mxu0 0
        %3726 = vmatpush1.bf16.msra.mxu0 %v3579
        %3727 = vmatprep.subr.bf16.mxu0 0
        %3728 = vmatpush1.bf16.msra.mxu0 %v3578
        %3729 = vmatprep.subr.bf16.mxu0 0
        %3730 = vmatpush1.bf16.msra.mxu0 %v3577
        %3731 = vmatprep.subr.bf16.mxu0 0
        %3732 = vmatpush1.bf16.msra.mxu0 %v3576
        %3733 = vmatprep.subr.bf16.mxu0 0
        %3734 = vmatpush1.bf16.msra.mxu0 %v3575
        %3735 = vmatprep.subr.bf16.mxu0 0
        %3736 = vmatpush2.bf16.msra.mxu0 %v3590
        %3737 = vmatprep.subr.bf16.mxu0 0
        %3738 = vmatpush2.bf16.msra.mxu0 %v3589
        %3739 = vmatprep.subr.bf16.mxu0 0
        %3740 = vmatpush2.bf16.msra.mxu0 %v3588
        %3741 = vmatprep.subr.bf16.mxu0 0
        %3742 = vmatpush2.bf16.msra.mxu0 %v3587
        %3743 = vmatprep.subr.bf16.mxu0 0
        %3744 = vmatpush2.bf16.msra.mxu0 %v3586
        %3745 = vmatprep.subr.bf16.mxu0 0
        %3746 = vmatpush2.bf16.msra.mxu0 %v3585
        %3747 = vmatprep.subr.bf16.mxu0 0
        %3748 = vmatpush2.bf16.msra.mxu0 %v3584
        %3749 = vmatprep.subr.bf16.mxu0 0
        %3750 = vmatpush2.bf16.msra.mxu0 %v3583
        %3751 = vmatprep.mubr.bf16.mxu0 %v3000
        %3752 = vmatmul.mubr.bf16.gmra.mxu0 %v2999
        %v3753 = vpop.f32.mrf.mxu0
        %v3754 = vadd.f32 %v2549, %v3753
        %v3755 = vpop.f32.mrf.mxu0
        %v3756 = vpop.f32.mrf.mxu0
        %v3757 = vadd.f32 %v2549, %v3756
        %v3758 = vpop.f32.mrf.mxu0
        %3759 = vmatprep.mubr.bf16.mxu0 %v3009
        %3760 = vmatmul.mubr.bf16.gmra.mxu0 %v3008
        %v3761 = vpop.f32.mrf.mxu0
        %v3762 = vadd.f32 %v2549, %v3761
        %v3763 = vpop.f32.mrf.mxu0
        %v3764 = vpop.f32.mrf.mxu0
        %v3765 = vadd.f32 %v2549, %v3764
        %v3766 = vpop.f32.mrf.mxu0
        %3767 = vmatprep.mubr.bf16.mxu0 %v3018
        %3768 = vmatmul.mubr.bf16.gmra.mxu0 %v3017
        %v3769 = vpop.f32.mrf.mxu0
        %v3770 = vadd.f32 %v2549, %v3769
        %v3771 = vpop.f32.mrf.mxu0
        %v3772 = vpop.f32.mrf.mxu0
        %v3773 = vadd.f32 %v2549, %v3772
        %v3774 = vpop.f32.mrf.mxu0
        %3775 = vmatprep.mubr.bf16.mxu0 %v3027
        %3776 = vmatmul.mubr.bf16.gmra.mxu0 %v3026
        %v3777 = vpop.f32.mrf.mxu0
        %v3778 = vadd.f32 %v2549, %v3777
        %v3779 = vpop.f32.mrf.mxu0
        %v3780 = vpop.f32.mrf.mxu0
        %v3781 = vadd.f32 %v2549, %v3780
        %v3782 = vpop.f32.mrf.mxu0
        %3783 = vmatprep.mubr.bf16.mxu0 %v3036
        %3784 = vmatmul.mubr.bf16.gmra.mxu0 %v3035
        %v3785 = vpop.f32.mrf.mxu0
        %v3786 = vadd.f32 %v2549, %v3785
        %v3787 = vpop.f32.mrf.mxu0
        %v3788 = vpop.f32.mrf.mxu0
        %v3789 = vadd.f32 %v2549, %v3788
        %v3790 = vpop.f32.mrf.mxu0
        %3791 = vmatprep.mubr.bf16.mxu0 %v3045
        %3792 = vmatmul.mubr.bf16.gmra.mxu0 %v3044
        %v3793 = vpop.f32.mrf.mxu0
        %v3794 = vadd.f32 %v2549, %v3793
        %v3795 = vpop.f32.mrf.mxu0
        %v3796 = vpop.f32.mrf.mxu0
        %v3797 = vadd.f32 %v2549, %v3796
        %v3798 = vpop.f32.mrf.mxu0
        %3799 = vmatprep.mubr.bf16.mxu0 %v3054
        %3800 = vmatmul.mubr.bf16.gmra.mxu0 %v3053
        %v3801 = vpop.f32.mrf.mxu0
        %v3802 = vadd.f32 %v2549, %v3801
        %v3803 = vpop.f32.mrf.mxu0
        %v3804 = vpop.f32.mrf.mxu0
        %v3805 = vadd.f32 %v2549, %v3804
        %v3806 = vpop.f32.mrf.mxu0
        %3807 = vmatprep.mubr.bf16.mxu0 %v3063
        %3808 = vmatmul.mubr.bf16.gmra.mxu0 %v3062
        %v3809 = vpop.f32.mrf.mxu0
        %v3810 = vadd.f32 %v2549, %v3809
        %v3811 = vpop.f32.mrf.mxu0
        %v3812 = vpop.f32.mrf.mxu0
        %v3813 = vadd.f32 %v2549, %v3812
        %v3814 = vpop.f32.mrf.mxu0
        %3815 = vmatprep.mubr.bf16.mxu0 %v3072
        %3816 = vmatmul.mubr.bf16.gmra.mxu0 %v3071
        %v3817 = vpop.f32.mrf.mxu0
        %v3818 = vadd.f32 %v2549, %v3817
        %v3819 = vpop.f32.mrf.mxu0
        %v3820 = vpop.f32.mrf.mxu0
        %v3821 = vadd.f32 %v2549, %v3820
        %v3822 = vpop.f32.mrf.mxu0
        %3823 = vmatprep.mubr.bf16.mxu0 %v3081
        %3824 = vmatmul.mubr.bf16.gmra.mxu0 %v3080
        %v3825 = vpop.f32.mrf.mxu0
        %v3826 = vadd.f32 %v2549, %v3825
        %v3827 = vpop.f32.mrf.mxu0
        %v3828 = vpop.f32.mrf.mxu0
        %v3829 = vadd.f32 %v2549, %v3828
        %v3830 = vpop.f32.mrf.mxu0
        %3831 = vmatprep.mubr.bf16.mxu0 %v3090
        %3832 = vmatmul.mubr.bf16.gmra.mxu0 %v3089
        %v3833 = vpop.f32.mrf.mxu0
        %v3834 = vadd.f32 %v2549, %v3833
        %v3835 = vpop.f32.mrf.mxu0
        %v3836 = vpop.f32.mrf.mxu0
        %v3837 = vadd.f32 %v2549, %v3836
        %v3838 = vpop.f32.mrf.mxu0
        %3839 = vmatprep.mubr.bf16.mxu0 %v3099
        %3840 = vmatmul.mubr.bf16.gmra.mxu0 %v3098
        %v3841 = vpop.f32.mrf.mxu0
        %v3842 = vadd.f32 %v2549, %v3841
        %v3843 = vpop.f32.mrf.mxu0
        %v3844 = vpop.f32.mrf.mxu0
        %v3845 = vadd.f32 %v2549, %v3844
        %v3846 = vpop.f32.mrf.mxu0
        %3847 = vmatprep.mubr.bf16.mxu0 %v3108
        %3848 = vmatmul.mubr.bf16.gmra.mxu0 %v3107
        %v3849 = vpop.f32.mrf.mxu0
        %v3850 = vadd.f32 %v2549, %v3849
        %v3851 = vpop.f32.mrf.mxu0
        %v3852 = vpop.f32.mrf.mxu0
        %v3853 = vadd.f32 %v2549, %v3852
        %v3854 = vpop.f32.mrf.mxu0
        %3855 = vmatprep.mubr.bf16.mxu0 %v3117
        %3856 = vmatmul.mubr.bf16.gmra.mxu0 %v3116
        %v3857 = vpop.f32.mrf.mxu0
        %v3858 = vadd.f32 %v2549, %v3857
        %v3859 = vpop.f32.mrf.mxu0
        %v3860 = vpop.f32.mrf.mxu0
        %v3861 = vadd.f32 %v2549, %v3860
        %v3862 = vpop.f32.mrf.mxu0
        %3863 = vmatprep.mubr.bf16.mxu0 %v3126
        %3864 = vmatmul.mubr.bf16.gmra.mxu0 %v3125
        %v3865 = vpop.f32.mrf.mxu0
        %v3866 = vadd.f32 %v2549, %v3865
        %v3867 = vpop.f32.mrf.mxu0
        %v3868 = vpop.f32.mrf.mxu0
        %v3869 = vadd.f32 %v2549, %v3868
        %v3870 = vpop.f32.mrf.mxu0
        %3871 = vmatprep.mubr.bf16.mxu0 %v3135
        %3872 = vmatmul.mubr.bf16.gmra.mxu0 %v3134
        %v3873 = vpop.f32.mrf.mxu0
        %v3874 = vadd.f32 %v2549, %v3873
        %v3875 = vpop.f32.mrf.mxu0
        %v3876 = vpop.f32.mrf.mxu0
        %v3877 = vadd.f32 %v2549, %v3876
        %v3878 = vpop.f32.mrf.mxu0
        %3879 = vdwg.mxu0
        %3880 = vmatprep.subr.bf16.mxu0 0
        %3881 = vmatpush1.bf16.msra.mxu0 %v3598
        %3882 = vmatprep.subr.bf16.mxu0 0
        %3883 = vmatpush1.bf16.msra.mxu0 %v3597
        %3884 = vmatprep.subr.bf16.mxu0 0
        %3885 = vmatpush1.bf16.msra.mxu0 %v3596
        %3886 = vmatprep.subr.bf16.mxu0 0
        %3887 = vmatpush1.bf16.msra.mxu0 %v3595
        %3888 = vmatprep.subr.bf16.mxu0 0
        %3889 = vmatpush1.bf16.msra.mxu0 %v3594
        %3890 = vmatprep.subr.bf16.mxu0 0
        %3891 = vmatpush1.bf16.msra.mxu0 %v3593
        %3892 = vmatprep.subr.bf16.mxu0 0
        %3893 = vmatpush1.bf16.msra.mxu0 %v3592
        %3894 = vmatprep.subr.bf16.mxu0 0
        %3895 = vmatpush1.bf16.msra.mxu0 %v3591
        %3896 = vmatprep.subr.bf16.mxu0 0
        %3897 = vmatpush2.bf16.msra.mxu0 %v3606
        %3898 = vmatprep.subr.bf16.mxu0 0
        %3899 = vmatpush2.bf16.msra.mxu0 %v3605
        %3900 = vmatprep.subr.bf16.mxu0 0
        %3901 = vmatpush2.bf16.msra.mxu0 %v3604
        %3902 = vmatprep.subr.bf16.mxu0 0
        %3903 = vmatpush2.bf16.msra.mxu0 %v3603
        %3904 = vmatprep.subr.bf16.mxu0 0
        %3905 = vmatpush2.bf16.msra.mxu0 %v3602
        %3906 = vmatprep.subr.bf16.mxu0 0
        %3907 = vmatpush2.bf16.msra.mxu0 %v3601
        %3908 = vmatprep.subr.bf16.mxu0 0
        %3909 = vmatpush2.bf16.msra.mxu0 %v3600
        %3910 = vmatprep.subr.bf16.mxu0 0
        %3911 = vmatpush2.bf16.msra.mxu0 %v3599
        %3912 = vmatprep.mubr.bf16.mxu0 %v3002
        %3913 = vmatmul.mubr.bf16.gmra.mxu0 %v3001
        %v3914 = vpop.f32.mrf.mxu0
        %v3915 = vadd.f32 %v3754, %v3914
        %v3916 = vpop.f32.mrf.mxu0
        %v3917 = vpop.f32.mrf.mxu0
        %v3918 = vadd.f32 %v3757, %v3917
        %v3919 = vpop.f32.mrf.mxu0
        %3920 = vmatprep.mubr.bf16.mxu0 %v3011
        %3921 = vmatmul.mubr.bf16.gmra.mxu0 %v3010
        %v3922 = vpop.f32.mrf.mxu0
        %v3923 = vadd.f32 %v3762, %v3922
        %v3924 = vpop.f32.mrf.mxu0
        %v3925 = vpop.f32.mrf.mxu0
        %v3926 = vadd.f32 %v3765, %v3925
        %v3927 = vpop.f32.mrf.mxu0
        %3928 = vmatprep.mubr.bf16.mxu0 %v3020
        %3929 = vmatmul.mubr.bf16.gmra.mxu0 %v3019
        %v3930 = vpop.f32.mrf.mxu0
        %v3931 = vadd.f32 %v3770, %v3930
        %v3932 = vpop.f32.mrf.mxu0
        %v3933 = vpop.f32.mrf.mxu0
        %v3934 = vadd.f32 %v3773, %v3933
        %v3935 = vpop.f32.mrf.mxu0
        %3936 = vmatprep.mubr.bf16.mxu0 %v3029
        %3937 = vmatmul.mubr.bf16.gmra.mxu0 %v3028
        %v3938 = vpop.f32.mrf.mxu0
        %v3939 = vadd.f32 %v3778, %v3938
        %v3940 = vpop.f32.mrf.mxu0
        %v3941 = vpop.f32.mrf.mxu0
        %v3942 = vadd.f32 %v3781, %v3941
        %v3943 = vpop.f32.mrf.mxu0
        %3944 = vmatprep.mubr.bf16.mxu0 %v3038
        %3945 = vmatmul.mubr.bf16.gmra.mxu0 %v3037
        %v3946 = vpop.f32.mrf.mxu0
        %v3947 = vadd.f32 %v3786, %v3946
        %v3948 = vpop.f32.mrf.mxu0
        %v3949 = vpop.f32.mrf.mxu0
        %v3950 = vadd.f32 %v3789, %v3949
        %v3951 = vpop.f32.mrf.mxu0
        %3952 = vmatprep.mubr.bf16.mxu0 %v3047
        %3953 = vmatmul.mubr.bf16.gmra.mxu0 %v3046
        %v3954 = vpop.f32.mrf.mxu0
        %v3955 = vadd.f32 %v3794, %v3954
        %v3956 = vpop.f32.mrf.mxu0
        %v3957 = vpop.f32.mrf.mxu0
        %v3958 = vadd.f32 %v3797, %v3957
        %v3959 = vpop.f32.mrf.mxu0
        %3960 = vmatprep.mubr.bf16.mxu0 %v3056
        %3961 = vmatmul.mubr.bf16.gmra.mxu0 %v3055
        %v3962 = vpop.f32.mrf.mxu0
        %v3963 = vadd.f32 %v3802, %v3962
        %v3964 = vpop.f32.mrf.mxu0
        %v3965 = vpop.f32.mrf.mxu0
        %v3966 = vadd.f32 %v3805, %v3965
        %v3967 = vpop.f32.mrf.mxu0
        %3968 = vmatprep.mubr.bf16.mxu0 %v3065
        %3969 = vmatmul.mubr.bf16.gmra.mxu0 %v3064
        %v3970 = vpop.f32.mrf.mxu0
        %v3971 = vadd.f32 %v3810, %v3970
        %v3972 = vpop.f32.mrf.mxu0
        %v3973 = vpop.f32.mrf.mxu0
        %v3974 = vadd.f32 %v3813, %v3973
        %v3975 = vpop.f32.mrf.mxu0
        %3976 = vmatprep.mubr.bf16.mxu0 %v3074
        %3977 = vmatmul.mubr.bf16.gmra.mxu0 %v3073
        %v3978 = vpop.f32.mrf.mxu0
        %v3979 = vadd.f32 %v3818, %v3978
        %v3980 = vpop.f32.mrf.mxu0
        %v3981 = vpop.f32.mrf.mxu0
        %v3982 = vadd.f32 %v3821, %v3981
        %v3983 = vpop.f32.mrf.mxu0
        %3984 = vmatprep.mubr.bf16.mxu0 %v3083
        %3985 = vmatmul.mubr.bf16.gmra.mxu0 %v3082
        %v3986 = vpop.f32.mrf.mxu0
        %v3987 = vadd.f32 %v3826, %v3986
        %v3988 = vpop.f32.mrf.mxu0
        %v3989 = vpop.f32.mrf.mxu0
        %v3990 = vadd.f32 %v3829, %v3989
        %v3991 = vpop.f32.mrf.mxu0
        %3992 = vmatprep.mubr.bf16.mxu0 %v3092
        %3993 = vmatmul.mubr.bf16.gmra.mxu0 %v3091
        %v3994 = vpop.f32.mrf.mxu0
        %v3995 = vadd.f32 %v3834, %v3994
        %v3996 = vpop.f32.mrf.mxu0
        %v3997 = vpop.f32.mrf.mxu0
        %v3998 = vadd.f32 %v3837, %v3997
        %v3999 = vpop.f32.mrf.mxu0
        %4000 = vmatprep.mubr.bf16.mxu0 %v3101
        %4001 = vmatmul.mubr.bf16.gmra.mxu0 %v3100
        %v4002 = vpop.f32.mrf.mxu0
        %v4003 = vadd.f32 %v3842, %v4002
        %v4004 = vpop.f32.mrf.mxu0
        %v4005 = vpop.f32.mrf.mxu0
        %v4006 = vadd.f32 %v3845, %v4005
        %v4007 = vpop.f32.mrf.mxu0
        %4008 = vmatprep.mubr.bf16.mxu0 %v3110
        %4009 = vmatmul.mubr.bf16.gmra.mxu0 %v3109
        %v4010 = vpop.f32.mrf.mxu0
        %v4011 = vadd.f32 %v3850, %v4010
        %v4012 = vpop.f32.mrf.mxu0
        %v4013 = vpop.f32.mrf.mxu0
        %v4014 = vadd.f32 %v3853, %v4013
        %v4015 = vpop.f32.mrf.mxu0
        %4016 = vmatprep.mubr.bf16.mxu0 %v3119
        %4017 = vmatmul.mubr.bf16.gmra.mxu0 %v3118
        %v4018 = vpop.f32.mrf.mxu0
        %v4019 = vadd.f32 %v3858, %v4018
        %v4020 = vpop.f32.mrf.mxu0
        %v4021 = vpop.f32.mrf.mxu0
        %v4022 = vadd.f32 %v3861, %v4021
        %v4023 = vpop.f32.mrf.mxu0
        %4024 = vmatprep.mubr.bf16.mxu0 %v3128
        %4025 = vmatmul.mubr.bf16.gmra.mxu0 %v3127
        %v4026 = vpop.f32.mrf.mxu0
        %v4027 = vadd.f32 %v3866, %v4026
        %v4028 = vpop.f32.mrf.mxu0
        %v4029 = vpop.f32.mrf.mxu0
        %v4030 = vadd.f32 %v3869, %v4029
        %v4031 = vpop.f32.mrf.mxu0
        %4032 = vmatprep.mubr.bf16.mxu0 %v3137
        %4033 = vmatmul.mubr.bf16.gmra.mxu0 %v3136
        %v4034 = vpop.f32.mrf.mxu0
        %v4035 = vadd.f32 %v3874, %v4034
        %v4036 = vpop.f32.mrf.mxu0
        %v4037 = vpop.f32.mrf.mxu0
        %v4038 = vadd.f32 %v3877, %v4037
        %v4039 = vpop.f32.mrf.mxu0
        %4040 = vdwg.mxu0
        %4041 = vmatprep.subr.bf16.mxu0 0
        %4042 = vmatpush1.bf16.msra.mxu0 %v3614
        %4043 = vmatprep.subr.bf16.mxu0 0
        %4044 = vmatpush1.bf16.msra.mxu0 %v3613
        %4045 = vmatprep.subr.bf16.mxu0 0
        %4046 = vmatpush1.bf16.msra.mxu0 %v3612
        %4047 = vmatprep.subr.bf16.mxu0 0
        %4048 = vmatpush1.bf16.msra.mxu0 %v3611
        %4049 = vmatprep.subr.bf16.mxu0 0
        %4050 = vmatpush1.bf16.msra.mxu0 %v3610
        %4051 = vmatprep.subr.bf16.mxu0 0
        %4052 = vmatpush1.bf16.msra.mxu0 %v3609
        %4053 = vmatprep.subr.bf16.mxu0 0
        %4054 = vmatpush1.bf16.msra.mxu0 %v3608
        %4055 = vmatprep.subr.bf16.mxu0 0
        %4056 = vmatpush1.bf16.msra.mxu0 %v3607
        %4057 = vmatprep.subr.bf16.mxu0 0
        %4058 = vmatpush2.bf16.msra.mxu0 %v3622
        %4059 = vmatprep.subr.bf16.mxu0 0
        %4060 = vmatpush2.bf16.msra.mxu0 %v3621
        %4061 = vmatprep.subr.bf16.mxu0 0
        %4062 = vmatpush2.bf16.msra.mxu0 %v3620
        %4063 = vmatprep.subr.bf16.mxu0 0
        %4064 = vmatpush2.bf16.msra.mxu0 %v3619
        %4065 = vmatprep.subr.bf16.mxu0 0
        %4066 = vmatpush2.bf16.msra.mxu0 %v3618
        %4067 = vmatprep.subr.bf16.mxu0 0
        %4068 = vmatpush2.bf16.msra.mxu0 %v3617
        %4069 = vmatprep.subr.bf16.mxu0 0
        %4070 = vmatpush2.bf16.msra.mxu0 %v3616
        %4071 = vmatprep.subr.bf16.mxu0 0
        %4072 = vmatpush2.bf16.msra.mxu0 %v3615
        %4073 = vmatprep.mubr.bf16.mxu0 %v3004
        %4074 = vmatmul.mubr.bf16.gmra.mxu0 %v3003
        %v4075 = vpop.f32.mrf.mxu0
        %v4076 = vadd.f32 %v3915, %v4075
        %v4077 = vpop.f32.mrf.mxu0
        %v4078 = vpop.f32.mrf.mxu0
        %v4079 = vadd.f32 %v3918, %v4078
        %v4080 = vpop.f32.mrf.mxu0
        %4081 = vmatprep.mubr.bf16.mxu0 %v3013
        %4082 = vmatmul.mubr.bf16.gmra.mxu0 %v3012
        %v4083 = vpop.f32.mrf.mxu0
        %v4084 = vadd.f32 %v3923, %v4083
        %v4085 = vpop.f32.mrf.mxu0
        %v4086 = vpop.f32.mrf.mxu0
        %v4087 = vadd.f32 %v3926, %v4086
        %v4088 = vpop.f32.mrf.mxu0
        %4089 = vmatprep.mubr.bf16.mxu0 %v3022
        %4090 = vmatmul.mubr.bf16.gmra.mxu0 %v3021
        %v4091 = vpop.f32.mrf.mxu0
        %v4092 = vadd.f32 %v3931, %v4091
        %v4093 = vpop.f32.mrf.mxu0
        %v4094 = vpop.f32.mrf.mxu0
        %v4095 = vadd.f32 %v3934, %v4094
        %v4096 = vpop.f32.mrf.mxu0
        %4097 = vmatprep.mubr.bf16.mxu0 %v3031
        %4098 = vmatmul.mubr.bf16.gmra.mxu0 %v3030
        %v4099 = vpop.f32.mrf.mxu0
        %v4100 = vadd.f32 %v3939, %v4099
        %v4101 = vpop.f32.mrf.mxu0
        %v4102 = vpop.f32.mrf.mxu0
        %v4103 = vadd.f32 %v3942, %v4102
        %v4104 = vpop.f32.mrf.mxu0
        %4105 = vmatprep.mubr.bf16.mxu0 %v3040
        %4106 = vmatmul.mubr.bf16.gmra.mxu0 %v3039
        %v4107 = vpop.f32.mrf.mxu0
        %v4108 = vadd.f32 %v3947, %v4107
        %v4109 = vpop.f32.mrf.mxu0
        %v4110 = vpop.f32.mrf.mxu0
        %v4111 = vadd.f32 %v3950, %v4110
        %v4112 = vpop.f32.mrf.mxu0
        %4113 = vmatprep.mubr.bf16.mxu0 %v3049
        %4114 = vmatmul.mubr.bf16.gmra.mxu0 %v3048
        %v4115 = vpop.f32.mrf.mxu0
        %v4116 = vadd.f32 %v3955, %v4115
        %v4117 = vpop.f32.mrf.mxu0
        %v4118 = vpop.f32.mrf.mxu0
        %v4119 = vadd.f32 %v3958, %v4118
        %v4120 = vpop.f32.mrf.mxu0
        %4121 = vmatprep.mubr.bf16.mxu0 %v3058
        %4122 = vmatmul.mubr.bf16.gmra.mxu0 %v3057
        %v4123 = vpop.f32.mrf.mxu0
        %v4124 = vadd.f32 %v3963, %v4123
        %v4125 = vpop.f32.mrf.mxu0
        %v4126 = vpop.f32.mrf.mxu0
        %v4127 = vadd.f32 %v3966, %v4126
        %v4128 = vpop.f32.mrf.mxu0
        %4129 = vmatprep.mubr.bf16.mxu0 %v3067
        %4130 = vmatmul.mubr.bf16.gmra.mxu0 %v3066
        %v4131 = vpop.f32.mrf.mxu0
        %v4132 = vadd.f32 %v3971, %v4131
        %v4133 = vpop.f32.mrf.mxu0
        %v4134 = vpop.f32.mrf.mxu0
        %v4135 = vadd.f32 %v3974, %v4134
        %v4136 = vpop.f32.mrf.mxu0
        %4137 = vmatprep.mubr.bf16.mxu0 %v3076
        %4138 = vmatmul.mubr.bf16.gmra.mxu0 %v3075
        %v4139 = vpop.f32.mrf.mxu0
        %v4140 = vadd.f32 %v3979, %v4139
        %v4141 = vpop.f32.mrf.mxu0
        %v4142 = vpop.f32.mrf.mxu0
        %v4143 = vadd.f32 %v3982, %v4142
        %v4144 = vpop.f32.mrf.mxu0
        %4145 = vmatprep.mubr.bf16.mxu0 %v3085
        %4146 = vmatmul.mubr.bf16.gmra.mxu0 %v3084
        %v4147 = vpop.f32.mrf.mxu0
        %v4148 = vadd.f32 %v3987, %v4147
        %v4149 = vpop.f32.mrf.mxu0
        %v4150 = vpop.f32.mrf.mxu0
        %v4151 = vadd.f32 %v3990, %v4150
        %v4152 = vpop.f32.mrf.mxu0
        %4153 = vmatprep.mubr.bf16.mxu0 %v3094
        %4154 = vmatmul.mubr.bf16.gmra.mxu0 %v3093
        %v4155 = vpop.f32.mrf.mxu0
        %v4156 = vadd.f32 %v3995, %v4155
        %v4157 = vpop.f32.mrf.mxu0
        %v4158 = vpop.f32.mrf.mxu0
        %v4159 = vadd.f32 %v3998, %v4158
        %v4160 = vpop.f32.mrf.mxu0
        %4161 = vmatprep.mubr.bf16.mxu0 %v3103
        %4162 = vmatmul.mubr.bf16.gmra.mxu0 %v3102
        %v4163 = vpop.f32.mrf.mxu0
        %v4164 = vadd.f32 %v4003, %v4163
        %v4165 = vpop.f32.mrf.mxu0
        %v4166 = vpop.f32.mrf.mxu0
        %v4167 = vadd.f32 %v4006, %v4166
        %v4168 = vpop.f32.mrf.mxu0
        %4169 = vmatprep.mubr.bf16.mxu0 %v3112
        %4170 = vmatmul.mubr.bf16.gmra.mxu0 %v3111
        %v4171 = vpop.f32.mrf.mxu0
        %v4172 = vadd.f32 %v4011, %v4171
        %v4173 = vpop.f32.mrf.mxu0
        %v4174 = vpop.f32.mrf.mxu0
        %v4175 = vadd.f32 %v4014, %v4174
        %v4176 = vpop.f32.mrf.mxu0
        %4177 = vmatprep.mubr.bf16.mxu0 %v3121
        %4178 = vmatmul.mubr.bf16.gmra.mxu0 %v3120
        %v4179 = vpop.f32.mrf.mxu0
        %v4180 = vadd.f32 %v4019, %v4179
        %v4181 = vpop.f32.mrf.mxu0
        %v4182 = vpop.f32.mrf.mxu0
        %v4183 = vadd.f32 %v4022, %v4182
        %v4184 = vpop.f32.mrf.mxu0
        %4185 = vmatprep.mubr.bf16.mxu0 %v3130
        %4186 = vmatmul.mubr.bf16.gmra.mxu0 %v3129
        %v4187 = vpop.f32.mrf.mxu0
        %v4188 = vadd.f32 %v4027, %v4187
        %v4189 = vpop.f32.mrf.mxu0
        %v4190 = vpop.f32.mrf.mxu0
        %v4191 = vadd.f32 %v4030, %v4190
        %v4192 = vpop.f32.mrf.mxu0
        %4193 = vmatprep.mubr.bf16.mxu0 %v3139
        %4194 = vmatmul.mubr.bf16.gmra.mxu0 %v3138
        %v4195 = vpop.f32.mrf.mxu0
        %v4196 = vadd.f32 %v4035, %v4195
        %v4197 = vpop.f32.mrf.mxu0
        %v4198 = vpop.f32.mrf.mxu0
        %v4199 = vadd.f32 %v4038, %v4198
        %v4200 = vpop.f32.mrf.mxu0
        %4201 = vdwg.mxu0
        %4202 = vmatprep.subr.bf16.mxu0 0
        %4203 = vmatpush1.bf16.msra.mxu0 %v3630
        %4204 = vmatprep.subr.bf16.mxu0 0
        %4205 = vmatpush1.bf16.msra.mxu0 %v3629
        %4206 = vmatprep.subr.bf16.mxu0 0
        %4207 = vmatpush1.bf16.msra.mxu0 %v3628
        %4208 = vmatprep.subr.bf16.mxu0 0
        %4209 = vmatpush1.bf16.msra.mxu0 %v3627
        %4210 = vmatprep.subr.bf16.mxu0 0
        %4211 = vmatpush1.bf16.msra.mxu0 %v3626
        %4212 = vmatprep.subr.bf16.mxu0 0
        %4213 = vmatpush1.bf16.msra.mxu0 %v3625
        %4214 = vmatprep.subr.bf16.mxu0 0
        %4215 = vmatpush1.bf16.msra.mxu0 %v3624
        %4216 = vmatprep.subr.bf16.mxu0 0
        %4217 = vmatpush1.bf16.msra.mxu0 %v3623
        %4218 = vmatprep.subr.bf16.mxu0 0
        %4219 = vmatpush2.bf16.msra.mxu0 %v3638
        %4220 = vmatprep.subr.bf16.mxu0 0
        %4221 = vmatpush2.bf16.msra.mxu0 %v3637
        %4222 = vmatprep.subr.bf16.mxu0 0
        %4223 = vmatpush2.bf16.msra.mxu0 %v3636
        %4224 = vmatprep.subr.bf16.mxu0 0
        %4225 = vmatpush2.bf16.msra.mxu0 %v3635
        %4226 = vmatprep.subr.bf16.mxu0 0
        %4227 = vmatpush2.bf16.msra.mxu0 %v3634
        %4228 = vmatprep.subr.bf16.mxu0 0
        %4229 = vmatpush2.bf16.msra.mxu0 %v3633
        %4230 = vmatprep.subr.bf16.mxu0 0
        %4231 = vmatpush2.bf16.msra.mxu0 %v3632
        %4232 = vmatprep.subr.bf16.mxu0 0
        %4233 = vmatpush2.bf16.msra.mxu0 %v3631
        %4234 = vmatprep.mubr.bf16.mxu0 %v3006
        %4235 = vmatmul.mubr.bf16.gmra.mxu0 %v3005
        %v4236 = vpop.f32.mrf.mxu0
        %v4237 = vadd.f32 %v4076, %v4236
        %v4238 = vpop.f32.mrf.mxu0
        %v4239 = vpop.f32.mrf.mxu0
        %v4240 = vadd.f32 %v4079, %v4239
        %v4241 = vpop.f32.mrf.mxu0
        %4242 = vmatprep.mubr.bf16.mxu0 %v3015
        %4243 = vmatmul.mubr.bf16.gmra.mxu0 %v3014
        %v4244 = vpop.f32.mrf.mxu0
        %v4245 = vadd.f32 %v4084, %v4244
        %v4246 = vpop.f32.mrf.mxu0
        %v4247 = vpop.f32.mrf.mxu0
        %v4248 = vadd.f32 %v4087, %v4247
        %v4249 = vpop.f32.mrf.mxu0
        %4250 = vmatprep.mubr.bf16.mxu0 %v3024
        %4251 = vmatmul.mubr.bf16.gmra.mxu0 %v3023
        %v4252 = vpop.f32.mrf.mxu0
        %v4253 = vadd.f32 %v4092, %v4252
        %v4254 = vpop.f32.mrf.mxu0
        %v4255 = vpop.f32.mrf.mxu0
        %v4256 = vadd.f32 %v4095, %v4255
        %v4257 = vpop.f32.mrf.mxu0
        %4258 = vmatprep.mubr.bf16.mxu0 %v3033
        %4259 = vmatmul.mubr.bf16.gmra.mxu0 %v3032
        %v4260 = vpop.f32.mrf.mxu0
        %v4261 = vadd.f32 %v4100, %v4260
        %v4262 = vpop.f32.mrf.mxu0
        %v4263 = vpop.f32.mrf.mxu0
        %v4264 = vadd.f32 %v4103, %v4263
        %v4265 = vpop.f32.mrf.mxu0
        %4266 = vmatprep.mubr.bf16.mxu0 %v3042
        %4267 = vmatmul.mubr.bf16.gmra.mxu0 %v3041
        %v4268 = vpop.f32.mrf.mxu0
        %v4269 = vadd.f32 %v4108, %v4268
        %v4270 = vpop.f32.mrf.mxu0
        %v4271 = vpop.f32.mrf.mxu0
        %v4272 = vadd.f32 %v4111, %v4271
        %v4273 = vpop.f32.mrf.mxu0
        %4274 = vmatprep.mubr.bf16.mxu0 %v3051
        %4275 = vmatmul.mubr.bf16.gmra.mxu0 %v3050
        %v4276 = vpop.f32.mrf.mxu0
        %v4277 = vadd.f32 %v4116, %v4276
        %v4278 = vpop.f32.mrf.mxu0
        %v4279 = vpop.f32.mrf.mxu0
        %v4280 = vadd.f32 %v4119, %v4279
        %v4281 = vpop.f32.mrf.mxu0
        %4282 = vmatprep.mubr.bf16.mxu0 %v3060
        %4283 = vmatmul.mubr.bf16.gmra.mxu0 %v3059
        %v4284 = vpop.f32.mrf.mxu0
        %v4285 = vadd.f32 %v4124, %v4284
        %v4286 = vpop.f32.mrf.mxu0
        %v4287 = vpop.f32.mrf.mxu0
        %v4288 = vadd.f32 %v4127, %v4287
        %v4289 = vpop.f32.mrf.mxu0
        %4290 = vmatprep.mubr.bf16.mxu0 %v3069
        %4291 = vmatmul.mubr.bf16.gmra.mxu0 %v3068
        %v4292 = vpop.f32.mrf.mxu0
        %v4293 = vadd.f32 %v4132, %v4292
        %v4294 = vpop.f32.mrf.mxu0
        %v4295 = vpop.f32.mrf.mxu0
        %v4296 = vadd.f32 %v4135, %v4295
        %v4297 = vpop.f32.mrf.mxu0
        %4298 = vmatprep.mubr.bf16.mxu0 %v3078
        %4299 = vmatmul.mubr.bf16.gmra.mxu0 %v3077
        %v4300 = vpop.f32.mrf.mxu0
        %v4301 = vadd.f32 %v4140, %v4300
        %v4302 = vpop.f32.mrf.mxu0
        %v4303 = vpop.f32.mrf.mxu0
        %v4304 = vadd.f32 %v4143, %v4303
        %v4305 = vpop.f32.mrf.mxu0
        %4306 = vmatprep.mubr.bf16.mxu0 %v3087
        %4307 = vmatmul.mubr.bf16.gmra.mxu0 %v3086
        %v4308 = vpop.f32.mrf.mxu0
        %v4309 = vadd.f32 %v4148, %v4308
        %v4310 = vpop.f32.mrf.mxu0
        %v4311 = vpop.f32.mrf.mxu0
        %v4312 = vadd.f32 %v4151, %v4311
        %v4313 = vpop.f32.mrf.mxu0
        %4314 = vmatprep.mubr.bf16.mxu0 %v3096
        %4315 = vmatmul.mubr.bf16.gmra.mxu0 %v3095
        %v4316 = vpop.f32.mrf.mxu0
        %v4317 = vadd.f32 %v4156, %v4316
        %v4318 = vpop.f32.mrf.mxu0
        %v4319 = vpop.f32.mrf.mxu0
        %v4320 = vadd.f32 %v4159, %v4319
        %v4321 = vpop.f32.mrf.mxu0
        %4322 = vmatprep.mubr.bf16.mxu0 %v3105
        %4323 = vmatmul.mubr.bf16.gmra.mxu0 %v3104
        %v4324 = vpop.f32.mrf.mxu0
        %v4325 = vadd.f32 %v4164, %v4324
        %v4326 = vpop.f32.mrf.mxu0
        %v4327 = vpop.f32.mrf.mxu0
        %v4328 = vadd.f32 %v4167, %v4327
        %v4329 = vpop.f32.mrf.mxu0
        %4330 = vmatprep.mubr.bf16.mxu0 %v3114
        %4331 = vmatmul.mubr.bf16.gmra.mxu0 %v3113
        %v4332 = vpop.f32.mrf.mxu0
        %v4333 = vadd.f32 %v4172, %v4332
        %v4334 = vpop.f32.mrf.mxu0
        %v4335 = vpop.f32.mrf.mxu0
        %v4336 = vadd.f32 %v4175, %v4335
        %v4337 = vpop.f32.mrf.mxu0
        %4338 = vmatprep.mubr.bf16.mxu0 %v3123
        %4339 = vmatmul.mubr.bf16.gmra.mxu0 %v3122
        %v4340 = vpop.f32.mrf.mxu0
        %v4341 = vadd.f32 %v4180, %v4340
        %v4342 = vpop.f32.mrf.mxu0
        %v4343 = vpop.f32.mrf.mxu0
        %v4344 = vadd.f32 %v4183, %v4343
        %v4345 = vpop.f32.mrf.mxu0
        %4346 = vmatprep.mubr.bf16.mxu0 %v3132
        %4347 = vmatmul.mubr.bf16.gmra.mxu0 %v3131
        %v4348 = vpop.f32.mrf.mxu0
        %v4349 = vadd.f32 %v4188, %v4348
        %v4350 = vpop.f32.mrf.mxu0
        %v4351 = vpop.f32.mrf.mxu0
        %v4352 = vadd.f32 %v4191, %v4351
        %v4353 = vpop.f32.mrf.mxu0
        %4354 = vmatprep.mubr.bf16.mxu0 %v3141
        %4355 = vmatmul.mubr.bf16.gmra.mxu0 %v3140
        %v4356 = vpop.f32.mrf.mxu0
        %v4357 = vadd.f32 %v4196, %v4356
        %v4358 = vpop.f32.mrf.mxu0
        %v4359 = vpop.f32.mrf.mxu0
        %v4360 = vadd.f32 %v4199, %v4359
        %v4361 = vpop.f32.mrf.mxu0
        %4362 = vdwg.mxu0
        %4363 = vmatprep.subr.bf16.mxu0 0
        %4364 = vmatpush1.bf16.msra.mxu0 %v3646
        %4365 = vmatprep.subr.bf16.mxu0 0
        %4366 = vmatpush1.bf16.msra.mxu0 %v3645
        %4367 = vmatprep.subr.bf16.mxu0 0
        %4368 = vmatpush1.bf16.msra.mxu0 %v3644
        %4369 = vmatprep.subr.bf16.mxu0 0
        %4370 = vmatpush1.bf16.msra.mxu0 %v3643
        %4371 = vmatprep.subr.bf16.mxu0 0
        %4372 = vmatpush1.bf16.msra.mxu0 %v3642
        %4373 = vmatprep.subr.bf16.mxu0 0
        %4374 = vmatpush1.bf16.msra.mxu0 %v3641
        %4375 = vmatprep.subr.bf16.mxu0 0
        %4376 = vmatpush1.bf16.msra.mxu0 %v3640
        %4377 = vmatprep.subr.bf16.mxu0 0
        %4378 = vmatpush1.bf16.msra.mxu0 %v3639
        %4379 = vmatprep.subr.bf16.mxu0 0
        %4380 = vmatpush2.bf16.msra.mxu0 0
        %4381 = vmatprep.subr.bf16.mxu0 0
        %4382 = vmatpush2.bf16.msra.mxu0 0
        %4383 = vmatprep.subr.bf16.mxu0 0
        %4384 = vmatpush2.bf16.msra.mxu0 0
        %4385 = vmatprep.subr.bf16.mxu0 0
        %4386 = vmatpush2.bf16.msra.mxu0 0
        %4387 = vmatprep.subr.bf16.mxu0 0
        %4388 = vmatpush2.bf16.msra.mxu0 0
        %4389 = vmatprep.subr.bf16.mxu0 0
        %4390 = vmatpush2.bf16.msra.mxu0 0
        %4391 = vmatprep.subr.bf16.mxu0 0
        %4392 = vmatpush2.bf16.msra.mxu0 0
        %4393 = vmatprep.subr.bf16.mxu0 0
        %4394 = vmatpush2.bf16.msra.mxu0 0
        %4395 = vmatprep.mubr.bf16.mxu0 0
        %4396 = vmatmul.mubr.bf16.gmra.mxu0 %v3007
        %v4397 = vpop.f32.mrf.mxu0
        %v4398 = vadd.f32 %v4237, %v4397
        %v4399 = vpop.f32.mrf.mxu0
        %v4400 = vpop.f32.mrf.mxu0
        %v4401 = vadd.f32 %v4240, %v4400
        %v4402 = vpop.f32.mrf.mxu0
        %4403 = vmatprep.mubr.bf16.mxu0 0
        %4404 = vmatmul.mubr.bf16.gmra.mxu0 %v3016
        %v4405 = vpop.f32.mrf.mxu0
        %v4406 = vadd.f32 %v4245, %v4405
        %v4407 = vpop.f32.mrf.mxu0
        %v4408 = vpop.f32.mrf.mxu0
        %v4409 = vadd.f32 %v4248, %v4408
        %v4410 = vpop.f32.mrf.mxu0
        %4411 = vmatprep.mubr.bf16.mxu0 0
        %4412 = vmatmul.mubr.bf16.gmra.mxu0 %v3025
        %v4413 = vpop.f32.mrf.mxu0
        %v4414 = vadd.f32 %v4253, %v4413
        %v4415 = vpop.f32.mrf.mxu0
        %v4416 = vpop.f32.mrf.mxu0
        %v4417 = vadd.f32 %v4256, %v4416
        %v4418 = vpop.f32.mrf.mxu0
        %4419 = vmatprep.mubr.bf16.mxu0 0
        %4420 = vmatmul.mubr.bf16.gmra.mxu0 %v3034
        %v4421 = vpop.f32.mrf.mxu0
        %v4422 = vadd.f32 %v4261, %v4421
        %v4423 = vpop.f32.mrf.mxu0
        %v4424 = vpop.f32.mrf.mxu0
        %v4425 = vadd.f32 %v4264, %v4424
        %v4426 = vpop.f32.mrf.mxu0
        %4427 = vmatprep.mubr.bf16.mxu0 0
        %4428 = vmatmul.mubr.bf16.gmra.mxu0 %v3043
        %v4429 = vpop.f32.mrf.mxu0
        %v4430 = vadd.f32 %v4269, %v4429
        %v4431 = vpop.f32.mrf.mxu0
        %v4432 = vpop.f32.mrf.mxu0
        %v4433 = vadd.f32 %v4272, %v4432
        %v4434 = vpop.f32.mrf.mxu0
        %4435 = vmatprep.mubr.bf16.mxu0 0
        %4436 = vmatmul.mubr.bf16.gmra.mxu0 %v3052
        %v4437 = vpop.f32.mrf.mxu0
        %v4438 = vadd.f32 %v4277, %v4437
        %v4439 = vpop.f32.mrf.mxu0
        %v4440 = vpop.f32.mrf.mxu0
        %v4441 = vadd.f32 %v4280, %v4440
        %v4442 = vpop.f32.mrf.mxu0
        %4443 = vmatprep.mubr.bf16.mxu0 0
        %4444 = vmatmul.mubr.bf16.gmra.mxu0 %v3061
        %v4445 = vpop.f32.mrf.mxu0
        %v4446 = vadd.f32 %v4285, %v4445
        %v4447 = vpop.f32.mrf.mxu0
        %v4448 = vpop.f32.mrf.mxu0
        %v4449 = vadd.f32 %v4288, %v4448
        %v4450 = vpop.f32.mrf.mxu0
        %4451 = vmatprep.mubr.bf16.mxu0 0
        %4452 = vmatmul.mubr.bf16.gmra.mxu0 %v3070
        %v4453 = vpop.f32.mrf.mxu0
        %v4454 = vadd.f32 %v4293, %v4453
        %v4455 = vpop.f32.mrf.mxu0
        %v4456 = vpop.f32.mrf.mxu0
        %v4457 = vadd.f32 %v4296, %v4456
        %v4458 = vpop.f32.mrf.mxu0
        %4459 = vmatprep.mubr.bf16.mxu0 0
        %4460 = vmatmul.mubr.bf16.gmra.mxu0 %v3079
        %v4461 = vpop.f32.mrf.mxu0
        %v4462 = vadd.f32 %v4301, %v4461
        %v4463 = vpop.f32.mrf.mxu0
        %v4464 = vpop.f32.mrf.mxu0
        %v4465 = vadd.f32 %v4304, %v4464
        %v4466 = vpop.f32.mrf.mxu0
        %4467 = vmatprep.mubr.bf16.mxu0 0
        %4468 = vmatmul.mubr.bf16.gmra.mxu0 %v3088
        %v4469 = vpop.f32.mrf.mxu0
        %v4470 = vadd.f32 %v4309, %v4469
        %v4471 = vpop.f32.mrf.mxu0
        %v4472 = vpop.f32.mrf.mxu0
        %v4473 = vadd.f32 %v4312, %v4472
        %v4474 = vpop.f32.mrf.mxu0
        %4475 = vmatprep.mubr.bf16.mxu0 0
        %4476 = vmatmul.mubr.bf16.gmra.mxu0 %v3097
        %v4477 = vpop.f32.mrf.mxu0
        %v4478 = vadd.f32 %v4317, %v4477
        %v4479 = vpop.f32.mrf.mxu0
        %v4480 = vpop.f32.mrf.mxu0
        %v4481 = vadd.f32 %v4320, %v4480
        %v4482 = vpop.f32.mrf.mxu0
        %4483 = vmatprep.mubr.bf16.mxu0 0
        %4484 = vmatmul.mubr.bf16.gmra.mxu0 %v3106
        %v4485 = vpop.f32.mrf.mxu0
        %v4486 = vadd.f32 %v4325, %v4485
        %v4487 = vpop.f32.mrf.mxu0
        %v4488 = vpop.f32.mrf.mxu0
        %v4489 = vadd.f32 %v4328, %v4488
        %v4490 = vpop.f32.mrf.mxu0
        %4491 = vmatprep.mubr.bf16.mxu0 0
        %4492 = vmatmul.mubr.bf16.gmra.mxu0 %v3115
        %v4493 = vpop.f32.mrf.mxu0
        %v4494 = vadd.f32 %v4333, %v4493
        %v4495 = vpop.f32.mrf.mxu0
        %v4496 = vpop.f32.mrf.mxu0
        %v4497 = vadd.f32 %v4336, %v4496
        %v4498 = vpop.f32.mrf.mxu0
        %4499 = vmatprep.mubr.bf16.mxu0 0
        %4500 = vmatmul.mubr.bf16.gmra.mxu0 %v3124
        %v4501 = vpop.f32.mrf.mxu0
        %v4502 = vadd.f32 %v4341, %v4501
        %v4503 = vpop.f32.mrf.mxu0
        %v4504 = vpop.f32.mrf.mxu0
        %v4505 = vadd.f32 %v4344, %v4504
        %v4506 = vpop.f32.mrf.mxu0
        %4507 = vmatprep.mubr.bf16.mxu0 0
        %4508 = vmatmul.mubr.bf16.gmra.mxu0 %v3133
        %v4509 = vpop.f32.mrf.mxu0
        %v4510 = vadd.f32 %v4349, %v4509
        %v4511 = vpop.f32.mrf.mxu0
        %v4512 = vpop.f32.mrf.mxu0
        %v4513 = vadd.f32 %v4352, %v4512
        %v4514 = vpop.f32.mrf.mxu0
        %4515 = vmatprep.mubr.bf16.mxu0 0
        %4516 = vmatmul.mubr.bf16.gmra.mxu0 %v3142
        %v4517 = vpop.f32.mrf.mxu0
        %v4518 = vadd.f32 %v4357, %v4517
        %v4519 = vpop.f32.mrf.mxu0
        %v4520 = vpop.f32.mrf.mxu0
        %v4521 = vadd.f32 %v4360, %v4520
        %v4522 = vpop.f32.mrf.mxu0
        %4523 = vdwg.mxu0
        %v4524 = vlaneseq
        %v4525 = vshrl.u32 %v4524, 7
        %v4526 = vsub.s32 0, %v4525
        %v4527 = vrot.slane %v510, %v4526
        %v4528 = vmul.f32 %v273, %v4527
        %v4529 = vmul.f32 %v274, %v4527
        %v4530 = vmul.f32 %v275, %v4527
        %v4531 = vmul.f32 %v276, %v4527
        %v4532 = vmul.f32 %v277, %v4527
        %v4533 = vmul.f32 %v278, %v4527
        %v4534 = vmul.f32 %v279, %v4527
        %v4535 = vmul.f32 %v280, %v4527
        %v4536 = vmul.f32 %v281, %v4527
        %v4537 = vmul.f32 %v282, %v4527
        %v4538 = vmul.f32 %v283, %v4527
        %v4539 = vmul.f32 %v284, %v4527
        %v4540 = vmul.f32 %v285, %v4527
        %v4541 = vmul.f32 %v286, %v4527
        %v4542 = vmul.f32 %v287, %v4527
        %v4543 = vmul.f32 %v288, %v4527
        %v4544 = vmul.f32 %v289, %v4527
        %v4545 = vmul.f32 %v290, %v4527
        %v4546 = vmul.f32 %v291, %v4527
        %v4547 = vmul.f32 %v292, %v4527
        %v4548 = vmul.f32 %v293, %v4527
        %v4549 = vmul.f32 %v294, %v4527
        %v4550 = vmul.f32 %v295, %v4527
        %v4551 = vmul.f32 %v296, %v4527
        %v4552 = vmul.f32 %v297, %v4527
        %v4553 = vmul.f32 %v298, %v4527
        %v4554 = vmul.f32 %v299, %v4527
        %v4555 = vmul.f32 %v300, %v4527
        %v4556 = vmul.f32 %v301, %v4527
        %v4557 = vmul.f32 %v302, %v4527
        %v4558 = vmul.f32 %v303, %v4527
        %v4559 = vmul.f32 %v304, %v4527
        %v4560 = vadd.f32 %v4398, %v4528
        %v4561 = vadd.f32 %v4401, %v4529
        %v4562 = vadd.f32 %v4406, %v4530
        %v4563 = vadd.f32 %v4409, %v4531
        %v4564 = vadd.f32 %v4414, %v4532
        %v4565 = vadd.f32 %v4417, %v4533
        %v4566 = vadd.f32 %v4422, %v4534
        %v4567 = vadd.f32 %v4425, %v4535
        %v4568 = vadd.f32 %v4430, %v4536
        %v4569 = vadd.f32 %v4433, %v4537
        %v4570 = vadd.f32 %v4438, %v4538
        %v4571 = vadd.f32 %v4441, %v4539
        %v4572 = vadd.f32 %v4446, %v4540
        %v4573 = vadd.f32 %v4449, %v4541
        %v4574 = vadd.f32 %v4454, %v4542
        %v4575 = vadd.f32 %v4457, %v4543
        %v4576 = vadd.f32 %v4462, %v4544
        %v4577 = vadd.f32 %v4465, %v4545
        %v4578 = vadd.f32 %v4470, %v4546
        %v4579 = vadd.f32 %v4473, %v4547
        %v4580 = vadd.f32 %v4478, %v4548
        %v4581 = vadd.f32 %v4481, %v4549
        %v4582 = vadd.f32 %v4486, %v4550
        %v4583 = vadd.f32 %v4489, %v4551
        %v4584 = vadd.f32 %v4494, %v4552
        %v4585 = vadd.f32 %v4497, %v4553
        %v4586 = vadd.f32 %v4502, %v4554
        %v4587 = vadd.f32 %v4505, %v4555
        %v4588 = vadd.f32 %v4510, %v4556
        %v4589 = vadd.f32 %v4513, %v4557
        %v4590 = vadd.f32 %v4518, %v4558
        %v4591 = vadd.f32 %v4521, %v4559
        %v4592 = vxor.u32 %v4560, 2147483648
        %v4593 = vxor.u32 %v4561, 2147483648
        %v4594 = vxor.u32 %v4562, 2147483648
        %v4595 = vxor.u32 %v4563, 2147483648
        %v4596 = vxor.u32 %v4564, 2147483648
        %v4597 = vxor.u32 %v4565, 2147483648
        %v4598 = vxor.u32 %v4566, 2147483648
        %v4599 = vxor.u32 %v4567, 2147483648
        %v4600 = vxor.u32 %v4568, 2147483648
        %v4601 = vxor.u32 %v4569, 2147483648
        %v4602 = vxor.u32 %v4570, 2147483648
        %v4603 = vxor.u32 %v4571, 2147483648
        %v4604 = vxor.u32 %v4572, 2147483648
        %v4605 = vxor.u32 %v4573, 2147483648
        %v4606 = vxor.u32 %v4574, 2147483648
        %v4607 = vxor.u32 %v4575, 2147483648
        %v4608 = vxor.u32 %v4576, 2147483648
        %v4609 = vxor.u32 %v4577, 2147483648
        %v4610 = vxor.u32 %v4578, 2147483648
        %v4611 = vxor.u32 %v4579, 2147483648
        %v4612 = vxor.u32 %v4580, 2147483648
        %v4613 = vxor.u32 %v4581, 2147483648
        %v4614 = vxor.u32 %v4582, 2147483648
        %v4615 = vxor.u32 %v4583, 2147483648
        %v4616 = vxor.u32 %v4584, 2147483648
        %v4617 = vxor.u32 %v4585, 2147483648
        %v4618 = vxor.u32 %v4586, 2147483648
        %v4619 = vxor.u32 %v4587, 2147483648
        %v4620 = vxor.u32 %v4588, 2147483648
        %v4621 = vxor.u32 %v4589, 2147483648
        %v4622 = vxor.u32 %v4590, 2147483648
        %v4623 = vxor.u32 %v4591, 2147483648
        %v4624 = vmul.f32 %v4592, 1.442695
        %v4625 = vpow.pop %v4624
        %v4626 = vmul.f32 %v4593, 1.442695
        %v4627 = vpow.pop %v4626
        %v4628 = vmul.f32 %v4594, 1.442695
        %v4629 = vpow.pop %v4628
        %v4630 = vmul.f32 %v4595, 1.442695
        %v4631 = vpow.pop %v4630
        %v4632 = vmul.f32 %v4596, 1.442695
        %v4633 = vpow.pop %v4632
        %v4634 = vmul.f32 %v4597, 1.442695
        %v4635 = vpow.pop %v4634
        %v4636 = vmul.f32 %v4598, 1.442695
        %v4637 = vpow.pop %v4636
        %v4638 = vmul.f32 %v4599, 1.442695
        %v4639 = vpow.pop %v4638
        %v4640 = vmul.f32 %v4600, 1.442695
        %v4641 = vpow.pop %v4640
        %v4642 = vmul.f32 %v4601, 1.442695
        %v4643 = vpow.pop %v4642
        %v4644 = vmul.f32 %v4602, 1.442695
        %v4645 = vpow.pop %v4644
        %v4646 = vmul.f32 %v4603, 1.442695
        %v4647 = vpow.pop %v4646
        %v4648 = vmul.f32 %v4604, 1.442695
        %v4649 = vpow.pop %v4648
        %v4650 = vmul.f32 %v4605, 1.442695
        %v4651 = vpow.pop %v4650
        %v4652 = vmul.f32 %v4606, 1.442695
        %v4653 = vpow.pop %v4652
        %v4654 = vmul.f32 %v4607, 1.442695
        %v4655 = vpow.pop %v4654
        %v4656 = vmul.f32 %v4608, 1.442695
        %v4657 = vpow.pop %v4656
        %v4658 = vmul.f32 %v4609, 1.442695
        %v4659 = vpow.pop %v4658
        %v4660 = vmul.f32 %v4610, 1.442695
        %v4661 = vpow.pop %v4660
        %v4662 = vmul.f32 %v4611, 1.442695
        %v4663 = vpow.pop %v4662
        %v4664 = vmul.f32 %v4612, 1.442695
        %v4665 = vpow.pop %v4664
        %v4666 = vmul.f32 %v4613, 1.442695
        %v4667 = vpow.pop %v4666
        %v4668 = vmul.f32 %v4614, 1.442695
        %v4669 = vpow.pop %v4668
        %v4670 = vmul.f32 %v4615, 1.442695
        %v4671 = vpow.pop %v4670
        %v4672 = vmul.f32 %v4616, 1.442695
        %v4673 = vpow.pop %v4672
        %v4674 = vmul.f32 %v4617, 1.442695
        %v4675 = vpow.pop %v4674
        %v4676 = vmul.f32 %v4618, 1.442695
        %v4677 = vpow.pop %v4676
        %v4678 = vmul.f32 %v4619, 1.442695
        %v4679 = vpow.pop %v4678
        %v4680 = vmul.f32 %v4620, 1.442695
        %v4681 = vpow.pop %v4680
        %v4682 = vmul.f32 %v4621, 1.442695
        %v4683 = vpow.pop %v4682
        %v4684 = vmul.f32 %v4622, 1.442695
        %v4685 = vpow.pop %v4684
        %v4686 = vmul.f32 %v4623, 1.442695
        %v4687 = vpow.pop %v4686
        %v4688 = vadd.f32 %v4625, 1.0
        %v4689 = vadd.f32 %v4627, 1.0
        %v4690 = vadd.f32 %v4629, 1.0
        %v4691 = vadd.f32 %v4631, 1.0
        %v4692 = vadd.f32 %v4633, 1.0
        %v4693 = vadd.f32 %v4635, 1.0
        %v4694 = vadd.f32 %v4637, 1.0
        %v4695 = vadd.f32 %v4639, 1.0
        %v4696 = vadd.f32 %v4641, 1.0
        %v4697 = vadd.f32 %v4643, 1.0
        %v4698 = vadd.f32 %v4645, 1.0
        %v4699 = vadd.f32 %v4647, 1.0
        %v4700 = vadd.f32 %v4649, 1.0
        %v4701 = vadd.f32 %v4651, 1.0
        %v4702 = vadd.f32 %v4653, 1.0
        %v4703 = vadd.f32 %v4655, 1.0
        %v4704 = vadd.f32 %v4657, 1.0
        %v4705 = vadd.f32 %v4659, 1.0
        %v4706 = vadd.f32 %v4661, 1.0
        %v4707 = vadd.f32 %v4663, 1.0
        %v4708 = vadd.f32 %v4665, 1.0
        %v4709 = vadd.f32 %v4667, 1.0
        %v4710 = vadd.f32 %v4669, 1.0
        %v4711 = vadd.f32 %v4671, 1.0
        %v4712 = vadd.f32 %v4673, 1.0
        %v4713 = vadd.f32 %v4675, 1.0
        %v4714 = vadd.f32 %v4677, 1.0
        %v4715 = vadd.f32 %v4679, 1.0
        %v4716 = vadd.f32 %v4681, 1.0
        %v4717 = vadd.f32 %v4683, 1.0
        %v4718 = vadd.f32 %v4685, 1.0
        %v4719 = vadd.f32 %v4687, 1.0
        %v4720 = vrcp.pop %v4688
        %v4721 = vmul.f32 1.0, %v4720
        %v4722 = vrcp.pop %v4689
        %v4723 = vmul.f32 1.0, %v4722
        %v4724 = vrcp.pop %v4690
        %v4725 = vmul.f32 1.0, %v4724
        %v4726 = vrcp.pop %v4691
        %v4727 = vmul.f32 1.0, %v4726
        %v4728 = vrcp.pop %v4692
        %v4729 = vmul.f32 1.0, %v4728
        %v4730 = vrcp.pop %v4693
        %v4731 = vmul.f32 1.0, %v4730
        %v4732 = vrcp.pop %v4694
        %v4733 = vmul.f32 1.0, %v4732
        %v4734 = vrcp.pop %v4695
        %v4735 = vmul.f32 1.0, %v4734
        %v4736 = vrcp.pop %v4696
        %v4737 = vmul.f32 1.0, %v4736
        %v4738 = vrcp.pop %v4697
        %v4739 = vmul.f32 1.0, %v4738
        %v4740 = vrcp.pop %v4698
        %v4741 = vmul.f32 1.0, %v4740
        %v4742 = vrcp.pop %v4699
        %v4743 = vmul.f32 1.0, %v4742
        %v4744 = vrcp.pop %v4700
        %v4745 = vmul.f32 1.0, %v4744
        %v4746 = vrcp.pop %v4701
        %v4747 = vmul.f32 1.0, %v4746
        %v4748 = vrcp.pop %v4702
        %v4749 = vmul.f32 1.0, %v4748
        %v4750 = vrcp.pop %v4703
        %v4751 = vmul.f32 1.0, %v4750
        %v4752 = vrcp.pop %v4704
        %v4753 = vmul.f32 1.0, %v4752
        %v4754 = vrcp.pop %v4705
        %v4755 = vmul.f32 1.0, %v4754
        %v4756 = vrcp.pop %v4706
        %v4757 = vmul.f32 1.0, %v4756
        %v4758 = vrcp.pop %v4707
        %v4759 = vmul.f32 1.0, %v4758
        %v4760 = vrcp.pop %v4708
        %v4761 = vmul.f32 1.0, %v4760
        %v4762 = vrcp.pop %v4709
        %v4763 = vmul.f32 1.0, %v4762
        %v4764 = vrcp.pop %v4710
        %v4765 = vmul.f32 1.0, %v4764
        %v4766 = vrcp.pop %v4711
        %v4767 = vmul.f32 1.0, %v4766
        %v4768 = vrcp.pop %v4712
        %v4769 = vmul.f32 1.0, %v4768
        %v4770 = vrcp.pop %v4713
        %v4771 = vmul.f32 1.0, %v4770
        %v4772 = vrcp.pop %v4714
        %v4773 = vmul.f32 1.0, %v4772
        %v4774 = vrcp.pop %v4715
        %v4775 = vmul.f32 1.0, %v4774
        %v4776 = vrcp.pop %v4716
        %v4777 = vmul.f32 1.0, %v4776
        %v4778 = vrcp.pop %v4717
        %v4779 = vmul.f32 1.0, %v4778
        %v4780 = vrcp.pop %v4718
        %v4781 = vmul.f32 1.0, %v4780
        %v4782 = vrcp.pop %v4719
        %v4783 = vmul.f32 1.0, %v4782
        %v4784 = vmul.f32 %v4560, %v4721
        %v4785 = vmul.f32 %v4561, %v4723
        %v4786 = vmul.f32 %v4562, %v4725
        %v4787 = vmul.f32 %v4563, %v4727
        %v4788 = vmul.f32 %v4564, %v4729
        %v4789 = vmul.f32 %v4565, %v4731
        %v4790 = vmul.f32 %v4566, %v4733
        %v4791 = vmul.f32 %v4567, %v4735
        %v4792 = vmul.f32 %v4568, %v4737
        %v4793 = vmul.f32 %v4569, %v4739
        %v4794 = vmul.f32 %v4570, %v4741
        %v4795 = vmul.f32 %v4571, %v4743
        %v4796 = vmul.f32 %v4572, %v4745
        %v4797 = vmul.f32 %v4573, %v4747
        %v4798 = vmul.f32 %v4574, %v4749
        %v4799 = vmul.f32 %v4575, %v4751
        %v4800 = vmul.f32 %v4576, %v4753
        %v4801 = vmul.f32 %v4577, %v4755
        %v4802 = vmul.f32 %v4578, %v4757
        %v4803 = vmul.f32 %v4579, %v4759
        %v4804 = vmul.f32 %v4580, %v4761
        %v4805 = vmul.f32 %v4581, %v4763
        %v4806 = vmul.f32 %v4582, %v4765
        %v4807 = vmul.f32 %v4583, %v4767
        %v4808 = vmul.f32 %v4584, %v4769
        %v4809 = vmul.f32 %v4585, %v4771
        %v4810 = vmul.f32 %v4586, %v4773
        %v4811 = vmul.f32 %v4587, %v4775
        %v4812 = vmul.f32 %v4588, %v4777
        %v4813 = vmul.f32 %v4589, %v4779
        %v4814 = vmul.f32 %v4590, %v4781
        %v4815 = vmul.f32 %v4591, %v4783
        %4816 = vst [vmem:[%s271] sm:$0xff] %v4784
        %4817 = vst [vmem:[%s271 + $0x8] sm:$0xff] %v4785
        %4818 = vst [vmem:[%s271 + $0x10] sm:$0xff] %v4786
        %4819 = vst [vmem:[%s271 + $0x18] sm:$0xff] %v4787
        %4820 = vst [vmem:[%s271 + $0x20] sm:$0xff] %v4788
        %4821 = vst [vmem:[%s271 + $0x28] sm:$0xff] %v4789
        %4822 = vst [vmem:[%s271 + $0x30] sm:$0xff] %v4790
        %4823 = vst [vmem:[%s271 + $0x38] sm:$0xff] %v4791
        %4824 = vst [vmem:[%s271 + $0x40] sm:$0xff] %v4792
        %4825 = vst [vmem:[%s271 + $0x48] sm:$0xff] %v4793
        %4826 = vst [vmem:[%s271 + $0x50] sm:$0xff] %v4794
        %4827 = vst [vmem:[%s271 + $0x58] sm:$0xff] %v4795
        %4828 = vst [vmem:[%s271 + $0x60] sm:$0xff] %v4796
        %4829 = vst [vmem:[%s271 + $0x68] sm:$0xff] %v4797
        %4830 = vst [vmem:[%s271 + $0x70] sm:$0xff] %v4798
        %4831 = vst [vmem:[%s271 + $0x78] sm:$0xff] %v4799
        %4832 = vst [vmem:[%s271 + $0x80] sm:$0xff] %v4800
        %4833 = vst [vmem:[%s271 + $0x88] sm:$0xff] %v4801
        %4834 = vst [vmem:[%s271 + $0x90] sm:$0xff] %v4802
        %4835 = vst [vmem:[%s271 + $0x98] sm:$0xff] %v4803
        %4836 = vst [vmem:[%s271 + $0xa0] sm:$0xff] %v4804
        %4837 = vst [vmem:[%s271 + $0xa8] sm:$0xff] %v4805
        %4838 = vst [vmem:[%s271 + $0xb0] sm:$0xff] %v4806
        %4839 = vst [vmem:[%s271 + $0xb8] sm:$0xff] %v4807
        %4840 = vst [vmem:[%s271 + $0xc0] sm:$0xff] %v4808
        %4841 = vst [vmem:[%s271 + $0xc8] sm:$0xff] %v4809
        %4842 = vst [vmem:[%s271 + $0xd0] sm:$0xff] %v4810
        %4843 = vst [vmem:[%s271 + $0xd8] sm:$0xff] %v4811
        %4844 = vst [vmem:[%s271 + $0xe0] sm:$0xff] %v4812
        %4845 = vst [vmem:[%s271 + $0xe8] sm:$0xff] %v4813
        %4846 = vst [vmem:[%s271 + $0xf0] sm:$0xff] %v4814
        %4847 = vst [vmem:[%s271 + $0xf8] sm:$0xff] %v4815
        %s4848 = sand.u32 %s141, 1
        %s4849 = scalar_lea.sflag [#allocation6], %s4848
        %s4850 = sand.u32 %s141, 1
        %s4851 = smul.addr %s4850, 256
        %s4852 = scalar_lea.vmem [#allocation10], %s4851
        // Predicated region
        $region53: #{tpu_custom_call.1} parent=39 // pred_check
          %p4853 = pneg %p151
        $region54: #{tpu_custom_call.1} parent=39 // pred_check_branch
          %4855 = sbr.rel (%p4853) target = $region56
        $region55: #{tpu_custom_call.1} parent=39 // pred_region
          %s4857 = ssub.s32 4096, 4096
          %4858 = vsyncadd %s4849, %s4857
          %s4859 = smul.addr %s23, 32
          %s4860 = smul.addr %s4859, 128
          %s4861 = scalar_lea.hbm %s5, %s4860
          %s4862 = sshll.u32 %s4852, 4
          %s4863 = int_to_ptr.vmem [resolvable:$true] %s4862
          %4868 = dma.vmem_to_hbm [thread:$0]  %s4863, 4096, %s4861, %s4849, 128, 128, 8
        $region56: #{tpu_custom_call.1} parent=39 // pred_fallthru
          _
      $region40: #{tpu_custom_call.1} parent=5 // pred_fallthru
        _
      %p4869 = scmp.le.s32.totalorder 2, %s18
      // Predicated region
      $region57: #{tpu_custom_call.1} parent=5 // pred_check
        %p4870 = pneg %p4869
      $region58: #{tpu_custom_call.1} parent=5 // pred_check_branch
        %4872 = sbr.rel (%p4870) target = $region60
      $region59: #{tpu_custom_call.1} parent=5 // pred_region
        %s4873 = ssub.s32 %s18, 2
        // Predicated region
        $region61: #{tpu_custom_call.1} parent=59 // pred_check
          %p4874 = pneg %p157
        $region62: #{tpu_custom_call.1} parent=59 // pred_check_branch
          %4876 = sbr.rel (%p4874) target = $region64
        $region63: #{tpu_custom_call.1} parent=59 // pred_region
          %s4877 = sand.u32 %s142, 1
          %s4878 = scalar_lea.sflag [#allocation6], %s4877
          %s4879 = sand.u32 %s142, 1
          %s4880 = smul.addr %s4879, 256
          %s4881 = scalar_lea.vmem [#allocation10], %s4880
          %4882 = dma.done %s4878, 4096
        $region64: #{tpu_custom_call.1} parent=59 // pred_fallthru
          _
      $region60: #{tpu_custom_call.1} parent=5 // pred_fallthru
        _
    $region6: #{tpu_custom_call.1} parent=1 // loop_footer
      %s22 = sadd.s32 1, %s18
    $region7: #{tpu_custom_call.1} parent=1 // loop_footer_branch
      %17 = sbr.rel target = $region3
    $region8: #{tpu_custom_call.1} parent=1 // loop_exit
      _
    %4883 = vsyncpa [#allocation5], 1
    %s4884 = scalar_lea.sflag [#allocation5], 1
    %4885 = vsyncpa %s4884, 1
    %4886 = vsyncpa [#allocation8], 1
    %4887 = vsyncpa [#allocation6], 1
    %s4888 = scalar_lea.sflag [#allocation6], 1
    %4889 = vsyncpa %s4888, 1

// kernel: tpu_custom_call.1
$region0: #{tpu_custom_call.1}
  #allocation0 [shape = 'u32[]', space=smem, size = 0x4, offset = 0x4, fixed_abs, tag = 'smem constant byte address 0x4 - core index']
  #allocation1 [shape = 'u32[144,128]{1,0:T(1,128)}', space=vmem, size = 0x12000, scoped, tag = 'internal scratch']
  #allocation2 [shape = 'f32[1,18,32,128]{3,2,1,0:T(8,128)}', space=vmem, size = 0x48000, scoped, tag = 'scratch operand']
  #allocation3 [shape = 'bf16[1,16,16,1152]{3,2,1,0:T(8,128)(2,1)}', space=vmem, size = 0x90000, scoped, tag = 'scratch operand']
  %s0 = inlined_call_operand.hbm [shape: f32[4,16,16,128], index: 0, kind: input, shape index: {}]
  %s1 = inlined_call_operand.hbm [shape: bf16[1152,128], index: 1, kind: input, shape index: {}]
  %s2 = inlined_call_operand.vmem [shape: f32[1,128], index: 2, kind: input, shape index: {}]
  %s3 = inlined_call_operand.hbm [shape: f32[128,128], index: 3, kind: input, shape index: {}]
  %s4 = inlined_call_operand.vmem [shape: f32[1,128], index: 4, kind: input, shape index: {}]
  %s5 = inlined_call_operand.hbm [shape: f32[4,16,16,128], index: 5, kind: output, shape index: {}]
  %s6 = sld [smem:[#allocation0]]
  $region65: #{tpu_custom_call.1} parent=0
    _
  %s8 = ssub.s32 1, %s6
  %s9 = scalar_select 0, %s8, %s6
  $region1: #{tpu_custom_call.1} parent=0
    #allocation4 [shape = 'u8[262144]{0}', space=vmem, size = 0x40000, scoped, tag = 'input window, operand 0']
    #allocation5 [shape = 's32[2]{0}', space=sflag, size = 0x8, scoped, tag = 'scoped memory for tpu_custom_call.1']
    #allocation6 [shape = 's32[2]{0}', space=sflag, size = 0x8, scoped, tag = 'scoped memory for tpu_custom_call.1']
    #allocation7 [shape = 'u8[294912]{0}', space=vmem, size = 0x48000, scoped, tag = 'input window, operand 1, single buffered']
    #allocation8 [shape = 's32[1]{0}', space=sflag, size = 0x4, scoped, tag = 'scoped memory for tpu_custom_call.1']
    #allocation9 [shape = 'u8[65536]{0}', space=vmem, size = 0x10000, scoped, tag = 'input window, operand 3, single buffered']
    #allocation10 [shape = 'u8[262144]{0}', space=vmem, size = 0x40000, scoped, tag = 'output window, operand 0']
    %10 = vsyncpa [#allocation5], 0
    %s11 = scalar_lea.sflag [#allocation5], 1
    %12 = vsyncpa %s11, 0
    %13 = vsyncpa [#allocation8], 0
    %14 = vsyncpa [#allocation6], 0
    %s15 = scalar_lea.sflag [#allocation6], 1
    %16 = vsyncpa %s15, 0
    loop: start=0, step=1, limit=6
    $region2: #{tpu_custom_call.1} parent=1 // loop_pre_header
      _
    $region3: #{tpu_custom_call.1} parent=1 // loop_header
      %s18 = sphi 0, %s22
      %p19 = scmp.ge.s32.totalorder %s18, 6
      %s28 = sphi 0, %s30
      %s31 = sphi 0, %s28
      %s32 = sphi 0, %s31
      %s48 = sphi 0, %s32
      %s52 = sphi 0, %s52
      %s54 = sphi 0, %s52
      %s55 = sphi 0, %s54
      %s69 = sphi 0, %s55
      %s73 = sphi 0, %s73
      %s75 = sphi 0, %s73
      %s76 = sphi 0, %s75
      %s90 = sphi 0, %s76
      %s94 = sphi 0, %s94
      %s96 = sphi 0, %s94
      %s97 = sphi 0, %s96
      %s111 = sphi 0, %s97
      %s115 = sphi 0, %s115
      %s117 = sphi 0, %s115
      %s118 = sphi 0, %s117
      %s132 = sphi 0, %s118
      %s138 = sphi 0, %s140
      %s141 = sphi 0, %s138
      %s142 = sphi 0, %s141
      %s158 = sphi 0, %s142
    $region4: #{tpu_custom_call.1} parent=1 // loop_header_branch
      %21 = sbr.rel (%p19) target = $region8
    $region5: #{tpu_custom_call.1} parent=1 // loop_body
      %s23 = ssub.s32 %s18, 1
      %s24 = ssub.s32 %s18, 2
      %s25 = sadd.s32 %s18, 1
      %s26 = ssub.s32 %s18, %s25
      %p27 = scmp.eq.s32.totalorder %s26, 0
      %s29 = sadd.s32 %s28, 1
      %s30 = scalar_select %p27, %s28, %s29
      %p33 = pneg %p27
      %p34 = scmp.eq.s32.totalorder %s18, 3
      %p35 = por %p33, %p34
      %p36 = scmp.ne.s32.totalorder %s28, %s31
      %p37 = scmp.eq.s32.totalorder %s18, 0
      %p38 = por %p36, %p37
      %p39 = scmp.ne.s32.totalorder %s28, %s31
      %p40 = scmp.eq.s32.totalorder %s23, 3
      %p41 = por %p39, %p40
      %p42 = scmp.ne.s32.totalorder %s31, %s32
      %p43 = scmp.eq.s32.totalorder %s23, 0
      %p44 = por %p42, %p43
      %p45 = scmp.ne.s32.totalorder %s31, %s32
      %p46 = scmp.eq.s32.totalorder %s24, 3
      %p47 = por %p45, %p46
      %p49 = scmp.ne.s32.totalorder %s32, %s48
      %p50 = scmp.eq.s32.totalorder %s24, 0
      %p51 = por %p49, %p50
      %s53 = sadd.s32 %s52, 1
      %p56 = scmp.eq.s32.totalorder %s18, 3
      %p57 = scmp.ne.s32.totalorder %s52, %s54
      %p58 = scmp.eq.s32.totalorder %s18, 0
      %p59 = por %p57, %p58
      %p60 = scmp.ne.s32.totalorder %s52, %s54
      %p61 = scmp.eq.s32.totalorder %s23, 3
      %p62 = por %p60, %p61
      %p63 = scmp.ne.s32.totalorder %s54, %s55
      %p64 = scmp.eq.s32.totalorder %s23, 0
      %p65 = por %p63, %p64
      %p66 = scmp.ne.s32.totalorder %s54, %s55
      %p67 = scmp.eq.s32.totalorder %s24, 3
      %p68 = por %p66, %p67
      %p70 = scmp.ne.s32.totalorder %s55, %s69
      %p71 = scmp.eq.s32.totalorder %s24, 0
      %p72 = por %p70, %p71
      %s74 = sadd.s32 %s73, 1
      %p77 = scmp.eq.s32.totalorder %s18, 3
      %p78 = scmp.ne.s32.totalorder %s73, %s75
      %p79 = scmp.eq.s32.totalorder %s18, 0
      %p80 = por %p78, %p79
      %p81 = scmp.ne.s32.totalorder %s73, %s75
      %p82 = scmp.eq.s32.totalorder %s23, 3
      %p83 = por %p81, %p82
      %p84 = scmp.ne.s32.totalorder %s75, %s76
      %p85 = scmp.eq.s32.totalorder %s23, 0
      %p86 = por %p84, %p85
      %p87 = scmp.ne.s32.totalorder %s75, %s76
      %p88 = scmp.eq.s32.totalorder %s24, 3
      %p89 = por %p87, %p88
      %p91 = scmp.ne.s32.totalorder %s76, %s90
      %p92 = scmp.eq.s32.totalorder %s24, 0
      %p93 = por %p91, %p92
      %s95 = sadd.s32 %s94, 1
      %p98 = scmp.eq.s32.totalorder %s18, 3
      %p99 = scmp.ne.s32.totalorder %s94, %s96
      %p100 = scmp.eq.s32.totalorder %s18, 0
      %p101 = por %p99, %p100
      %p102 = scmp.ne.s32.totalorder %s94, %s96
      %p103 = scmp.eq.s32.totalorder %s23, 3
      %p104 = por %p102, %p103
      %p105 = scmp.ne.s32.totalorder %s96, %s97
      %p106 = scmp.eq.s32.totalorder %s23, 0
      %p107 = por %p105, %p106
      %p108 = scmp.ne.s32.totalorder %s96, %s97
      %p109 = scmp.eq.s32.totalorder %s24, 3
      %p110 = por %p108, %p109
      %p112 = scmp.ne.s32.totalorder %s97, %s111
      %p113 = scmp.eq.s32.totalorder %s24, 0
      %p114 = por %p112, %p113
      %s116 = sadd.s32 %s115, 1
      %p119 = scmp.eq.s32.totalorder %s18, 3
      %p120 = scmp.ne.s32.totalorder %s115, %s117
      %p121 = scmp.eq.s32.totalorder %s18, 0
      %p122 = por %p120, %p121
      %p123 = scmp.ne.s32.totalorder %s115, %s117
      %p124 = scmp.eq.s32.totalorder %s23, 3
      %p125 = por %p123, %p124
      %p126 = scmp.ne.s32.totalorder %s117, %s118
      %p127 = scmp.eq.s32.totalorder %s23, 0
      %p128 = por %p126, %p127
      %p129 = scmp.ne.s32.totalorder %s117, %s118
      %p130 = scmp.eq.s32.totalorder %s24, 3
      %p131 = por %p129, %p130
      %p133 = scmp.ne.s32.totalorder %s118, %s132
      %p134 = scmp.eq.s32.totalorder %s24, 0
      %p135 = por %p133, %p134
      %s136 = ssub.s32 %s18, %s25
      %p137 = scmp.eq.s32.totalorder %s136, 0
      %s139 = sadd.s32 %s138, 1
      %s140 = scalar_select %p137, %s138, %s139
      %p143 = pneg %p137
      %p144 = scmp.eq.s32.totalorder %s18, 3
      %p145 = por %p143, %p144
      %p146 = scmp.ne.s32.totalorder %s138, %s141
      %p147 = scmp.eq.s32.totalorder %s18, 0
      %p148 = por %p146, %p147
      %p149 = scmp.ne.s32.totalorder %s138, %s141
      %p150 = scmp.eq.s32.totalorder %s23, 3
      %p151 = por %p149, %p150
      %p152 = scmp.ne.s32.totalorder %s141, %s142
      %p153 = scmp.eq.s32.totalorder %s23, 0
      %p154 = por %p152, %p153
      %p155 = scmp.ne.s32.totalorder %s141, %s142
      %p156 = scmp.eq.s32.totalorder %s24, 3
      %p157 = por %p155, %p156
      %p159 = scmp.ne.s32.totalorder %s142, %s158
      %p160 = scmp.eq.s32.totalorder %s24, 0
      %p161 = por %p159, %p160
      %p162 = scmp.le.s32.totalorder 1, %s18
      %p163 = scmp.lt.s32.totalorder %s18, 5
      %p164 = pnand %p162, %p163
      %p165 = pneg %p164
      // Predicated region
      $region9: #{tpu_custom_call.1} parent=5 // pred_check
        _
      $region10: #{tpu_custom_call.1} parent=5 // pred_check_branch
        %167 = sbr.rel (%p164) target = $region12
      $region11: #{tpu_custom_call.1} parent=5 // pred_region
        %s168 = ssub.s32 %s18, 1
        // Predicated region
        $region13: #{tpu_custom_call.1} parent=11 // pred_check
          %p169 = pneg %p65
        $region14: #{tpu_custom_call.1} parent=11 // pred_check_branch
          %171 = sbr.rel (%p169) target = $region16
        $region15: #{tpu_custom_call.1} parent=11 // pred_region
          %s173 = ssub.s32 9216, 9216
          %174 = vsyncadd [#allocation8], %s173
          %s175 = sshll.u32 [#allocation7], 4
          %s176 = int_to_ptr.vmem [resolvable:$true] %s175
          %181 = dma.hbm_to_vmem [thread:$0]  %s1, 9216, %s176, [#allocation8], 64, 64, 4
        $region16: #{tpu_custom_call.1} parent=11 // pred_fallthru
          _
        // Predicated region
        $region17: #{tpu_custom_call.1} parent=11 // pred_check
          %p182 = pneg %p86
        $region18: #{tpu_custom_call.1} parent=11 // pred_check_branch
          %184 = sbr.rel (%p182) target = $region20
        $region19: #{tpu_custom_call.1} parent=11 // pred_region
          _
        $region20: #{tpu_custom_call.1} parent=11 // pred_fallthru
          _
        // Predicated region
        $region21: #{tpu_custom_call.1} parent=11 // pred_check
          %p185 = pneg %p107
        $region22: #{tpu_custom_call.1} parent=11 // pred_check_branch
          %187 = sbr.rel (%p185) target = $region24
        $region23: #{tpu_custom_call.1} parent=11 // pred_region
          %s189 = ssub.s32 2048, 2048
          %190 = vsyncadd [#allocation8], %s189
          %s191 = sshll.u32 [#allocation9], 4
          %s192 = int_to_ptr.vmem [resolvable:$true] %s191
          %197 = dma.hbm_to_vmem [thread:$0]  %s3, 2048, %s192, [#allocation8], 128, 128, 8
        $region24: #{tpu_custom_call.1} parent=11 // pred_fallthru
          _
        // Predicated region
        $region25: #{tpu_custom_call.1} parent=11 // pred_check
          %p198 = pneg %p128
        $region26: #{tpu_custom_call.1} parent=11 // pred_check_branch
          %200 = sbr.rel (%p198) target = $region28
        $region27: #{tpu_custom_call.1} parent=11 // pred_region
          _
        $region28: #{tpu_custom_call.1} parent=11 // pred_fallthru
          _
      $region12: #{tpu_custom_call.1} parent=5 // pred_fallthru
        _
      %p201 = scmp.lt.s32.totalorder %s18, 4
      // Predicated region
      $region29: #{tpu_custom_call.1} parent=5 // pred_check
        %p202 = pneg %p201
      $region30: #{tpu_custom_call.1} parent=5 // pred_check_branch
        %204 = sbr.rel (%p202) target = $region32
      $region31: #{tpu_custom_call.1} parent=5 // pred_region
        // Predicated region
        $region33: #{tpu_custom_call.1} parent=31 // pred_check
          %p205 = pneg %p38
        $region34: #{tpu_custom_call.1} parent=31 // pred_check_branch
          %207 = sbr.rel (%p205) target = $region36
        $region35: #{tpu_custom_call.1} parent=31 // pred_region
          %s208 = sand.u32 %s28, 1
          %s209 = scalar_lea.sflag [#allocation5], %s208
          %s210 = sand.u32 %s28, 1
          %s211 = smul.addr %s210, 256
          %s212 = scalar_lea.vmem [#allocation4], %s211
          %s214 = ssub.s32 4096, 4096
          %215 = vsyncadd %s209, %s214
          %s216 = smul.addr %s18, 32
          %s217 = smul.addr %s216, 128
          %s218 = scalar_lea.hbm %s0, %s217
          %s219 = sshll.u32 %s212, 4
          %s220 = int_to_ptr.vmem [resolvable:$true] %s219
          %225 = dma.hbm_to_vmem [thread:$0]  %s218, 4096, %s220, %s209, 128, 128, 8
        $region36: #{tpu_custom_call.1} parent=31 // pred_fallthru
          _
      $region32: #{tpu_custom_call.1} parent=5 // pred_fallthru
        _
      %p226 = scmp.le.s32.totalorder 1, %s18
      %p227 = scmp.lt.s32.totalorder %s18, 5
      %p228 = pnand %p226, %p227
      %p229 = pneg %p228
      // Predicated region
      $region37: #{tpu_custom_call.1} parent=5 // pred_check
        _
      $region38: #{tpu_custom_call.1} parent=5 // pred_check_branch
        %231 = sbr.rel (%p228) target = $region40
      $region39: #{tpu_custom_call.1} parent=5 // pred_region
        %s232 = ssub.s32 %s18, 1
        %s233 = sand.u32 %s31, 1
        %s234 = scalar_lea.sflag [#allocation5], %s233
        %s235 = sand.u32 %s31, 1
        %s236 = smul.addr %s235, 256
        %s237 = scalar_lea.vmem [#allocation4], %s236
        // Predicated region
        $region41: #{tpu_custom_call.1} parent=39 // pred_check
          %p238 = pneg %p44
        $region42: #{tpu_custom_call.1} parent=39 // pred_check_branch
          %240 = sbr.rel (%p238) target = $region44
        $region43: #{tpu_custom_call.1} parent=39 // pred_region
          %241 = dma.done %s234, 4096
        $region44: #{tpu_custom_call.1} parent=39 // pred_fallthru
          _
        // Predicated region
        $region45: #{tpu_custom_call.1} parent=39 // pred_check
          %p242 = pneg %p65
        $region46: #{tpu_custom_call.1} parent=39 // pred_check_branch
          %244 = sbr.rel (%p242) target = $region48
        $region47: #{tpu_custom_call.1} parent=39 // pred_region
          %245 = dma.done [#allocation8], 9216
        $region48: #{tpu_custom_call.1} parent=39 // pred_fallthru
          _
        // Predicated region
        $region49: #{tpu_custom_call.1} parent=39 // pred_check
          %p246 = pneg %p107
        $region50: #{tpu_custom_call.1} parent=39 // pred_check_branch
          %248 = sbr.rel (%p246) target = $region52
        $region51: #{tpu_custom_call.1} parent=39 // pred_region
          %249 = dma.done [#allocation8], 2048
        $region52: #{tpu_custom_call.1} parent=39 // pred_fallthru
          _
        %s250 = sand.u32 %s31, 1
        %s251 = scalar_lea.sflag [#allocation5], %s250
        %s252 = sand.u32 %s31, 1
        %s253 = smul.addr %s252, 256
        %s254 = scalar_lea.vmem [#allocation4], %s253
        %p255 = pneg %p44
        %p256 = pneg %p41
        %p257 = pneg %p65
        %p258 = pneg %p62
        %p259 = pneg %p86
        %p260 = pneg %p83
        %p261 = pneg %p107
        %p262 = pneg %p104
        %p263 = pneg %p128
        %p264 = pneg %p125
        %p265 = pneg %p154
        %p266 = pneg %p151
        %s267 = sand.u32 %s141, 1
        %s268 = scalar_lea.sflag [#allocation6], %s267
        %s269 = sand.u32 %s141, 1
        %s270 = smul.addr %s269, 256
        %s271 = scalar_lea.vmem [#allocation10], %s270
        %v273 = vld [vmem:[%s237] sm:$0xff]
        %v274 = vld [vmem:[%s237 + $0x8] sm:$0xff]
        %v275 = vld [vmem:[%s237 + $0x10] sm:$0xff]
        %v276 = vld [vmem:[%s237 + $0x18] sm:$0xff]
        %v277 = vld [vmem:[%s237 + $0x20] sm:$0xff]
        %v278 = vld [vmem:[%s237 + $0x28] sm:$0xff]
        %v279 = vld [vmem:[%s237 + $0x30] sm:$0xff]
        %v280 = vld [vmem:[%s237 + $0x38] sm:$0xff]
        %v281 = vld [vmem:[%s237 + $0x40] sm:$0xff]
        %v282 = vld [vmem:[%s237 + $0x48] sm:$0xff]
        %v283 = vld [vmem:[%s237 + $0x50] sm:$0xff]
        %v284 = vld [vmem:[%s237 + $0x58] sm:$0xff]
        %v285 = vld [vmem:[%s237 + $0x60] sm:$0xff]
        %v286 = vld [vmem:[%s237 + $0x68] sm:$0xff]
        %v287 = vld [vmem:[%s237 + $0x70] sm:$0xff]
        %v288 = vld [vmem:[%s237 + $0x78] sm:$0xff]
        %v289 = vld [vmem:[%s237 + $0x80] sm:$0xff]
        %v290 = vld [vmem:[%s237 + $0x88] sm:$0xff]
        %v291 = vld [vmem:[%s237 + $0x90] sm:$0xff]
        %v292 = vld [vmem:[%s237 + $0x98] sm:$0xff]
        %v293 = vld [vmem:[%s237 + $0xa0] sm:$0xff]
        %v294 = vld [vmem:[%s237 + $0xa8] sm:$0xff]
        %v295 = vld [vmem:[%s237 + $0xb0] sm:$0xff]
        %v296 = vld [vmem:[%s237 + $0xb8] sm:$0xff]
        %v297 = vld [vmem:[%s237 + $0xc0] sm:$0xff]
        %v298 = vld [vmem:[%s237 + $0xc8] sm:$0xff]
        %v299 = vld [vmem:[%s237 + $0xd0] sm:$0xff]
        %v300 = vld [vmem:[%s237 + $0xd8] sm:$0xff]
        %v301 = vld [vmem:[%s237 + $0xe0] sm:$0xff]
        %v302 = vld [vmem:[%s237 + $0xe8] sm:$0xff]
        %v303 = vld [vmem:[%s237 + $0xf0] sm:$0xff]
        %v304 = vld [vmem:[%s237 + $0xf8] sm:$0xff]
        %305 = vst [vmem:[#allocation2] sm:$0xff] 0.0
        %306 = vst [vmem:[#allocation2 + $0x8] sm:$0xff] 0.0
        %307 = vst [vmem:[#allocation2 + $0x10] sm:$0xff] 0.0
        %308 = vst [vmem:[#allocation2 + $0x18] sm:$0xff] 0.0
        %s309 = scalar_lea.vmem [#allocation2], 544
        %310 = vst [vmem:[%s309] sm:$0xff] 0.0
        %311 = vst [vmem:[%s309 + $0x8] sm:$0xff] 0.0
        %312 = vst [vmem:[%s309 + $0x10] sm:$0xff] 0.0
        %313 = vst [vmem:[%s309 + $0x18] sm:$0xff] 0.0
        %s314 = scalar_lea.vmem [#allocation2], 32
        %315 = vst [vmem:[%s314 + $0x7] sm:$0x1] 0.0
        %316 = vst [vmem:[%s314 + $0x27] sm:$0x1] 0.0
        %317 = vst [vmem:[%s314 + $0x47] sm:$0x1] 0.0
        %318 = vst [vmem:[%s314 + $0x67] sm:$0x1] 0.0
        %319 = vst [vmem:[%s314 + $0x87] sm:$0x1] 0.0
        %320 = vst [vmem:[%s314 + $0xa7] sm:$0x1] 0.0
        %321 = vst [vmem:[%s314 + $0xc7] sm:$0x1] 0.0
        %322 = vst [vmem:[%s314 + $0xe7] sm:$0x1] 0.0
        %323 = vst [vmem:[%s314 + $0x107] sm:$0x1] 0.0
        %324 = vst [vmem:[%s314 + $0x127] sm:$0x1] 0.0
        %325 = vst [vmem:[%s314 + $0x147] sm:$0x1] 0.0
        %326 = vst [vmem:[%s314 + $0x167] sm:$0x1] 0.0
        %327 = vst [vmem:[%s314 + $0x187] sm:$0x1] 0.0
        %328 = vst [vmem:[%s314 + $0x1a7] sm:$0x1] 0.0
        %329 = vst [vmem:[%s314 + $0x1c7] sm:$0x1] 0.0
        %330 = vst [vmem:[%s314 + $0x1e7] sm:$0x1] 0.0
        %331 = vst [vmem:[%s314 + $0x18] sm:$0x1] 0.0
        %332 = vst [vmem:[%s314 + $0x38] sm:$0x1] 0.0
        %333 = vst [vmem:[%s314 + $0x58] sm:$0x1] 0.0
        %334 = vst [vmem:[%s314 + $0x78] sm:$0x1] 0.0
        %335 = vst [vmem:[%s314 + $0x98] sm:$0x1] 0.0
        %336 = vst [vmem:[%s314 + $0xb8] sm:$0x1] 0.0
        %337 = vst [vmem:[%s314 + $0xd8] sm:$0x1] 0.0
        %338 = vst [vmem:[%s314 + $0xf8] sm:$0x1] 0.0
        %339 = vst [vmem:[%s314 + $0x118] sm:$0x1] 0.0
        %340 = vst [vmem:[%s314 + $0x138] sm:$0x1] 0.0
        %341 = vst [vmem:[%s314 + $0x158] sm:$0x1] 0.0
        %342 = vst [vmem:[%s314 + $0x178] sm:$0x1] 0.0
        %343 = vst [vmem:[%s314 + $0x198] sm:$0x1] 0.0
        %344 = vst [vmem:[%s314 + $0x1b8] sm:$0x1] 0.0
        %345 = vst [vmem:[%s314 + $0x1d8] sm:$0x1] 0.0
        %346 = vst [vmem:[%s314 + $0x1f8] sm:$0x1] 0.0
        %347 = vst [vmem:[%s314 + $0x8] sm:$0xff] %v273
        %348 = vst [vmem:[%s314 + $0x10] sm:$0xff] %v274
        %349 = vst [vmem:[%s314 + $0x28] sm:$0xff] %v275
        %350 = vst [vmem:[%s314 + $0x30] sm:$0xff] %v276
        %351 = vst [vmem:[%s314 + $0x48] sm:$0xff] %v277
        %352 = vst [vmem:[%s314 + $0x50] sm:$0xff] %v278
        %353 = vst [vmem:[%s314 + $0x68] sm:$0xff] %v279
        %354 = vst [vmem:[%s314 + $0x70] sm:$0xff] %v280
        %355 = vst [vmem:[%s314 + $0x88] sm:$0xff] %v281
        %356 = vst [vmem:[%s314 + $0x90] sm:$0xff] %v282
        %357 = vst [vmem:[%s314 + $0xa8] sm:$0xff] %v283
        %358 = vst [vmem:[%s314 + $0xb0] sm:$0xff] %v284
        %359 = vst [vmem:[%s314 + $0xc8] sm:$0xff] %v285
        %360 = vst [vmem:[%s314 + $0xd0] sm:$0xff] %v286
        %361 = vst [vmem:[%s314 + $0xe8] sm:$0xff] %v287
        %362 = vst [vmem:[%s314 + $0xf0] sm:$0xff] %v288
        %363 = vst [vmem:[%s314 + $0x108] sm:$0xff] %v289
        %364 = vst [vmem:[%s314 + $0x110] sm:$0xff] %v290
        %365 = vst [vmem:[%s314 + $0x128] sm:$0xff] %v291
        %366 = vst [vmem:[%s314 + $0x130] sm:$0xff] %v292
        %367 = vst [vmem:[%s314 + $0x148] sm:$0xff] %v293
        %368 = vst [vmem:[%s314 + $0x150] sm:$0xff] %v294
        %369 = vst [vmem:[%s314 + $0x168] sm:$0xff] %v295
        %370 = vst [vmem:[%s314 + $0x170] sm:$0xff] %v296
        %371 = vst [vmem:[%s314 + $0x188] sm:$0xff] %v297
        %372 = vst [vmem:[%s314 + $0x190] sm:$0xff] %v298
        %373 = vst [vmem:[%s314 + $0x1a8] sm:$0xff] %v299
        %374 = vst [vmem:[%s314 + $0x1b0] sm:$0xff] %v300
        %375 = vst [vmem:[%s314 + $0x1c8] sm:$0xff] %v301
        %376 = vst [vmem:[%s314 + $0x1d0] sm:$0xff] %v302
        %377 = vst [vmem:[%s314 + $0x1e8] sm:$0xff] %v303
        %378 = vst [vmem:[%s314 + $0x1f0] sm:$0xff] %v304
        %v379 = vadd.f32 %v273, %v274
        %v380 = vadd.f32 %v379, %v275
        %v381 = vadd.f32 %v380, %v276
        %v382 = vadd.f32 %v381, %v277
        %v383 = vadd.f32 %v382, %v278
        %v384 = vadd.f32 %v383, %v279
        %v385 = vadd.f32 %v384, %v280
        %v386 = vadd.f32 %v385, %v281
        %v387 = vadd.f32 %v386, %v282
        %v388 = vadd.f32 %v387, %v283
        %v389 = vadd.f32 %v388, %v284
        %v390 = vadd.f32 %v389, %v285
        %v391 = vadd.f32 %v390, %v286
        %v392 = vadd.f32 %v391, %v287
        %v393 = vadd.f32 %v392, %v288
        %v394 = vadd.f32 %v393, %v289
        %v395 = vadd.f32 %v394, %v290
        %v396 = vadd.f32 %v395, %v291
        %v397 = vadd.f32 %v396, %v292
        %v398 = vadd.f32 %v397, %v293
        %v399 = vadd.f32 %v398, %v294
        %v400 = vadd.f32 %v399, %v295
        %v401 = vadd.f32 %v400, %v296
        %v402 = vadd.f32 %v401, %v297
        %v403 = vadd.f32 %v402, %v298
        %v404 = vadd.f32 %v403, %v299
        %v405 = vadd.f32 %v404, %v300
        %v406 = vadd.f32 %v405, %v301
        %v407 = vadd.f32 %v406, %v302
        %v408 = vadd.f32 %v407, %v303
        %v409 = vadd.f32 %v408, %v304
        %v410 = vrot.slane %v409, 4
        %v411 = vadd.f32 %v409, %v410
        %v412 = vrot.slane %v411, 2
        %v413 = vadd.f32 %v411, %v412
        %v414 = vrot.slane %v413, 1
        %v415 = vadd.f32 %v413, %v414
        %v416 = vrcp.pop 256.0
        %v417 = vmul.f32 %v415, %v416
        %v418 = vld [vmem:[#allocation9] sm:$0xff]
        %v419 = vld [vmem:[#allocation9 + $0x8] sm:$0xff]
        %v420 = vld [vmem:[#allocation9 + $0x10] sm:$0xff]
        %v421 = vld [vmem:[#allocation9 + $0x18] sm:$0xff]
        %v422 = vld [vmem:[#allocation9 + $0x20] sm:$0xff]
        %v423 = vld [vmem:[#allocation9 + $0x28] sm:$0xff]
        %v424 = vld [vmem:[#allocation9 + $0x30] sm:$0xff]
        %v425 = vld [vmem:[#allocation9 + $0x38] sm:$0xff]
        %v426 = vld [vmem:[#allocation9 + $0x40] sm:$0xff]
        %v427 = vld [vmem:[#allocation9 + $0x48] sm:$0xff]
        %v428 = vld [vmem:[#allocation9 + $0x50] sm:$0xff]
        %v429 = vld [vmem:[#allocation9 + $0x58] sm:$0xff]
        %v430 = vld [vmem:[#allocation9 + $0x60] sm:$0xff]
        %v431 = vld [vmem:[#allocation9 + $0x68] sm:$0xff]
        %v432 = vld [vmem:[#allocation9 + $0x70] sm:$0xff]
        %v433 = vld [vmem:[#allocation9 + $0x78] sm:$0xff]
        %v434 = vld [vmem:[%s4] sm:$0x1]
        %435 = vmatprep.subr.mxu0 0.0
        %436 = vmatpush1.msra.mxu0 %v433
        %437 = vmatprep.subr.mxu0 0.0
        %438 = vmatpush1.msra.mxu0 %v432
        %439 = vmatprep.subr.mxu0 0.0
        %440 = vmatpush1.msra.mxu0 %v431
        %441 = vmatprep.subr.mxu0 0.0
        %442 = vmatpush1.msra.mxu0 %v430
        %443 = vmatprep.subr.mxu0 0.0
        %444 = vmatpush1.msra.mxu0 %v429
        %445 = vmatprep.subr.mxu0 0.0
        %446 = vmatpush1.msra.mxu0 %v428
        %447 = vmatprep.subr.mxu0 0.0
        %448 = vmatpush1.msra.mxu0 %v427
        %449 = vmatprep.subr.mxu0 0.0
        %450 = vmatpush1.msra.mxu0 %v426
        %451 = vmatprep.subr.mxu0 0.0
        %452 = vmatpush1.msra.mxu0 %v425
        %453 = vmatprep.subr.mxu0 0.0
        %454 = vmatpush1.msra.mxu0 %v424
        %455 = vmatprep.subr.mxu0 0.0
        %456 = vmatpush1.msra.mxu0 %v423
        %457 = vmatprep.subr.mxu0 0.0
        %458 = vmatpush1.msra.mxu0 %v422
        %459 = vmatprep.subr.mxu0 0.0
        %460 = vmatpush1.msra.mxu0 %v421
        %461 = vmatprep.subr.mxu0 0.0
        %462 = vmatpush1.msra.mxu0 %v420
        %463 = vmatprep.subr.mxu0 0.0
        %464 = vmatpush1.msra.mxu0 %v419
        %465 = vmatprep.subr.mxu0 0.0
        %466 = vmatpush1.msra.mxu0 %v418
        %467 = vmatprep.subr.mxu0 0.0
        %468 = vmatpush2.msra.mxu0 0.0
        %469 = vmatprep.subr.mxu0 0.0
        %470 = vmatpush2.msra.mxu0 0.0
        %471 = vmatprep.subr.mxu0 0.0
        %472 = vmatpush2.msra.mxu0 0.0
        %473 = vmatprep.subr.mxu0 0.0
        %474 = vmatpush2.msra.mxu0 0.0
        %475 = vmatprep.subr.mxu0 0.0
        %476 = vmatpush2.msra.mxu0 0.0
        %477 = vmatprep.subr.mxu0 0.0
        %478 = vmatpush2.msra.mxu0 0.0
        %479 = vmatprep.subr.mxu0 0.0
        %480 = vmatpush2.msra.mxu0 0.0
        %481 = vmatprep.subr.mxu0 0.0
        %482 = vmatpush2.msra.mxu0 0.0
        %483 = vmatprep.subr.mxu0 0.0
        %484 = vmatpush2.msra.mxu0 0.0
        %485 = vmatprep.subr.mxu0 0.0
        %486 = vmatpush2.msra.mxu0 0.0
        %487 = vmatprep.subr.mxu0 0.0
        %488 = vmatpush2.msra.mxu0 0.0
        %489 = vmatprep.subr.mxu0 0.0
        %490 = vmatpush2.msra.mxu0 0.0
        %491 = vmatprep.subr.mxu0 0.0
        %492 = vmatpush2.msra.mxu0 0.0
        %493 = vmatprep.subr.mxu0 0.0
        %494 = vmatpush2.msra.mxu0 0.0
        %495 = vmatprep.subr.mxu0 0.0
        %496 = vmatpush2.msra.mxu0 0.0
        %497 = vmatprep.subr.mxu0 0.0
        %498 = vmatpush2.msra.mxu0 0.0
        %499 = vmatprep.mubr.f32.mxu0 0.0
        %500 = vmatmul.mubr.f32.gmra.mxu0 %v417
        %v501 = vpop.f32.mrf.mxu0
        %v502 = vadd.f32 %v434, %v501
        %v503 = vpop.f32.mrf.mxu0
        %504 = vdwg.mxu0
        %v505 = vxor.u32 %v502, 2147483648
        %v506 = vmul.f32 %v505, 1.442695
        %v507 = vpow.pop %v506
        %v508 = vadd.f32 %v507, 1.0
        %v509 = vrcp.pop %v508
        %v510 = vmul.f32 1.0, %v509
        %v511 = vld [vmem:[#allocation2 + $0x7] sm:$0xff]
        %v512 = vld [vmem:[#allocation2 + $0xf] sm:$0xff]
        %v513 = vld [vmem:[#allocation2 + $0x27] sm:$0xff]
        %v514 = vld [vmem:[#allocation2 + $0x2f] sm:$0xff]
        %v515 = vld [vmem:[#allocation2 + $0x47] sm:$0xff]
        %v516 = vld [vmem:[#allocation2 + $0x4f] sm:$0xff]
        %v517 = vld [vmem:[#allocation2 + $0x67] sm:$0xff]
        %v518 = vld [vmem:[#allocation2 + $0x6f] sm:$0xff]
        %v519 = vld [vmem:[#allocation2 + $0x87] sm:$0xff]
        %v520 = vld [vmem:[#allocation2 + $0x8f] sm:$0xff]
        %v521 = vld [vmem:[#allocation2 + $0xa7] sm:$0xff]
        %v522 = vld [vmem:[#allocation2 + $0xaf] sm:$0xff]
        %v523 = vld [vmem:[#allocation2 + $0xc7] sm:$0xff]
        %v524 = vld [vmem:[#allocation2 + $0xcf] sm:$0xff]
        %v525 = vld [vmem:[#allocation2 + $0xe7] sm:$0xff]
        %v526 = vld [vmem:[#allocation2 + $0xef] sm:$0xff]
        %v527 = vld [vmem:[#allocation2 + $0x107] sm:$0xff]
        %v528 = vld [vmem:[#allocation2 + $0x10f] sm:$0xff]
        %v529 = vld [vmem:[#allocation2 + $0x127] sm:$0xff]
        %v530 = vld [vmem:[#allocation2 + $0x12f] sm:$0xff]
        %v531 = vld [vmem:[#allocation2 + $0x147] sm:$0xff]
        %v532 = vld [vmem:[#allocation2 + $0x14f] sm:$0xff]
        %v533 = vld [vmem:[#allocation2 + $0x167] sm:$0xff]
        %v534 = vld [vmem:[#allocation2 + $0x16f] sm:$0xff]
        %v535 = vld [vmem:[#allocation2 + $0x187] sm:$0xff]
        %v536 = vld [vmem:[#allocation2 + $0x18f] sm:$0xff]
        %v537 = vld [vmem:[#allocation2 + $0x1a7] sm:$0xff]
        %v538 = vld [vmem:[#allocation2 + $0x1af] sm:$0xff]
        %v539 = vld [vmem:[#allocation2 + $0x1c7] sm:$0xff]
        %v540 = vld [vmem:[#allocation2 + $0x1cf] sm:$0xff]
        %v541 = vld [vmem:[#allocation2 + $0x1e7] sm:$0xff]
        %v542 = vld [vmem:[#allocation2 + $0x1ef] sm:$0xff]
        %v543 = vpack.c.bf16 %v512, %v511
        %v544 = vpack.c.bf16 %v514, %v513
        %v545 = vpack.c.bf16 %v516, %v515
        %v546 = vpack.c.bf16 %v518, %v517
        %v547 = vpack.c.bf16 %v520, %v519
        %v548 = vpack.c.bf16 %v522, %v521
        %v549 = vpack.c.bf16 %v524, %v523
        %v550 = vpack.c.bf16 %v526, %v525
        %v551 = vpack.c.bf16 %v528, %v527
        %v552 = vpack.c.bf16 %v530, %v529
        %v553 = vpack.c.bf16 %v532, %v531
        %v554 = vpack.c.bf16 %v534, %v533
        %v555 = vpack.c.bf16 %v536, %v535
        %v556 = vpack.c.bf16 %v538, %v537
        %v557 = vpack.c.bf16 %v540, %v539
        %v558 = vpack.c.bf16 %v542, %v541
        %v575 = vunpack.c.l.b16 %v543
        %v576 = vunpack.c.h.b16 %v543
        %v577 = vunpack.c.l.b16 %v544
        %v578 = vunpack.c.h.b16 %v544
        %v579 = vunpack.c.l.b16 %v545
        %v580 = vunpack.c.h.b16 %v545
        %v581 = vunpack.c.l.b16 %v546
        %v582 = vunpack.c.h.b16 %v546
        %v583 = vunpack.c.l.b16 %v547
        %v584 = vunpack.c.h.b16 %v547
        %v585 = vunpack.c.l.b16 %v548
        %v586 = vunpack.c.h.b16 %v548
        %v587 = vunpack.c.l.b16 %v549
        %v588 = vunpack.c.h.b16 %v549
        %v589 = vunpack.c.l.b16 %v550
        %v590 = vunpack.c.h.b16 %v550
        %v591 = vunpack.c.l.b16 %v551
        %v592 = vunpack.c.h.b16 %v551
        %v593 = vunpack.c.l.b16 %v552
        %v594 = vunpack.c.h.b16 %v552
        %v595 = vunpack.c.l.b16 %v553
        %v596 = vunpack.c.h.b16 %v553
        %v597 = vunpack.c.l.b16 %v554
        %v598 = vunpack.c.h.b16 %v554
        %v599 = vunpack.c.l.b16 %v555
        %v600 = vunpack.c.h.b16 %v555
        %v601 = vunpack.c.l.b16 %v556
        %v602 = vunpack.c.h.b16 %v556
        %v603 = vunpack.c.l.b16 %v557
        %v604 = vunpack.c.h.b16 %v557
        %v605 = vunpack.c.l.b16 %v558
        %v606 = vunpack.c.h.b16 %v558
        %v607 = vpack.c.b16 %v575, %v575
        %v608 = vpack.c.b16 %v576, %v576
        %v609 = vpack.c.b16 %v577, %v577
        %v610 = vpack.c.b16 %v578, %v578
        %v611 = vpack.c.b16 %v579, %v579
        %v612 = vpack.c.b16 %v580, %v580
        %v613 = vpack.c.b16 %v581, %v581
        %v614 = vpack.c.b16 %v582, %v582
        %v615 = vpack.c.b16 %v583, %v583
        %v616 = vpack.c.b16 %v584, %v584
        %v617 = vpack.c.b16 %v585, %v585
        %v618 = vpack.c.b16 %v586, %v586
        %v619 = vpack.c.b16 %v587, %v587
        %v620 = vpack.c.b16 %v588, %v588
        %v621 = vpack.c.b16 %v589, %v589
        %v622 = vpack.c.b16 %v590, %v590
        %v623 = vpack.c.b16 %v591, %v591
        %v624 = vpack.c.b16 %v592, %v592
        %v625 = vpack.c.b16 %v593, %v593
        %v626 = vpack.c.b16 %v594, %v594
        %v627 = vpack.c.b16 %v595, %v595
        %v628 = vpack.c.b16 %v596, %v596
        %v629 = vpack.c.b16 %v597, %v597
        %v630 = vpack.c.b16 %v598, %v598
        %v631 = vpack.c.b16 %v599, %v599
        %v632 = vpack.c.b16 %v600, %v600
        %v633 = vpack.c.b16 %v601, %v601
        %v634 = vpack.c.b16 %v602, %v602
        %v635 = vpack.c.b16 %v603, %v603
        %v636 = vpack.c.b16 %v604, %v604
        %v637 = vpack.c.b16 %v605, %v605
        %v638 = vpack.c.b16 %v606, %v606
        %671 = vst [vmem:[#allocation3] sm:$0xf] %v607
        %672 = vst [vmem:[#allocation3 + $0x24] sm:$0xf] %v608
        %673 = vst [vmem:[#allocation3 + $0x48] sm:$0xf] %v609
        %674 = vst [vmem:[#allocation3 + $0x6c] sm:$0xf] %v610
        %675 = vst [vmem:[#allocation3 + $0x90] sm:$0xf] %v611
        %676 = vst [vmem:[#allocation3 + $0xb4] sm:$0xf] %v612
        %677 = vst [vmem:[#allocation3 + $0xd8] sm:$0xf] %v613
        %678 = vst [vmem:[#allocation3 + $0xfc] sm:$0xf] %v614
        %679 = vst [vmem:[#allocation3 + $0x120] sm:$0xf] %v615
        %680 = vst [vmem:[#allocation3 + $0x144] sm:$0xf] %v616
        %681 = vst [vmem:[#allocation3 + $0x168] sm:$0xf] %v617
        %682 = vst [vmem:[#allocation3 + $0x18c] sm:$0xf] %v618
        %683 = vst [vmem:[#allocation3 + $0x1b0] sm:$0xf] %v619
        %684 = vst [vmem:[#allocation3 + $0x1d4] sm:$0xf] %v620
        %685 = vst [vmem:[#allocation3 + $0x1f8] sm:$0xf] %v621
        %686 = vst [vmem:[#allocation3 + $0x21c] sm:$0xf] %v622
        %687 = vst [vmem:[#allocation3 + $0x240] sm:$0xf] %v623
        %688 = vst [vmem:[#allocation3 + $0x264] sm:$0xf] %v624
        %689 = vst [vmem:[#allocation3 + $0x288] sm:$0xf] %v625
        %690 = vst [vmem:[#allocation3 + $0x2ac] sm:$0xf] %v626
        %691 = vst [vmem:[#allocation3 + $0x2d0] sm:$0xf] %v627
        %692 = vst [vmem:[#allocation3 + $0x2f4] sm:$0xf] %v628
        %693 = vst [vmem:[#allocation3 + $0x318] sm:$0xf] %v629
        %694 = vst [vmem:[#allocation3 + $0x33c] sm:$0xf] %v630
        %695 = vst [vmem:[#allocation3 + $0x360] sm:$0xf] %v631
        %696 = vst [vmem:[#allocation3 + $0x384] sm:$0xf] %v632
        %697 = vst [vmem:[#allocation3 + $0x3a8] sm:$0xf] %v633
        %698 = vst [vmem:[#allocation3 + $0x3cc] sm:$0xf] %v634
        %699 = vst [vmem:[#allocation3 + $0x3f0] sm:$0xf] %v635
        %700 = vst [vmem:[#allocation3 + $0x414] sm:$0xf] %v636
        %701 = vst [vmem:[#allocation3 + $0x438] sm:$0xf] %v637
        %702 = vst [vmem:[#allocation3 + $0x45c] sm:$0xf] %v638
        %v703 = vld [vmem:[#allocation2 + $0x8] sm:$0xff]
        %v704 = vld [vmem:[#allocation2 + $0x10] sm:$0xff]
        %v705 = vld [vmem:[#allocation2 + $0x28] sm:$0xff]
        %v706 = vld [vmem:[#allocation2 + $0x30] sm:$0xff]
        %v707 = vld [vmem:[#allocation2 + $0x48] sm:$0xff]
        %v708 = vld [vmem:[#allocation2 + $0x50] sm:$0xff]
        %v709 = vld [vmem:[#allocation2 + $0x68] sm:$0xff]
        %v710 = vld [vmem:[#allocation2 + $0x70] sm:$0xff]
        %v711 = vld [vmem:[#allocation2 + $0x88] sm:$0xff]
        %v712 = vld [vmem:[#allocation2 + $0x90] sm:$0xff]
        %v713 = vld [vmem:[#allocation2 + $0xa8] sm:$0xff]
        %v714 = vld [vmem:[#allocation2 + $0xb0] sm:$0xff]
        %v715 = vld [vmem:[#allocation2 + $0xc8] sm:$0xff]
        %v716 = vld [vmem:[#allocation2 + $0xd0] sm:$0xff]
        %v717 = vld [vmem:[#allocation2 + $0xe8] sm:$0xff]
        %v718 = vld [vmem:[#allocation2 + $0xf0] sm:$0xff]
        %v719 = vld [vmem:[#allocation2 + $0x108] sm:$0xff]
        %v720 = vld [vmem:[#allocation2 + $0x110] sm:$0xff]
        %v721 = vld [vmem:[#allocation2 + $0x128] sm:$0xff]
        %v722 = vld [vmem:[#allocation2 + $0x130] sm:$0xff]
        %v723 = vld [vmem:[#allocation2 + $0x148] sm:$0xff]
        %v724 = vld [vmem:[#allocation2 + $0x150] sm:$0xff]
        %v725 = vld [vmem:[#allocation2 + $0x168] sm:$0xff]
        %v726 = vld [vmem:[#allocation2 + $0x170] sm:$0xff]
        %v727 = vld [vmem:[#allocation2 + $0x188] sm:$0xff]
        %v728 = vld [vmem:[#allocation2 + $0x190] sm:$0xff]
        %v729 = vld [vmem:[#allocation2 + $0x1a8] sm:$0xff]
        %v730 = vld [vmem:[#allocation2 + $0x1b0] sm:$0xff]
        %v731 = vld [vmem:[#allocation2 + $0x1c8] sm:$0xff]
        %v732 = vld [vmem:[#allocation2 + $0x1d0] sm:$0xff]
        %v733 = vld [vmem:[#allocation2 + $0x1e8] sm:$0xff]
        %v734 = vld [vmem:[#allocation2 + $0x1f0] sm:$0xff]
        %v735 = vpack.c.bf16 %v704, %v703
        %v736 = vpack.c.bf16 %v706, %v705
        %v737 = vpack.c.bf16 %v708, %v707
        %v738 = vpack.c.bf16 %v710, %v709
        %v739 = vpack.c.bf16 %v712, %v711
        %v740 = vpack.c.bf16 %v714, %v713
        %v741 = vpack.c.bf16 %v716, %v715
        %v742 = vpack.c.bf16 %v718, %v717
        %v743 = vpack.c.bf16 %v720, %v719
        %v744 = vpack.c.bf16 %v722, %v721
        %v745 = vpack.c.bf16 %v724, %v723
        %v746 = vpack.c.bf16 %v726, %v725
        %v747 = vpack.c.bf16 %v728, %v727
        %v748 = vpack.c.bf16 %v730, %v729
        %v749 = vpack.c.bf16 %v732, %v731
        %v750 = vpack.c.bf16 %v734, %v733
        %v767 = vunpack.c.l.b16 %v735
        %v768 = vunpack.c.h.b16 %v735
        %v769 = vunpack.c.l.b16 %v736
        %v770 = vunpack.c.h.b16 %v736
        %v771 = vunpack.c.l.b16 %v737
        %v772 = vunpack.c.h.b16 %v737
        %v773 = vunpack.c.l.b16 %v738
        %v774 = vunpack.c.h.b16 %v738
        %v775 = vunpack.c.l.b16 %v739
        %v776 = vunpack.c.h.b16 %v739
        %v777 = vunpack.c.l.b16 %v740
        %v778 = vunpack.c.h.b16 %v740
        %v779 = vunpack.c.l.b16 %v741
        %v780 = vunpack.c.h.b16 %v741
        %v781 = vunpack.c.l.b16 %v742
        %v782 = vunpack.c.h.b16 %v742
        %v783 = vunpack.c.l.b16 %v743
        %v784 = vunpack.c.h.b16 %v743
        %v785 = vunpack.c.l.b16 %v744
        %v786 = vunpack.c.h.b16 %v744
        %v787 = vunpack.c.l.b16 %v745
        %v788 = vunpack.c.h.b16 %v745
        %v789 = vunpack.c.l.b16 %v746
        %v790 = vunpack.c.h.b16 %v746
        %v791 = vunpack.c.l.b16 %v747
        %v792 = vunpack.c.h.b16 %v747
        %v793 = vunpack.c.l.b16 %v748
        %v794 = vunpack.c.h.b16 %v748
        %v795 = vunpack.c.l.b16 %v749
        %v796 = vunpack.c.h.b16 %v749
        %v797 = vunpack.c.l.b16 %v750
        %v798 = vunpack.c.h.b16 %v750
        %v799 = vpack.c.b16 %v767, %v767
        %v800 = vpack.c.b16 %v768, %v768
        %v801 = vpack.c.b16 %v769, %v769
        %v802 = vpack.c.b16 %v770, %v770
        %v803 = vpack.c.b16 %v771, %v771
        %v804 = vpack.c.b16 %v772, %v772
        %v805 = vpack.c.b16 %v773, %v773
        %v806 = vpack.c.b16 %v774, %v774
        %v807 = vpack.c.b16 %v775, %v775
        %v808 = vpack.c.b16 %v776, %v776
        %v809 = vpack.c.b16 %v777, %v777
        %v810 = vpack.c.b16 %v778, %v778
        %v811 = vpack.c.b16 %v779, %v779
        %v812 = vpack.c.b16 %v780, %v780
        %v813 = vpack.c.b16 %v781, %v781
        %v814 = vpack.c.b16 %v782, %v782
        %v815 = vpack.c.b16 %v783, %v783
        %v816 = vpack.c.b16 %v784, %v784
        %v817 = vpack.c.b16 %v785, %v785
        %v818 = vpack.c.b16 %v786, %v786
        %v819 = vpack.c.b16 %v787, %v787
        %v820 = vpack.c.b16 %v788, %v788
        %v821 = vpack.c.b16 %v789, %v789
        %v822 = vpack.c.b16 %v790, %v790
        %v823 = vpack.c.b16 %v791, %v791
        %v824 = vpack.c.b16 %v792, %v792
        %v825 = vpack.c.b16 %v793, %v793
        %v826 = vpack.c.b16 %v794, %v794
        %v827 = vpack.c.b16 %v795, %v795
        %v828 = vpack.c.b16 %v796, %v796
        %v829 = vpack.c.b16 %v797, %v797
        %v830 = vpack.c.b16 %v798, %v798
        %863 = vst [vmem:[#allocation3 + $0x4] sm:$0xf] %v799
        %864 = vst [vmem:[#allocation3 + $0x28] sm:$0xf] %v800
        %865 = vst [vmem:[#allocation3 + $0x4c] sm:$0xf] %v801
        %866 = vst [vmem:[#allocation3 + $0x70] sm:$0xf] %v802
        %867 = vst [vmem:[#allocation3 + $0x94] sm:$0xf] %v803
        %868 = vst [vmem:[#allocation3 + $0xb8] sm:$0xf] %v804
        %869 = vst [vmem:[#allocation3 + $0xdc] sm:$0xf] %v805
        %870 = vst [vmem:[#allocation3 + $0x100] sm:$0xf] %v806
        %871 = vst [vmem:[#allocation3 + $0x124] sm:$0xf] %v807
        %872 = vst [vmem:[#allocation3 + $0x148] sm:$0xf] %v808
        %873 = vst [vmem:[#allocation3 + $0x16c] sm:$0xf] %v809
        %874 = vst [vmem:[#allocation3 + $0x190] sm:$0xf] %v810
        %875 = vst [vmem:[#allocation3 + $0x1b4] sm:$0xf] %v811
        %876 = vst [vmem:[#allocation3 + $0x1d8] sm:$0xf] %v812
        %877 = vst [vmem:[#allocation3 + $0x1fc] sm:$0xf] %v813
        %878 = vst [vmem:[#allocation3 + $0x220] sm:$0xf] %v814
        %879 = vst [vmem:[#allocation3 + $0x244] sm:$0xf] %v815
        %880 = vst [vmem:[#allocation3 + $0x268] sm:$0xf] %v816
        %881 = vst [vmem:[#allocation3 + $0x28c] sm:$0xf] %v817
        %882 = vst [vmem:[#allocation3 + $0x2b0] sm:$0xf] %v818
        %883 = vst [vmem:[#allocation3 + $0x2d4] sm:$0xf] %v819
        %884 = vst [vmem:[#allocation3 + $0x2f8] sm:$0xf] %v820
        %885 = vst [vmem:[#allocation3 + $0x31c] sm:$0xf] %v821
        %886 = vst [vmem:[#allocation3 + $0x340] sm:$0xf] %v822
        %887 = vst [vmem:[#allocation3 + $0x364] sm:$0xf] %v823
        %888 = vst [vmem:[#allocation3 + $0x388] sm:$0xf] %v824
        %889 = vst [vmem:[#allocation3 + $0x3ac] sm:$0xf] %v825
        %890 = vst [vmem:[#allocation3 + $0x3d0] sm:$0xf] %v826
        %891 = vst [vmem:[#allocation3 + $0x3f4] sm:$0xf] %v827
        %892 = vst [vmem:[#allocation3 + $0x418] sm:$0xf] %v828
        %893 = vst [vmem:[#allocation3 + $0x43c] sm:$0xf] %v829
        %894 = vst [vmem:[#allocation3 + $0x460] sm:$0xf] %v830
        %v895 = vld [vmem:[#allocation2 + $0x9] sm:$0xff]
        %v896 = vld [vmem:[#allocation2 + $0x11] sm:$0xff]
        %v897 = vld [vmem:[#allocation2 + $0x29] sm:$0xff]
        %v898 = vld [vmem:[#allocation2 + $0x31] sm:$0xff]
        %v899 = vld [vmem:[#allocation2 + $0x49] sm:$0xff]
        %v900 = vld [vmem:[#allocation2 + $0x51] sm:$0xff]
        %v901 = vld [vmem:[#allocation2 + $0x69] sm:$0xff]
        %v902 = vld [vmem:[#allocation2 + $0x71] sm:$0xff]
        %v903 = vld [vmem:[#allocation2 + $0x89] sm:$0xff]
        %v904 = vld [vmem:[#allocation2 + $0x91] sm:$0xff]
        %v905 = vld [vmem:[#allocation2 + $0xa9] sm:$0xff]
        %v906 = vld [vmem:[#allocation2 + $0xb1] sm:$0xff]
        %v907 = vld [vmem:[#allocation2 + $0xc9] sm:$0xff]
        %v908 = vld [vmem:[#allocation2 + $0xd1] sm:$0xff]
        %v909 = vld [vmem:[#allocation2 + $0xe9] sm:$0xff]
        %v910 = vld [vmem:[#allocation2 + $0xf1] sm:$0xff]
        %v911 = vld [vmem:[#allocation2 + $0x109] sm:$0xff]
        %v912 = vld [vmem:[#allocation2 + $0x111] sm:$0xff]
        %v913 = vld [vmem:[#allocation2 + $0x129] sm:$0xff]
        %v914 = vld [vmem:[#allocation2 + $0x131] sm:$0xff]
        %v915 = vld [vmem:[#allocation2 + $0x149] sm:$0xff]
        %v916 = vld [vmem:[#allocation2 + $0x151] sm:$0xff]
        %v917 = vld [vmem:[#allocation2 + $0x169] sm:$0xff]
        %v918 = vld [vmem:[#allocation2 + $0x171] sm:$0xff]
        %v919 = vld [vmem:[#allocation2 + $0x189] sm:$0xff]
        %v920 = vld [vmem:[#allocation2 + $0x191] sm:$0xff]
        %v921 = vld [vmem:[#allocation2 + $0x1a9] sm:$0xff]
        %v922 = vld [vmem:[#allocation2 + $0x1b1] sm:$0xff]
        %v923 = vld [vmem:[#allocation2 + $0x1c9] sm:$0xff]
        %v924 = vld [vmem:[#allocation2 + $0x1d1] sm:$0xff]
        %v925 = vld [vmem:[#allocation2 + $0x1e9] sm:$0xff]
        %v926 = vld [vmem:[#allocation2 + $0x1f1] sm:$0xff]
        %v927 = vpack.c.bf16 %v896, %v895
        %v928 = vpack.c.bf16 %v898, %v897
        %v929 = vpack.c.bf16 %v900, %v899
        %v930 = vpack.c.bf16 %v902, %v901
        %v931 = vpack.c.bf16 %v904, %v903
        %v932 = vpack.c.bf16 %v906, %v905
        %v933 = vpack.c.bf16 %v908, %v907
        %v934 = vpack.c.bf16 %v910, %v909
        %v935 = vpack.c.bf16 %v912, %v911
        %v936 = vpack.c.bf16 %v914, %v913
        %v937 = vpack.c.bf16 %v916, %v915
        %v938 = vpack.c.bf16 %v918, %v917
        %v939 = vpack.c.bf16 %v920, %v919
        %v940 = vpack.c.bf16 %v922, %v921
        %v941 = vpack.c.bf16 %v924, %v923
        %v942 = vpack.c.bf16 %v926, %v925
        %v959 = vunpack.c.l.b16 %v927
        %v960 = vunpack.c.h.b16 %v927
        %v961 = vunpack.c.l.b16 %v928
        %v962 = vunpack.c.h.b16 %v928
        %v963 = vunpack.c.l.b16 %v929
        %v964 = vunpack.c.h.b16 %v929
        %v965 = vunpack.c.l.b16 %v930
        %v966 = vunpack.c.h.b16 %v930
        %v967 = vunpack.c.l.b16 %v931
        %v968 = vunpack.c.h.b16 %v931
        %v969 = vunpack.c.l.b16 %v932
        %v970 = vunpack.c.h.b16 %v932
        %v971 = vunpack.c.l.b16 %v933
        %v972 = vunpack.c.h.b16 %v933
        %v973 = vunpack.c.l.b16 %v934
        %v974 = vunpack.c.h.b16 %v934
        %v975 = vunpack.c.l.b16 %v935
        %v976 = vunpack.c.h.b16 %v935
        %v977 = vunpack.c.l.b16 %v936
        %v978 = vunpack.c.h.b16 %v936
        %v979 = vunpack.c.l.b16 %v937
        %v980 = vunpack.c.h.b16 %v937
        %v981 = vunpack.c.l.b16 %v938
        %v982 = vunpack.c.h.b16 %v938
        %v983 = vunpack.c.l.b16 %v939
        %v984 = vunpack.c.h.b16 %v939
        %v985 = vunpack.c.l.b16 %v940
        %v986 = vunpack.c.h.b16 %v940
        %v987 = vunpack.c.l.b16 %v941
        %v988 = vunpack.c.h.b16 %v941
        %v989 = vunpack.c.l.b16 %v942
        %v990 = vunpack.c.h.b16 %v942
        %v991 = vpack.c.b16 %v959, %v959
        %v992 = vpack.c.b16 %v960, %v960
        %v993 = vpack.c.b16 %v961, %v961
        %v994 = vpack.c.b16 %v962, %v962
        %v995 = vpack.c.b16 %v963, %v963
        %v996 = vpack.c.b16 %v964, %v964
        %v997 = vpack.c.b16 %v965, %v965
        %v998 = vpack.c.b16 %v966, %v966
        %v999 = vpack.c.b16 %v967, %v967
        %v1000 = vpack.c.b16 %v968, %v968
        %v1001 = vpack.c.b16 %v969, %v969
        %v1002 = vpack.c.b16 %v970, %v970
        %v1003 = vpack.c.b16 %v971, %v971
        %v1004 = vpack.c.b16 %v972, %v972
        %v1005 = vpack.c.b16 %v973, %v973
        %v1006 = vpack.c.b16 %v974, %v974
        %v1007 = vpack.c.b16 %v975, %v975
        %v1008 = vpack.c.b16 %v976, %v976
        %v1009 = vpack.c.b16 %v977, %v977
        %v1010 = vpack.c.b16 %v978, %v978
        %v1011 = vpack.c.b16 %v979, %v979
        %v1012 = vpack.c.b16 %v980, %v980
        %v1013 = vpack.c.b16 %v981, %v981
        %v1014 = vpack.c.b16 %v982, %v982
        %v1015 = vpack.c.b16 %v983, %v983
        %v1016 = vpack.c.b16 %v984, %v984
        %v1017 = vpack.c.b16 %v985, %v985
        %v1018 = vpack.c.b16 %v986, %v986
        %v1019 = vpack.c.b16 %v987, %v987
        %v1020 = vpack.c.b16 %v988, %v988
        %v1021 = vpack.c.b16 %v989, %v989
        %v1022 = vpack.c.b16 %v990, %v990
        %1055 = vst [vmem:[#allocation3 + $0x8] sm:$0xf] %v991
        %1056 = vst [vmem:[#allocation3 + $0x2c] sm:$0xf] %v992
        %1057 = vst [vmem:[#allocation3 + $0x50] sm:$0xf] %v993
        %1058 = vst [vmem:[#allocation3 + $0x74] sm:$0xf] %v994
        %1059 = vst [vmem:[#allocation3 + $0x98] sm:$0xf] %v995
        %1060 = vst [vmem:[#allocation3 + $0xbc] sm:$0xf] %v996
        %1061 = vst [vmem:[#allocation3 + $0xe0] sm:$0xf] %v997
        %1062 = vst [vmem:[#allocation3 + $0x104] sm:$0xf] %v998
        %1063 = vst [vmem:[#allocation3 + $0x128] sm:$0xf] %v999
        %1064 = vst [vmem:[#allocation3 + $0x14c] sm:$0xf] %v1000
        %1065 = vst [vmem:[#allocation3 + $0x170] sm:$0xf] %v1001
        %1066 = vst [vmem:[#allocation3 + $0x194] sm:$0xf] %v1002
        %1067 = vst [vmem:[#allocation3 + $0x1b8] sm:$0xf] %v1003
        %1068 = vst [vmem:[#allocation3 + $0x1dc] sm:$0xf] %v1004
        %1069 = vst [vmem:[#allocation3 + $0x200] sm:$0xf] %v1005
        %1070 = vst [vmem:[#allocation3 + $0x224] sm:$0xf] %v1006
        %1071 = vst [vmem:[#allocation3 + $0x248] sm:$0xf] %v1007
        %1072 = vst [vmem:[#allocation3 + $0x26c] sm:$0xf] %v1008
        %1073 = vst [vmem:[#allocation3 + $0x290] sm:$0xf] %v1009
        %1074 = vst [vmem:[#allocation3 + $0x2b4] sm:$0xf] %v1010
        %1075 = vst [vmem:[#allocation3 + $0x2d8] sm:$0xf] %v1011
        %1076 = vst [vmem:[#allocation3 + $0x2fc] sm:$0xf] %v1012
        %1077 = vst [vmem:[#allocation3 + $0x320] sm:$0xf] %v1013
        %1078 = vst [vmem:[#allocation3 + $0x344] sm:$0xf] %v1014
        %1079 = vst [vmem:[#allocation3 + $0x368] sm:$0xf] %v1015
        %1080 = vst [vmem:[#allocation3 + $0x38c] sm:$0xf] %v1016
        %1081 = vst [vmem:[#allocation3 + $0x3b0] sm:$0xf] %v1017
        %1082 = vst [vmem:[#allocation3 + $0x3d4] sm:$0xf] %v1018
        %1083 = vst [vmem:[#allocation3 + $0x3f8] sm:$0xf] %v1019
        %1084 = vst [vmem:[#allocation3 + $0x41c] sm:$0xf] %v1020
        %1085 = vst [vmem:[#allocation3 + $0x440] sm:$0xf] %v1021
        %1086 = vst [vmem:[#allocation3 + $0x464] sm:$0xf] %v1022
        %v1087 = vld [vmem:[%s314 + $0x7] sm:$0xff]
        %v1088 = vld [vmem:[%s314 + $0xf] sm:$0xff]
        %v1089 = vld [vmem:[%s314 + $0x27] sm:$0xff]
        %v1090 = vld [vmem:[%s314 + $0x2f] sm:$0xff]
        %v1091 = vld [vmem:[%s314 + $0x47] sm:$0xff]
        %v1092 = vld [vmem:[%s314 + $0x4f] sm:$0xff]
        %v1093 = vld [vmem:[%s314 + $0x67] sm:$0xff]
        %v1094 = vld [vmem:[%s314 + $0x6f] sm:$0xff]
        %v1095 = vld [vmem:[%s314 + $0x87] sm:$0xff]
        %v1096 = vld [vmem:[%s314 + $0x8f] sm:$0xff]
        %v1097 = vld [vmem:[%s314 + $0xa7] sm:$0xff]
        %v1098 = vld [vmem:[%s314 + $0xaf] sm:$0xff]
        %v1099 = vld [vmem:[%s314 + $0xc7] sm:$0xff]
        %v1100 = vld [vmem:[%s314 + $0xcf] sm:$0xff]
        %v1101 = vld [vmem:[%s314 + $0xe7] sm:$0xff]
        %v1102 = vld [vmem:[%s314 + $0xef] sm:$0xff]
        %v1103 = vld [vmem:[%s314 + $0x107] sm:$0xff]
        %v1104 = vld [vmem:[%s314 + $0x10f] sm:$0xff]
        %v1105 = vld [vmem:[%s314 + $0x127] sm:$0xff]
        %v1106 = vld [vmem:[%s314 + $0x12f] sm:$0xff]
        %v1107 = vld [vmem:[%s314 + $0x147] sm:$0xff]
        %v1108 = vld [vmem:[%s314 + $0x14f] sm:$0xff]
        %v1109 = vld [vmem:[%s314 + $0x167] sm:$0xff]
        %v1110 = vld [vmem:[%s314 + $0x16f] sm:$0xff]
        %v1111 = vld [vmem:[%s314 + $0x187] sm:$0xff]
        %v1112 = vld [vmem:[%s314 + $0x18f] sm:$0xff]
        %v1113 = vld [vmem:[%s314 + $0x1a7] sm:$0xff]
        %v1114 = vld [vmem:[%s314 + $0x1af] sm:$0xff]
        %v1115 = vld [vmem:[%s314 + $0x1c7] sm:$0xff]
        %v1116 = vld [vmem:[%s314 + $0x1cf] sm:$0xff]
        %v1117 = vld [vmem:[%s314 + $0x1e7] sm:$0xff]
        %v1118 = vld [vmem:[%s314 + $0x1ef] sm:$0xff]
        %v1119 = vpack.c.bf16 %v1088, %v1087
        %v1120 = vpack.c.bf16 %v1090, %v1089
        %v1121 = vpack.c.bf16 %v1092, %v1091
        %v1122 = vpack.c.bf16 %v1094, %v1093
        %v1123 = vpack.c.bf16 %v1096, %v1095
        %v1124 = vpack.c.bf16 %v1098, %v1097
        %v1125 = vpack.c.bf16 %v1100, %v1099
        %v1126 = vpack.c.bf16 %v1102, %v1101
        %v1127 = vpack.c.bf16 %v1104, %v1103
        %v1128 = vpack.c.bf16 %v1106, %v1105
        %v1129 = vpack.c.bf16 %v1108, %v1107
        %v1130 = vpack.c.bf16 %v1110, %v1109
        %v1131 = vpack.c.bf16 %v1112, %v1111
        %v1132 = vpack.c.bf16 %v1114, %v1113
        %v1133 = vpack.c.bf16 %v1116, %v1115
        %v1134 = vpack.c.bf16 %v1118, %v1117
        %v1151 = vunpack.c.l.b16 %v1119
        %v1152 = vunpack.c.h.b16 %v1119
        %v1153 = vunpack.c.l.b16 %v1120
        %v1154 = vunpack.c.h.b16 %v1120
        %v1155 = vunpack.c.l.b16 %v1121
        %v1156 = vunpack.c.h.b16 %v1121
        %v1157 = vunpack.c.l.b16 %v1122
        %v1158 = vunpack.c.h.b16 %v1122
        %v1159 = vunpack.c.l.b16 %v1123
        %v1160 = vunpack.c.h.b16 %v1123
        %v1161 = vunpack.c.l.b16 %v1124
        %v1162 = vunpack.c.h.b16 %v1124
        %v1163 = vunpack.c.l.b16 %v1125
        %v1164 = vunpack.c.h.b16 %v1125
        %v1165 = vunpack.c.l.b16 %v1126
        %v1166 = vunpack.c.h.b16 %v1126
        %v1167 = vunpack.c.l.b16 %v1127
        %v1168 = vunpack.c.h.b16 %v1127
        %v1169 = vunpack.c.l.b16 %v1128
        %v1170 = vunpack.c.h.b16 %v1128
        %v1171 = vunpack.c.l.b16 %v1129
        %v1172 = vunpack.c.h.b16 %v1129
        %v1173 = vunpack.c.l.b16 %v1130
        %v1174 = vunpack.c.h.b16 %v1130
        %v1175 = vunpack.c.l.b16 %v1131
        %v1176 = vunpack.c.h.b16 %v1131
        %v1177 = vunpack.c.l.b16 %v1132
        %v1178 = vunpack.c.h.b16 %v1132
        %v1179 = vunpack.c.l.b16 %v1133
        %v1180 = vunpack.c.h.b16 %v1133
        %v1181 = vunpack.c.l.b16 %v1134
        %v1182 = vunpack.c.h.b16 %v1134
        %v1183 = vpack.c.b16 %v1151, %v1151
        %v1184 = vpack.c.b16 %v1152, %v1152
        %v1185 = vpack.c.b16 %v1153, %v1153
        %v1186 = vpack.c.b16 %v1154, %v1154
        %v1187 = vpack.c.b16 %v1155, %v1155
        %v1188 = vpack.c.b16 %v1156, %v1156
        %v1189 = vpack.c.b16 %v1157, %v1157
        %v1190 = vpack.c.b16 %v1158, %v1158
        %v1191 = vpack.c.b16 %v1159, %v1159
        %v1192 = vpack.c.b16 %v1160, %v1160
        %v1193 = vpack.c.b16 %v1161, %v1161
        %v1194 = vpack.c.b16 %v1162, %v1162
        %v1195 = vpack.c.b16 %v1163, %v1163
        %v1196 = vpack.c.b16 %v1164, %v1164
        %v1197 = vpack.c.b16 %v1165, %v1165
        %v1198 = vpack.c.b16 %v1166, %v1166
        %v1199 = vpack.c.b16 %v1167, %v1167
        %v1200 = vpack.c.b16 %v1168, %v1168
        %v1201 = vpack.c.b16 %v1169, %v1169
        %v1202 = vpack.c.b16 %v1170, %v1170
        %v1203 = vpack.c.b16 %v1171, %v1171
        %v1204 = vpack.c.b16 %v1172, %v1172
        %v1205 = vpack.c.b16 %v1173, %v1173
        %v1206 = vpack.c.b16 %v1174, %v1174
        %v1207 = vpack.c.b16 %v1175, %v1175
        %v1208 = vpack.c.b16 %v1176, %v1176
        %v1209 = vpack.c.b16 %v1177, %v1177
        %v1210 = vpack.c.b16 %v1178, %v1178
        %v1211 = vpack.c.b16 %v1179, %v1179
        %v1212 = vpack.c.b16 %v1180, %v1180
        %v1213 = vpack.c.b16 %v1181, %v1181
        %v1214 = vpack.c.b16 %v1182, %v1182
        %1247 = vst [vmem:[#allocation3 + $0xc] sm:$0xf] %v1183
        %1248 = vst [vmem:[#allocation3 + $0x30] sm:$0xf] %v1184
        %1249 = vst [vmem:[#allocation3 + $0x54] sm:$0xf] %v1185
        %1250 = vst [vmem:[#allocation3 + $0x78] sm:$0xf] %v1186
        %1251 = vst [vmem:[#allocation3 + $0x9c] sm:$0xf] %v1187
        %1252 = vst [vmem:[#allocation3 + $0xc0] sm:$0xf] %v1188
        %1253 = vst [vmem:[#allocation3 + $0xe4] sm:$0xf] %v1189
        %1254 = vst [vmem:[#allocation3 + $0x108] sm:$0xf] %v1190
        %1255 = vst [vmem:[#allocation3 + $0x12c] sm:$0xf] %v1191
        %1256 = vst [vmem:[#allocation3 + $0x150] sm:$0xf] %v1192
        %1257 = vst [vmem:[#allocation3 + $0x174] sm:$0xf] %v1193
        %1258 = vst [vmem:[#allocation3 + $0x198] sm:$0xf] %v1194
        %1259 = vst [vmem:[#allocation3 + $0x1bc] sm:$0xf] %v1195
        %1260 = vst [vmem:[#allocation3 + $0x1e0] sm:$0xf] %v1196
        %1261 = vst [vmem:[#allocation3 + $0x204] sm:$0xf] %v1197
        %1262 = vst [vmem:[#allocation3 + $0x228] sm:$0xf] %v1198
        %1263 = vst [vmem:[#allocation3 + $0x24c] sm:$0xf] %v1199
        %1264 = vst [vmem:[#allocation3 + $0x270] sm:$0xf] %v1200
        %1265 = vst [vmem:[#allocation3 + $0x294] sm:$0xf] %v1201
        %1266 = vst [vmem:[#allocation3 + $0x2b8] sm:$0xf] %v1202
        %1267 = vst [vmem:[#allocation3 + $0x2dc] sm:$0xf] %v1203
        %1268 = vst [vmem:[#allocation3 + $0x300] sm:$0xf] %v1204
        %1269 = vst [vmem:[#allocation3 + $0x324] sm:$0xf] %v1205
        %1270 = vst [vmem:[#allocation3 + $0x348] sm:$0xf] %v1206
        %1271 = vst [vmem:[#allocation3 + $0x36c] sm:$0xf] %v1207
        %1272 = vst [vmem:[#allocation3 + $0x390] sm:$0xf] %v1208
        %1273 = vst [vmem:[#allocation3 + $0x3b4] sm:$0xf] %v1209
        %1274 = vst [vmem:[#allocation3 + $0x3d8] sm:$0xf] %v1210
        %1275 = vst [vmem:[#allocation3 + $0x3fc] sm:$0xf] %v1211
        %1276 = vst [vmem:[#allocation3 + $0x420] sm:$0xf] %v1212
        %1277 = vst [vmem:[#allocation3 + $0x444] sm:$0xf] %v1213
        %1278 = vst [vmem:[#allocation3 + $0x468] sm:$0xf] %v1214
        %v1279 = vld [vmem:[%s314 + $0x8] sm:$0xff]
        %v1280 = vld [vmem:[%s314 + $0x10] sm:$0xff]
        %v1281 = vld [vmem:[%s314 + $0x28] sm:$0xff]
        %v1282 = vld [vmem:[%s314 + $0x30] sm:$0xff]
        %v1283 = vld [vmem:[%s314 + $0x48] sm:$0xff]
        %v1284 = vld [vmem:[%s314 + $0x50] sm:$0xff]
        %v1285 = vld [vmem:[%s314 + $0x68] sm:$0xff]
        %v1286 = vld [vmem:[%s314 + $0x70] sm:$0xff]
        %v1287 = vld [vmem:[%s314 + $0x88] sm:$0xff]
        %v1288 = vld [vmem:[%s314 + $0x90] sm:$0xff]
        %v1289 = vld [vmem:[%s314 + $0xa8] sm:$0xff]
        %v1290 = vld [vmem:[%s314 + $0xb0] sm:$0xff]
        %v1291 = vld [vmem:[%s314 + $0xc8] sm:$0xff]
        %v1292 = vld [vmem:[%s314 + $0xd0] sm:$0xff]
        %v1293 = vld [vmem:[%s314 + $0xe8] sm:$0xff]
        %v1294 = vld [vmem:[%s314 + $0xf0] sm:$0xff]
        %v1295 = vld [vmem:[%s314 + $0x108] sm:$0xff]
        %v1296 = vld [vmem:[%s314 + $0x110] sm:$0xff]
        %v1297 = vld [vmem:[%s314 + $0x128] sm:$0xff]
        %v1298 = vld [vmem:[%s314 + $0x130] sm:$0xff]
        %v1299 = vld [vmem:[%s314 + $0x148] sm:$0xff]
        %v1300 = vld [vmem:[%s314 + $0x150] sm:$0xff]
        %v1301 = vld [vmem:[%s314 + $0x168] sm:$0xff]
        %v1302 = vld [vmem:[%s314 + $0x170] sm:$0xff]
        %v1303 = vld [vmem:[%s314 + $0x188] sm:$0xff]
        %v1304 = vld [vmem:[%s314 + $0x190] sm:$0xff]
        %v1305 = vld [vmem:[%s314 + $0x1a8] sm:$0xff]
        %v1306 = vld [vmem:[%s314 + $0x1b0] sm:$0xff]
        %v1307 = vld [vmem:[%s314 + $0x1c8] sm:$0xff]
        %v1308 = vld [vmem:[%s314 + $0x1d0] sm:$0xff]
        %v1309 = vld [vmem:[%s314 + $0x1e8] sm:$0xff]
        %v1310 = vld [vmem:[%s314 + $0x1f0] sm:$0xff]
        %v1311 = vpack.c.bf16 %v1280, %v1279
        %v1312 = vpack.c.bf16 %v1282, %v1281
        %v1313 = vpack.c.bf16 %v1284, %v1283
        %v1314 = vpack.c.bf16 %v1286, %v1285
        %v1315 = vpack.c.bf16 %v1288, %v1287
        %v1316 = vpack.c.bf16 %v1290, %v1289
        %v1317 = vpack.c.bf16 %v1292, %v1291
        %v1318 = vpack.c.bf16 %v1294, %v1293
        %v1319 = vpack.c.bf16 %v1296, %v1295
        %v1320 = vpack.c.bf16 %v1298, %v1297
        %v1321 = vpack.c.bf16 %v1300, %v1299
        %v1322 = vpack.c.bf16 %v1302, %v1301
        %v1323 = vpack.c.bf16 %v1304, %v1303
        %v1324 = vpack.c.bf16 %v1306, %v1305
        %v1325 = vpack.c.bf16 %v1308, %v1307
        %v1326 = vpack.c.bf16 %v1310, %v1309
        %v1343 = vunpack.c.l.b16 %v1311
        %v1344 = vunpack.c.h.b16 %v1311
        %v1345 = vunpack.c.l.b16 %v1312
        %v1346 = vunpack.c.h.b16 %v1312
        %v1347 = vunpack.c.l.b16 %v1313
        %v1348 = vunpack.c.h.b16 %v1313
        %v1349 = vunpack.c.l.b16 %v1314
        %v1350 = vunpack.c.h.b16 %v1314
        %v1351 = vunpack.c.l.b16 %v1315
        %v1352 = vunpack.c.h.b16 %v1315
        %v1353 = vunpack.c.l.b16 %v1316
        %v1354 = vunpack.c.h.b16 %v1316
        %v1355 = vunpack.c.l.b16 %v1317
        %v1356 = vunpack.c.h.b16 %v1317
        %v1357 = vunpack.c.l.b16 %v1318
        %v1358 = vunpack.c.h.b16 %v1318
        %v1359 = vunpack.c.l.b16 %v1319
        %v1360 = vunpack.c.h.b16 %v1319
        %v1361 = vunpack.c.l.b16 %v1320
        %v1362 = vunpack.c.h.b16 %v1320
        %v1363 = vunpack.c.l.b16 %v1321
        %v1364 = vunpack.c.h.b16 %v1321
        %v1365 = vunpack.c.l.b16 %v1322
        %v1366 = vunpack.c.h.b16 %v1322
        %v1367 = vunpack.c.l.b16 %v1323
        %v1368 = vunpack.c.h.b16 %v1323
        %v1369 = vunpack.c.l.b16 %v1324
        %v1370 = vunpack.c.h.b16 %v1324
        %v1371 = vunpack.c.l.b16 %v1325
        %v1372 = vunpack.c.h.b16 %v1325
        %v1373 = vunpack.c.l.b16 %v1326
        %v1374 = vunpack.c.h.b16 %v1326
        %v1375 = vpack.c.b16 %v1343, %v1343
        %v1376 = vpack.c.b16 %v1344, %v1344
        %v1377 = vpack.c.b16 %v1345, %v1345
        %v1378 = vpack.c.b16 %v1346, %v1346
        %v1379 = vpack.c.b16 %v1347, %v1347
        %v1380 = vpack.c.b16 %v1348, %v1348
        %v1381 = vpack.c.b16 %v1349, %v1349
        %v1382 = vpack.c.b16 %v1350, %v1350
        %v1383 = vpack.c.b16 %v1351, %v1351
        %v1384 = vpack.c.b16 %v1352, %v1352
        %v1385 = vpack.c.b16 %v1353, %v1353
        %v1386 = vpack.c.b16 %v1354, %v1354
        %v1387 = vpack.c.b16 %v1355, %v1355
        %v1388 = vpack.c.b16 %v1356, %v1356
        %v1389 = vpack.c.b16 %v1357, %v1357
        %v1390 = vpack.c.b16 %v1358, %v1358
        %v1391 = vpack.c.b16 %v1359, %v1359
        %v1392 = vpack.c.b16 %v1360, %v1360
        %v1393 = vpack.c.b16 %v1361, %v1361
        %v1394 = vpack.c.b16 %v1362, %v1362
        %v1395 = vpack.c.b16 %v1363, %v1363
        %v1396 = vpack.c.b16 %v1364, %v1364
        %v1397 = vpack.c.b16 %v1365, %v1365
        %v1398 = vpack.c.b16 %v1366, %v1366
        %v1399 = vpack.c.b16 %v1367, %v1367
        %v1400 = vpack.c.b16 %v1368, %v1368
        %v1401 = vpack.c.b16 %v1369, %v1369
        %v1402 = vpack.c.b16 %v1370, %v1370
        %v1403 = vpack.c.b16 %v1371, %v1371
        %v1404 = vpack.c.b16 %v1372, %v1372
        %v1405 = vpack.c.b16 %v1373, %v1373
        %v1406 = vpack.c.b16 %v1374, %v1374
        %1439 = vst [vmem:[#allocation3 + $0x10] sm:$0xf] %v1375
        %1440 = vst [vmem:[#allocation3 + $0x34] sm:$0xf] %v1376
        %1441 = vst [vmem:[#allocation3 + $0x58] sm:$0xf] %v1377
        %1442 = vst [vmem:[#allocation3 + $0x7c] sm:$0xf] %v1378
        %1443 = vst [vmem:[#allocation3 + $0xa0] sm:$0xf] %v1379
        %1444 = vst [vmem:[#allocation3 + $0xc4] sm:$0xf] %v1380
        %1445 = vst [vmem:[#allocation3 + $0xe8] sm:$0xf] %v1381
        %1446 = vst [vmem:[#allocation3 + $0x10c] sm:$0xf] %v1382
        %1447 = vst [vmem:[#allocation3 + $0x130] sm:$0xf] %v1383
        %1448 = vst [vmem:[#allocation3 + $0x154] sm:$0xf] %v1384
        %1449 = vst [vmem:[#allocation3 + $0x178] sm:$0xf] %v1385
        %1450 = vst [vmem:[#allocation3 + $0x19c] sm:$0xf] %v1386
        %1451 = vst [vmem:[#allocation3 + $0x1c0] sm:$0xf] %v1387
        %1452 = vst [vmem:[#allocation3 + $0x1e4] sm:$0xf] %v1388
        %1453 = vst [vmem:[#allocation3 + $0x208] sm:$0xf] %v1389
        %1454 = vst [vmem:[#allocation3 + $0x22c] sm:$0xf] %v1390
        %1455 = vst [vmem:[#allocation3 + $0x250] sm:$0xf] %v1391
        %1456 = vst [vmem:[#allocation3 + $0x274] sm:$0xf] %v1392
        %1457 = vst [vmem:[#allocation3 + $0x298] sm:$0xf] %v1393
        %1458 = vst [vmem:[#allocation3 + $0x2bc] sm:$0xf] %v1394
        %1459 = vst [vmem:[#allocation3 + $0x2e0] sm:$0xf] %v1395
        %1460 = vst [vmem:[#allocation3 + $0x304] sm:$0xf] %v1396
        %1461 = vst [vmem:[#allocation3 + $0x328] sm:$0xf] %v1397
        %1462 = vst [vmem:[#allocation3 + $0x34c] sm:$0xf] %v1398
        %1463 = vst [vmem:[#allocation3 + $0x370] sm:$0xf] %v1399
        %1464 = vst [vmem:[#allocation3 + $0x394] sm:$0xf] %v1400
        %1465 = vst [vmem:[#allocation3 + $0x3b8] sm:$0xf] %v1401
        %1466 = vst [vmem:[#allocation3 + $0x3dc] sm:$0xf] %v1402
        %1467 = vst [vmem:[#allocation3 + $0x400] sm:$0xf] %v1403
        %1468 = vst [vmem:[#allocation3 + $0x424] sm:$0xf] %v1404
        %1469 = vst [vmem:[#allocation3 + $0x448] sm:$0xf] %v1405
        %1470 = vst [vmem:[#allocation3 + $0x46c] sm:$0xf] %v1406
        %v1471 = vld [vmem:[%s314 + $0x9] sm:$0xff]
        %v1472 = vld [vmem:[%s314 + $0x11] sm:$0xff]
        %v1473 = vld [vmem:[%s314 + $0x29] sm:$0xff]
        %v1474 = vld [vmem:[%s314 + $0x31] sm:$0xff]
        %v1475 = vld [vmem:[%s314 + $0x49] sm:$0xff]
        %v1476 = vld [vmem:[%s314 + $0x51] sm:$0xff]
        %v1477 = vld [vmem:[%s314 + $0x69] sm:$0xff]
        %v1478 = vld [vmem:[%s314 + $0x71] sm:$0xff]
        %v1479 = vld [vmem:[%s314 + $0x89] sm:$0xff]
        %v1480 = vld [vmem:[%s314 + $0x91] sm:$0xff]
        %v1481 = vld [vmem:[%s314 + $0xa9] sm:$0xff]
        %v1482 = vld [vmem:[%s314 + $0xb1] sm:$0xff]
        %v1483 = vld [vmem:[%s314 + $0xc9] sm:$0xff]
        %v1484 = vld [vmem:[%s314 + $0xd1] sm:$0xff]
        %v1485 = vld [vmem:[%s314 + $0xe9] sm:$0xff]
        %v1486 = vld [vmem:[%s314 + $0xf1] sm:$0xff]
        %v1487 = vld [vmem:[%s314 + $0x109] sm:$0xff]
        %v1488 = vld [vmem:[%s314 + $0x111] sm:$0xff]
        %v1489 = vld [vmem:[%s314 + $0x129] sm:$0xff]
        %v1490 = vld [vmem:[%s314 + $0x131] sm:$0xff]
        %v1491 = vld [vmem:[%s314 + $0x149] sm:$0xff]
        %v1492 = vld [vmem:[%s314 + $0x151] sm:$0xff]
        %v1493 = vld [vmem:[%s314 + $0x169] sm:$0xff]
        %v1494 = vld [vmem:[%s314 + $0x171] sm:$0xff]
        %v1495 = vld [vmem:[%s314 + $0x189] sm:$0xff]
        %v1496 = vld [vmem:[%s314 + $0x191] sm:$0xff]
        %v1497 = vld [vmem:[%s314 + $0x1a9] sm:$0xff]
        %v1498 = vld [vmem:[%s314 + $0x1b1] sm:$0xff]
        %v1499 = vld [vmem:[%s314 + $0x1c9] sm:$0xff]
        %v1500 = vld [vmem:[%s314 + $0x1d1] sm:$0xff]
        %v1501 = vld [vmem:[%s314 + $0x1e9] sm:$0xff]
        %v1502 = vld [vmem:[%s314 + $0x1f1] sm:$0xff]
        %v1503 = vpack.c.bf16 %v1472, %v1471
        %v1504 = vpack.c.bf16 %v1474, %v1473
        %v1505 = vpack.c.bf16 %v1476, %v1475
        %v1506 = vpack.c.bf16 %v1478, %v1477
        %v1507 = vpack.c.bf16 %v1480, %v1479
        %v1508 = vpack.c.bf16 %v1482, %v1481
        %v1509 = vpack.c.bf16 %v1484, %v1483
        %v1510 = vpack.c.bf16 %v1486, %v1485
        %v1511 = vpack.c.bf16 %v1488, %v1487
        %v1512 = vpack.c.bf16 %v1490, %v1489
        %v1513 = vpack.c.bf16 %v1492, %v1491
        %v1514 = vpack.c.bf16 %v1494, %v1493
        %v1515 = vpack.c.bf16 %v1496, %v1495
        %v1516 = vpack.c.bf16 %v1498, %v1497
        %v1517 = vpack.c.bf16 %v1500, %v1499
        %v1518 = vpack.c.bf16 %v1502, %v1501
        %v1535 = vunpack.c.l.b16 %v1503
        %v1536 = vunpack.c.h.b16 %v1503
        %v1537 = vunpack.c.l.b16 %v1504
        %v1538 = vunpack.c.h.b16 %v1504
        %v1539 = vunpack.c.l.b16 %v1505
        %v1540 = vunpack.c.h.b16 %v1505
        %v1541 = vunpack.c.l.b16 %v1506
        %v1542 = vunpack.c.h.b16 %v1506
        %v1543 = vunpack.c.l.b16 %v1507
        %v1544 = vunpack.c.h.b16 %v1507
        %v1545 = vunpack.c.l.b16 %v1508
        %v1546 = vunpack.c.h.b16 %v1508
        %v1547 = vunpack.c.l.b16 %v1509
        %v1548 = vunpack.c.h.b16 %v1509
        %v1549 = vunpack.c.l.b16 %v1510
        %v1550 = vunpack.c.h.b16 %v1510
        %v1551 = vunpack.c.l.b16 %v1511
        %v1552 = vunpack.c.h.b16 %v1511
        %v1553 = vunpack.c.l.b16 %v1512
        %v1554 = vunpack.c.h.b16 %v1512
        %v1555 = vunpack.c.l.b16 %v1513
        %v1556 = vunpack.c.h.b16 %v1513
        %v1557 = vunpack.c.l.b16 %v1514
        %v1558 = vunpack.c.h.b16 %v1514
        %v1559 = vunpack.c.l.b16 %v1515
        %v1560 = vunpack.c.h.b16 %v1515
        %v1561 = vunpack.c.l.b16 %v1516
        %v1562 = vunpack.c.h.b16 %v1516
        %v1563 = vunpack.c.l.b16 %v1517
        %v1564 = vunpack.c.h.b16 %v1517
        %v1565 = vunpack.c.l.b16 %v1518
        %v1566 = vunpack.c.h.b16 %v1518
        %v1567 = vpack.c.b16 %v1535, %v1535
        %v1568 = vpack.c.b16 %v1536, %v1536
        %v1569 = vpack.c.b16 %v1537, %v1537
        %v1570 = vpack.c.b16 %v1538, %v1538
        %v1571 = vpack.c.b16 %v1539, %v1539
        %v1572 = vpack.c.b16 %v1540, %v1540
        %v1573 = vpack.c.b16 %v1541, %v1541
        %v1574 = vpack.c.b16 %v1542, %v1542
        %v1575 = vpack.c.b16 %v1543, %v1543
        %v1576 = vpack.c.b16 %v1544, %v1544
        %v1577 = vpack.c.b16 %v1545, %v1545
        %v1578 = vpack.c.b16 %v1546, %v1546
        %v1579 = vpack.c.b16 %v1547, %v1547
        %v1580 = vpack.c.b16 %v1548, %v1548
        %v1581 = vpack.c.b16 %v1549, %v1549
        %v1582 = vpack.c.b16 %v1550, %v1550
        %v1583 = vpack.c.b16 %v1551, %v1551
        %v1584 = vpack.c.b16 %v1552, %v1552
        %v1585 = vpack.c.b16 %v1553, %v1553
        %v1586 = vpack.c.b16 %v1554, %v1554
        %v1587 = vpack.c.b16 %v1555, %v1555
        %v1588 = vpack.c.b16 %v1556, %v1556
        %v1589 = vpack.c.b16 %v1557, %v1557
        %v1590 = vpack.c.b16 %v1558, %v1558
        %v1591 = vpack.c.b16 %v1559, %v1559
        %v1592 = vpack.c.b16 %v1560, %v1560
        %v1593 = vpack.c.b16 %v1561, %v1561
        %v1594 = vpack.c.b16 %v1562, %v1562
        %v1595 = vpack.c.b16 %v1563, %v1563
        %v1596 = vpack.c.b16 %v1564, %v1564
        %v1597 = vpack.c.b16 %v1565, %v1565
        %v1598 = vpack.c.b16 %v1566, %v1566
        %1631 = vst [vmem:[#allocation3 + $0x14] sm:$0xf] %v1567
        %1632 = vst [vmem:[#allocation3 + $0x38] sm:$0xf] %v1568
        %1633 = vst [vmem:[#allocation3 + $0x5c] sm:$0xf] %v1569
        %1634 = vst [vmem:[#allocation3 + $0x80] sm:$0xf] %v1570
        %1635 = vst [vmem:[#allocation3 + $0xa4] sm:$0xf] %v1571
        %1636 = vst [vmem:[#allocation3 + $0xc8] sm:$0xf] %v1572
        %1637 = vst [vmem:[#allocation3 + $0xec] sm:$0xf] %v1573
        %1638 = vst [vmem:[#allocation3 + $0x110] sm:$0xf] %v1574
        %1639 = vst [vmem:[#allocation3 + $0x134] sm:$0xf] %v1575
        %1640 = vst [vmem:[#allocation3 + $0x158] sm:$0xf] %v1576
        %1641 = vst [vmem:[#allocation3 + $0x17c] sm:$0xf] %v1577
        %1642 = vst [vmem:[#allocation3 + $0x1a0] sm:$0xf] %v1578
        %1643 = vst [vmem:[#allocation3 + $0x1c4] sm:$0xf] %v1579
        %1644 = vst [vmem:[#allocation3 + $0x1e8] sm:$0xf] %v1580
        %1645 = vst [vmem:[#allocation3 + $0x20c] sm:$0xf] %v1581
        %1646 = vst [vmem:[#allocation3 + $0x230] sm:$0xf] %v1582
        %1647 = vst [vmem:[#allocation3 + $0x254] sm:$0xf] %v1583
        %1648 = vst [vmem:[#allocation3 + $0x278] sm:$0xf] %v1584
        %1649 = vst [vmem:[#allocation3 + $0x29c] sm:$0xf] %v1585
        %1650 = vst [vmem:[#allocation3 + $0x2c0] sm:$0xf] %v1586
        %1651 = vst [vmem:[#allocation3 + $0x2e4] sm:$0xf] %v1587
        %1652 = vst [vmem:[#allocation3 + $0x308] sm:$0xf] %v1588
        %1653 = vst [vmem:[#allocation3 + $0x32c] sm:$0xf] %v1589
        %1654 = vst [vmem:[#allocation3 + $0x350] sm:$0xf] %v1590
        %1655 = vst [vmem:[#allocation3 + $0x374] sm:$0xf] %v1591
        %1656 = vst [vmem:[#allocation3 + $0x398] sm:$0xf] %v1592
        %1657 = vst [vmem:[#allocation3 + $0x3bc] sm:$0xf] %v1593
        %1658 = vst [vmem:[#allocation3 + $0x3e0] sm:$0xf] %v1594
        %1659 = vst [vmem:[#allocation3 + $0x404] sm:$0xf] %v1595
        %1660 = vst [vmem:[#allocation3 + $0x428] sm:$0xf] %v1596
        %1661 = vst [vmem:[#allocation3 + $0x44c] sm:$0xf] %v1597
        %1662 = vst [vmem:[#allocation3 + $0x470] sm:$0xf] %v1598
        %s1663 = scalar_lea.vmem [#allocation2], 64
        %v1664 = vld [vmem:[%s1663 + $0x7] sm:$0xff]
        %v1665 = vld [vmem:[%s1663 + $0xf] sm:$0xff]
        %v1666 = vld [vmem:[%s1663 + $0x27] sm:$0xff]
        %v1667 = vld [vmem:[%s1663 + $0x2f] sm:$0xff]
        %v1668 = vld [vmem:[%s1663 + $0x47] sm:$0xff]
        %v1669 = vld [vmem:[%s1663 + $0x4f] sm:$0xff]
        %v1670 = vld [vmem:[%s1663 + $0x67] sm:$0xff]
        %v1671 = vld [vmem:[%s1663 + $0x6f] sm:$0xff]
        %v1672 = vld [vmem:[%s1663 + $0x87] sm:$0xff]
        %v1673 = vld [vmem:[%s1663 + $0x8f] sm:$0xff]
        %v1674 = vld [vmem:[%s1663 + $0xa7] sm:$0xff]
        %v1675 = vld [vmem:[%s1663 + $0xaf] sm:$0xff]
        %v1676 = vld [vmem:[%s1663 + $0xc7] sm:$0xff]
        %v1677 = vld [vmem:[%s1663 + $0xcf] sm:$0xff]
        %v1678 = vld [vmem:[%s1663 + $0xe7] sm:$0xff]
        %v1679 = vld [vmem:[%s1663 + $0xef] sm:$0xff]
        %v1680 = vld [vmem:[%s1663 + $0x107] sm:$0xff]
        %v1681 = vld [vmem:[%s1663 + $0x10f] sm:$0xff]
        %v1682 = vld [vmem:[%s1663 + $0x127] sm:$0xff]
        %v1683 = vld [vmem:[%s1663 + $0x12f] sm:$0xff]
        %v1684 = vld [vmem:[%s1663 + $0x147] sm:$0xff]
        %v1685 = vld [vmem:[%s1663 + $0x14f] sm:$0xff]
        %v1686 = vld [vmem:[%s1663 + $0x167] sm:$0xff]
        %v1687 = vld [vmem:[%s1663 + $0x16f] sm:$0xff]
        %v1688 = vld [vmem:[%s1663 + $0x187] sm:$0xff]
        %v1689 = vld [vmem:[%s1663 + $0x18f] sm:$0xff]
        %v1690 = vld [vmem:[%s1663 + $0x1a7] sm:$0xff]
        %v1691 = vld [vmem:[%s1663 + $0x1af] sm:$0xff]
        %v1692 = vld [vmem:[%s1663 + $0x1c7] sm:$0xff]
        %v1693 = vld [vmem:[%s1663 + $0x1cf] sm:$0xff]
        %v1694 = vld [vmem:[%s1663 + $0x1e7] sm:$0xff]
        %v1695 = vld [vmem:[%s1663 + $0x1ef] sm:$0xff]
        %v1696 = vpack.c.bf16 %v1665, %v1664
        %v1697 = vpack.c.bf16 %v1667, %v1666
        %v1698 = vpack.c.bf16 %v1669, %v1668
        %v1699 = vpack.c.bf16 %v1671, %v1670
        %v1700 = vpack.c.bf16 %v1673, %v1672
        %v1701 = vpack.c.bf16 %v1675, %v1674
        %v1702 = vpack.c.bf16 %v1677, %v1676
        %v1703 = vpack.c.bf16 %v1679, %v1678
        %v1704 = vpack.c.bf16 %v1681, %v1680
        %v1705 = vpack.c.bf16 %v1683, %v1682
        %v1706 = vpack.c.bf16 %v1685, %v1684
        %v1707 = vpack.c.bf16 %v1687, %v1686
        %v1708 = vpack.c.bf16 %v1689, %v1688
        %v1709 = vpack.c.bf16 %v1691, %v1690
        %v1710 = vpack.c.bf16 %v1693, %v1692
        %v1711 = vpack.c.bf16 %v1695, %v1694
        %v1728 = vunpack.c.l.b16 %v1696
        %v1729 = vunpack.c.h.b16 %v1696
        %v1730 = vunpack.c.l.b16 %v1697
        %v1731 = vunpack.c.h.b16 %v1697
        %v1732 = vunpack.c.l.b16 %v1698
        %v1733 = vunpack.c.h.b16 %v1698
        %v1734 = vunpack.c.l.b16 %v1699
        %v1735 = vunpack.c.h.b16 %v1699
        %v1736 = vunpack.c.l.b16 %v1700
        %v1737 = vunpack.c.h.b16 %v1700
        %v1738 = vunpack.c.l.b16 %v1701
        %v1739 = vunpack.c.h.b16 %v1701
        %v1740 = vunpack.c.l.b16 %v1702
        %v1741 = vunpack.c.h.b16 %v1702
        %v1742 = vunpack.c.l.b16 %v1703
        %v1743 = vunpack.c.h.b16 %v1703
        %v1744 = vunpack.c.l.b16 %v1704
        %v1745 = vunpack.c.h.b16 %v1704
        %v1746 = vunpack.c.l.b16 %v1705
        %v1747 = vunpack.c.h.b16 %v1705
        %v1748 = vunpack.c.l.b16 %v1706
        %v1749 = vunpack.c.h.b16 %v1706
        %v1750 = vunpack.c.l.b16 %v1707
        %v1751 = vunpack.c.h.b16 %v1707
        %v1752 = vunpack.c.l.b16 %v1708
        %v1753 = vunpack.c.h.b16 %v1708
        %v1754 = vunpack.c.l.b16 %v1709
        %v1755 = vunpack.c.h.b16 %v1709
        %v1756 = vunpack.c.l.b16 %v1710
        %v1757 = vunpack.c.h.b16 %v1710
        %v1758 = vunpack.c.l.b16 %v1711
        %v1759 = vunpack.c.h.b16 %v1711
        %v1760 = vpack.c.b16 %v1728, %v1728
        %v1761 = vpack.c.b16 %v1729, %v1729
        %v1762 = vpack.c.b16 %v1730, %v1730
        %v1763 = vpack.c.b16 %v1731, %v1731
        %v1764 = vpack.c.b16 %v1732, %v1732
        %v1765 = vpack.c.b16 %v1733, %v1733
        %v1766 = vpack.c.b16 %v1734, %v1734
        %v1767 = vpack.c.b16 %v1735, %v1735
        %v1768 = vpack.c.b16 %v1736, %v1736
        %v1769 = vpack.c.b16 %v1737, %v1737
        %v1770 = vpack.c.b16 %v1738, %v1738
        %v1771 = vpack.c.b16 %v1739, %v1739
        %v1772 = vpack.c.b16 %v1740, %v1740
        %v1773 = vpack.c.b16 %v1741, %v1741
        %v1774 = vpack.c.b16 %v1742, %v1742
        %v1775 = vpack.c.b16 %v1743, %v1743
        %v1776 = vpack.c.b16 %v1744, %v1744
        %v1777 = vpack.c.b16 %v1745, %v1745
        %v1778 = vpack.c.b16 %v1746, %v1746
        %v1779 = vpack.c.b16 %v1747, %v1747
        %v1780 = vpack.c.b16 %v1748, %v1748
        %v1781 = vpack.c.b16 %v1749, %v1749
        %v1782 = vpack.c.b16 %v1750, %v1750
        %v1783 = vpack.c.b16 %v1751, %v1751
        %v1784 = vpack.c.b16 %v1752, %v1752
        %v1785 = vpack.c.b16 %v1753, %v1753
        %v1786 = vpack.c.b16 %v1754, %v1754
        %v1787 = vpack.c.b16 %v1755, %v1755
        %v1788 = vpack.c.b16 %v1756, %v1756
        %v1789 = vpack.c.b16 %v1757, %v1757
        %v1790 = vpack.c.b16 %v1758, %v1758
        %v1791 = vpack.c.b16 %v1759, %v1759
        %1824 = vst [vmem:[#allocation3 + $0x18] sm:$0xf] %v1760
        %1825 = vst [vmem:[#allocation3 + $0x3c] sm:$0xf] %v1761
        %1826 = vst [vmem:[#allocation3 + $0x60] sm:$0xf] %v1762
        %1827 = vst [vmem:[#allocation3 + $0x84] sm:$0xf] %v1763
        %1828 = vst [vmem:[#allocation3 + $0xa8] sm:$0xf] %v1764
        %1829 = vst [vmem:[#allocation3 + $0xcc] sm:$0xf] %v1765
        %1830 = vst [vmem:[#allocation3 + $0xf0] sm:$0xf] %v1766
        %1831 = vst [vmem:[#allocation3 + $0x114] sm:$0xf] %v1767
        %1832 = vst [vmem:[#allocation3 + $0x138] sm:$0xf] %v1768
        %1833 = vst [vmem:[#allocation3 + $0x15c] sm:$0xf] %v1769
        %1834 = vst [vmem:[#allocation3 + $0x180] sm:$0xf] %v1770
        %1835 = vst [vmem:[#allocation3 + $0x1a4] sm:$0xf] %v1771
        %1836 = vst [vmem:[#allocation3 + $0x1c8] sm:$0xf] %v1772
        %1837 = vst [vmem:[#allocation3 + $0x1ec] sm:$0xf] %v1773
        %1838 = vst [vmem:[#allocation3 + $0x210] sm:$0xf] %v1774
        %1839 = vst [vmem:[#allocation3 + $0x234] sm:$0xf] %v1775
        %1840 = vst [vmem:[#allocation3 + $0x258] sm:$0xf] %v1776
        %1841 = vst [vmem:[#allocation3 + $0x27c] sm:$0xf] %v1777
        %1842 = vst [vmem:[#allocation3 + $0x2a0] sm:$0xf] %v1778
        %1843 = vst [vmem:[#allocation3 + $0x2c4] sm:$0xf] %v1779
        %1844 = vst [vmem:[#allocation3 + $0x2e8] sm:$0xf] %v1780
        %1845 = vst [vmem:[#allocation3 + $0x30c] sm:$0xf] %v1781
        %1846 = vst [vmem:[#allocation3 + $0x330] sm:$0xf] %v1782
        %1847 = vst [vmem:[#allocation3 + $0x354] sm:$0xf] %v1783
        %1848 = vst [vmem:[#allocation3 + $0x378] sm:$0xf] %v1784
        %1849 = vst [vmem:[#allocation3 + $0x39c] sm:$0xf] %v1785
        %1850 = vst [vmem:[#allocation3 + $0x3c0] sm:$0xf] %v1786
        %1851 = vst [vmem:[#allocation3 + $0x3e4] sm:$0xf] %v1787
        %1852 = vst [vmem:[#allocation3 + $0x408] sm:$0xf] %v1788
        %1853 = vst [vmem:[#allocation3 + $0x42c] sm:$0xf] %v1789
        %1854 = vst [vmem:[#allocation3 + $0x450] sm:$0xf] %v1790
        %1855 = vst [vmem:[#allocation3 + $0x474] sm:$0xf] %v1791
        %v1856 = vld [vmem:[%s1663 + $0x8] sm:$0xff]
        %v1857 = vld [vmem:[%s1663 + $0x10] sm:$0xff]
        %v1858 = vld [vmem:[%s1663 + $0x28] sm:$0xff]
        %v1859 = vld [vmem:[%s1663 + $0x30] sm:$0xff]
        %v1860 = vld [vmem:[%s1663 + $0x48] sm:$0xff]
        %v1861 = vld [vmem:[%s1663 + $0x50] sm:$0xff]
        %v1862 = vld [vmem:[%s1663 + $0x68] sm:$0xff]
        %v1863 = vld [vmem:[%s1663 + $0x70] sm:$0xff]
        %v1864 = vld [vmem:[%s1663 + $0x88] sm:$0xff]
        %v1865 = vld [vmem:[%s1663 + $0x90] sm:$0xff]
        %v1866 = vld [vmem:[%s1663 + $0xa8] sm:$0xff]
        %v1867 = vld [vmem:[%s1663 + $0xb0] sm:$0xff]
        %v1868 = vld [vmem:[%s1663 + $0xc8] sm:$0xff]
        %v1869 = vld [vmem:[%s1663 + $0xd0] sm:$0xff]
        %v1870 = vld [vmem:[%s1663 + $0xe8] sm:$0xff]
        %v1871 = vld [vmem:[%s1663 + $0xf0] sm:$0xff]
        %v1872 = vld [vmem:[%s1663 + $0x108] sm:$0xff]
        %v1873 = vld [vmem:[%s1663 + $0x110] sm:$0xff]
        %v1874 = vld [vmem:[%s1663 + $0x128] sm:$0xff]
        %v1875 = vld [vmem:[%s1663 + $0x130] sm:$0xff]
        %v1876 = vld [vmem:[%s1663 + $0x148] sm:$0xff]
        %v1877 = vld [vmem:[%s1663 + $0x150] sm:$0xff]
        %v1878 = vld [vmem:[%s1663 + $0x168] sm:$0xff]
        %v1879 = vld [vmem:[%s1663 + $0x170] sm:$0xff]
        %v1880 = vld [vmem:[%s1663 + $0x188] sm:$0xff]
        %v1881 = vld [vmem:[%s1663 + $0x190] sm:$0xff]
        %v1882 = vld [vmem:[%s1663 + $0x1a8] sm:$0xff]
        %v1883 = vld [vmem:[%s1663 + $0x1b0] sm:$0xff]
        %v1884 = vld [vmem:[%s1663 + $0x1c8] sm:$0xff]
        %v1885 = vld [vmem:[%s1663 + $0x1d0] sm:$0xff]
        %v1886 = vld [vmem:[%s1663 + $0x1e8] sm:$0xff]
        %v1887 = vld [vmem:[%s1663 + $0x1f0] sm:$0xff]
        %v1888 = vpack.c.bf16 %v1857, %v1856
        %v1889 = vpack.c.bf16 %v1859, %v1858
        %v1890 = vpack.c.bf16 %v1861, %v1860
        %v1891 = vpack.c.bf16 %v1863, %v1862
        %v1892 = vpack.c.bf16 %v1865, %v1864
        %v1893 = vpack.c.bf16 %v1867, %v1866
        %v1894 = vpack.c.bf16 %v1869, %v1868
        %v1895 = vpack.c.bf16 %v1871, %v1870
        %v1896 = vpack.c.bf16 %v1873, %v1872
        %v1897 = vpack.c.bf16 %v1875, %v1874
        %v1898 = vpack.c.bf16 %v1877, %v1876
        %v1899 = vpack.c.bf16 %v1879, %v1878
        %v1900 = vpack.c.bf16 %v1881, %v1880
        %v1901 = vpack.c.bf16 %v1883, %v1882
        %v1902 = vpack.c.bf16 %v1885, %v1884
        %v1903 = vpack.c.bf16 %v1887, %v1886
        %v1920 = vunpack.c.l.b16 %v1888
        %v1921 = vunpack.c.h.b16 %v1888
        %v1922 = vunpack.c.l.b16 %v1889
        %v1923 = vunpack.c.h.b16 %v1889
        %v1924 = vunpack.c.l.b16 %v1890
        %v1925 = vunpack.c.h.b16 %v1890
        %v1926 = vunpack.c.l.b16 %v1891
        %v1927 = vunpack.c.h.b16 %v1891
        %v1928 = vunpack.c.l.b16 %v1892
        %v1929 = vunpack.c.h.b16 %v1892
        %v1930 = vunpack.c.l.b16 %v1893
        %v1931 = vunpack.c.h.b16 %v1893
        %v1932 = vunpack.c.l.b16 %v1894
        %v1933 = vunpack.c.h.b16 %v1894
        %v1934 = vunpack.c.l.b16 %v1895
        %v1935 = vunpack.c.h.b16 %v1895
        %v1936 = vunpack.c.l.b16 %v1896
        %v1937 = vunpack.c.h.b16 %v1896
        %v1938 = vunpack.c.l.b16 %v1897
        %v1939 = vunpack.c.h.b16 %v1897
        %v1940 = vunpack.c.l.b16 %v1898
        %v1941 = vunpack.c.h.b16 %v1898
        %v1942 = vunpack.c.l.b16 %v1899
        %v1943 = vunpack.c.h.b16 %v1899
        %v1944 = vunpack.c.l.b16 %v1900
        %v1945 = vunpack.c.h.b16 %v1900
        %v1946 = vunpack.c.l.b16 %v1901
        %v1947 = vunpack.c.h.b16 %v1901
        %v1948 = vunpack.c.l.b16 %v1902
        %v1949 = vunpack.c.h.b16 %v1902
        %v1950 = vunpack.c.l.b16 %v1903
        %v1951 = vunpack.c.h.b16 %v1903
        %v1952 = vpack.c.b16 %v1920, %v1920
        %v1953 = vpack.c.b16 %v1921, %v1921
        %v1954 = vpack.c.b16 %v1922, %v1922
        %v1955 = vpack.c.b16 %v1923, %v1923
        %v1956 = vpack.c.b16 %v1924, %v1924
        %v1957 = vpack.c.b16 %v1925, %v1925
        %v1958 = vpack.c.b16 %v1926, %v1926
        %v1959 = vpack.c.b16 %v1927, %v1927
        %v1960 = vpack.c.b16 %v1928, %v1928
        %v1961 = vpack.c.b16 %v1929, %v1929
        %v1962 = vpack.c.b16 %v1930, %v1930
        %v1963 = vpack.c.b16 %v1931, %v1931
        %v1964 = vpack.c.b16 %v1932, %v1932
        %v1965 = vpack.c.b16 %v1933, %v1933
        %v1966 = vpack.c.b16 %v1934, %v1934
        %v1967 = vpack.c.b16 %v1935, %v1935
        %v1968 = vpack.c.b16 %v1936, %v1936
        %v1969 = vpack.c.b16 %v1937, %v1937
        %v1970 = vpack.c.b16 %v1938, %v1938
        %v1971 = vpack.c.b16 %v1939, %v1939
        %v1972 = vpack.c.b16 %v1940, %v1940
        %v1973 = vpack.c.b16 %v1941, %v1941
        %v1974 = vpack.c.b16 %v1942, %v1942
        %v1975 = vpack.c.b16 %v1943, %v1943
        %v1976 = vpack.c.b16 %v1944, %v1944
        %v1977 = vpack.c.b16 %v1945, %v1945
        %v1978 = vpack.c.b16 %v1946, %v1946
        %v1979 = vpack.c.b16 %v1947, %v1947
        %v1980 = vpack.c.b16 %v1948, %v1948
        %v1981 = vpack.c.b16 %v1949, %v1949
        %v1982 = vpack.c.b16 %v1950, %v1950
        %v1983 = vpack.c.b16 %v1951, %v1951
        %2016 = vst [vmem:[#allocation3 + $0x1c] sm:$0xf] %v1952
        %2017 = vst [vmem:[#allocation3 + $0x40] sm:$0xf] %v1953
        %2018 = vst [vmem:[#allocation3 + $0x64] sm:$0xf] %v1954
        %2019 = vst [vmem:[#allocation3 + $0x88] sm:$0xf] %v1955
        %2020 = vst [vmem:[#allocation3 + $0xac] sm:$0xf] %v1956
        %2021 = vst [vmem:[#allocation3 + $0xd0] sm:$0xf] %v1957
        %2022 = vst [vmem:[#allocation3 + $0xf4] sm:$0xf] %v1958
        %2023 = vst [vmem:[#allocation3 + $0x118] sm:$0xf] %v1959
        %2024 = vst [vmem:[#allocation3 + $0x13c] sm:$0xf] %v1960
        %2025 = vst [vmem:[#allocation3 + $0x160] sm:$0xf] %v1961
        %2026 = vst [vmem:[#allocation3 + $0x184] sm:$0xf] %v1962
        %2027 = vst [vmem:[#allocation3 + $0x1a8] sm:$0xf] %v1963
        %2028 = vst [vmem:[#allocation3 + $0x1cc] sm:$0xf] %v1964
        %2029 = vst [vmem:[#allocation3 + $0x1f0] sm:$0xf] %v1965
        %2030 = vst [vmem:[#allocation3 + $0x214] sm:$0xf] %v1966
        %2031 = vst [vmem:[#allocation3 + $0x238] sm:$0xf] %v1967
        %2032 = vst [vmem:[#allocation3 + $0x25c] sm:$0xf] %v1968
        %2033 = vst [vmem:[#allocation3 + $0x280] sm:$0xf] %v1969
        %2034 = vst [vmem:[#allocation3 + $0x2a4] sm:$0xf] %v1970
        %2035 = vst [vmem:[#allocation3 + $0x2c8] sm:$0xf] %v1971
        %2036 = vst [vmem:[#allocation3 + $0x2ec] sm:$0xf] %v1972
        %2037 = vst [vmem:[#allocation3 + $0x310] sm:$0xf] %v1973
        %2038 = vst [vmem:[#allocation3 + $0x334] sm:$0xf] %v1974
        %2039 = vst [vmem:[#allocation3 + $0x358] sm:$0xf] %v1975
        %2040 = vst [vmem:[#allocation3 + $0x37c] sm:$0xf] %v1976
        %2041 = vst [vmem:[#allocation3 + $0x3a0] sm:$0xf] %v1977
        %2042 = vst [vmem:[#allocation3 + $0x3c4] sm:$0xf] %v1978
        %2043 = vst [vmem:[#allocation3 + $0x3e8] sm:$0xf] %v1979
        %2044 = vst [vmem:[#allocation3 + $0x40c] sm:$0xf] %v1980
        %2045 = vst [vmem:[#allocation3 + $0x430] sm:$0xf] %v1981
        %2046 = vst [vmem:[#allocation3 + $0x454] sm:$0xf] %v1982
        %2047 = vst [vmem:[#allocation3 + $0x478] sm:$0xf] %v1983
        %v2048 = vld [vmem:[%s1663 + $0x9] sm:$0xff]
        %v2049 = vld [vmem:[%s1663 + $0x11] sm:$0xff]
        %v2050 = vld [vmem:[%s1663 + $0x29] sm:$0xff]
        %v2051 = vld [vmem:[%s1663 + $0x31] sm:$0xff]
        %v2052 = vld [vmem:[%s1663 + $0x49] sm:$0xff]
        %v2053 = vld [vmem:[%s1663 + $0x51] sm:$0xff]
        %v2054 = vld [vmem:[%s1663 + $0x69] sm:$0xff]
        %v2055 = vld [vmem:[%s1663 + $0x71] sm:$0xff]
        %v2056 = vld [vmem:[%s1663 + $0x89] sm:$0xff]
        %v2057 = vld [vmem:[%s1663 + $0x91] sm:$0xff]
        %v2058 = vld [vmem:[%s1663 + $0xa9] sm:$0xff]
        %v2059 = vld [vmem:[%s1663 + $0xb1] sm:$0xff]
        %v2060 = vld [vmem:[%s1663 + $0xc9] sm:$0xff]
        %v2061 = vld [vmem:[%s1663 + $0xd1] sm:$0xff]
        %v2062 = vld [vmem:[%s1663 + $0xe9] sm:$0xff]
        %v2063 = vld [vmem:[%s1663 + $0xf1] sm:$0xff]
        %v2064 = vld [vmem:[%s1663 + $0x109] sm:$0xff]
        %v2065 = vld [vmem:[%s1663 + $0x111] sm:$0xff]
        %v2066 = vld [vmem:[%s1663 + $0x129] sm:$0xff]
        %v2067 = vld [vmem:[%s1663 + $0x131] sm:$0xff]
        %v2068 = vld [vmem:[%s1663 + $0x149] sm:$0xff]
        %v2069 = vld [vmem:[%s1663 + $0x151] sm:$0xff]
        %v2070 = vld [vmem:[%s1663 + $0x169] sm:$0xff]
        %v2071 = vld [vmem:[%s1663 + $0x171] sm:$0xff]
        %v2072 = vld [vmem:[%s1663 + $0x189] sm:$0xff]
        %v2073 = vld [vmem:[%s1663 + $0x191] sm:$0xff]
        %v2074 = vld [vmem:[%s1663 + $0x1a9] sm:$0xff]
        %v2075 = vld [vmem:[%s1663 + $0x1b1] sm:$0xff]
        %v2076 = vld [vmem:[%s1663 + $0x1c9] sm:$0xff]
        %v2077 = vld [vmem:[%s1663 + $0x1d1] sm:$0xff]
        %v2078 = vld [vmem:[%s1663 + $0x1e9] sm:$0xff]
        %v2079 = vld [vmem:[%s1663 + $0x1f1] sm:$0xff]
        %v2080 = vpack.c.bf16 %v2049, %v2048
        %v2081 = vpack.c.bf16 %v2051, %v2050
        %v2082 = vpack.c.bf16 %v2053, %v2052
        %v2083 = vpack.c.bf16 %v2055, %v2054
        %v2084 = vpack.c.bf16 %v2057, %v2056
        %v2085 = vpack.c.bf16 %v2059, %v2058
        %v2086 = vpack.c.bf16 %v2061, %v2060
        %v2087 = vpack.c.bf16 %v2063, %v2062
        %v2088 = vpack.c.bf16 %v2065, %v2064
        %v2089 = vpack.c.bf16 %v2067, %v2066
        %v2090 = vpack.c.bf16 %v2069, %v2068
        %v2091 = vpack.c.bf16 %v2071, %v2070
        %v2092 = vpack.c.bf16 %v2073, %v2072
        %v2093 = vpack.c.bf16 %v2075, %v2074
        %v2094 = vpack.c.bf16 %v2077, %v2076
        %v2095 = vpack.c.bf16 %v2079, %v2078
        %v2112 = vunpack.c.l.b16 %v2080
        %v2113 = vunpack.c.h.b16 %v2080
        %v2114 = vunpack.c.l.b16 %v2081
        %v2115 = vunpack.c.h.b16 %v2081
        %v2116 = vunpack.c.l.b16 %v2082
        %v2117 = vunpack.c.h.b16 %v2082
        %v2118 = vunpack.c.l.b16 %v2083
        %v2119 = vunpack.c.h.b16 %v2083
        %v2120 = vunpack.c.l.b16 %v2084
        %v2121 = vunpack.c.h.b16 %v2084
        %v2122 = vunpack.c.l.b16 %v2085
        %v2123 = vunpack.c.h.b16 %v2085
        %v2124 = vunpack.c.l.b16 %v2086
        %v2125 = vunpack.c.h.b16 %v2086
        %v2126 = vunpack.c.l.b16 %v2087
        %v2127 = vunpack.c.h.b16 %v2087
        %v2128 = vunpack.c.l.b16 %v2088
        %v2129 = vunpack.c.h.b16 %v2088
        %v2130 = vunpack.c.l.b16 %v2089
        %v2131 = vunpack.c.h.b16 %v2089
        %v2132 = vunpack.c.l.b16 %v2090
        %v2133 = vunpack.c.h.b16 %v2090
        %v2134 = vunpack.c.l.b16 %v2091
        %v2135 = vunpack.c.h.b16 %v2091
        %v2136 = vunpack.c.l.b16 %v2092
        %v2137 = vunpack.c.h.b16 %v2092
        %v2138 = vunpack.c.l.b16 %v2093
        %v2139 = vunpack.c.h.b16 %v2093
        %v2140 = vunpack.c.l.b16 %v2094
        %v2141 = vunpack.c.h.b16 %v2094
        %v2142 = vunpack.c.l.b16 %v2095
        %v2143 = vunpack.c.h.b16 %v2095
        %v2144 = vpack.c.b16 %v2112, %v2112
        %v2145 = vpack.c.b16 %v2113, %v2113
        %v2146 = vpack.c.b16 %v2114, %v2114
        %v2147 = vpack.c.b16 %v2115, %v2115
        %v2148 = vpack.c.b16 %v2116, %v2116
        %v2149 = vpack.c.b16 %v2117, %v2117
        %v2150 = vpack.c.b16 %v2118, %v2118
        %v2151 = vpack.c.b16 %v2119, %v2119
        %v2152 = vpack.c.b16 %v2120, %v2120
        %v2153 = vpack.c.b16 %v2121, %v2121
        %v2154 = vpack.c.b16 %v2122, %v2122
        %v2155 = vpack.c.b16 %v2123, %v2123
        %v2156 = vpack.c.b16 %v2124, %v2124
        %v2157 = vpack.c.b16 %v2125, %v2125
        %v2158 = vpack.c.b16 %v2126, %v2126
        %v2159 = vpack.c.b16 %v2127, %v2127
        %v2160 = vpack.c.b16 %v2128, %v2128
        %v2161 = vpack.c.b16 %v2129, %v2129
        %v2162 = vpack.c.b16 %v2130, %v2130
        %v2163 = vpack.c.b16 %v2131, %v2131
        %v2164 = vpack.c.b16 %v2132, %v2132
        %v2165 = vpack.c.b16 %v2133, %v2133
        %v2166 = vpack.c.b16 %v2134, %v2134
        %v2167 = vpack.c.b16 %v2135, %v2135
        %v2168 = vpack.c.b16 %v2136, %v2136
        %v2169 = vpack.c.b16 %v2137, %v2137
        %v2170 = vpack.c.b16 %v2138, %v2138
        %v2171 = vpack.c.b16 %v2139, %v2139
        %v2172 = vpack.c.b16 %v2140, %v2140
        %v2173 = vpack.c.b16 %v2141, %v2141
        %v2174 = vpack.c.b16 %v2142, %v2142
        %v2175 = vpack.c.b16 %v2143, %v2143
        %2208 = vst [vmem:[#allocation3 + $0x20] sm:$0xf] %v2144
        %2209 = vst [vmem:[#allocation3 + $0x44] sm:$0xf] %v2145
        %2210 = vst [vmem:[#allocation3 + $0x68] sm:$0xf] %v2146
        %2211 = vst [vmem:[#allocation3 + $0x8c] sm:$0xf] %v2147
        %2212 = vst [vmem:[#allocation3 + $0xb0] sm:$0xf] %v2148
        %2213 = vst [vmem:[#allocation3 + $0xd4] sm:$0xf] %v2149
        %2214 = vst [vmem:[#allocation3 + $0xf8] sm:$0xf] %v2150
        %2215 = vst [vmem:[#allocation3 + $0x11c] sm:$0xf] %v2151
        %2216 = vst [vmem:[#allocation3 + $0x140] sm:$0xf] %v2152
        %2217 = vst [vmem:[#allocation3 + $0x164] sm:$0xf] %v2153
        %2218 = vst [vmem:[#allocation3 + $0x188] sm:$0xf] %v2154
        %2219 = vst [vmem:[#allocation3 + $0x1ac] sm:$0xf] %v2155
        %2220 = vst [vmem:[#allocation3 + $0x1d0] sm:$0xf] %v2156
        %2221 = vst [vmem:[#allocation3 + $0x1f4] sm:$0xf] %v2157
        %2222 = vst [vmem:[#allocation3 + $0x218] sm:$0xf] %v2158
        %2223 = vst [vmem:[#allocation3 + $0x23c] sm:$0xf] %v2159
        %2224 = vst [vmem:[#allocation3 + $0x260] sm:$0xf] %v2160
        %2225 = vst [vmem:[#allocation3 + $0x284] sm:$0xf] %v2161
        %2226 = vst [vmem:[#allocation3 + $0x2a8] sm:$0xf] %v2162
        %2227 = vst [vmem:[#allocation3 + $0x2cc] sm:$0xf] %v2163
        %2228 = vst [vmem:[#allocation3 + $0x2f0] sm:$0xf] %v2164
        %2229 = vst [vmem:[#allocation3 + $0x314] sm:$0xf] %v2165
        %2230 = vst [vmem:[#allocation3 + $0x338] sm:$0xf] %v2166
        %2231 = vst [vmem:[#allocation3 + $0x35c] sm:$0xf] %v2167
        %2232 = vst [vmem:[#allocation3 + $0x380] sm:$0xf] %v2168
        %2233 = vst [vmem:[#allocation3 + $0x3a4] sm:$0xf] %v2169
        %2234 = vst [vmem:[#allocation3 + $0x3c8] sm:$0xf] %v2170
        %2235 = vst [vmem:[#allocation3 + $0x3ec] sm:$0xf] %v2171
        %2236 = vst [vmem:[#allocation3 + $0x410] sm:$0xf] %v2172
        %2237 = vst [vmem:[#allocation3 + $0x434] sm:$0xf] %v2173
        %2238 = vst [vmem:[#allocation3 + $0x458] sm:$0xf] %v2174
        %2239 = vst [vmem:[#allocation3 + $0x47c] sm:$0xf] %v2175
        %v2240 = vld [vmem:[#allocation3] sm:$0xff]
        %v2241 = vld [vmem:[#allocation3 + $0x8] sm:$0xff]
        %v2242 = vld [vmem:[#allocation3 + $0x10] sm:$0xff]
        %v2243 = vld [vmem:[#allocation3 + $0x18] sm:$0xff]
        %v2244 = vld [vmem:[#allocation3 + $0x20] sm:$0xf]
        %v2245 = vld [vmem:[#allocation3 + $0x24] sm:$0xff]
        %v2246 = vld [vmem:[#allocation3 + $0x2c] sm:$0xff]
        %v2247 = vld [vmem:[#allocation3 + $0x34] sm:$0xff]
        %v2248 = vld [vmem:[#allocation3 + $0x3c] sm:$0xff]
        %v2249 = vld [vmem:[#allocation3 + $0x44] sm:$0xf]
        %v2250 = vld [vmem:[#allocation3 + $0x48] sm:$0xff]
        %v2251 = vld [vmem:[#allocation3 + $0x50] sm:$0xff]
        %v2252 = vld [vmem:[#allocation3 + $0x58] sm:$0xff]
        %v2253 = vld [vmem:[#allocation3 + $0x60] sm:$0xff]
        %v2254 = vld [vmem:[#allocation3 + $0x68] sm:$0xf]
        %v2255 = vld [vmem:[#allocation3 + $0x6c] sm:$0xff]
        %v2256 = vld [vmem:[#allocation3 + $0x74] sm:$0xff]
        %v2257 = vld [vmem:[#allocation3 + $0x7c] sm:$0xff]
        %v2258 = vld [vmem:[#allocation3 + $0x84] sm:$0xff]
        %v2259 = vld [vmem:[#allocation3 + $0x8c] sm:$0xf]
        %v2260 = vld [vmem:[#allocation3 + $0x90] sm:$0xff]
        %v2261 = vld [vmem:[#allocation3 + $0x98] sm:$0xff]
        %v2262 = vld [vmem:[#allocation3 + $0xa0] sm:$0xff]
        %v2263 = vld [vmem:[#allocation3 + $0xa8] sm:$0xff]
        %v2264 = vld [vmem:[#allocation3 + $0xb0] sm:$0xf]
        %v2265 = vld [vmem:[#allocation3 + $0xb4] sm:$0xff]
        %v2266 = vld [vmem:[#allocation3 + $0xbc] sm:$0xff]
        %v2267 = vld [vmem:[#allocation3 + $0xc4] sm:$0xff]
        %v2268 = vld [vmem:[#allocation3 + $0xcc] sm:$0xff]
        %v2269 = vld [vmem:[#allocation3 + $0xd4] sm:$0xf]
        %v2270 = vld [vmem:[#allocation3 + $0xd8] sm:$0xff]
        %v2271 = vld [vmem:[#allocation3 + $0xe0] sm:$0xff]
        %v2272 = vld [vmem:[#allocation3 + $0xe8] sm:$0xff]
        %v2273 = vld [vmem:[#allocation3 + $0xf0] sm:$0xff]
        %v2274 = vld [vmem:[#allocation3 + $0xf8] sm:$0xf]
        %v2275 = vld [vmem:[#allocation3 + $0xfc] sm:$0xff]
        %v2276 = vld [vmem:[#allocation3 + $0x104] sm:$0xff]
        %v2277 = vld [vmem:[#allocation3 + $0x10c] sm:$0xff]
        %v2278 = vld [vmem:[#allocation3 + $0x114] sm:$0xff]
        %v2279 = vld [vmem:[#allocation3 + $0x11c] sm:$0xf]
        %v2280 = vld [vmem:[#allocation3 + $0x120] sm:$0xff]
        %v2281 = vld [vmem:[#allocation3 + $0x128] sm:$0xff]
        %v2282 = vld [vmem:[#allocation3 + $0x130] sm:$0xff]
        %v2283 = vld [vmem:[#allocation3 + $0x138] sm:$0xff]
        %v2284 = vld [vmem:[#allocation3 + $0x140] sm:$0xf]
        %v2285 = vld [vmem:[#allocation3 + $0x144] sm:$0xff]
        %v2286 = vld [vmem:[#allocation3 + $0x14c] sm:$0xff]
        %v2287 = vld [vmem:[#allocation3 + $0x154] sm:$0xff]
        %v2288 = vld [vmem:[#allocation3 + $0x15c] sm:$0xff]
        %v2289 = vld [vmem:[#allocation3 + $0x164] sm:$0xf]
        %v2290 = vld [vmem:[#allocation3 + $0x168] sm:$0xff]
        %v2291 = vld [vmem:[#allocation3 + $0x170] sm:$0xff]
        %v2292 = vld [vmem:[#allocation3 + $0x178] sm:$0xff]
        %v2293 = vld [vmem:[#allocation3 + $0x180] sm:$0xff]
        %v2294 = vld [vmem:[#allocation3 + $0x188] sm:$0xf]
        %v2295 = vld [vmem:[#allocation3 + $0x18c] sm:$0xff]
        %v2296 = vld [vmem:[#allocation3 + $0x194] sm:$0xff]
        %v2297 = vld [vmem:[#allocation3 + $0x19c] sm:$0xff]
        %v2298 = vld [vmem:[#allocation3 + $0x1a4] sm:$0xff]
        %v2299 = vld [vmem:[#allocation3 + $0x1ac] sm:$0xf]
        %v2300 = vld [vmem:[#allocation3 + $0x1b0] sm:$0xff]
        %v2301 = vld [vmem:[#allocation3 + $0x1b8] sm:$0xff]
        %v2302 = vld [vmem:[#allocation3 + $0x1c0] sm:$0xff]
        %v2303 = vld [vmem:[#allocation3 + $0x1c8] sm:$0xff]
        %v2304 = vld [vmem:[#allocation3 + $0x1d0] sm:$0xf]
        %v2305 = vld [vmem:[#allocation3 + $0x1d4] sm:$0xff]
        %v2306 = vld [vmem:[#allocation3 + $0x1dc] sm:$0xff]
        %v2307 = vld [vmem:[#allocation3 + $0x1e4] sm:$0xff]
        %v2308 = vld [vmem:[#allocation3 + $0x1ec] sm:$0xff]
        %v2309 = vld [vmem:[#allocation3 + $0x1f4] sm:$0xf]
        %v2310 = vld [vmem:[#allocation3 + $0x1f8] sm:$0xff]
        %v2311 = vld [vmem:[#allocation3 + $0x200] sm:$0xff]
        %v2312 = vld [vmem:[#allocation3 + $0x208] sm:$0xff]
        %v2313 = vld [vmem:[#allocation3 + $0x210] sm:$0xff]
        %v2314 = vld [vmem:[#allocation3 + $0x218] sm:$0xf]
        %v2315 = vld [vmem:[#allocation3 + $0x21c] sm:$0xff]
        %v2316 = vld [vmem:[#allocation3 + $0x224] sm:$0xff]
        %v2317 = vld [vmem:[#allocation3 + $0x22c] sm:$0xff]
        %v2318 = vld [vmem:[#allocation3 + $0x234] sm:$0xff]
        %v2319 = vld [vmem:[#allocation3 + $0x23c] sm:$0xf]
        %v2320 = vld [vmem:[#allocation3 + $0x240] sm:$0xff]
        %v2321 = vld [vmem:[#allocation3 + $0x248] sm:$0xff]
        %v2322 = vld [vmem:[#allocation3 + $0x250] sm:$0xff]
        %v2323 = vld [vmem:[#allocation3 + $0x258] sm:$0xff]
        %v2324 = vld [vmem:[#allocation3 + $0x260] sm:$0xf]
        %v2325 = vld [vmem:[#allocation3 + $0x264] sm:$0xff]
        %v2326 = vld [vmem:[#allocation3 + $0x26c] sm:$0xff]
        %v2327 = vld [vmem:[#allocation3 + $0x274] sm:$0xff]
        %v2328 = vld [vmem:[#allocation3 + $0x27c] sm:$0xff]
        %v2329 = vld [vmem:[#allocation3 + $0x284] sm:$0xf]
        %v2330 = vld [vmem:[#allocation3 + $0x288] sm:$0xff]
        %v2331 = vld [vmem:[#allocation3 + $0x290] sm:$0xff]
        %v2332 = vld [vmem:[#allocation3 + $0x298] sm:$0xff]
        %v2333 = vld [vmem:[#allocation3 + $0x2a0] sm:$0xff]
        %v2334 = vld [vmem:[#allocation3 + $0x2a8] sm:$0xf]
        %v2335 = vld [vmem:[#allocation3 + $0x2ac] sm:$0xff]
        %v2336 = vld [vmem:[#allocation3 + $0x2b4] sm:$0xff]
        %v2337 = vld [vmem:[#allocation3 + $0x2bc] sm:$0xff]
        %v2338 = vld [vmem:[#allocation3 + $0x2c4] sm:$0xff]
        %v2339 = vld [vmem:[#allocation3 + $0x2cc] sm:$0xf]
        %v2340 = vld [vmem:[#allocation3 + $0x2d0] sm:$0xff]
        %v2341 = vld [vmem:[#allocation3 + $0x2d8] sm:$0xff]
        %v2342 = vld [vmem:[#allocation3 + $0x2e0] sm:$0xff]
        %v2343 = vld [vmem:[#allocation3 + $0x2e8] sm:$0xff]
        %v2344 = vld [vmem:[#allocation3 + $0x2f0] sm:$0xf]
        %v2345 = vld [vmem:[#allocation3 + $0x2f4] sm:$0xff]
        %v2346 = vld [vmem:[#allocation3 + $0x2fc] sm:$0xff]
        %v2347 = vld [vmem:[#allocation3 + $0x304] sm:$0xff]
        %v2348 = vld [vmem:[#allocation3 + $0x30c] sm:$0xff]
        %v2349 = vld [vmem:[#allocation3 + $0x314] sm:$0xf]
        %v2350 = vld [vmem:[#allocation3 + $0x318] sm:$0xff]
        %v2351 = vld [vmem:[#allocation3 + $0x320] sm:$0xff]
        %v2352 = vld [vmem:[#allocation3 + $0x328] sm:$0xff]
        %v2353 = vld [vmem:[#allocation3 + $0x330] sm:$0xff]
        %v2354 = vld [vmem:[#allocation3 + $0x338] sm:$0xf]
        %v2355 = vld [vmem:[#allocation3 + $0x33c] sm:$0xff]
        %v2356 = vld [vmem:[#allocation3 + $0x344] sm:$0xff]
        %v2357 = vld [vmem:[#allocation3 + $0x34c] sm:$0xff]
        %v2358 = vld [vmem:[#allocation3 + $0x354] sm:$0xff]
        %v2359 = vld [vmem:[#allocation3 + $0x35c] sm:$0xf]
        %v2360 = vld [vmem:[#allocation3 + $0x360] sm:$0xff]
        %v2361 = vld [vmem:[#allocation3 + $0x368] sm:$0xff]
        %v2362 = vld [vmem:[#allocation3 + $0x370] sm:$0xff]
        %v2363 = vld [vmem:[#allocation3 + $0x378] sm:$0xff]
        %v2364 = vld [vmem:[#allocation3 + $0x380] sm:$0xf]
        %v2365 = vld [vmem:[#allocation3 + $0x384] sm:$0xff]
        %v2366 = vld [vmem:[#allocation3 + $0x38c] sm:$0xff]
        %v2367 = vld [vmem:[#allocation3 + $0x394] sm:$0xff]
        %v2368 = vld [vmem:[#allocation3 + $0x39c] sm:$0xff]
        %v2369 = vld [vmem:[#allocation3 + $0x3a4] sm:$0xf]
        %v2370 = vld [vmem:[#allocation3 + $0x3a8] sm:$0xff]
        %v2371 = vld [vmem:[#allocation3 + $0x3b0] sm:$0xff]
        %v2372 = vld [vmem:[#allocation3 + $0x3b8] sm:$0xff]
        %v2373 = vld [vmem:[#allocation3 + $0x3c0] sm:$0xff]
        %v2374 = vld [vmem:[#allocation3 + $0x3c8] sm:$0xf]
        %v2375 = vld [vmem:[#allocation3 + $0x3cc] sm:$0xff]
        %v2376 = vld [vmem:[#allocation3 + $0x3d4] sm:$0xff]
        %v2377 = vld [vmem:[#allocation3 + $0x3dc] sm:$0xff]
        %v2378 = vld [vmem:[#allocation3 + $0x3e4] sm:$0xff]
        %v2379 = vld [vmem:[#allocation3 + $0x3ec] sm:$0xf]
        %v2380 = vld [vmem:[#allocation3 + $0x3f0] sm:$0xff]
        %v2381 = vld [vmem:[#allocation3 + $0x3f8] sm:$0xff]
        %v2382 = vld [vmem:[#allocation3 + $0x400] sm:$0xff]
        %v2383 = vld [vmem:[#allocation3 + $0x408] sm:$0xff]
        %v2384 = vld [vmem:[#allocation3 + $0x410] sm:$0xf]
        %v2385 = vld [vmem:[#allocation3 + $0x414] sm:$0xff]
        %v2386 = vld [vmem:[#allocation3 + $0x41c] sm:$0xff]
        %v2387 = vld [vmem:[#allocation3 + $0x424] sm:$0xff]
        %v2388 = vld [vmem:[#allocation3 + $0x42c] sm:$0xff]
        %v2389 = vld [vmem:[#allocation3 + $0x434] sm:$0xf]
        %v2390 = vld [vmem:[#allocation3 + $0x438] sm:$0xff]
        %v2391 = vld [vmem:[#allocation3 + $0x440] sm:$0xff]
        %v2392 = vld [vmem:[#allocation3 + $0x448] sm:$0xff]
        %v2393 = vld [vmem:[#allocation3 + $0x450] sm:$0xff]
        %v2394 = vld [vmem:[#allocation3 + $0x458] sm:$0xf]
        %v2395 = vld [vmem:[#allocation3 + $0x45c] sm:$0xff]
        %v2396 = vld [vmem:[#allocation3 + $0x464] sm:$0xff]
        %v2397 = vld [vmem:[#allocation3 + $0x46c] sm:$0xff]
        %v2398 = vld [vmem:[#allocation3 + $0x474] sm:$0xff]
        %v2399 = vld [vmem:[#allocation3 + $0x47c] sm:$0xf]
        %v2400 = vld [vmem:[#allocation7] sm:$0xf]
        %v2401 = vld [vmem:[#allocation7 + $0x4] sm:$0xf]
        %v2402 = vld [vmem:[#allocation7 + $0x8] sm:$0xf]
        %v2403 = vld [vmem:[#allocation7 + $0xc] sm:$0xf]
        %v2404 = vld [vmem:[#allocation7 + $0x10] sm:$0xf]
        %v2405 = vld [vmem:[#allocation7 + $0x14] sm:$0xf]
        %v2406 = vld [vmem:[#allocation7 + $0x18] sm:$0xf]
        %v2407 = vld [vmem:[#allocation7 + $0x1c] sm:$0xf]
        %v2408 = vld [vmem:[#allocation7 + $0x20] sm:$0xf]
        %v2409 = vld [vmem:[#allocation7 + $0x24] sm:$0xf]
        %v2410 = vld [vmem:[#allocation7 + $0x28] sm:$0xf]
        %v2411 = vld [vmem:[#allocation7 + $0x2c] sm:$0xf]
        %v2412 = vld [vmem:[#allocation7 + $0x30] sm:$0xf]
        %v2413 = vld [vmem:[#allocation7 + $0x34] sm:$0xf]
        %v2414 = vld [vmem:[#allocation7 + $0x38] sm:$0xf]
        %v2415 = vld [vmem:[#allocation7 + $0x3c] sm:$0xf]
        %v2416 = vld [vmem:[#allocation7 + $0x40] sm:$0xf]
        %v2417 = vld [vmem:[#allocation7 + $0x44] sm:$0xf]
        %v2418 = vld [vmem:[#allocation7 + $0x48] sm:$0xf]
        %v2419 = vld [vmem:[#allocation7 + $0x4c] sm:$0xf]
        %v2420 = vld [vmem:[#allocation7 + $0x50] sm:$0xf]
        %v2421 = vld [vmem:[#allocation7 + $0x54] sm:$0xf]
        %v2422 = vld [vmem:[#allocation7 + $0x58] sm:$0xf]
        %v2423 = vld [vmem:[#allocation7 + $0x5c] sm:$0xf]
        %v2424 = vld [vmem:[#allocation7 + $0x60] sm:$0xf]
        %v2425 = vld [vmem:[#allocation7 + $0x64] sm:$0xf]
        %v2426 = vld [vmem:[#allocation7 + $0x68] sm:$0xf]
        %v2427 = vld [vmem:[#allocation7 + $0x6c] sm:$0xf]
        %v2428 = vld [vmem:[#allocation7 + $0x70] sm:$0xf]
        %v2429 = vld [vmem:[#allocation7 + $0x74] sm:$0xf]
        %v2430 = vld [vmem:[#allocation7 + $0x78] sm:$0xf]
        %v2431 = vld [vmem:[#allocation7 + $0x7c] sm:$0xf]
        %v2432 = vld [vmem:[#allocation7 + $0x80] sm:$0xf]
        %v2433 = vld [vmem:[#allocation7 + $0x84] sm:$0xf]
        %v2434 = vld [vmem:[#allocation7 + $0x88] sm:$0xf]
        %v2435 = vld [vmem:[#allocation7 + $0x8c] sm:$0xf]
        %v2436 = vld [vmem:[#allocation7 + $0x90] sm:$0xf]
        %v2437 = vld [vmem:[#allocation7 + $0x94] sm:$0xf]
        %v2438 = vld [vmem:[#allocation7 + $0x98] sm:$0xf]
        %v2439 = vld [vmem:[#allocation7 + $0x9c] sm:$0xf]
        %v2440 = vld [vmem:[#allocation7 + $0xa0] sm:$0xf]
        %v2441 = vld [vmem:[#allocation7 + $0xa4] sm:$0xf]
        %v2442 = vld [vmem:[#allocation7 + $0xa8] sm:$0xf]
        %v2443 = vld [vmem:[#allocation7 + $0xac] sm:$0xf]
        %v2444 = vld [vmem:[#allocation7 + $0xb0] sm:$0xf]
        %v2445 = vld [vmem:[#allocation7 + $0xb4] sm:$0xf]
        %v2446 = vld [vmem:[#allocation7 + $0xb8] sm:$0xf]
        %v2447 = vld [vmem:[#allocation7 + $0xbc] sm:$0xf]
        %v2448 = vld [vmem:[#allocation7 + $0xc0] sm:$0xf]
        %v2449 = vld [vmem:[#allocation7 + $0xc4] sm:$0xf]
        %v2450 = vld [vmem:[#allocation7 + $0xc8] sm:$0xf]
        %v2451 = vld [vmem:[#allocation7 + $0xcc] sm:$0xf]
        %v2452 = vld [vmem:[#allocation7 + $0xd0] sm:$0xf]
        %v2453 = vld [vmem:[#allocation7 + $0xd4] sm:$0xf]
        %v2454 = vld [vmem:[#allocation7 + $0xd8] sm:$0xf]
        %v2455 = vld [vmem:[#allocation7 + $0xdc] sm:$0xf]
        %v2456 = vld [vmem:[#allocation7 + $0xe0] sm:$0xf]
        %v2457 = vld [vmem:[#allocation7 + $0xe4] sm:$0xf]
        %v2458 = vld [vmem:[#allocation7 + $0xe8] sm:$0xf]
        %v2459 = vld [vmem:[#allocation7 + $0xec] sm:$0xf]
        %v2460 = vld [vmem:[#allocation7 + $0xf0] sm:$0xf]
        %v2461 = vld [vmem:[#allocation7 + $0xf4] sm:$0xf]
        %v2462 = vld [vmem:[#allocation7 + $0xf8] sm:$0xf]
        %v2463 = vld [vmem:[#allocation7 + $0xfc] sm:$0xf]
        %v2464 = vld [vmem:[#allocation7 + $0x100] sm:$0xf]
        %v2465 = vld [vmem:[#allocation7 + $0x104] sm:$0xf]
        %v2466 = vld [vmem:[#allocation7 + $0x108] sm:$0xf]
        %v2467 = vld [vmem:[#allocation7 + $0x10c] sm:$0xf]
        %v2468 = vld [vmem:[#allocation7 + $0x110] sm:$0xf]
        %v2469 = vld [vmem:[#allocation7 + $0x114] sm:$0xf]
        %v2470 = vld [vmem:[#allocation7 + $0x118] sm:$0xf]
        %v2471 = vld [vmem:[#allocation7 + $0x11c] sm:$0xf]
        %v2472 = vld [vmem:[#allocation7 + $0x120] sm:$0xf]
        %v2473 = vld [vmem:[#allocation7 + $0x124] sm:$0xf]
        %v2474 = vld [vmem:[#allocation7 + $0x128] sm:$0xf]
        %v2475 = vld [vmem:[#allocation7 + $0x12c] sm:$0xf]
        %v2476 = vld [vmem:[#allocation7 + $0x130] sm:$0xf]
        %v2477 = vld [vmem:[#allocation7 + $0x134] sm:$0xf]
        %v2478 = vld [vmem:[#allocation7 + $0x138] sm:$0xf]
        %v2479 = vld [vmem:[#allocation7 + $0x13c] sm:$0xf]
        %v2480 = vld [vmem:[#allocation7 + $0x140] sm:$0xf]
        %v2481 = vld [vmem:[#allocation7 + $0x144] sm:$0xf]
        %v2482 = vld [vmem:[#allocation7 + $0x148] sm:$0xf]
        %v2483 = vld [vmem:[#allocation7 + $0x14c] sm:$0xf]
        %v2484 = vld [vmem:[#allocation7 + $0x150] sm:$0xf]
        %v2485 = vld [vmem:[#allocation7 + $0x154] sm:$0xf]
        %v2486 = vld [vmem:[#allocation7 + $0x158] sm:$0xf]
        %v2487 = vld [vmem:[#allocation7 + $0x15c] sm:$0xf]
        %v2488 = vld [vmem:[#allocation7 + $0x160] sm:$0xf]
        %v2489 = vld [vmem:[#allocation7 + $0x164] sm:$0xf]
        %v2490 = vld [vmem:[#allocation7 + $0x168] sm:$0xf]
        %v2491 = vld [vmem:[#allocation7 + $0x16c] sm:$0xf]
        %v2492 = vld [vmem:[#allocation7 + $0x170] sm:$0xf]
        %v2493 = vld [vmem:[#allocation7 + $0x174] sm:$0xf]
        %v2494 = vld [vmem:[#allocation7 + $0x178] sm:$0xf]
        %v2495 = vld [vmem:[#allocation7 + $0x17c] sm:$0xf]
        %v2496 = vld [vmem:[#allocation7 + $0x180] sm:$0xf]
        %v2497 = vld [vmem:[#allocation7 + $0x184] sm:$0xf]
        %v2498 = vld [vmem:[#allocation7 + $0x188] sm:$0xf]
        %v2499 = vld [vmem:[#allocation7 + $0x18c] sm:$0xf]
        %v2500 = vld [vmem:[#allocation7 + $0x190] sm:$0xf]
        %v2501 = vld [vmem:[#allocation7 + $0x194] sm:$0xf]
        %v2502 = vld [vmem:[#allocation7 + $0x198] sm:$0xf]
        %v2503 = vld [vmem:[#allocation7 + $0x19c] sm:$0xf]
        %v2504 = vld [vmem:[#allocation7 + $0x1a0] sm:$0xf]
        %v2505 = vld [vmem:[#allocation7 + $0x1a4] sm:$0xf]
        %v2506 = vld [vmem:[#allocation7 + $0x1a8] sm:$0xf]
        %v2507 = vld [vmem:[#allocation7 + $0x1ac] sm:$0xf]
        %v2508 = vld [vmem:[#allocation7 + $0x1b0] sm:$0xf]
        %v2509 = vld [vmem:[#allocation7 + $0x1b4] sm:$0xf]
        %v2510 = vld [vmem:[#allocation7 + $0x1b8] sm:$0xf]
        %v2511 = vld [vmem:[#allocation7 + $0x1bc] sm:$0xf]
        %v2512 = vld [vmem:[#allocation7 + $0x1c0] sm:$0xf]
        %v2513 = vld [vmem:[#allocation7 + $0x1c4] sm:$0xf]
        %v2514 = vld [vmem:[#allocation7 + $0x1c8] sm:$0xf]
        %v2515 = vld [vmem:[#allocation7 + $0x1cc] sm:$0xf]
        %v2516 = vld [vmem:[#allocation7 + $0x1d0] sm:$0xf]
        %v2517 = vld [vmem:[#allocation7 + $0x1d4] sm:$0xf]
        %v2518 = vld [vmem:[#allocation7 + $0x1d8] sm:$0xf]
        %v2519 = vld [vmem:[#allocation7 + $0x1dc] sm:$0xf]
        %v2520 = vld [vmem:[#allocation7 + $0x1e0] sm:$0xf]
        %v2521 = vld [vmem:[#allocation7 + $0x1e4] sm:$0xf]
        %v2522 = vld [vmem:[#allocation7 + $0x1e8] sm:$0xf]
        %v2523 = vld [vmem:[#allocation7 + $0x1ec] sm:$0xf]
        %v2524 = vld [vmem:[#allocation7 + $0x1f0] sm:$0xf]
        %v2525 = vld [vmem:[#allocation7 + $0x1f4] sm:$0xf]
        %v2526 = vld [vmem:[#allocation7 + $0x1f8] sm:$0xf]
        %v2527 = vld [vmem:[#allocation7 + $0x1fc] sm:$0xf]
        %v2528 = vld [vmem:[#allocation7 + $0x200] sm:$0xf]
        %v2529 = vld [vmem:[#allocation7 + $0x204] sm:$0xf]
        %v2530 = vld [vmem:[#allocation7 + $0x208] sm:$0xf]
        %v2531 = vld [vmem:[#allocation7 + $0x20c] sm:$0xf]
        %v2532 = vld [vmem:[#allocation7 + $0x210] sm:$0xf]
        %v2533 = vld [vmem:[#allocation7 + $0x214] sm:$0xf]
        %v2534 = vld [vmem:[#allocation7 + $0x218] sm:$0xf]
        %v2535 = vld [vmem:[#allocation7 + $0x21c] sm:$0xf]
        %v2536 = vld [vmem:[#allocation7 + $0x220] sm:$0xf]
        %v2537 = vld [vmem:[#allocation7 + $0x224] sm:$0xf]
        %v2538 = vld [vmem:[#allocation7 + $0x228] sm:$0xf]
        %v2539 = vld [vmem:[#allocation7 + $0x22c] sm:$0xf]
        %v2540 = vld [vmem:[#allocation7 + $0x230] sm:$0xf]
        %v2541 = vld [vmem:[#allocation7 + $0x234] sm:$0xf]
        %v2542 = vld [vmem:[#allocation7 + $0x238] sm:$0xf]
        %v2543 = vld [vmem:[#allocation7 + $0x23c] sm:$0xf]
        %v2544 = vld [vmem:[%s2] sm:$0x1]
        %v2546 = vlaneseq
        %v2547 = vshrl.u32 %v2546, 7
        %v2548 = vsub.s32 0, %v2547
        %v2549 = vrot.slane %v2544, %v2548
        %v2711 = vunpack.c.l.b16 %v2240
        %v2712 = vunpack.c.h.b16 %v2240
        %v2713 = vunpack.c.l.b16 %v2241
        %v2714 = vunpack.c.h.b16 %v2241
        %v2715 = vunpack.c.l.b16 %v2242
        %v2716 = vunpack.c.h.b16 %v2242
        %v2717 = vunpack.c.l.b16 %v2243
        %v2718 = vunpack.c.h.b16 %v2243
        %v2719 = vunpack.c.l.b16 %v2244
        %v2720 = vunpack.c.l.b16 %v2245
        %v2721 = vunpack.c.h.b16 %v2245
        %v2722 = vunpack.c.l.b16 %v2246
        %v2723 = vunpack.c.h.b16 %v2246
        %v2724 = vunpack.c.l.b16 %v2247
        %v2725 = vunpack.c.h.b16 %v2247
        %v2726 = vunpack.c.l.b16 %v2248
        %v2727 = vunpack.c.h.b16 %v2248
        %v2728 = vunpack.c.l.b16 %v2249
        %v2729 = vunpack.c.l.b16 %v2250
        %v2730 = vunpack.c.h.b16 %v2250
        %v2731 = vunpack.c.l.b16 %v2251
        %v2732 = vunpack.c.h.b16 %v2251
        %v2733 = vunpack.c.l.b16 %v2252
        %v2734 = vunpack.c.h.b16 %v2252
        %v2735 = vunpack.c.l.b16 %v2253
        %v2736 = vunpack.c.h.b16 %v2253
        %v2737 = vunpack.c.l.b16 %v2254
        %v2738 = vunpack.c.l.b16 %v2255
        %v2739 = vunpack.c.h.b16 %v2255
        %v2740 = vunpack.c.l.b16 %v2256
        %v2741 = vunpack.c.h.b16 %v2256
        %v2742 = vunpack.c.l.b16 %v2257
        %v2743 = vunpack.c.h.b16 %v2257
        %v2744 = vunpack.c.l.b16 %v2258
        %v2745 = vunpack.c.h.b16 %v2258
        %v2746 = vunpack.c.l.b16 %v2259
        %v2747 = vunpack.c.l.b16 %v2260
        %v2748 = vunpack.c.h.b16 %v2260
        %v2749 = vunpack.c.l.b16 %v2261
        %v2750 = vunpack.c.h.b16 %v2261
        %v2751 = vunpack.c.l.b16 %v2262
        %v2752 = vunpack.c.h.b16 %v2262
        %v2753 = vunpack.c.l.b16 %v2263
        %v2754 = vunpack.c.h.b16 %v2263
        %v2755 = vunpack.c.l.b16 %v2264
        %v2756 = vunpack.c.l.b16 %v2265
        %v2757 = vunpack.c.h.b16 %v2265
        %v2758 = vunpack.c.l.b16 %v2266
        %v2759 = vunpack.c.h.b16 %v2266
        %v2760 = vunpack.c.l.b16 %v2267
        %v2761 = vunpack.c.h.b16 %v2267
        %v2762 = vunpack.c.l.b16 %v2268
        %v2763 = vunpack.c.h.b16 %v2268
        %v2764 = vunpack.c.l.b16 %v2269
        %v2765 = vunpack.c.l.b16 %v2270
        %v2766 = vunpack.c.h.b16 %v2270
        %v2767 = vunpack.c.l.b16 %v2271
        %v2768 = vunpack.c.h.b16 %v2271
        %v2769 = vunpack.c.l.b16 %v2272
        %v2770 = vunpack.c.h.b16 %v2272
        %v2771 = vunpack.c.l.b16 %v2273
        %v2772 = vunpack.c.h.b16 %v2273
        %v2773 = vunpack.c.l.b16 %v2274
        %v2774 = vunpack.c.l.b16 %v2275
        %v2775 = vunpack.c.h.b16 %v2275
        %v2776 = vunpack.c.l.b16 %v2276
        %v2777 = vunpack.c.h.b16 %v2276
        %v2778 = vunpack.c.l.b16 %v2277
        %v2779 = vunpack.c.h.b16 %v2277
        %v2780 = vunpack.c.l.b16 %v2278
        %v2781 = vunpack.c.h.b16 %v2278
        %v2782 = vunpack.c.l.b16 %v2279
        %v2783 = vunpack.c.l.b16 %v2280
        %v2784 = vunpack.c.h.b16 %v2280
        %v2785 = vunpack.c.l.b16 %v2281
        %v2786 = vunpack.c.h.b16 %v2281
        %v2787 = vunpack.c.l.b16 %v2282
        %v2788 = vunpack.c.h.b16 %v2282
        %v2789 = vunpack.c.l.b16 %v2283
        %v2790 = vunpack.c.h.b16 %v2283
        %v2791 = vunpack.c.l.b16 %v2284
        %v2792 = vunpack.c.l.b16 %v2285
        %v2793 = vunpack.c.h.b16 %v2285
        %v2794 = vunpack.c.l.b16 %v2286
        %v2795 = vunpack.c.h.b16 %v2286
        %v2796 = vunpack.c.l.b16 %v2287
        %v2797 = vunpack.c.h.b16 %v2287
        %v2798 = vunpack.c.l.b16 %v2288
        %v2799 = vunpack.c.h.b16 %v2288
        %v2800 = vunpack.c.l.b16 %v2289
        %v2801 = vunpack.c.l.b16 %v2290
        %v2802 = vunpack.c.h.b16 %v2290
        %v2803 = vunpack.c.l.b16 %v2291
        %v2804 = vunpack.c.h.b16 %v2291
        %v2805 = vunpack.c.l.b16 %v2292
        %v2806 = vunpack.c.h.b16 %v2292
        %v2807 = vunpack.c.l.b16 %v2293
        %v2808 = vunpack.c.h.b16 %v2293
        %v2809 = vunpack.c.l.b16 %v2294
        %v2810 = vunpack.c.l.b16 %v2295
        %v2811 = vunpack.c.h.b16 %v2295
        %v2812 = vunpack.c.l.b16 %v2296
        %v2813 = vunpack.c.h.b16 %v2296
        %v2814 = vunpack.c.l.b16 %v2297
        %v2815 = vunpack.c.h.b16 %v2297
        %v2816 = vunpack.c.l.b16 %v2298
        %v2817 = vunpack.c.h.b16 %v2298
        %v2818 = vunpack.c.l.b16 %v2299
        %v2819 = vunpack.c.l.b16 %v2300
        %v2820 = vunpack.c.h.b16 %v2300
        %v2821 = vunpack.c.l.b16 %v2301
        %v2822 = vunpack.c.h.b16 %v2301
        %v2823 = vunpack.c.l.b16 %v2302
        %v2824 = vunpack.c.h.b16 %v2302
        %v2825 = vunpack.c.l.b16 %v2303
        %v2826 = vunpack.c.h.b16 %v2303
        %v2827 = vunpack.c.l.b16 %v2304
        %v2828 = vunpack.c.l.b16 %v2305
        %v2829 = vunpack.c.h.b16 %v2305
        %v2830 = vunpack.c.l.b16 %v2306
        %v2831 = vunpack.c.h.b16 %v2306
        %v2832 = vunpack.c.l.b16 %v2307
        %v2833 = vunpack.c.h.b16 %v2307
        %v2834 = vunpack.c.l.b16 %v2308
        %v2835 = vunpack.c.h.b16 %v2308
        %v2836 = vunpack.c.l.b16 %v2309
        %v2837 = vunpack.c.l.b16 %v2310
        %v2838 = vunpack.c.h.b16 %v2310
        %v2839 = vunpack.c.l.b16 %v2311
        %v2840 = vunpack.c.h.b16 %v2311
        %v2841 = vunpack.c.l.b16 %v2312
        %v2842 = vunpack.c.h.b16 %v2312
        %v2843 = vunpack.c.l.b16 %v2313
        %v2844 = vunpack.c.h.b16 %v2313
        %v2845 = vunpack.c.l.b16 %v2314
        %v2846 = vunpack.c.l.b16 %v2315
        %v2847 = vunpack.c.h.b16 %v2315
        %v2848 = vunpack.c.l.b16 %v2316
        %v2849 = vunpack.c.h.b16 %v2316
        %v2850 = vunpack.c.l.b16 %v2317
        %v2851 = vunpack.c.h.b16 %v2317
        %v2852 = vunpack.c.l.b16 %v2318
        %v2853 = vunpack.c.h.b16 %v2318
        %v2854 = vunpack.c.l.b16 %v2319
        %v2855 = vunpack.c.l.b16 %v2320
        %v2856 = vunpack.c.h.b16 %v2320
        %v2857 = vunpack.c.l.b16 %v2321
        %v2858 = vunpack.c.h.b16 %v2321
        %v2859 = vunpack.c.l.b16 %v2322
        %v2860 = vunpack.c.h.b16 %v2322
        %v2861 = vunpack.c.l.b16 %v2323
        %v2862 = vunpack.c.h.b16 %v2323
        %v2863 = vunpack.c.l.b16 %v2324
        %v2864 = vunpack.c.l.b16 %v2325
        %v2865 = vunpack.c.h.b16 %v2325
        %v2866 = vunpack.c.l.b16 %v2326
        %v2867 = vunpack.c.h.b16 %v2326
        %v2868 = vunpack.c.l.b16 %v2327
        %v2869 = vunpack.c.h.b16 %v2327
        %v2870 = vunpack.c.l.b16 %v2328
        %v2871 = vunpack.c.h.b16 %v2328
        %v2872 = vunpack.c.l.b16 %v2329
        %v2873 = vunpack.c.l.b16 %v2330
        %v2874 = vunpack.c.h.b16 %v2330
        %v2875 = vunpack.c.l.b16 %v2331
        %v2876 = vunpack.c.h.b16 %v2331
        %v2877 = vunpack.c.l.b16 %v2332
        %v2878 = vunpack.c.h.b16 %v2332
        %v2879 = vunpack.c.l.b16 %v2333
        %v2880 = vunpack.c.h.b16 %v2333
        %v2881 = vunpack.c.l.b16 %v2334
        %v2882 = vunpack.c.l.b16 %v2335
        %v2883 = vunpack.c.h.b16 %v2335
        %v2884 = vunpack.c.l.b16 %v2336
        %v2885 = vunpack.c.h.b16 %v2336
        %v2886 = vunpack.c.l.b16 %v2337
        %v2887 = vunpack.c.h.b16 %v2337
        %v2888 = vunpack.c.l.b16 %v2338
        %v2889 = vunpack.c.h.b16 %v2338
        %v2890 = vunpack.c.l.b16 %v2339
        %v2891 = vunpack.c.l.b16 %v2340
        %v2892 = vunpack.c.h.b16 %v2340
        %v2893 = vunpack.c.l.b16 %v2341
        %v2894 = vunpack.c.h.b16 %v2341
        %v2895 = vunpack.c.l.b16 %v2342
        %v2896 = vunpack.c.h.b16 %v2342
        %v2897 = vunpack.c.l.b16 %v2343
        %v2898 = vunpack.c.h.b16 %v2343
        %v2899 = vunpack.c.l.b16 %v2344
        %v2900 = vunpack.c.l.b16 %v2345
        %v2901 = vunpack.c.h.b16 %v2345
        %v2902 = vunpack.c.l.b16 %v2346
        %v2903 = vunpack.c.h.b16 %v2346
        %v2904 = vunpack.c.l.b16 %v2347
        %v2905 = vunpack.c.h.b16 %v2347
        %v2906 = vunpack.c.l.b16 %v2348
        %v2907 = vunpack.c.h.b16 %v2348
        %v2908 = vunpack.c.l.b16 %v2349
        %v2909 = vunpack.c.l.b16 %v2350
        %v2910 = vunpack.c.h.b16 %v2350
        %v2911 = vunpack.c.l.b16 %v2351
        %v2912 = vunpack.c.h.b16 %v2351
        %v2913 = vunpack.c.l.b16 %v2352
        %v2914 = vunpack.c.h.b16 %v2352
        %v2915 = vunpack.c.l.b16 %v2353
        %v2916 = vunpack.c.h.b16 %v2353
        %v2917 = vunpack.c.l.b16 %v2354
        %v2918 = vunpack.c.l.b16 %v2355
        %v2919 = vunpack.c.h.b16 %v2355
        %v2920 = vunpack.c.l.b16 %v2356
        %v2921 = vunpack.c.h.b16 %v2356
        %v2922 = vunpack.c.l.b16 %v2357
        %v2923 = vunpack.c.h.b16 %v2357
        %v2924 = vunpack.c.l.b16 %v2358
        %v2925 = vunpack.c.h.b16 %v2358
        %v2926 = vunpack.c.l.b16 %v2359
        %v2927 = vunpack.c.l.b16 %v2360
        %v2928 = vunpack.c.h.b16 %v2360
        %v2929 = vunpack.c.l.b16 %v2361
        %v2930 = vunpack.c.h.b16 %v2361
        %v2931 = vunpack.c.l.b16 %v2362
        %v2932 = vunpack.c.h.b16 %v2362
        %v2933 = vunpack.c.l.b16 %v2363
        %v2934 = vunpack.c.h.b16 %v2363
        %v2935 = vunpack.c.l.b16 %v2364
        %v2936 = vunpack.c.l.b16 %v2365
        %v2937 = vunpack.c.h.b16 %v2365
        %v2938 = vunpack.c.l.b16 %v2366
        %v2939 = vunpack.c.h.b16 %v2366
        %v2940 = vunpack.c.l.b16 %v2367
        %v2941 = vunpack.c.h.b16 %v2367
        %v2942 = vunpack.c.l.b16 %v2368
        %v2943 = vunpack.c.h.b16 %v2368
        %v2944 = vunpack.c.l.b16 %v2369
        %v2945 = vunpack.c.l.b16 %v2370
        %v2946 = vunpack.c.h.b16 %v2370
        %v2947 = vunpack.c.l.b16 %v2371
        %v2948 = vunpack.c.h.b16 %v2371
        %v2949 = vunpack.c.l.b16 %v2372
        %v2950 = vunpack.c.h.b16 %v2372
        %v2951 = vunpack.c.l.b16 %v2373
        %v2952 = vunpack.c.h.b16 %v2373
        %v2953 = vunpack.c.l.b16 %v2374
        %v2954 = vunpack.c.l.b16 %v2375
        %v2955 = vunpack.c.h.b16 %v2375
        %v2956 = vunpack.c.l.b16 %v2376
        %v2957 = vunpack.c.h.b16 %v2376
        %v2958 = vunpack.c.l.b16 %v2377
        %v2959 = vunpack.c.h.b16 %v2377
        %v2960 = vunpack.c.l.b16 %v2378
        %v2961 = vunpack.c.h.b16 %v2378
        %v2962 = vunpack.c.l.b16 %v2379
        %v2963 = vunpack.c.l.b16 %v2380
        %v2964 = vunpack.c.h.b16 %v2380
        %v2965 = vunpack.c.l.b16 %v2381
        %v2966 = vunpack.c.h.b16 %v2381
        %v2967 = vunpack.c.l.b16 %v2382
        %v2968 = vunpack.c.h.b16 %v2382
        %v2969 = vunpack.c.l.b16 %v2383
        %v2970 = vunpack.c.h.b16 %v2383
        %v2971 = vunpack.c.l.b16 %v2384
        %v2972 = vunpack.c.l.b16 %v2385
        %v2973 = vunpack.c.h.b16 %v2385
        %v2974 = vunpack.c.l.b16 %v2386
        %v2975 = vunpack.c.h.b16 %v2386
        %v2976 = vunpack.c.l.b16 %v2387
        %v2977 = vunpack.c.h.b16 %v2387
        %v2978 = vunpack.c.l.b16 %v2388
        %v2979 = vunpack.c.h.b16 %v2388
        %v2980 = vunpack.c.l.b16 %v2389
        %v2981 = vunpack.c.l.b16 %v2390
        %v2982 = vunpack.c.h.b16 %v2390
        %v2983 = vunpack.c.l.b16 %v2391
        %v2984 = vunpack.c.h.b16 %v2391
        %v2985 = vunpack.c.l.b16 %v2392
        %v2986 = vunpack.c.h.b16 %v2392
        %v2987 = vunpack.c.l.b16 %v2393
        %v2988 = vunpack.c.h.b16 %v2393
        %v2989 = vunpack.c.l.b16 %v2394
        %v2990 = vunpack.c.l.b16 %v2395
        %v2991 = vunpack.c.h.b16 %v2395
        %v2992 = vunpack.c.l.b16 %v2396
        %v2993 = vunpack.c.h.b16 %v2396
        %v2994 = vunpack.c.l.b16 %v2397
        %v2995 = vunpack.c.h.b16 %v2397
        %v2996 = vunpack.c.l.b16 %v2398
        %v2997 = vunpack.c.h.b16 %v2398
        %v2998 = vunpack.c.l.b16 %v2399
        %v2999 = vpack.c.b16 %v2720, %v2711
        %v3000 = vpack.c.b16 %v2721, %v2712
        %v3001 = vpack.c.b16 %v2722, %v2713
        %v3002 = vpack.c.b16 %v2723, %v2714
        %v3003 = vpack.c.b16 %v2724, %v2715
        %v3004 = vpack.c.b16 %v2725, %v2716
        %v3005 = vpack.c.b16 %v2726, %v2717
        %v3006 = vpack.c.b16 %v2727, %v2718
        %v3007 = vpack.c.b16 %v2728, %v2719
        %v3008 = vpack.c.b16 %v2738, %v2729
        %v3009 = vpack.c.b16 %v2739, %v2730
        %v3010 = vpack.c.b16 %v2740, %v2731
        %v3011 = vpack.c.b16 %v2741, %v2732
        %v3012 = vpack.c.b16 %v2742, %v2733
        %v3013 = vpack.c.b16 %v2743, %v2734
        %v3014 = vpack.c.b16 %v2744, %v2735
        %v3015 = vpack.c.b16 %v2745, %v2736
        %v3016 = vpack.c.b16 %v2746, %v2737
        %v3017 = vpack.c.b16 %v2756, %v2747
        %v3018 = vpack.c.b16 %v2757, %v2748
        %v3019 = vpack.c.b16 %v2758, %v2749
        %v3020 = vpack.c.b16 %v2759, %v2750
        %v3021 = vpack.c.b16 %v2760, %v2751
        %v3022 = vpack.c.b16 %v2761, %v2752
        %v3023 = vpack.c.b16 %v2762, %v2753
        %v3024 = vpack.c.b16 %v2763, %v2754
        %v3025 = vpack.c.b16 %v2764, %v2755
        %v3026 = vpack.c.b16 %v2774, %v2765
        %v3027 = vpack.c.b16 %v2775, %v2766
        %v3028 = vpack.c.b16 %v2776, %v2767
        %v3029 = vpack.c.b16 %v2777, %v2768
        %v3030 = vpack.c.b16 %v2778, %v2769
        %v3031 = vpack.c.b16 %v2779, %v2770
        %v3032 = vpack.c.b16 %v2780, %v2771
        %v3033 = vpack.c.b16 %v2781, %v2772
        %v3034 = vpack.c.b16 %v2782, %v2773
        %v3035 = vpack.c.b16 %v2792, %v2783
        %v3036 = vpack.c.b16 %v2793, %v2784
        %v3037 = vpack.c.b16 %v2794, %v2785
        %v3038 = vpack.c.b16 %v2795, %v2786
        %v3039 = vpack.c.b16 %v2796, %v2787
        %v3040 = vpack.c.b16 %v2797, %v2788
        %v3041 = vpack.c.b16 %v2798, %v2789
        %v3042 = vpack.c.b16 %v2799, %v2790
        %v3043 = vpack.c.b16 %v2800, %v2791
        %v3044 = vpack.c.b16 %v2810, %v2801
        %v3045 = vpack.c.b16 %v2811, %v2802
        %v3046 = vpack.c.b16 %v2812, %v2803
        %v3047 = vpack.c.b16 %v2813, %v2804
        %v3048 = vpack.c.b16 %v2814, %v2805
        %v3049 = vpack.c.b16 %v2815, %v2806
        %v3050 = vpack.c.b16 %v2816, %v2807
        %v3051 = vpack.c.b16 %v2817, %v2808
        %v3052 = vpack.c.b16 %v2818, %v2809
        %v3053 = vpack.c.b16 %v2828, %v2819
        %v3054 = vpack.c.b16 %v2829, %v2820
        %v3055 = vpack.c.b16 %v2830, %v2821
        %v3056 = vpack.c.b16 %v2831, %v2822
        %v3057 = vpack.c.b16 %v2832, %v2823
        %v3058 = vpack.c.b16 %v2833, %v2824
        %v3059 = vpack.c.b16 %v2834, %v2825
        %v3060 = vpack.c.b16 %v2835, %v2826
        %v3061 = vpack.c.b16 %v2836, %v2827
        %v3062 = vpack.c.b16 %v2846, %v2837
        %v3063 = vpack.c.b16 %v2847, %v2838
        %v3064 = vpack.c.b16 %v2848, %v2839
        %v3065 = vpack.c.b16 %v2849, %v2840
        %v3066 = vpack.c.b16 %v2850, %v2841
        %v3067 = vpack.c.b16 %v2851, %v2842
        %v3068 = vpack.c.b16 %v2852, %v2843
        %v3069 = vpack.c.b16 %v2853, %v2844
        %v3070 = vpack.c.b16 %v2854, %v2845
        %v3071 = vpack.c.b16 %v2864, %v2855
        %v3072 = vpack.c.b16 %v2865, %v2856
        %v3073 = vpack.c.b16 %v2866, %v2857
        %v3074 = vpack.c.b16 %v2867, %v2858
        %v3075 = vpack.c.b16 %v2868, %v2859
        %v3076 = vpack.c.b16 %v2869, %v2860
        %v3077 = vpack.c.b16 %v2870, %v2861
        %v3078 = vpack.c.b16 %v2871, %v2862
        %v3079 = vpack.c.b16 %v2872, %v2863
        %v3080 = vpack.c.b16 %v2882, %v2873
        %v3081 = vpack.c.b16 %v2883, %v2874
        %v3082 = vpack.c.b16 %v2884, %v2875
        %v3083 = vpack.c.b16 %v2885, %v2876
        %v3084 = vpack.c.b16 %v2886, %v2877
        %v3085 = vpack.c.b16 %v2887, %v2878
        %v3086 = vpack.c.b16 %v2888, %v2879
        %v3087 = vpack.c.b16 %v2889, %v2880
        %v3088 = vpack.c.b16 %v2890, %v2881
        %v3089 = vpack.c.b16 %v2900, %v2891
        %v3090 = vpack.c.b16 %v2901, %v2892
        %v3091 = vpack.c.b16 %v2902, %v2893
        %v3092 = vpack.c.b16 %v2903, %v2894
        %v3093 = vpack.c.b16 %v2904, %v2895
        %v3094 = vpack.c.b16 %v2905, %v2896
        %v3095 = vpack.c.b16 %v2906, %v2897
        %v3096 = vpack.c.b16 %v2907, %v2898
        %v3097 = vpack.c.b16 %v2908, %v2899
        %v3098 = vpack.c.b16 %v2918, %v2909
        %v3099 = vpack.c.b16 %v2919, %v2910
        %v3100 = vpack.c.b16 %v2920, %v2911
        %v3101 = vpack.c.b16 %v2921, %v2912
        %v3102 = vpack.c.b16 %v2922, %v2913
        %v3103 = vpack.c.b16 %v2923, %v2914
        %v3104 = vpack.c.b16 %v2924, %v2915
        %v3105 = vpack.c.b16 %v2925, %v2916
        %v3106 = vpack.c.b16 %v2926, %v2917
        %v3107 = vpack.c.b16 %v2936, %v2927
        %v3108 = vpack.c.b16 %v2937, %v2928
        %v3109 = vpack.c.b16 %v2938, %v2929
        %v3110 = vpack.c.b16 %v2939, %v2930
        %v3111 = vpack.c.b16 %v2940, %v2931
        %v3112 = vpack.c.b16 %v2941, %v2932
        %v3113 = vpack.c.b16 %v2942, %v2933
        %v3114 = vpack.c.b16 %v2943, %v2934
        %v3115 = vpack.c.b16 %v2944, %v2935
        %v3116 = vpack.c.b16 %v2954, %v2945
        %v3117 = vpack.c.b16 %v2955, %v2946
        %v3118 = vpack.c.b16 %v2956, %v2947
        %v3119 = vpack.c.b16 %v2957, %v2948
        %v3120 = vpack.c.b16 %v2958, %v2949
        %v3121 = vpack.c.b16 %v2959, %v2950
        %v3122 = vpack.c.b16 %v2960, %v2951
        %v3123 = vpack.c.b16 %v2961, %v2952
        %v3124 = vpack.c.b16 %v2962, %v2953
        %v3125 = vpack.c.b16 %v2972, %v2963
        %v3126 = vpack.c.b16 %v2973, %v2964
        %v3127 = vpack.c.b16 %v2974, %v2965
        %v3128 = vpack.c.b16 %v2975, %v2966
        %v3129 = vpack.c.b16 %v2976, %v2967
        %v3130 = vpack.c.b16 %v2977, %v2968
        %v3131 = vpack.c.b16 %v2978, %v2969
        %v3132 = vpack.c.b16 %v2979, %v2970
        %v3133 = vpack.c.b16 %v2980, %v2971
        %v3134 = vpack.c.b16 %v2990, %v2981
        %v3135 = vpack.c.b16 %v2991, %v2982
        %v3136 = vpack.c.b16 %v2992, %v2983
        %v3137 = vpack.c.b16 %v2993, %v2984
        %v3138 = vpack.c.b16 %v2994, %v2985
        %v3139 = vpack.c.b16 %v2995, %v2986
        %v3140 = vpack.c.b16 %v2996, %v2987
        %v3141 = vpack.c.b16 %v2997, %v2988
        %v3142 = vpack.c.b16 %v2998, %v2989
        %v3431 = vunpack.c.l.b16 %v2400
        %v3432 = vunpack.c.l.b16 %v2401
        %v3433 = vunpack.c.l.b16 %v2402
        %v3434 = vunpack.c.l.b16 %v2403
        %v3435 = vunpack.c.l.b16 %v2404
        %v3436 = vunpack.c.l.b16 %v2405
        %v3437 = vunpack.c.l.b16 %v2406
        %v3438 = vunpack.c.l.b16 %v2407
        %v3439 = vunpack.c.l.b16 %v2408
        %v3440 = vunpack.c.l.b16 %v2409
        %v3441 = vunpack.c.l.b16 %v2410
        %v3442 = vunpack.c.l.b16 %v2411
        %v3443 = vunpack.c.l.b16 %v2412
        %v3444 = vunpack.c.l.b16 %v2413
        %v3445 = vunpack.c.l.b16 %v2414
        %v3446 = vunpack.c.l.b16 %v2415
        %v3447 = vunpack.c.l.b16 %v2416
        %v3448 = vunpack.c.l.b16 %v2417
        %v3449 = vunpack.c.l.b16 %v2418
        %v3450 = vunpack.c.l.b16 %v2419
        %v3451 = vunpack.c.l.b16 %v2420
        %v3452 = vunpack.c.l.b16 %v2421
        %v3453 = vunpack.c.l.b16 %v2422
        %v3454 = vunpack.c.l.b16 %v2423
        %v3455 = vunpack.c.l.b16 %v2424
        %v3456 = vunpack.c.l.b16 %v2425
        %v3457 = vunpack.c.l.b16 %v2426
        %v3458 = vunpack.c.l.b16 %v2427
        %v3459 = vunpack.c.l.b16 %v2428
        %v3460 = vunpack.c.l.b16 %v2429
        %v3461 = vunpack.c.l.b16 %v2430
        %v3462 = vunpack.c.l.b16 %v2431
        %v3463 = vunpack.c.l.b16 %v2432
        %v3464 = vunpack.c.l.b16 %v2433
        %v3465 = vunpack.c.l.b16 %v2434
        %v3466 = vunpack.c.l.b16 %v2435
        %v3467 = vunpack.c.l.b16 %v2436
        %v3468 = vunpack.c.l.b16 %v2437
        %v3469 = vunpack.c.l.b16 %v2438
        %v3470 = vunpack.c.l.b16 %v2439
        %v3471 = vunpack.c.l.b16 %v2440
        %v3472 = vunpack.c.l.b16 %v2441
        %v3473 = vunpack.c.l.b16 %v2442
        %v3474 = vunpack.c.l.b16 %v2443
        %v3475 = vunpack.c.l.b16 %v2444
        %v3476 = vunpack.c.l.b16 %v2445
        %v3477 = vunpack.c.l.b16 %v2446
        %v3478 = vunpack.c.l.b16 %v2447
        %v3479 = vunpack.c.l.b16 %v2448
        %v3480 = vunpack.c.l.b16 %v2449
        %v3481 = vunpack.c.l.b16 %v2450
        %v3482 = vunpack.c.l.b16 %v2451
        %v3483 = vunpack.c.l.b16 %v2452
        %v3484 = vunpack.c.l.b16 %v2453
        %v3485 = vunpack.c.l.b16 %v2454
        %v3486 = vunpack.c.l.b16 %v2455
        %v3487 = vunpack.c.l.b16 %v2456
        %v3488 = vunpack.c.l.b16 %v2457
        %v3489 = vunpack.c.l.b16 %v2458
        %v3490 = vunpack.c.l.b16 %v2459
        %v3491 = vunpack.c.l.b16 %v2460
        %v3492 = vunpack.c.l.b16 %v2461
        %v3493 = vunpack.c.l.b16 %v2462
        %v3494 = vunpack.c.l.b16 %v2463
        %v3495 = vunpack.c.l.b16 %v2464
        %v3496 = vunpack.c.l.b16 %v2465
        %v3497 = vunpack.c.l.b16 %v2466
        %v3498 = vunpack.c.l.b16 %v2467
        %v3499 = vunpack.c.l.b16 %v2468
        %v3500 = vunpack.c.l.b16 %v2469
        %v3501 = vunpack.c.l.b16 %v2470
        %v3502 = vunpack.c.l.b16 %v2471
        %v3503 = vunpack.c.l.b16 %v2472
        %v3504 = vunpack.c.l.b16 %v2473
        %v3505 = vunpack.c.l.b16 %v2474
        %v3506 = vunpack.c.l.b16 %v2475
        %v3507 = vunpack.c.l.b16 %v2476
        %v3508 = vunpack.c.l.b16 %v2477
        %v3509 = vunpack.c.l.b16 %v2478
        %v3510 = vunpack.c.l.b16 %v2479
        %v3511 = vunpack.c.l.b16 %v2480
        %v3512 = vunpack.c.l.b16 %v2481
        %v3513 = vunpack.c.l.b16 %v2482
        %v3514 = vunpack.c.l.b16 %v2483
        %v3515 = vunpack.c.l.b16 %v2484
        %v3516 = vunpack.c.l.b16 %v2485
        %v3517 = vunpack.c.l.b16 %v2486
        %v3518 = vunpack.c.l.b16 %v2487
        %v3519 = vunpack.c.l.b16 %v2488
        %v3520 = vunpack.c.l.b16 %v2489
        %v3521 = vunpack.c.l.b16 %v2490
        %v3522 = vunpack.c.l.b16 %v2491
        %v3523 = vunpack.c.l.b16 %v2492
        %v3524 = vunpack.c.l.b16 %v2493
        %v3525 = vunpack.c.l.b16 %v2494
        %v3526 = vunpack.c.l.b16 %v2495
        %v3527 = vunpack.c.l.b16 %v2496
        %v3528 = vunpack.c.l.b16 %v2497
        %v3529 = vunpack.c.l.b16 %v2498
        %v3530 = vunpack.c.l.b16 %v2499
        %v3531 = vunpack.c.l.b16 %v2500
        %v3532 = vunpack.c.l.b16 %v2501
        %v3533 = vunpack.c.l.b16 %v2502
        %v3534 = vunpack.c.l.b16 %v2503
        %v3535 = vunpack.c.l.b16 %v2504
        %v3536 = vunpack.c.l.b16 %v2505
        %v3537 = vunpack.c.l.b16 %v2506
        %v3538 = vunpack.c.l.b16 %v2507
        %v3539 = vunpack.c.l.b16 %v2508
        %v3540 = vunpack.c.l.b16 %v2509
        %v3541 = vunpack.c.l.b16 %v2510
        %v3542 = vunpack.c.l.b16 %v2511
        %v3543 = vunpack.c.l.b16 %v2512
        %v3544 = vunpack.c.l.b16 %v2513
        %v3545 = vunpack.c.l.b16 %v2514
        %v3546 = vunpack.c.l.b16 %v2515
        %v3547 = vunpack.c.l.b16 %v2516
        %v3548 = vunpack.c.l.b16 %v2517
        %v3549 = vunpack.c.l.b16 %v2518
        %v3550 = vunpack.c.l.b16 %v2519
        %v3551 = vunpack.c.l.b16 %v2520
        %v3552 = vunpack.c.l.b16 %v2521
        %v3553 = vunpack.c.l.b16 %v2522
        %v3554 = vunpack.c.l.b16 %v2523
        %v3555 = vunpack.c.l.b16 %v2524
        %v3556 = vunpack.c.l.b16 %v2525
        %v3557 = vunpack.c.l.b16 %v2526
        %v3558 = vunpack.c.l.b16 %v2527
        %v3559 = vunpack.c.l.b16 %v2528
        %v3560 = vunpack.c.l.b16 %v2529
        %v3561 = vunpack.c.l.b16 %v2530
        %v3562 = vunpack.c.l.b16 %v2531
        %v3563 = vunpack.c.l.b16 %v2532
        %v3564 = vunpack.c.l.b16 %v2533
        %v3565 = vunpack.c.l.b16 %v2534
        %v3566 = vunpack.c.l.b16 %v2535
        %v3567 = vunpack.c.l.b16 %v2536
        %v3568 = vunpack.c.l.b16 %v2537
        %v3569 = vunpack.c.l.b16 %v2538
        %v3570 = vunpack.c.l.b16 %v2539
        %v3571 = vunpack.c.l.b16 %v2540
        %v3572 = vunpack.c.l.b16 %v2541
        %v3573 = vunpack.c.l.b16 %v2542
        %v3574 = vunpack.c.l.b16 %v2543
        %v3575 = vpack.c.b16 %v3432, %v3431
        %v3576 = vpack.c.b16 %v3434, %v3433
        %v3577 = vpack.c.b16 %v3436, %v3435
        %v3578 = vpack.c.b16 %v3438, %v3437
        %v3579 = vpack.c.b16 %v3440, %v3439
        %v3580 = vpack.c.b16 %v3442, %v3441
        %v3581 = vpack.c.b16 %v3444, %v3443
        %v3582 = vpack.c.b16 %v3446, %v3445
        %v3583 = vpack.c.b16 %v3448, %v3447
        %v3584 = vpack.c.b16 %v3450, %v3449
        %v3585 = vpack.c.b16 %v3452, %v3451
        %v3586 = vpack.c.b16 %v3454, %v3453
        %v3587 = vpack.c.b16 %v3456, %v3455
        %v3588 = vpack.c.b16 %v3458, %v3457
        %v3589 = vpack.c.b16 %v3460, %v3459
        %v3590 = vpack.c.b16 %v3462, %v3461
        %v3591 = vpack.c.b16 %v3464, %v3463
        %v3592 = vpack.c.b16 %v3466, %v3465
        %v3593 = vpack.c.b16 %v3468, %v3467
        %v3594 = vpack.c.b16 %v3470, %v3469
        %v3595 = vpack.c.b16 %v3472, %v3471
        %v3596 = vpack.c.b16 %v3474, %v3473
        %v3597 = vpack.c.b16 %v3476, %v3475
        %v3598 = vpack.c.b16 %v3478, %v3477
        %v3599 = vpack.c.b16 %v3480, %v3479
        %v3600 = vpack.c.b16 %v3482, %v3481
        %v3601 = vpack.c.b16 %v3484, %v3483
        %v3602 = vpack.c.b16 %v3486, %v3485
        %v3603 = vpack.c.b16 %v3488, %v3487
        %v3604 = vpack.c.b16 %v3490, %v3489
        %v3605 = vpack.c.b16 %v3492, %v3491
        %v3606 = vpack.c.b16 %v3494, %v3493
        %v3607 = vpack.c.b16 %v3496, %v3495
        %v3608 = vpack.c.b16 %v3498, %v3497
        %v3609 = vpack.c.b16 %v3500, %v3499
        %v3610 = vpack.c.b16 %v3502, %v3501
        %v3611 = vpack.c.b16 %v3504, %v3503
        %v3612 = vpack.c.b16 %v3506, %v3505
        %v3613 = vpack.c.b16 %v3508, %v3507
        %v3614 = vpack.c.b16 %v3510, %v3509
        %v3615 = vpack.c.b16 %v3512, %v3511
        %v3616 = vpack.c.b16 %v3514, %v3513
        %v3617 = vpack.c.b16 %v3516, %v3515
        %v3618 = vpack.c.b16 %v3518, %v3517
        %v3619 = vpack.c.b16 %v3520, %v3519
        %v3620 = vpack.c.b16 %v3522, %v3521
        %v3621 = vpack.c.b16 %v3524, %v3523
        %v3622 = vpack.c.b16 %v3526, %v3525
        %v3623 = vpack.c.b16 %v3528, %v3527
        %v3624 = vpack.c.b16 %v3530, %v3529
        %v3625 = vpack.c.b16 %v3532, %v3531
        %v3626 = vpack.c.b16 %v3534, %v3533
        %v3627 = vpack.c.b16 %v3536, %v3535
        %v3628 = vpack.c.b16 %v3538, %v3537
        %v3629 = vpack.c.b16 %v3540, %v3539
        %v3630 = vpack.c.b16 %v3542, %v3541
        %v3631 = vpack.c.b16 %v3544, %v3543
        %v3632 = vpack.c.b16 %v3546, %v3545
        %v3633 = vpack.c.b16 %v3548, %v3547
        %v3634 = vpack.c.b16 %v3550, %v3549
        %v3635 = vpack.c.b16 %v3552, %v3551
        %v3636 = vpack.c.b16 %v3554, %v3553
        %v3637 = vpack.c.b16 %v3556, %v3555
        %v3638 = vpack.c.b16 %v3558, %v3557
        %v3639 = vpack.c.b16 %v3560, %v3559
        %v3640 = vpack.c.b16 %v3562, %v3561
        %v3641 = vpack.c.b16 %v3564, %v3563
        %v3642 = vpack.c.b16 %v3566, %v3565
        %v3643 = vpack.c.b16 %v3568, %v3567
        %v3644 = vpack.c.b16 %v3570, %v3569
        %v3645 = vpack.c.b16 %v3572, %v3571
        %v3646 = vpack.c.b16 %v3574, %v3573
        %3719 = vmatprep.subr.bf16.mxu0 0
        %3720 = vmatpush1.bf16.msra.mxu0 %v3582
        %3721 = vmatprep.subr.bf16.mxu0 0
        %3722 = vmatpush1.bf16.msra.mxu0 %v3581
        %3723 = vmatprep.subr.bf16.mxu0 0
        %3724 = vmatpush1.bf16.msra.mxu0 %v3580
        %3725 = vmatprep.subr.bf16.mxu0 0
        %3726 = vmatpush1.bf16.msra.mxu0 %v3579
        %3727 = vmatprep.subr.bf16.mxu0 0
        %3728 = vmatpush1.bf16.msra.mxu0 %v3578
        %3729 = vmatprep.subr.bf16.mxu0 0
        %3730 = vmatpush1.bf16.msra.mxu0 %v3577
        %3731 = vmatprep.subr.bf16.mxu0 0
        %3732 = vmatpush1.bf16.msra.mxu0 %v3576
        %3733 = vmatprep.subr.bf16.mxu0 0
        %3734 = vmatpush1.bf16.msra.mxu0 %v3575
        %3735 = vmatprep.subr.bf16.mxu0 0
        %3736 = vmatpush2.bf16.msra.mxu0 %v3590
        %3737 = vmatprep.subr.bf16.mxu0 0
        %3738 = vmatpush2.bf16.msra.mxu0 %v3589
        %3739 = vmatprep.subr.bf16.mxu0 0
        %3740 = vmatpush2.bf16.msra.mxu0 %v3588
        %3741 = vmatprep.subr.bf16.mxu0 0
        %3742 = vmatpush2.bf16.msra.mxu0 %v3587
        %3743 = vmatprep.subr.bf16.mxu0 0
        %3744 = vmatpush2.bf16.msra.mxu0 %v3586
        %3745 = vmatprep.subr.bf16.mxu0 0
        %3746 = vmatpush2.bf16.msra.mxu0 %v3585
        %3747 = vmatprep.subr.bf16.mxu0 0
        %3748 = vmatpush2.bf16.msra.mxu0 %v3584
        %3749 = vmatprep.subr.bf16.mxu0 0
        %3750 = vmatpush2.bf16.msra.mxu0 %v3583
        %3751 = vmatprep.mubr.bf16.mxu0 %v3000
        %3752 = vmatmul.mubr.bf16.gmra.mxu0 %v2999
        %v3753 = vpop.f32.mrf.mxu0
        %v3754 = vadd.f32 %v2549, %v3753
        %v3755 = vpop.f32.mrf.mxu0
        %v3756 = vpop.f32.mrf.mxu0
        %v3757 = vadd.f32 %v2549, %v3756
        %v3758 = vpop.f32.mrf.mxu0
        %3759 = vmatprep.mubr.bf16.mxu0 %v3009
        %3760 = vmatmul.mubr.bf16.gmra.mxu0 %v3008
        %v3761 = vpop.f32.mrf.mxu0
        %v3762 = vadd.f32 %v2549, %v3761
        %v3763 = vpop.f32.mrf.mxu0
        %v3764 = vpop.f32.mrf.mxu0
        %v3765 = vadd.f32 %v2549, %v3764
        %v3766 = vpop.f32.mrf.mxu0
        %3767 = vmatprep.mubr.bf16.mxu0 %v3018
        %3768 = vmatmul.mubr.bf16.gmra.mxu0 %v3017
        %v3769 = vpop.f32.mrf.mxu0
        %v3770 = vadd.f32 %v2549, %v3769
        %v3771 = vpop.f32.mrf.mxu0
        %v3772 = vpop.f32.mrf.mxu0
        %v3773 = vadd.f32 %v2549, %v3772
        %v3774 = vpop.f32.mrf.mxu0
        %3775 = vmatprep.mubr.bf16.mxu0 %v3027
        %3776 = vmatmul.mubr.bf16.gmra.mxu0 %v3026
        %v3777 = vpop.f32.mrf.mxu0
        %v3778 = vadd.f32 %v2549, %v3777
        %v3779 = vpop.f32.mrf.mxu0
        %v3780 = vpop.f32.mrf.mxu0
        %v3781 = vadd.f32 %v2549, %v3780
        %v3782 = vpop.f32.mrf.mxu0
        %3783 = vmatprep.mubr.bf16.mxu0 %v3036
        %3784 = vmatmul.mubr.bf16.gmra.mxu0 %v3035
        %v3785 = vpop.f32.mrf.mxu0
        %v3786 = vadd.f32 %v2549, %v3785
        %v3787 = vpop.f32.mrf.mxu0
        %v3788 = vpop.f32.mrf.mxu0
        %v3789 = vadd.f32 %v2549, %v3788
        %v3790 = vpop.f32.mrf.mxu0
        %3791 = vmatprep.mubr.bf16.mxu0 %v3045
        %3792 = vmatmul.mubr.bf16.gmra.mxu0 %v3044
        %v3793 = vpop.f32.mrf.mxu0
        %v3794 = vadd.f32 %v2549, %v3793
        %v3795 = vpop.f32.mrf.mxu0
        %v3796 = vpop.f32.mrf.mxu0
        %v3797 = vadd.f32 %v2549, %v3796
        %v3798 = vpop.f32.mrf.mxu0
        %3799 = vmatprep.mubr.bf16.mxu0 %v3054
        %3800 = vmatmul.mubr.bf16.gmra.mxu0 %v3053
        %v3801 = vpop.f32.mrf.mxu0
        %v3802 = vadd.f32 %v2549, %v3801
        %v3803 = vpop.f32.mrf.mxu0
        %v3804 = vpop.f32.mrf.mxu0
        %v3805 = vadd.f32 %v2549, %v3804
        %v3806 = vpop.f32.mrf.mxu0
        %3807 = vmatprep.mubr.bf16.mxu0 %v3063
        %3808 = vmatmul.mubr.bf16.gmra.mxu0 %v3062
        %v3809 = vpop.f32.mrf.mxu0
        %v3810 = vadd.f32 %v2549, %v3809
        %v3811 = vpop.f32.mrf.mxu0
        %v3812 = vpop.f32.mrf.mxu0
        %v3813 = vadd.f32 %v2549, %v3812
        %v3814 = vpop.f32.mrf.mxu0
        %3815 = vmatprep.mubr.bf16.mxu0 %v3072
        %3816 = vmatmul.mubr.bf16.gmra.mxu0 %v3071
        %v3817 = vpop.f32.mrf.mxu0
        %v3818 = vadd.f32 %v2549, %v3817
        %v3819 = vpop.f32.mrf.mxu0
        %v3820 = vpop.f32.mrf.mxu0
        %v3821 = vadd.f32 %v2549, %v3820
        %v3822 = vpop.f32.mrf.mxu0
        %3823 = vmatprep.mubr.bf16.mxu0 %v3081
        %3824 = vmatmul.mubr.bf16.gmra.mxu0 %v3080
        %v3825 = vpop.f32.mrf.mxu0
        %v3826 = vadd.f32 %v2549, %v3825
        %v3827 = vpop.f32.mrf.mxu0
        %v3828 = vpop.f32.mrf.mxu0
        %v3829 = vadd.f32 %v2549, %v3828
        %v3830 = vpop.f32.mrf.mxu0
        %3831 = vmatprep.mubr.bf16.mxu0 %v3090
        %3832 = vmatmul.mubr.bf16.gmra.mxu0 %v3089
        %v3833 = vpop.f32.mrf.mxu0
        %v3834 = vadd.f32 %v2549, %v3833
        %v3835 = vpop.f32.mrf.mxu0
        %v3836 = vpop.f32.mrf.mxu0
        %v3837 = vadd.f32 %v2549, %v3836
        %v3838 = vpop.f32.mrf.mxu0
        %3839 = vmatprep.mubr.bf16.mxu0 %v3099
        %3840 = vmatmul.mubr.bf16.gmra.mxu0 %v3098
        %v3841 = vpop.f32.mrf.mxu0
        %v3842 = vadd.f32 %v2549, %v3841
        %v3843 = vpop.f32.mrf.mxu0
        %v3844 = vpop.f32.mrf.mxu0
        %v3845 = vadd.f32 %v2549, %v3844
        %v3846 = vpop.f32.mrf.mxu0
        %3847 = vmatprep.mubr.bf16.mxu0 %v3108
        %3848 = vmatmul.mubr.bf16.gmra.mxu0 %v3107
        %v3849 = vpop.f32.mrf.mxu0
        %v3850 = vadd.f32 %v2549, %v3849
        %v3851 = vpop.f32.mrf.mxu0
        %v3852 = vpop.f32.mrf.mxu0
        %v3853 = vadd.f32 %v2549, %v3852
        %v3854 = vpop.f32.mrf.mxu0
        %3855 = vmatprep.mubr.bf16.mxu0 %v3117
        %3856 = vmatmul.mubr.bf16.gmra.mxu0 %v3116
        %v3857 = vpop.f32.mrf.mxu0
        %v3858 = vadd.f32 %v2549, %v3857
        %v3859 = vpop.f32.mrf.mxu0
        %v3860 = vpop.f32.mrf.mxu0
        %v3861 = vadd.f32 %v2549, %v3860
        %v3862 = vpop.f32.mrf.mxu0
        %3863 = vmatprep.mubr.bf16.mxu0 %v3126
        %3864 = vmatmul.mubr.bf16.gmra.mxu0 %v3125
        %v3865 = vpop.f32.mrf.mxu0
        %v3866 = vadd.f32 %v2549, %v3865
        %v3867 = vpop.f32.mrf.mxu0
        %v3868 = vpop.f32.mrf.mxu0
        %v3869 = vadd.f32 %v2549, %v3868
        %v3870 = vpop.f32.mrf.mxu0
        %3871 = vmatprep.mubr.bf16.mxu0 %v3135
        %3872 = vmatmul.mubr.bf16.gmra.mxu0 %v3134
        %v3873 = vpop.f32.mrf.mxu0
        %v3874 = vadd.f32 %v2549, %v3873
        %v3875 = vpop.f32.mrf.mxu0
        %v3876 = vpop.f32.mrf.mxu0
        %v3877 = vadd.f32 %v2549, %v3876
        %v3878 = vpop.f32.mrf.mxu0
        %3879 = vdwg.mxu0
        %3880 = vmatprep.subr.bf16.mxu0 0
        %3881 = vmatpush1.bf16.msra.mxu0 %v3598
        %3882 = vmatprep.subr.bf16.mxu0 0
        %3883 = vmatpush1.bf16.msra.mxu0 %v3597
        %3884 = vmatprep.subr.bf16.mxu0 0
        %3885 = vmatpush1.bf16.msra.mxu0 %v3596
        %3886 = vmatprep.subr.bf16.mxu0 0
        %3887 = vmatpush1.bf16.msra.mxu0 %v3595
        %3888 = vmatprep.subr.bf16.mxu0 0
        %3889 = vmatpush1.bf16.msra.mxu0 %v3594
        %3890 = vmatprep.subr.bf16.mxu0 0
        %3891 = vmatpush1.bf16.msra.mxu0 %v3593
        %3892 = vmatprep.subr.bf16.mxu0 0
        %3893 = vmatpush1.bf16.msra.mxu0 %v3592
        %3894 = vmatprep.subr.bf16.mxu0 0
        %3895 = vmatpush1.bf16.msra.mxu0 %v3591
        %3896 = vmatprep.subr.bf16.mxu0 0
        %3897 = vmatpush2.bf16.msra.mxu0 %v3606
        %3898 = vmatprep.subr.bf16.mxu0 0
        %3899 = vmatpush2.bf16.msra.mxu0 %v3605
        %3900 = vmatprep.subr.bf16.mxu0 0
        %3901 = vmatpush2.bf16.msra.mxu0 %v3604
        %3902 = vmatprep.subr.bf16.mxu0 0
        %3903 = vmatpush2.bf16.msra.mxu0 %v3603
        %3904 = vmatprep.subr.bf16.mxu0 0
        %3905 = vmatpush2.bf16.msra.mxu0 %v3602
        %3906 = vmatprep.subr.bf16.mxu0 0
        %3907 = vmatpush2.bf16.msra.mxu0 %v3601
        %3908 = vmatprep.subr.bf16.mxu0 0
        %3909 = vmatpush2.bf16.msra.mxu0 %v3600
        %3910 = vmatprep.subr.bf16.mxu0 0
        %3911 = vmatpush2.bf16.msra.mxu0 %v3599
        %3912 = vmatprep.mubr.bf16.mxu0 %v3002
        %3913 = vmatmul.mubr.bf16.gmra.mxu0 %v3001
        %v3914 = vpop.f32.mrf.mxu0
        %v3915 = vadd.f32 %v3754, %v3914
        %v3916 = vpop.f32.mrf.mxu0
        %v3917 = vpop.f32.mrf.mxu0
        %v3918 = vadd.f32 %v3757, %v3917
        %v3919 = vpop.f32.mrf.mxu0
        %3920 = vmatprep.mubr.bf16.mxu0 %v3011
        %3921 = vmatmul.mubr.bf16.gmra.mxu0 %v3010
        %v3922 = vpop.f32.mrf.mxu0
        %v3923 = vadd.f32 %v3762, %v3922
        %v3924 = vpop.f32.mrf.mxu0
        %v3925 = vpop.f32.mrf.mxu0
        %v3926 = vadd.f32 %v3765, %v3925
        %v3927 = vpop.f32.mrf.mxu0
        %3928 = vmatprep.mubr.bf16.mxu0 %v3020
        %3929 = vmatmul.mubr.bf16.gmra.mxu0 %v3019
        %v3930 = vpop.f32.mrf.mxu0
        %v3931 = vadd.f32 %v3770, %v3930
        %v3932 = vpop.f32.mrf.mxu0
        %v3933 = vpop.f32.mrf.mxu0
        %v3934 = vadd.f32 %v3773, %v3933
        %v3935 = vpop.f32.mrf.mxu0
        %3936 = vmatprep.mubr.bf16.mxu0 %v3029
        %3937 = vmatmul.mubr.bf16.gmra.mxu0 %v3028
        %v3938 = vpop.f32.mrf.mxu0
        %v3939 = vadd.f32 %v3778, %v3938
        %v3940 = vpop.f32.mrf.mxu0
        %v3941 = vpop.f32.mrf.mxu0
        %v3942 = vadd.f32 %v3781, %v3941
        %v3943 = vpop.f32.mrf.mxu0
        %3944 = vmatprep.mubr.bf16.mxu0 %v3038
        %3945 = vmatmul.mubr.bf16.gmra.mxu0 %v3037
        %v3946 = vpop.f32.mrf.mxu0
        %v3947 = vadd.f32 %v3786, %v3946
        %v3948 = vpop.f32.mrf.mxu0
        %v3949 = vpop.f32.mrf.mxu0
        %v3950 = vadd.f32 %v3789, %v3949
        %v3951 = vpop.f32.mrf.mxu0
        %3952 = vmatprep.mubr.bf16.mxu0 %v3047
        %3953 = vmatmul.mubr.bf16.gmra.mxu0 %v3046
        %v3954 = vpop.f32.mrf.mxu0
        %v3955 = vadd.f32 %v3794, %v3954
        %v3956 = vpop.f32.mrf.mxu0
        %v3957 = vpop.f32.mrf.mxu0
        %v3958 = vadd.f32 %v3797, %v3957
        %v3959 = vpop.f32.mrf.mxu0
        %3960 = vmatprep.mubr.bf16.mxu0 %v3056
        %3961 = vmatmul.mubr.bf16.gmra.mxu0 %v3055
        %v3962 = vpop.f32.mrf.mxu0
        %v3963 = vadd.f32 %v3802, %v3962
        %v3964 = vpop.f32.mrf.mxu0
        %v3965 = vpop.f32.mrf.mxu0
        %v3966 = vadd.f32 %v3805, %v3965
        %v3967 = vpop.f32.mrf.mxu0
        %3968 = vmatprep.mubr.bf16.mxu0 %v3065
        %3969 = vmatmul.mubr.bf16.gmra.mxu0 %v3064
        %v3970 = vpop.f32.mrf.mxu0
        %v3971 = vadd.f32 %v3810, %v3970
        %v3972 = vpop.f32.mrf.mxu0
        %v3973 = vpop.f32.mrf.mxu0
        %v3974 = vadd.f32 %v3813, %v3973
        %v3975 = vpop.f32.mrf.mxu0
        %3976 = vmatprep.mubr.bf16.mxu0 %v3074
        %3977 = vmatmul.mubr.bf16.gmra.mxu0 %v3073
        %v3978 = vpop.f32.mrf.mxu0
        %v3979 = vadd.f32 %v3818, %v3978
        %v3980 = vpop.f32.mrf.mxu0
        %v3981 = vpop.f32.mrf.mxu0
        %v3982 = vadd.f32 %v3821, %v3981
        %v3983 = vpop.f32.mrf.mxu0
        %3984 = vmatprep.mubr.bf16.mxu0 %v3083
        %3985 = vmatmul.mubr.bf16.gmra.mxu0 %v3082
        %v3986 = vpop.f32.mrf.mxu0
        %v3987 = vadd.f32 %v3826, %v3986
        %v3988 = vpop.f32.mrf.mxu0
        %v3989 = vpop.f32.mrf.mxu0
        %v3990 = vadd.f32 %v3829, %v3989
        %v3991 = vpop.f32.mrf.mxu0
        %3992 = vmatprep.mubr.bf16.mxu0 %v3092
        %3993 = vmatmul.mubr.bf16.gmra.mxu0 %v3091
        %v3994 = vpop.f32.mrf.mxu0
        %v3995 = vadd.f32 %v3834, %v3994
        %v3996 = vpop.f32.mrf.mxu0
        %v3997 = vpop.f32.mrf.mxu0
        %v3998 = vadd.f32 %v3837, %v3997
        %v3999 = vpop.f32.mrf.mxu0
        %4000 = vmatprep.mubr.bf16.mxu0 %v3101
        %4001 = vmatmul.mubr.bf16.gmra.mxu0 %v3100
        %v4002 = vpop.f32.mrf.mxu0
        %v4003 = vadd.f32 %v3842, %v4002
        %v4004 = vpop.f32.mrf.mxu0
        %v4005 = vpop.f32.mrf.mxu0
        %v4006 = vadd.f32 %v3845, %v4005
        %v4007 = vpop.f32.mrf.mxu0
        %4008 = vmatprep.mubr.bf16.mxu0 %v3110
        %4009 = vmatmul.mubr.bf16.gmra.mxu0 %v3109
        %v4010 = vpop.f32.mrf.mxu0
        %v4011 = vadd.f32 %v3850, %v4010
        %v4012 = vpop.f32.mrf.mxu0
        %v4013 = vpop.f32.mrf.mxu0
        %v4014 = vadd.f32 %v3853, %v4013
        %v4015 = vpop.f32.mrf.mxu0
        %4016 = vmatprep.mubr.bf16.mxu0 %v3119
        %4017 = vmatmul.mubr.bf16.gmra.mxu0 %v3118
        %v4018 = vpop.f32.mrf.mxu0
        %v4019 = vadd.f32 %v3858, %v4018
        %v4020 = vpop.f32.mrf.mxu0
        %v4021 = vpop.f32.mrf.mxu0
        %v4022 = vadd.f32 %v3861, %v4021
        %v4023 = vpop.f32.mrf.mxu0
        %4024 = vmatprep.mubr.bf16.mxu0 %v3128
        %4025 = vmatmul.mubr.bf16.gmra.mxu0 %v3127
        %v4026 = vpop.f32.mrf.mxu0
        %v4027 = vadd.f32 %v3866, %v4026
        %v4028 = vpop.f32.mrf.mxu0
        %v4029 = vpop.f32.mrf.mxu0
        %v4030 = vadd.f32 %v3869, %v4029
        %v4031 = vpop.f32.mrf.mxu0
        %4032 = vmatprep.mubr.bf16.mxu0 %v3137
        %4033 = vmatmul.mubr.bf16.gmra.mxu0 %v3136
        %v4034 = vpop.f32.mrf.mxu0
        %v4035 = vadd.f32 %v3874, %v4034
        %v4036 = vpop.f32.mrf.mxu0
        %v4037 = vpop.f32.mrf.mxu0
        %v4038 = vadd.f32 %v3877, %v4037
        %v4039 = vpop.f32.mrf.mxu0
        %4040 = vdwg.mxu0
        %4041 = vmatprep.subr.bf16.mxu0 0
        %4042 = vmatpush1.bf16.msra.mxu0 %v3614
        %4043 = vmatprep.subr.bf16.mxu0 0
        %4044 = vmatpush1.bf16.msra.mxu0 %v3613
        %4045 = vmatprep.subr.bf16.mxu0 0
        %4046 = vmatpush1.bf16.msra.mxu0 %v3612
        %4047 = vmatprep.subr.bf16.mxu0 0
        %4048 = vmatpush1.bf16.msra.mxu0 %v3611
        %4049 = vmatprep.subr.bf16.mxu0 0
        %4050 = vmatpush1.bf16.msra.mxu0 %v3610
        %4051 = vmatprep.subr.bf16.mxu0 0
        %4052 = vmatpush1.bf16.msra.mxu0 %v3609
        %4053 = vmatprep.subr.bf16.mxu0 0
        %4054 = vmatpush1.bf16.msra.mxu0 %v3608
        %4055 = vmatprep.subr.bf16.mxu0 0
        %4056 = vmatpush1.bf16.msra.mxu0 %v3607
        %4057 = vmatprep.subr.bf16.mxu0 0
        %4058 = vmatpush2.bf16.msra.mxu0 %v3622
        %4059 = vmatprep.subr.bf16.mxu0 0
        %4060 = vmatpush2.bf16.msra.mxu0 %v3621
        %4061 = vmatprep.subr.bf16.mxu0 0
        %4062 = vmatpush2.bf16.msra.mxu0 %v3620
        %4063 = vmatprep.subr.bf16.mxu0 0
        %4064 = vmatpush2.bf16.msra.mxu0 %v3619
        %4065 = vmatprep.subr.bf16.mxu0 0
        %4066 = vmatpush2.bf16.msra.mxu0 %v3618
        %4067 = vmatprep.subr.bf16.mxu0 0
        %4068 = vmatpush2.bf16.msra.mxu0 %v3617
        %4069 = vmatprep.subr.bf16.mxu0 0
        %4070 = vmatpush2.bf16.msra.mxu0 %v3616
        %4071 = vmatprep.subr.bf16.mxu0 0
        %4072 = vmatpush2.bf16.msra.mxu0 %v3615
        %4073 = vmatprep.mubr.bf16.mxu0 %v3004
        %4074 = vmatmul.mubr.bf16.gmra.mxu0 %v3003
        %v4075 = vpop.f32.mrf.mxu0
        %v4076 = vadd.f32 %v3915, %v4075
        %v4077 = vpop.f32.mrf.mxu0
        %v4078 = vpop.f32.mrf.mxu0
        %v4079 = vadd.f32 %v3918, %v4078
        %v4080 = vpop.f32.mrf.mxu0
        %4081 = vmatprep.mubr.bf16.mxu0 %v3013
        %4082 = vmatmul.mubr.bf16.gmra.mxu0 %v3012
        %v4083 = vpop.f32.mrf.mxu0
        %v4084 = vadd.f32 %v3923, %v4083
        %v4085 = vpop.f32.mrf.mxu0
        %v4086 = vpop.f32.mrf.mxu0
        %v4087 = vadd.f32 %v3926, %v4086
        %v4088 = vpop.f32.mrf.mxu0
        %4089 = vmatprep.mubr.bf16.mxu0 %v3022
        %4090 = vmatmul.mubr.bf16.gmra.mxu0 %v3021
        %v4091 = vpop.f32.mrf.mxu0
        %v4092 = vadd.f32 %v3931, %v4091
        %v4093 = vpop.f32.mrf.mxu0
        %v4094 = vpop.f32.mrf.mxu0
        %v4095 = vadd.f32 %v3934, %v4094
        %v4096 = vpop.f32.mrf.mxu0
        %4097 = vmatprep.mubr.bf16.mxu0 %v3031
        %4098 = vmatmul.mubr.bf16.gmra.mxu0 %v3030
        %v4099 = vpop.f32.mrf.mxu0
        %v4100 = vadd.f32 %v3939, %v4099
        %v4101 = vpop.f32.mrf.mxu0
        %v4102 = vpop.f32.mrf.mxu0
        %v4103 = vadd.f32 %v3942, %v4102
        %v4104 = vpop.f32.mrf.mxu0
        %4105 = vmatprep.mubr.bf16.mxu0 %v3040
        %4106 = vmatmul.mubr.bf16.gmra.mxu0 %v3039
        %v4107 = vpop.f32.mrf.mxu0
        %v4108 = vadd.f32 %v3947, %v4107
        %v4109 = vpop.f32.mrf.mxu0
        %v4110 = vpop.f32.mrf.mxu0
        %v4111 = vadd.f32 %v3950, %v4110
        %v4112 = vpop.f32.mrf.mxu0
        %4113 = vmatprep.mubr.bf16.mxu0 %v3049
        %4114 = vmatmul.mubr.bf16.gmra.mxu0 %v3048
        %v4115 = vpop.f32.mrf.mxu0
        %v4116 = vadd.f32 %v3955, %v4115
        %v4117 = vpop.f32.mrf.mxu0
        %v4118 = vpop.f32.mrf.mxu0
        %v4119 = vadd.f32 %v3958, %v4118
        %v4120 = vpop.f32.mrf.mxu0
        %4121 = vmatprep.mubr.bf16.mxu0 %v3058
        %4122 = vmatmul.mubr.bf16.gmra.mxu0 %v3057
        %v4123 = vpop.f32.mrf.mxu0
        %v4124 = vadd.f32 %v3963, %v4123
        %v4125 = vpop.f32.mrf.mxu0
        %v4126 = vpop.f32.mrf.mxu0
        %v4127 = vadd.f32 %v3966, %v4126
        %v4128 = vpop.f32.mrf.mxu0
        %4129 = vmatprep.mubr.bf16.mxu0 %v3067
        %4130 = vmatmul.mubr.bf16.gmra.mxu0 %v3066
        %v4131 = vpop.f32.mrf.mxu0
        %v4132 = vadd.f32 %v3971, %v4131
        %v4133 = vpop.f32.mrf.mxu0
        %v4134 = vpop.f32.mrf.mxu0
        %v4135 = vadd.f32 %v3974, %v4134
        %v4136 = vpop.f32.mrf.mxu0
        %4137 = vmatprep.mubr.bf16.mxu0 %v3076
        %4138 = vmatmul.mubr.bf16.gmra.mxu0 %v3075
        %v4139 = vpop.f32.mrf.mxu0
        %v4140 = vadd.f32 %v3979, %v4139
        %v4141 = vpop.f32.mrf.mxu0
        %v4142 = vpop.f32.mrf.mxu0
        %v4143 = vadd.f32 %v3982, %v4142
        %v4144 = vpop.f32.mrf.mxu0
        %4145 = vmatprep.mubr.bf16.mxu0 %v3085
        %4146 = vmatmul.mubr.bf16.gmra.mxu0 %v3084
        %v4147 = vpop.f32.mrf.mxu0
        %v4148 = vadd.f32 %v3987, %v4147
        %v4149 = vpop.f32.mrf.mxu0
        %v4150 = vpop.f32.mrf.mxu0
        %v4151 = vadd.f32 %v3990, %v4150
        %v4152 = vpop.f32.mrf.mxu0
        %4153 = vmatprep.mubr.bf16.mxu0 %v3094
        %4154 = vmatmul.mubr.bf16.gmra.mxu0 %v3093
        %v4155 = vpop.f32.mrf.mxu0
        %v4156 = vadd.f32 %v3995, %v4155
        %v4157 = vpop.f32.mrf.mxu0
        %v4158 = vpop.f32.mrf.mxu0
        %v4159 = vadd.f32 %v3998, %v4158
        %v4160 = vpop.f32.mrf.mxu0
        %4161 = vmatprep.mubr.bf16.mxu0 %v3103
        %4162 = vmatmul.mubr.bf16.gmra.mxu0 %v3102
        %v4163 = vpop.f32.mrf.mxu0
        %v4164 = vadd.f32 %v4003, %v4163
        %v4165 = vpop.f32.mrf.mxu0
        %v4166 = vpop.f32.mrf.mxu0
        %v4167 = vadd.f32 %v4006, %v4166
        %v4168 = vpop.f32.mrf.mxu0
        %4169 = vmatprep.mubr.bf16.mxu0 %v3112
        %4170 = vmatmul.mubr.bf16.gmra.mxu0 %v3111
        %v4171 = vpop.f32.mrf.mxu0
        %v4172 = vadd.f32 %v4011, %v4171
        %v4173 = vpop.f32.mrf.mxu0
        %v4174 = vpop.f32.mrf.mxu0
        %v4175 = vadd.f32 %v4014, %v4174
        %v4176 = vpop.f32.mrf.mxu0
        %4177 = vmatprep.mubr.bf16.mxu0 %v3121
        %4178 = vmatmul.mubr.bf16.gmra.mxu0 %v3120
        %v4179 = vpop.f32.mrf.mxu0
        %v4180 = vadd.f32 %v4019, %v4179
        %v4181 = vpop.f32.mrf.mxu0
        %v4182 = vpop.f32.mrf.mxu0
        %v4183 = vadd.f32 %v4022, %v4182
        %v4184 = vpop.f32.mrf.mxu0
        %4185 = vmatprep.mubr.bf16.mxu0 %v3130
        %4186 = vmatmul.mubr.bf16.gmra.mxu0 %v3129
        %v4187 = vpop.f32.mrf.mxu0
        %v4188 = vadd.f32 %v4027, %v4187
        %v4189 = vpop.f32.mrf.mxu0
        %v4190 = vpop.f32.mrf.mxu0
        %v4191 = vadd.f32 %v4030, %v4190
        %v4192 = vpop.f32.mrf.mxu0
        %4193 = vmatprep.mubr.bf16.mxu0 %v3139
        %4194 = vmatmul.mubr.bf16.gmra.mxu0 %v3138
        %v4195 = vpop.f32.mrf.mxu0
        %v4196 = vadd.f32 %v4035, %v4195
        %v4197 = vpop.f32.mrf.mxu0
        %v4198 = vpop.f32.mrf.mxu0
        %v4199 = vadd.f32 %v4038, %v4198
        %v4200 = vpop.f32.mrf.mxu0
        %4201 = vdwg.mxu0
        %4202 = vmatprep.subr.bf16.mxu0 0
        %4203 = vmatpush1.bf16.msra.mxu0 %v3630
        %4204 = vmatprep.subr.bf16.mxu0 0
        %4205 = vmatpush1.bf16.msra.mxu0 %v3629
        %4206 = vmatprep.subr.bf16.mxu0 0
        %4207 = vmatpush1.bf16.msra.mxu0 %v3628
        %4208 = vmatprep.subr.bf16.mxu0 0
        %4209 = vmatpush1.bf16.msra.mxu0 %v3627
        %4210 = vmatprep.subr.bf16.mxu0 0
        %4211 = vmatpush1.bf16.msra.mxu0 %v3626
        %4212 = vmatprep.subr.bf16.mxu0 0
        %4213 = vmatpush1.bf16.msra.mxu0 %v3625
        %4214 = vmatprep.subr.bf16.mxu0 0
        %4215 = vmatpush1.bf16.msra.mxu0 %v3624
        %4216 = vmatprep.subr.bf16.mxu0 0
        %4217 = vmatpush1.bf16.msra.mxu0 %v3623
        %4218 = vmatprep.subr.bf16.mxu0 0
        %4219 = vmatpush2.bf16.msra.mxu0 %v3638
        %4220 = vmatprep.subr.bf16.mxu0 0
        %4221 = vmatpush2.bf16.msra.mxu0 %v3637
        %4222 = vmatprep.subr.bf16.mxu0 0
        %4223 = vmatpush2.bf16.msra.mxu0 %v3636
        %4224 = vmatprep.subr.bf16.mxu0 0
        %4225 = vmatpush2.bf16.msra.mxu0 %v3635
        %4226 = vmatprep.subr.bf16.mxu0 0
        %4227 = vmatpush2.bf16.msra.mxu0 %v3634
        %4228 = vmatprep.subr.bf16.mxu0 0
        %4229 = vmatpush2.bf16.msra.mxu0 %v3633
        %4230 = vmatprep.subr.bf16.mxu0 0
        %4231 = vmatpush2.bf16.msra.mxu0 %v3632
        %4232 = vmatprep.subr.bf16.mxu0 0
        %4233 = vmatpush2.bf16.msra.mxu0 %v3631
        %4234 = vmatprep.mubr.bf16.mxu0 %v3006
        %4235 = vmatmul.mubr.bf16.gmra.mxu0 %v3005
        %v4236 = vpop.f32.mrf.mxu0
        %v4237 = vadd.f32 %v4076, %v4236
        %v4238 = vpop.f32.mrf.mxu0
        %v4239 = vpop.f32.mrf.mxu0
        %v4240 = vadd.f32 %v4079, %v4239
        %v4241 = vpop.f32.mrf.mxu0
        %4242 = vmatprep.mubr.bf16.mxu0 %v3015
        %4243 = vmatmul.mubr.bf16.gmra.mxu0 %v3014
        %v4244 = vpop.f32.mrf.mxu0
        %v4245 = vadd.f32 %v4084, %v4244
        %v4246 = vpop.f32.mrf.mxu0
        %v4247 = vpop.f32.mrf.mxu0
        %v4248 = vadd.f32 %v4087, %v4247
        %v4249 = vpop.f32.mrf.mxu0
        %4250 = vmatprep.mubr.bf16.mxu0 %v3024
        %4251 = vmatmul.mubr.bf16.gmra.mxu0 %v3023
        %v4252 = vpop.f32.mrf.mxu0
        %v4253 = vadd.f32 %v4092, %v4252
        %v4254 = vpop.f32.mrf.mxu0
        %v4255 = vpop.f32.mrf.mxu0
        %v4256 = vadd.f32 %v4095, %v4255
        %v4257 = vpop.f32.mrf.mxu0
        %4258 = vmatprep.mubr.bf16.mxu0 %v3033
        %4259 = vmatmul.mubr.bf16.gmra.mxu0 %v3032
        %v4260 = vpop.f32.mrf.mxu0
        %v4261 = vadd.f32 %v4100, %v4260
        %v4262 = vpop.f32.mrf.mxu0
        %v4263 = vpop.f32.mrf.mxu0
        %v4264 = vadd.f32 %v4103, %v4263
        %v4265 = vpop.f32.mrf.mxu0
        %4266 = vmatprep.mubr.bf16.mxu0 %v3042
        %4267 = vmatmul.mubr.bf16.gmra.mxu0 %v3041
        %v4268 = vpop.f32.mrf.mxu0
        %v4269 = vadd.f32 %v4108, %v4268
        %v4270 = vpop.f32.mrf.mxu0
        %v4271 = vpop.f32.mrf.mxu0
        %v4272 = vadd.f32 %v4111, %v4271
        %v4273 = vpop.f32.mrf.mxu0
        %4274 = vmatprep.mubr.bf16.mxu0 %v3051
        %4275 = vmatmul.mubr.bf16.gmra.mxu0 %v3050
        %v4276 = vpop.f32.mrf.mxu0
        %v4277 = vadd.f32 %v4116, %v4276
        %v4278 = vpop.f32.mrf.mxu0
        %v4279 = vpop.f32.mrf.mxu0
        %v4280 = vadd.f32 %v4119, %v4279
        %v4281 = vpop.f32.mrf.mxu0
        %4282 = vmatprep.mubr.bf16.mxu0 %v3060
        %4283 = vmatmul.mubr.bf16.gmra.mxu0 %v3059
        %v4284 = vpop.f32.mrf.mxu0
        %v4285 = vadd.f32 %v4124, %v4284
        %v4286 = vpop.f32.mrf.mxu0
        %v4287 = vpop.f32.mrf.mxu0
        %v4288 = vadd.f32 %v4127, %v4287
        %v4289 = vpop.f32.mrf.mxu0
        %4290 = vmatprep.mubr.bf16.mxu0 %v3069
        %4291 = vmatmul.mubr.bf16.gmra.mxu0 %v3068
        %v4292 = vpop.f32.mrf.mxu0
        %v4293 = vadd.f32 %v4132, %v4292
        %v4294 = vpop.f32.mrf.mxu0
        %v4295 = vpop.f32.mrf.mxu0
        %v4296 = vadd.f32 %v4135, %v4295
        %v4297 = vpop.f32.mrf.mxu0
        %4298 = vmatprep.mubr.bf16.mxu0 %v3078
        %4299 = vmatmul.mubr.bf16.gmra.mxu0 %v3077
        %v4300 = vpop.f32.mrf.mxu0
        %v4301 = vadd.f32 %v4140, %v4300
        %v4302 = vpop.f32.mrf.mxu0
        %v4303 = vpop.f32.mrf.mxu0
        %v4304 = vadd.f32 %v4143, %v4303
        %v4305 = vpop.f32.mrf.mxu0
        %4306 = vmatprep.mubr.bf16.mxu0 %v3087
        %4307 = vmatmul.mubr.bf16.gmra.mxu0 %v3086
        %v4308 = vpop.f32.mrf.mxu0
        %v4309 = vadd.f32 %v4148, %v4308
        %v4310 = vpop.f32.mrf.mxu0
        %v4311 = vpop.f32.mrf.mxu0
        %v4312 = vadd.f32 %v4151, %v4311
        %v4313 = vpop.f32.mrf.mxu0
        %4314 = vmatprep.mubr.bf16.mxu0 %v3096
        %4315 = vmatmul.mubr.bf16.gmra.mxu0 %v3095
        %v4316 = vpop.f32.mrf.mxu0
        %v4317 = vadd.f32 %v4156, %v4316
        %v4318 = vpop.f32.mrf.mxu0
        %v4319 = vpop.f32.mrf.mxu0
        %v4320 = vadd.f32 %v4159, %v4319
        %v4321 = vpop.f32.mrf.mxu0
        %4322 = vmatprep.mubr.bf16.mxu0 %v3105
        %4323 = vmatmul.mubr.bf16.gmra.mxu0 %v3104
        %v4324 = vpop.f32.mrf.mxu0
        %v4325 = vadd.f32 %v4164, %v4324
        %v4326 = vpop.f32.mrf.mxu0
        %v4327 = vpop.f32.mrf.mxu0
        %v4328 = vadd.f32 %v4167, %v4327
        %v4329 = vpop.f32.mrf.mxu0
        %4330 = vmatprep.mubr.bf16.mxu0 %v3114
        %4331 = vmatmul.mubr.bf16.gmra.mxu0 %v3113
        %v4332 = vpop.f32.mrf.mxu0
        %v4333 = vadd.f32 %v4172, %v4332
        %v4334 = vpop.f32.mrf.mxu0
        %v4335 = vpop.f32.mrf.mxu0
        %v4336 = vadd.f32 %v4175, %v4335
        %v4337 = vpop.f32.mrf.mxu0
        %4338 = vmatprep.mubr.bf16.mxu0 %v3123
        %4339 = vmatmul.mubr.bf16.gmra.mxu0 %v3122
        %v4340 = vpop.f32.mrf.mxu0
        %v4341 = vadd.f32 %v4180, %v4340
        %v4342 = vpop.f32.mrf.mxu0
        %v4343 = vpop.f32.mrf.mxu0
        %v4344 = vadd.f32 %v4183, %v4343
        %v4345 = vpop.f32.mrf.mxu0
        %4346 = vmatprep.mubr.bf16.mxu0 %v3132
        %4347 = vmatmul.mubr.bf16.gmra.mxu0 %v3131
        %v4348 = vpop.f32.mrf.mxu0
        %v4349 = vadd.f32 %v4188, %v4348
        %v4350 = vpop.f32.mrf.mxu0
        %v4351 = vpop.f32.mrf.mxu0
        %v4352 = vadd.f32 %v4191, %v4351
        %v4353 = vpop.f32.mrf.mxu0
        %4354 = vmatprep.mubr.bf16.mxu0 %v3141
        %4355 = vmatmul.mubr.bf16.gmra.mxu0 %v3140
        %v4356 = vpop.f32.mrf.mxu0
        %v4357 = vadd.f32 %v4196, %v4356
        %v4358 = vpop.f32.mrf.mxu0
        %v4359 = vpop.f32.mrf.mxu0
        %v4360 = vadd.f32 %v4199, %v4359
        %v4361 = vpop.f32.mrf.mxu0
        %4362 = vdwg.mxu0
        %4363 = vmatprep.subr.bf16.mxu0 0
        %4364 = vmatpush1.bf16.msra.mxu0 %v3646
        %4365 = vmatprep.subr.bf16.mxu0 0
        %4366 = vmatpush1.bf16.msra.mxu0 %v3645
        %4367 = vmatprep.subr.bf16.mxu0 0
        %4368 = vmatpush1.bf16.msra.mxu0 %v3644
        %4369 = vmatprep.subr.bf16.mxu0 0
        %4370 = vmatpush1.bf16.msra.mxu0 %v3643
        %4371 = vmatprep.subr.bf16.mxu0 0
        %4372 = vmatpush1.bf16.msra.mxu0 %v3642
        %4373 = vmatprep.subr.bf16.mxu0 0
        %4374 = vmatpush1.bf16.msra.mxu0 %v3641
        %4375 = vmatprep.subr.bf16.mxu0 0
        %4376 = vmatpush1.bf16.msra.mxu0 %v3640
        %4377 = vmatprep.subr.bf16.mxu0 0
        %4378 = vmatpush1.bf16.msra.mxu0 %v3639
        %4379 = vmatprep.subr.bf16.mxu0 0
        %4380 = vmatpush2.bf16.msra.mxu0 0
        %4381 = vmatprep.subr.bf16.mxu0 0
        %4382 = vmatpush2.bf16.msra.mxu0 0
        %4383 = vmatprep.subr.bf16.mxu0 0
        %4384 = vmatpush2.bf16.msra.mxu0 0
        %4385 = vmatprep.subr.bf16.mxu0 0
        %4386 = vmatpush2.bf16.msra.mxu0 0
        %4387 = vmatprep.subr.bf16.mxu0 0
        %4388 = vmatpush2.bf16.msra.mxu0 0
        %4389 = vmatprep.subr.bf16.mxu0 0
        %4390 = vmatpush2.bf16.msra.mxu0 0
        %4391 = vmatprep.subr.bf16.mxu0 0
        %4392 = vmatpush2.bf16.msra.mxu0 0
        %4393 = vmatprep.subr.bf16.mxu0 0
        %4394 = vmatpush2.bf16.msra.mxu0 0
        %4395 = vmatprep.mubr.bf16.mxu0 0
        %4396 = vmatmul.mubr.bf16.gmra.mxu0 %v3007
        %v4397 = vpop.f32.mrf.mxu0
        %v4398 = vadd.f32 %v4237, %v4397
        %v4399 = vpop.f32.mrf.mxu0
        %v4400 = vpop.f32.mrf.mxu0
        %v4401 = vadd.f32 %v4240, %v4400
        %v4402 = vpop.f32.mrf.mxu0
        %4403 = vmatprep.mubr.bf16.mxu0 0
        %4404 = vmatmul.mubr.bf16.gmra.mxu0 %v3016
        %v4405 = vpop.f32.mrf.mxu0
        %v4406 = vadd.f32 %v4245, %v4405
        %v4407 = vpop.f32.mrf.mxu0
        %v4408 = vpop.f32.mrf.mxu0
        %v4409 = vadd.f32 %v4248, %v4408
        %v4410 = vpop.f32.mrf.mxu0
        %4411 = vmatprep.mubr.bf16.mxu0 0
        %4412 = vmatmul.mubr.bf16.gmra.mxu0 %v3025
        %v4413 = vpop.f32.mrf.mxu0
        %v4414 = vadd.f32 %v4253, %v4413
        %v4415 = vpop.f32.mrf.mxu0
        %v4416 = vpop.f32.mrf.mxu0
        %v4417 = vadd.f32 %v4256, %v4416
        %v4418 = vpop.f32.mrf.mxu0
        %4419 = vmatprep.mubr.bf16.mxu0 0
        %4420 = vmatmul.mubr.bf16.gmra.mxu0 %v3034
        %v4421 = vpop.f32.mrf.mxu0
        %v4422 = vadd.f32 %v4261, %v4421
        %v4423 = vpop.f32.mrf.mxu0
        %v4424 = vpop.f32.mrf.mxu0
        %v4425 = vadd.f32 %v4264, %v4424
        %v4426 = vpop.f32.mrf.mxu0
        %4427 = vmatprep.mubr.bf16.mxu0 0
        %4428 = vmatmul.mubr.bf16.gmra.mxu0 %v3043
        %v4429 = vpop.f32.mrf.mxu0
        %v4430 = vadd.f32 %v4269, %v4429
        %v4431 = vpop.f32.mrf.mxu0
        %v4432 = vpop.f32.mrf.mxu0
        %v4433 = vadd.f32 %v4272, %v4432
        %v4434 = vpop.f32.mrf.mxu0
        %4435 = vmatprep.mubr.bf16.mxu0 0
        %4436 = vmatmul.mubr.bf16.gmra.mxu0 %v3052
        %v4437 = vpop.f32.mrf.mxu0
        %v4438 = vadd.f32 %v4277, %v4437
        %v4439 = vpop.f32.mrf.mxu0
        %v4440 = vpop.f32.mrf.mxu0
        %v4441 = vadd.f32 %v4280, %v4440
        %v4442 = vpop.f32.mrf.mxu0
        %4443 = vmatprep.mubr.bf16.mxu0 0
        %4444 = vmatmul.mubr.bf16.gmra.mxu0 %v3061
        %v4445 = vpop.f32.mrf.mxu0
        %v4446 = vadd.f32 %v4285, %v4445
        %v4447 = vpop.f32.mrf.mxu0
        %v4448 = vpop.f32.mrf.mxu0
        %v4449 = vadd.f32 %v4288, %v4448
        %v4450 = vpop.f32.mrf.mxu0
        %4451 = vmatprep.mubr.bf16.mxu0 0
        %4452 = vmatmul.mubr.bf16.gmra.mxu0 %v3070
        %v4453 = vpop.f32.mrf.mxu0
        %v4454 = vadd.f32 %v4293, %v4453
        %v4455 = vpop.f32.mrf.mxu0
        %v4456 = vpop.f32.mrf.mxu0
        %v4457 = vadd.f32 %v4296, %v4456
        %v4458 = vpop.f32.mrf.mxu0
        %4459 = vmatprep.mubr.bf16.mxu0 0
        %4460 = vmatmul.mubr.bf16.gmra.mxu0 %v3079
        %v4461 = vpop.f32.mrf.mxu0
        %v4462 = vadd.f32 %v4301, %v4461
        %v4463 = vpop.f32.mrf.mxu0
        %v4464 = vpop.f32.mrf.mxu0
        %v4465 = vadd.f32 %v4304, %v4464
        %v4466 = vpop.f32.mrf.mxu0
        %4467 = vmatprep.mubr.bf16.mxu0 0
        %4468 = vmatmul.mubr.bf16.gmra.mxu0 %v3088
        %v4469 = vpop.f32.mrf.mxu0
        %v4470 = vadd.f32 %v4309, %v4469
        %v4471 = vpop.f32.mrf.mxu0
        %v4472 = vpop.f32.mrf.mxu0
        %v4473 = vadd.f32 %v4312, %v4472
        %v4474 = vpop.f32.mrf.mxu0
        %4475 = vmatprep.mubr.bf16.mxu0 0
        %4476 = vmatmul.mubr.bf16.gmra.mxu0 %v3097
        %v4477 = vpop.f32.mrf.mxu0
        %v4478 = vadd.f32 %v4317, %v4477
        %v4479 = vpop.f32.mrf.mxu0
        %v4480 = vpop.f32.mrf.mxu0
        %v4481 = vadd.f32 %v4320, %v4480
        %v4482 = vpop.f32.mrf.mxu0
        %4483 = vmatprep.mubr.bf16.mxu0 0
        %4484 = vmatmul.mubr.bf16.gmra.mxu0 %v3106
        %v4485 = vpop.f32.mrf.mxu0
        %v4486 = vadd.f32 %v4325, %v4485
        %v4487 = vpop.f32.mrf.mxu0
        %v4488 = vpop.f32.mrf.mxu0
        %v4489 = vadd.f32 %v4328, %v4488
        %v4490 = vpop.f32.mrf.mxu0
        %4491 = vmatprep.mubr.bf16.mxu0 0
        %4492 = vmatmul.mubr.bf16.gmra.mxu0 %v3115
        %v4493 = vpop.f32.mrf.mxu0
        %v4494 = vadd.f32 %v4333, %v4493
        %v4495 = vpop.f32.mrf.mxu0
        %v4496 = vpop.f32.mrf.mxu0
        %v4497 = vadd.f32 %v4336, %v4496
        %v4498 = vpop.f32.mrf.mxu0
        %4499 = vmatprep.mubr.bf16.mxu0 0
        %4500 = vmatmul.mubr.bf16.gmra.mxu0 %v3124
        %v4501 = vpop.f32.mrf.mxu0
        %v4502 = vadd.f32 %v4341, %v4501
        %v4503 = vpop.f32.mrf.mxu0
        %v4504 = vpop.f32.mrf.mxu0
        %v4505 = vadd.f32 %v4344, %v4504
        %v4506 = vpop.f32.mrf.mxu0
        %4507 = vmatprep.mubr.bf16.mxu0 0
        %4508 = vmatmul.mubr.bf16.gmra.mxu0 %v3133
        %v4509 = vpop.f32.mrf.mxu0
        %v4510 = vadd.f32 %v4349, %v4509
        %v4511 = vpop.f32.mrf.mxu0
        %v4512 = vpop.f32.mrf.mxu0
        %v4513 = vadd.f32 %v4352, %v4512
        %v4514 = vpop.f32.mrf.mxu0
        %4515 = vmatprep.mubr.bf16.mxu0 0
        %4516 = vmatmul.mubr.bf16.gmra.mxu0 %v3142
        %v4517 = vpop.f32.mrf.mxu0
        %v4518 = vadd.f32 %v4357, %v4517
        %v4519 = vpop.f32.mrf.mxu0
        %v4520 = vpop.f32.mrf.mxu0
        %v4521 = vadd.f32 %v4360, %v4520
        %v4522 = vpop.f32.mrf.mxu0
        %4523 = vdwg.mxu0
        %v4524 = vlaneseq
        %v4525 = vshrl.u32 %v4524, 7
        %v4526 = vsub.s32 0, %v4525
        %v4527 = vrot.slane %v510, %v4526
        %v4528 = vmul.f32 %v273, %v4527
        %v4529 = vmul.f32 %v274, %v4527
        %v4530 = vmul.f32 %v275, %v4527
        %v4531 = vmul.f32 %v276, %v4527
        %v4532 = vmul.f32 %v277, %v4527
        %v4533 = vmul.f32 %v278, %v4527
        %v4534 = vmul.f32 %v279, %v4527
        %v4535 = vmul.f32 %v280, %v4527
        %v4536 = vmul.f32 %v281, %v4527
        %v4537 = vmul.f32 %v282, %v4527
        %v4538 = vmul.f32 %v283, %v4527
        %v4539 = vmul.f32 %v284, %v4527
        %v4540 = vmul.f32 %v285, %v4527
        %v4541 = vmul.f32 %v286, %v4527
        %v4542 = vmul.f32 %v287, %v4527
        %v4543 = vmul.f32 %v288, %v4527
        %v4544 = vmul.f32 %v289, %v4527
        %v4545 = vmul.f32 %v290, %v4527
        %v4546 = vmul.f32 %v291, %v4527
        %v4547 = vmul.f32 %v292, %v4527
        %v4548 = vmul.f32 %v293, %v4527
        %v4549 = vmul.f32 %v294, %v4527
        %v4550 = vmul.f32 %v295, %v4527
        %v4551 = vmul.f32 %v296, %v4527
        %v4552 = vmul.f32 %v297, %v4527
        %v4553 = vmul.f32 %v298, %v4527
        %v4554 = vmul.f32 %v299, %v4527
        %v4555 = vmul.f32 %v300, %v4527
        %v4556 = vmul.f32 %v301, %v4527
        %v4557 = vmul.f32 %v302, %v4527
        %v4558 = vmul.f32 %v303, %v4527
        %v4559 = vmul.f32 %v304, %v4527
        %v4560 = vadd.f32 %v4398, %v4528
        %v4561 = vadd.f32 %v4401, %v4529
        %v4562 = vadd.f32 %v4406, %v4530
        %v4563 = vadd.f32 %v4409, %v4531
        %v4564 = vadd.f32 %v4414, %v4532
        %v4565 = vadd.f32 %v4417, %v4533
        %v4566 = vadd.f32 %v4422, %v4534
        %v4567 = vadd.f32 %v4425, %v4535
        %v4568 = vadd.f32 %v4430, %v4536
        %v4569 = vadd.f32 %v4433, %v4537
        %v4570 = vadd.f32 %v4438, %v4538
        %v4571 = vadd.f32 %v4441, %v4539
        %v4572 = vadd.f32 %v4446, %v4540
        %v4573 = vadd.f32 %v4449, %v4541
        %v4574 = vadd.f32 %v4454, %v4542
        %v4575 = vadd.f32 %v4457, %v4543
        %v4576 = vadd.f32 %v4462, %v4544
        %v4577 = vadd.f32 %v4465, %v4545
        %v4578 = vadd.f32 %v4470, %v4546
        %v4579 = vadd.f32 %v4473, %v4547
        %v4580 = vadd.f32 %v4478, %v4548
        %v4581 = vadd.f32 %v4481, %v4549
        %v4582 = vadd.f32 %v4486, %v4550
        %v4583 = vadd.f32 %v4489, %v4551
        %v4584 = vadd.f32 %v4494, %v4552
        %v4585 = vadd.f32 %v4497, %v4553
        %v4586 = vadd.f32 %v4502, %v4554
        %v4587 = vadd.f32 %v4505, %v4555
        %v4588 = vadd.f32 %v4510, %v4556
        %v4589 = vadd.f32 %v4513, %v4557
        %v4590 = vadd.f32 %v4518, %v4558
        %v4591 = vadd.f32 %v4521, %v4559
        %v4592 = vxor.u32 %v4560, 2147483648
        %v4593 = vxor.u32 %v4561, 2147483648
        %v4594 = vxor.u32 %v4562, 2147483648
        %v4595 = vxor.u32 %v4563, 2147483648
        %v4596 = vxor.u32 %v4564, 2147483648
        %v4597 = vxor.u32 %v4565, 2147483648
        %v4598 = vxor.u32 %v4566, 2147483648
        %v4599 = vxor.u32 %v4567, 2147483648
        %v4600 = vxor.u32 %v4568, 2147483648
        %v4601 = vxor.u32 %v4569, 2147483648
        %v4602 = vxor.u32 %v4570, 2147483648
        %v4603 = vxor.u32 %v4571, 2147483648
        %v4604 = vxor.u32 %v4572, 2147483648
        %v4605 = vxor.u32 %v4573, 2147483648
        %v4606 = vxor.u32 %v4574, 2147483648
        %v4607 = vxor.u32 %v4575, 2147483648
        %v4608 = vxor.u32 %v4576, 2147483648
        %v4609 = vxor.u32 %v4577, 2147483648
        %v4610 = vxor.u32 %v4578, 2147483648
        %v4611 = vxor.u32 %v4579, 2147483648
        %v4612 = vxor.u32 %v4580, 2147483648
        %v4613 = vxor.u32 %v4581, 2147483648
        %v4614 = vxor.u32 %v4582, 2147483648
        %v4615 = vxor.u32 %v4583, 2147483648
        %v4616 = vxor.u32 %v4584, 2147483648
        %v4617 = vxor.u32 %v4585, 2147483648
        %v4618 = vxor.u32 %v4586, 2147483648
        %v4619 = vxor.u32 %v4587, 2147483648
        %v4620 = vxor.u32 %v4588, 2147483648
        %v4621 = vxor.u32 %v4589, 2147483648
        %v4622 = vxor.u32 %v4590, 2147483648
        %v4623 = vxor.u32 %v4591, 2147483648
        %v4624 = vmul.f32 %v4592, 1.442695
        %v4625 = vpow.pop %v4624
        %v4626 = vmul.f32 %v4593, 1.442695
        %v4627 = vpow.pop %v4626
        %v4628 = vmul.f32 %v4594, 1.442695
        %v4629 = vpow.pop %v4628
        %v4630 = vmul.f32 %v4595, 1.442695
        %v4631 = vpow.pop %v4630
        %v4632 = vmul.f32 %v4596, 1.442695
        %v4633 = vpow.pop %v4632
        %v4634 = vmul.f32 %v4597, 1.442695
        %v4635 = vpow.pop %v4634
        %v4636 = vmul.f32 %v4598, 1.442695
        %v4637 = vpow.pop %v4636
        %v4638 = vmul.f32 %v4599, 1.442695
        %v4639 = vpow.pop %v4638
        %v4640 = vmul.f32 %v4600, 1.442695
        %v4641 = vpow.pop %v4640
        %v4642 = vmul.f32 %v4601, 1.442695
        %v4643 = vpow.pop %v4642
        %v4644 = vmul.f32 %v4602, 1.442695
        %v4645 = vpow.pop %v4644
        %v4646 = vmul.f32 %v4603, 1.442695
        %v4647 = vpow.pop %v4646
        %v4648 = vmul.f32 %v4604, 1.442695
        %v4649 = vpow.pop %v4648
        %v4650 = vmul.f32 %v4605, 1.442695
        %v4651 = vpow.pop %v4650
        %v4652 = vmul.f32 %v4606, 1.442695
        %v4653 = vpow.pop %v4652
        %v4654 = vmul.f32 %v4607, 1.442695
        %v4655 = vpow.pop %v4654
        %v4656 = vmul.f32 %v4608, 1.442695
        %v4657 = vpow.pop %v4656
        %v4658 = vmul.f32 %v4609, 1.442695
        %v4659 = vpow.pop %v4658
        %v4660 = vmul.f32 %v4610, 1.442695
        %v4661 = vpow.pop %v4660
        %v4662 = vmul.f32 %v4611, 1.442695
        %v4663 = vpow.pop %v4662
        %v4664 = vmul.f32 %v4612, 1.442695
        %v4665 = vpow.pop %v4664
        %v4666 = vmul.f32 %v4613, 1.442695
        %v4667 = vpow.pop %v4666
        %v4668 = vmul.f32 %v4614, 1.442695
        %v4669 = vpow.pop %v4668
        %v4670 = vmul.f32 %v4615, 1.442695
        %v4671 = vpow.pop %v4670
        %v4672 = vmul.f32 %v4616, 1.442695
        %v4673 = vpow.pop %v4672
        %v4674 = vmul.f32 %v4617, 1.442695
        %v4675 = vpow.pop %v4674
        %v4676 = vmul.f32 %v4618, 1.442695
        %v4677 = vpow.pop %v4676
        %v4678 = vmul.f32 %v4619, 1.442695
        %v4679 = vpow.pop %v4678
        %v4680 = vmul.f32 %v4620, 1.442695
        %v4681 = vpow.pop %v4680
        %v4682 = vmul.f32 %v4621, 1.442695
        %v4683 = vpow.pop %v4682
        %v4684 = vmul.f32 %v4622, 1.442695
        %v4685 = vpow.pop %v4684
        %v4686 = vmul.f32 %v4623, 1.442695
        %v4687 = vpow.pop %v4686
        %v4688 = vadd.f32 %v4625, 1.0
        %v4689 = vadd.f32 %v4627, 1.0
        %v4690 = vadd.f32 %v4629, 1.0
        %v4691 = vadd.f32 %v4631, 1.0
        %v4692 = vadd.f32 %v4633, 1.0
        %v4693 = vadd.f32 %v4635, 1.0
        %v4694 = vadd.f32 %v4637, 1.0
        %v4695 = vadd.f32 %v4639, 1.0
        %v4696 = vadd.f32 %v4641, 1.0
        %v4697 = vadd.f32 %v4643, 1.0
        %v4698 = vadd.f32 %v4645, 1.0
        %v4699 = vadd.f32 %v4647, 1.0
        %v4700 = vadd.f32 %v4649, 1.0
        %v4701 = vadd.f32 %v4651, 1.0
        %v4702 = vadd.f32 %v4653, 1.0
        %v4703 = vadd.f32 %v4655, 1.0
        %v4704 = vadd.f32 %v4657, 1.0
        %v4705 = vadd.f32 %v4659, 1.0
        %v4706 = vadd.f32 %v4661, 1.0
        %v4707 = vadd.f32 %v4663, 1.0
        %v4708 = vadd.f32 %v4665, 1.0
        %v4709 = vadd.f32 %v4667, 1.0
        %v4710 = vadd.f32 %v4669, 1.0
        %v4711 = vadd.f32 %v4671, 1.0
        %v4712 = vadd.f32 %v4673, 1.0
        %v4713 = vadd.f32 %v4675, 1.0
        %v4714 = vadd.f32 %v4677, 1.0
        %v4715 = vadd.f32 %v4679, 1.0
        %v4716 = vadd.f32 %v4681, 1.0
        %v4717 = vadd.f32 %v4683, 1.0
        %v4718 = vadd.f32 %v4685, 1.0
        %v4719 = vadd.f32 %v4687, 1.0
        %v4720 = vrcp.pop %v4688
        %v4721 = vmul.f32 1.0, %v4720
        %v4722 = vrcp.pop %v4689
        %v4723 = vmul.f32 1.0, %v4722
        %v4724 = vrcp.pop %v4690
        %v4725 = vmul.f32 1.0, %v4724
        %v4726 = vrcp.pop %v4691
        %v4727 = vmul.f32 1.0, %v4726
        %v4728 = vrcp.pop %v4692
        %v4729 = vmul.f32 1.0, %v4728
        %v4730 = vrcp.pop %v4693
        %v4731 = vmul.f32 1.0, %v4730
        %v4732 = vrcp.pop %v4694
        %v4733 = vmul.f32 1.0, %v4732
        %v4734 = vrcp.pop %v4695
        %v4735 = vmul.f32 1.0, %v4734
        %v4736 = vrcp.pop %v4696
        %v4737 = vmul.f32 1.0, %v4736
        %v4738 = vrcp.pop %v4697
        %v4739 = vmul.f32 1.0, %v4738
        %v4740 = vrcp.pop %v4698
        %v4741 = vmul.f32 1.0, %v4740
        %v4742 = vrcp.pop %v4699
        %v4743 = vmul.f32 1.0, %v4742
        %v4744 = vrcp.pop %v4700
        %v4745 = vmul.f32 1.0, %v4744
        %v4746 = vrcp.pop %v4701
        %v4747 = vmul.f32 1.0, %v4746
        %v4748 = vrcp.pop %v4702
        %v4749 = vmul.f32 1.0, %v4748
        %v4750 = vrcp.pop %v4703
        %v4751 = vmul.f32 1.0, %v4750
        %v4752 = vrcp.pop %v4704
        %v4753 = vmul.f32 1.0, %v4752
        %v4754 = vrcp.pop %v4705
        %v4755 = vmul.f32 1.0, %v4754
        %v4756 = vrcp.pop %v4706
        %v4757 = vmul.f32 1.0, %v4756
        %v4758 = vrcp.pop %v4707
        %v4759 = vmul.f32 1.0, %v4758
        %v4760 = vrcp.pop %v4708
        %v4761 = vmul.f32 1.0, %v4760
        %v4762 = vrcp.pop %v4709
        %v4763 = vmul.f32 1.0, %v4762
        %v4764 = vrcp.pop %v4710
        %v4765 = vmul.f32 1.0, %v4764
        %v4766 = vrcp.pop %v4711
        %v4767 = vmul.f32 1.0, %v4766
        %v4768 = vrcp.pop %v4712
        %v4769 = vmul.f32 1.0, %v4768
        %v4770 = vrcp.pop %v4713
        %v4771 = vmul.f32 1.0, %v4770
        %v4772 = vrcp.pop %v4714
        %v4773 = vmul.f32 1.0, %v4772
        %v4774 = vrcp.pop %v4715
        %v4775 = vmul.f32 1.0, %v4774
        %v4776 = vrcp.pop %v4716
        %v4777 = vmul.f32 1.0, %v4776
        %v4778 = vrcp.pop %v4717
        %v4779 = vmul.f32 1.0, %v4778
        %v4780 = vrcp.pop %v4718
        %v4781 = vmul.f32 1.0, %v4780
        %v4782 = vrcp.pop %v4719
        %v4783 = vmul.f32 1.0, %v4782
        %v4784 = vmul.f32 %v4560, %v4721
        %v4785 = vmul.f32 %v4561, %v4723
        %v4786 = vmul.f32 %v4562, %v4725
        %v4787 = vmul.f32 %v4563, %v4727
        %v4788 = vmul.f32 %v4564, %v4729
        %v4789 = vmul.f32 %v4565, %v4731
        %v4790 = vmul.f32 %v4566, %v4733
        %v4791 = vmul.f32 %v4567, %v4735
        %v4792 = vmul.f32 %v4568, %v4737
        %v4793 = vmul.f32 %v4569, %v4739
        %v4794 = vmul.f32 %v4570, %v4741
        %v4795 = vmul.f32 %v4571, %v4743
        %v4796 = vmul.f32 %v4572, %v4745
        %v4797 = vmul.f32 %v4573, %v4747
        %v4798 = vmul.f32 %v4574, %v4749
        %v4799 = vmul.f32 %v4575, %v4751
        %v4800 = vmul.f32 %v4576, %v4753
        %v4801 = vmul.f32 %v4577, %v4755
        %v4802 = vmul.f32 %v4578, %v4757
        %v4803 = vmul.f32 %v4579, %v4759
        %v4804 = vmul.f32 %v4580, %v4761
        %v4805 = vmul.f32 %v4581, %v4763
        %v4806 = vmul.f32 %v4582, %v4765
        %v4807 = vmul.f32 %v4583, %v4767
        %v4808 = vmul.f32 %v4584, %v4769
        %v4809 = vmul.f32 %v4585, %v4771
        %v4810 = vmul.f32 %v4586, %v4773
        %v4811 = vmul.f32 %v4587, %v4775
        %v4812 = vmul.f32 %v4588, %v4777
        %v4813 = vmul.f32 %v4589, %v4779
        %v4814 = vmul.f32 %v4590, %v4781
        %v4815 = vmul.f32 %v4591, %v4783
        %4816 = vst [vmem:[%s271] sm:$0xff] %v4784
        %4817 = vst [vmem:[%s271 + $0x8] sm:$0xff] %v4785
        %4818 = vst [vmem:[%s271 + $0x10] sm:$0xff] %v4786
        %4819 = vst [vmem:[%s271 + $0x18] sm:$0xff] %v4787
        %4820 = vst [vmem:[%s271 + $0x20] sm:$0xff] %v4788
        %4821 = vst [vmem:[%s271 + $0x28] sm:$0xff] %v4789
        %4822 = vst [vmem:[%s271 + $0x30] sm:$0xff] %v4790
        %4823 = vst [vmem:[%s271 + $0x38] sm:$0xff] %v4791
        %4824 = vst [vmem:[%s271 + $0x40] sm:$0xff] %v4792
        %4825 = vst [vmem:[%s271 + $0x48] sm:$0xff] %v4793
        %4826 = vst [vmem:[%s271 + $0x50] sm:$0xff] %v4794
        %4827 = vst [vmem:[%s271 + $0x58] sm:$0xff] %v4795
        %4828 = vst [vmem:[%s271 + $0x60] sm:$0xff] %v4796
        %4829 = vst [vmem:[%s271 + $0x68] sm:$0xff] %v4797
        %4830 = vst [vmem:[%s271 + $0x70] sm:$0xff] %v4798
        %4831 = vst [vmem:[%s271 + $0x78] sm:$0xff] %v4799
        %4832 = vst [vmem:[%s271 + $0x80] sm:$0xff] %v4800
        %4833 = vst [vmem:[%s271 + $0x88] sm:$0xff] %v4801
        %4834 = vst [vmem:[%s271 + $0x90] sm:$0xff] %v4802
        %4835 = vst [vmem:[%s271 + $0x98] sm:$0xff] %v4803
        %4836 = vst [vmem:[%s271 + $0xa0] sm:$0xff] %v4804
        %4837 = vst [vmem:[%s271 + $0xa8] sm:$0xff] %v4805
        %4838 = vst [vmem:[%s271 + $0xb0] sm:$0xff] %v4806
        %4839 = vst [vmem:[%s271 + $0xb8] sm:$0xff] %v4807
        %4840 = vst [vmem:[%s271 + $0xc0] sm:$0xff] %v4808
        %4841 = vst [vmem:[%s271 + $0xc8] sm:$0xff] %v4809
        %4842 = vst [vmem:[%s271 + $0xd0] sm:$0xff] %v4810
        %4843 = vst [vmem:[%s271 + $0xd8] sm:$0xff] %v4811
        %4844 = vst [vmem:[%s271 + $0xe0] sm:$0xff] %v4812
        %4845 = vst [vmem:[%s271 + $0xe8] sm:$0xff] %v4813
        %4846 = vst [vmem:[%s271 + $0xf0] sm:$0xff] %v4814
        %4847 = vst [vmem:[%s271 + $0xf8] sm:$0xff] %v4815
        %s4848 = sand.u32 %s141, 1
        %s4849 = scalar_lea.sflag [#allocation6], %s4848
        %s4850 = sand.u32 %s141, 1
        %s4851 = smul.addr %s4850, 256
        %s4852 = scalar_lea.vmem [#allocation10], %s4851
        // Predicated region
        $region53: #{tpu_custom_call.1} parent=39 // pred_check
          %p4853 = pneg %p151
        $region54: #{tpu_custom_call.1} parent=39 // pred_check_branch
          %4855 = sbr.rel (%p4853) target = $region56
        $region55: #{tpu_custom_call.1} parent=39 // pred_region
          %s4857 = ssub.s32 4096, 4096
          %4858 = vsyncadd %s4849, %s4857
          %s4859 = smul.addr %s23, 32
          %s4860 = smul.addr %s4859, 128
          %s4861 = scalar_lea.hbm %s5, %s4860
          %s4862 = sshll.u32 %s4852, 4
          %s4863 = int_to_ptr.vmem [resolvable:$true] %s4862
          %4868 = dma.vmem_to_hbm [thread:$0]  %s4863, 4096, %s4861, %s4849, 128, 128, 8
        $region56: #{tpu_custom_call.1} parent=39 // pred_fallthru
          _
      $region40: #{tpu_custom_call.1} parent=5 // pred_fallthru
        _
      %p4869 = scmp.le.s32.totalorder 2, %s18
      // Predicated region
      $region57: #{tpu_custom_call.1} parent=5 // pred_check
        %p4870 = pneg %p4869
      $region58: #{tpu_custom_call.1} parent=5 // pred_check_branch
        %4872 = sbr.rel (%p4870) target = $region60
      $region59: #{tpu_custom_call.1} parent=5 // pred_region
        %s4873 = ssub.s32 %s18, 2
        // Predicated region
        $region61: #{tpu_custom_call.1} parent=59 // pred_check
          %p4874 = pneg %p157
        $region62: #{tpu_custom_call.1} parent=59 // pred_check_branch
          %4876 = sbr.rel (%p4874) target = $region64
        $region63: #{tpu_custom_call.1} parent=59 // pred_region
          %s4877 = sand.u32 %s142, 1
          %s4878 = scalar_lea.sflag [#allocation6], %s4877
          %s4879 = sand.u32 %s142, 1
          %s4880 = smul.addr %s4879, 256
          %s4881 = scalar_lea.vmem [#allocation10], %s4880
          %4882 = dma.done %s4878, 4096
        $region64: #{tpu_custom_call.1} parent=59 // pred_fallthru
          _
      $region60: #{tpu_custom_call.1} parent=5 // pred_fallthru
        _
    $region6: #{tpu_custom_call.1} parent=1 // loop_footer
      %s22 = sadd.s32 1, %s18
    $region7: #{tpu_custom_call.1} parent=1 // loop_footer_branch
      %17 = sbr.rel target = $region3
    $region8: #{tpu_custom_call.1} parent=1 // loop_exit
      _
    %4883 = vsyncpa [#allocation5], 1
    %s4884 = scalar_lea.sflag [#allocation5], 1
    %4885 = vsyncpa %s4884, 1
    %4886 = vsyncpa [#allocation8], 1
    %4887 = vsyncpa [#allocation6], 1
    %s4888 = scalar_lea.sflag [#allocation6], 1
    %4889 = vsyncpa %s4888, 1

</llo_original>
